<compile_context>
chip_gen: v7x
topology: tpu7x:2x2x1
jax: 0.10.0
libtpu: 0.0.40
codegen_flags: <defaults>
</compile_context>

<pallas_src>
import functools

import numpy as np
import jax
import jax.numpy as jnp
from jax.experimental import pallas as pl
from jax.experimental.pallas import tpu as pltpu


_SQRT2 = float(np.sqrt(2.0))
_C0 = float(np.sqrt(2.0 / np.pi))      # sqrt(2/pi)
_C1 = _C0 * 0.044715                   # cubic coefficient of tanh-Phi approx


def _erfinv_f32(u):
    """Single-precision erfinv (M. Giles, 2010), branchless via jnp.where."""
    w = -jnp.log(jnp.maximum((1.0 - u) * (1.0 + u), 1e-30))
    # central branch (w < 5)
    wc = w - 2.5
    p1 = 2.81022636e-08
    for c in (3.43273939e-07, -3.5233877e-06, -4.39150654e-06, 2.1858087e-04,
              -1.25372503e-03, -4.17768164e-03, 2.46640727e-01, 1.50140941e+00):
        p1 = p1 * wc + c
    # tail branch (w >= 5)
    wt = jnp.sqrt(w) - 3.0
    p2 = -2.00214257e-04
    for c in (1.00950558e-04, 1.34934322e-03, -3.67342844e-03, 5.73950773e-03,
              -7.6224613e-03, 9.43887047e-03, 1.00167406e+00, 2.83297682e+00):
        p2 = p2 * wt + c
    return jnp.where(w < 5.0, p1, p2) * u


def _kd_norm_kernel(it_ref, jt_ref, xi_ref, xj_ref, invbw_ref, w_ref, b_ref,
                    y_ref, acc_ref, *, tiles, tile_n, inv_n):
    """Grid = (row_tiles, pairs).  Pairs enumerate column-tile pairs it <= jt.

    acc_ref: [tiles, TR, TB] VMEM scratch; slot t holds sum_j tanh(.) for the
    t-th column tile of the current row tile (i.e. N * (2*cdf - 1), tiled).
    """
    p = pl.program_id(1)

    @pl.when(p == 0)
    def _init():
        acc_ref[...] = jnp.zeros_like(acc_ref)

    it = it_ref[p]
    jt = jt_ref[p]

    inv_bw = invbw_ref[...]                                    # [TR, 1]
    # Pre-scale by 1/bw so the O(TR*TB^2) pair block has no divide / extra mul.
    xi = xi_ref[...] * inv_bw                                  # [TR, TB]  (i tile)
    xj = xj_ref[...] * inv_bw                                  # [TR, TB]  (j tile)

    # s[r, b, a] = (x_i[a] - x_j[b]) / bw : j on sublanes, i on lanes.
    # Phi(s) ~= 0.5*(1 + tanh(C0*s + C1*s^3)); only the (odd) tanh is summed.
    s = xi[:, None, :] - xj[:, :, None]                        # [TR, TB, TB]
    g = s * (_C0 + _C1 * (s * s))
    t = jnp.tanh(g)                                            # antisymmetric block

    # i-tile gets +sum_j t  (sublane reduce -> lane-dense [TR, TB]).
    acc_ref[it] += jnp.sum(t, axis=1)

    @pl.when(it != jt)
    def _mirror():
        # Mirrored orientation (queries in the j tile, data in the i tile):
        # sum_{j in it-tile} tanh((x_i' - x_j)/bw) = -sum_a t[.., b, a].
        acc_ref[jt] += -jnp.sum(t, axis=2)

    @pl.when(p == pl.num_programs(1) - 1)
    def _finalize():
        w = w_ref[...]                                         # [1, N]
        b = b_ref[...]                                         # [1, N]
        for tt in range(tiles):                                # static unroll
            lo = tt * tile_n
            u = acc_ref[tt] * inv_n                            # = 2*cdf - 1
            y = _erfinv_f32(u) * _SQRT2                        # Gaussian ppf
            y_ref[:, lo:lo + tile_n] = (
                y * w[:, lo:lo + tile_n] + b[:, lo:lo + tile_n]
            ).astype(y_ref.dtype)


def _pick_tile(total, candidates):
    for c in candidates:
        if c <= total and total % c == 0:
            return c
    return total


def kd_layer_norm(x, weight, bias, norm_ndim):
    """JAX/Pallas equivalent of KDLayerNorm.forward."""
    norm_shape = x.shape[-norm_ndim:]
    extra_shape = x.shape[:-norm_ndim]
    R = int(np.prod(extra_shape)) if extra_shape else 1
    N = int(np.prod(norm_shape))

    x2 = x.reshape(R, N).astype(jnp.float32)
    w2 = jnp.asarray(weight, jnp.float32).reshape(1, N)
    b2 = (jnp.asarray(bias, jnp.float32).reshape(1, N)
          if bias is not None else jnp.zeros((1, N), jnp.float32))

    # Silverman-2D bandwidth, hoisted out of the kernel (O(R*N) once vs the
    # O(R*N^2) in-kernel pair loop).  Unbiased std, exactly as torch.std(dim=-1).
    mean = jnp.mean(x2, axis=-1, keepdims=True)
    var = jnp.sum((x2 - mean) ** 2, axis=-1, keepdims=True) * (1.0 / max(N - 1, 1))
    bw = 0.9 * jnp.sqrt(var) * float(N) ** (-0.2)
    # TODO(synk): constant rows (std == 0) give huge-but-finite outputs here;
    # exact PyTorch parity would produce NaN for such rows.
    inv_bw = 1.0 / jnp.maximum(bw, 1e-12)                      # [R, 1]

    # Tile selection.
    #  TR rows / step, TB columns per pair tile.  Pair-loop temps are
    #  ~4 * TR*TB*TB*4 B (TR=8, TB=256 -> 8 MiB) + ~5*TR*N*4 B of resident /
    #  double-buffered tiles -> well under the 32 MiB default scoped VMEM on
    #  all generations (incl. v7x's 64 MiB physical).  On 128-MiB v5e/v6e a
    #  larger TB (512/1024) is possible with vmem_limit_bytes raised.
    #  For megacore, R//TR parallel steps are sharded across TensorCores.
    TR = _pick_tile(R, (8,))
    TB = _pick_tile(N, (256, 128))
    T = N // TB
    P = T * (T + 1) // 2                  # pairs with it <= jt (antisymmetry)

    it_list, jt_list = [], []
    for i in range(T):
        for j in range(i, T):
            it_list.append(i)
            jt_list.append(j)
    it_arr = jnp.asarray(np.asarray(it_list, np.int32))
    jt_arr = jnp.asarray(np.asarray(jt_list, np.int32))

    grid = (R // TR, P)

    kernel = functools.partial(_kd_norm_kernel, tiles=T, tile_n=TB, inv_n=1.0 / N)

    y2 = pl.pallas_call(
        kernel,
        out_shape=jax.ShapeDtypeStruct((R, N), jnp.float32),
        grid_spec=pltpu.PrefetchScalarGridSpec(
            num_scalar_prefetch=2,        # it_arr, jt_arr land in SMEM
            grid=grid,
            in_specs=[
                pl.BlockSpec((TR, TB), lambda r, p, it, jt: (r, it[p])),  # i tile
                pl.BlockSpec((TR, TB), lambda r, p, it, jt: (r, jt[p])),  # j tile
                pl.BlockSpec((TR, 1),  lambda r, p, it, jt: (r, 0)),      # 1/bw
                pl.BlockSpec((1, N),   lambda r, p, it, jt: (0, 0)),      # weight
                pl.BlockSpec((1, N),   lambda r, p, it, jt: (0, 0)),      # bias
            ],
            out_specs=pl.BlockSpec((TR, N), lambda r, p, it, jt: (r, 0)),
            scratch_shapes=[pltpu.VMEM((T, TR, TB), jnp.float32)],
        ),
        compiler_params=pltpu.CompilerParams(
            dimension_semantics=("parallel", "arbitrary"),
        ),
    )(it_arr, jt_arr, x2, x2, inv_bw, w2, b2)

    return y2.reshape(extra_shape + norm_shape)


def kd_layer_norm_reference(x, weight, bias, norm_ndim):
    """Exact (erf/erfinv) plain-JAX reference of the PyTorch forward."""
    norm_shape = x.shape[-norm_ndim:]
    extra_shape = x.shape[:-norm_ndim]
    R = int(np.prod(extra_shape)) if extra_shape else 1
    N = int(np.prod(norm_shape))
    x2 = x.reshape(R, N).astype(jnp.float32)
    std = jnp.std(x2, axis=-1, ddof=1, keepdims=True)
    bw = 0.9 * std * float(N) ** (-0.2)
    s = (x2[:, :, None] - x2[:, None, :]) / bw[:, :, None]
    cdf = jnp.mean(0.5 * (1.0 + jax.scipy.special.erf(s / np.sqrt(2.0))), axis=2)
    y = jax.scipy.special.erfinv(2.0 * cdf - 1.0) * np.sqrt(2.0)
    y = y.reshape(extra_shape + norm_shape) * weight
    if bias is not None:
        y = y + bias
    return y


if __name__ == "__main__":
    key = jax.random.PRNGKey(0)

    # Input consistent with the module: normalize over the last 2 dims (16,16).
    x = jax.random.normal(key, (2, 4, 16, 16), dtype=jnp.float32)

    norm_size = (16, 16)
    # Deterministic parameter init, exactly as in KDLayerNorm.__init__:
    weight = jnp.ones(norm_size, dtype=jnp.float32)
    bias = jnp.zeros(norm_size, dtype=jnp.float32)

    out = kd_layer_norm(x, weight, bias, norm_ndim=len(norm_size))
    out = jax.block_until_ready(out)
    assert out.shape == x.shape
    assert bool(jnp.all(jnp.isfinite(out)))

    # End-to-end check vs. exact erf/erfinv reference; the in-kernel tanh-Phi +
    # polynomial erfinv keep the output within ~2e-3 (tolerance 1e-2).
    ref = kd_layer_norm_reference(x, weight, bias, norm_ndim=len(norm_size))
    max_err = float(jnp.max(jnp.abs(out - ref)))
    assert max_err < 1e-2, f"max abs error vs reference: {max_err}"

    print("KERNEL_OK")
</pallas_src>

<mosaic_0001>
module attributes {stable_mosaic.version = 11 : i64} {
  func.func @_kd_norm_kernel(%arg0: i32, %arg1: i32, %arg2: memref<1xi32, #tpu.memory_space<smem>>, %arg3: memref<1xi32, #tpu.memory_space<smem>>, %arg4: memref<8x256xf32, #tpu.memory_space<vmem>>, %arg5: memref<8x256xf32, #tpu.memory_space<vmem>>, %arg6: memref<8x1xf32, #tpu.memory_space<vmem>>, %arg7: memref<1x256xf32, #tpu.memory_space<vmem>>, %arg8: memref<1x256xf32, #tpu.memory_space<vmem>>, %arg9: memref<8x256xf32, #tpu.memory_space<vmem>>, %arg10: memref<1x8x256xf32, #tpu.memory_space<vmem>>) attributes {dimension_semantics = [#tpu.dimension_semantics<parallel>, #tpu.dimension_semantics<arbitrary>], iteration_bounds = array<i64: 1, 1>, scalar_prefetch = 2 : i64, scratch_operands = 1 : i64, tpu.core_type = #tpu.core_type<tc>, window_params = [{transform_indices = @transform_0, window_bounds = array<i64: 8, 256>}, {transform_indices = @transform_1, window_bounds = array<i64: 8, 256>}, {transform_indices = @transform_2, window_bounds = array<i64: 8, 1>}, {pipeline_mode = #tpu.pipeline_mode<synchronous>, transform_indices = @transform_3, window_bounds = array<i64: 1, 256>}, {pipeline_mode = #tpu.pipeline_mode<synchronous>, transform_indices = @transform_4, window_bounds = array<i64: 1, 256>}, {transform_indices = @transform_5, window_bounds = array<i64: 8, 256>}]} {
    %c0_i32 = arith.constant 0 : i32
    %0 = arith.cmpi eq, %arg1, %c0_i32 : i32
    %1 = arith.extui %0 : i1 to i32
    %c0_i32_0 = arith.constant 0 : i32
    %2 = arith.cmpi ne, %1, %c0_i32_0 : i32
    scf.if %2 {
      %cst_15 = arith.constant 0.000000e+00 : f32
      %41 = vector.broadcast %cst_15 : f32 to vector<1x8x256xf32>
      %c0_16 = arith.constant 0 : index
      %c0_17 = arith.constant 0 : index
      %c0_18 = arith.constant 0 : index
      %42 = vector.load %arg10[%c0_16, %c0_17, %c0_18] : memref<1x8x256xf32, #tpu.memory_space<vmem>>, vector<1x8x256xf32>
      tpu.vector_store %arg10[%c0_16, %c0_17, %c0_18], %41 {strides = array<i32>} : memref<1x8x256xf32, #tpu.memory_space<vmem>>, vector<1x8x256xf32>,
    } else {
    }
    %3 = arith.index_cast %arg1 : i32 to index
    %4 = memref.load %arg2[%3] : memref<1xi32, #tpu.memory_space<smem>>
    %5 = arith.index_cast %arg1 : i32 to index
    %6 = memref.load %arg3[%5] : memref<1xi32, #tpu.memory_space<smem>>
    %c0 = arith.constant 0 : index
    %c0_1 = arith.constant 0 : index
    %7 = vector.load %arg6[%c0, %c0_1] : memref<8x1xf32, #tpu.memory_space<vmem>>, vector<8x1xf32>
    %c0_2 = arith.constant 0 : index
    %c0_3 = arith.constant 0 : index
    %8 = vector.load %arg4[%c0_2, %c0_3] : memref<8x256xf32, #tpu.memory_space<vmem>>, vector<8x256xf32>
    %9 = vector.broadcast %7 : vector<8x1xf32> to vector<8x256xf32>
    %10 = arith.mulf %8, %9 : vector<8x256xf32>
    %c0_4 = arith.constant 0 : index
    %c0_5 = arith.constant 0 : index
    %11 = vector.load %arg5[%c0_4, %c0_5] : memref<8x256xf32, #tpu.memory_space<vmem>>, vector<8x256xf32>
    %12 = vector.broadcast %7 : vector<8x1xf32> to vector<8x256xf32>
    %13 = arith.mulf %11, %12 : vector<8x256xf32>
    %14 = vector.shape_cast %10 : vector<8x256xf32> to vector<8x1x256xf32>
    %15 = vector.shape_cast %13 : vector<8x256xf32> to vector<8x256x1xf32>
    %16 = vector.broadcast %14 : vector<8x1x256xf32> to vector<8x256x256xf32>
    %17 = vector.broadcast %15 : vector<8x256x1xf32> to vector<8x256x256xf32>
    %18 = arith.subf %16, %17 : vector<8x256x256xf32>
    %19 = arith.mulf %18, %18 : vector<8x256x256xf32>
    %cst = arith.constant 0.0356774069 : f32
    %20 = vector.broadcast %cst : f32 to vector<8x256x256xf32>
    %21 = arith.mulf %20, %19 : vector<8x256x256xf32>
    %cst_6 = arith.constant 0.797884583 : f32
    %22 = vector.broadcast %cst_6 : f32 to vector<8x256x256xf32>
    %23 = arith.addf %22, %21 : vector<8x256x256xf32>
    %24 = arith.mulf %18, %23 : vector<8x256x256xf32>
    %25 = math.tanh %24 : vector<8x256x256xf32>
    %26 = arith.index_cast %4 : i32 to index
    %c0_7 = arith.constant 0 : index
    %c0_8 = arith.constant 0 : index
    %27 = vector.load %arg10[%26, %c0_7, %c0_8] : memref<1x8x256xf32, #tpu.memory_space<vmem>>, vector<1x8x256xf32>
    %28 = vector.shape_cast %27 : vector<1x8x256xf32> to vector<8x256xf32>
    %cst_9 = arith.constant dense<0.000000e+00> : vector<8x256xf32>
    %29 = vector.multi_reduction <add>, %25, %cst_9 [1] : vector<8x256x256xf32> to vector<8x256xf32>
    %30 = arith.addf %28, %29 : vector<8x256xf32>
    %31 = arith.index_cast %4 : i32 to index
    %c0_10 = arith.constant 0 : index
    %c0_11 = arith.constant 0 : index
    %32 = vector.load %arg10[%31, %c0_10, %c0_11] : memref<1x8x256xf32, #tpu.memory_space<vmem>>, vector<1x8x256xf32>
    %33 = vector.shape_cast %32 : vector<1x8x256xf32> to vector<8x256xf32>
    %34 = vector.shape_cast %30 : vector<8x256xf32> to vector<1x8x256xf32>
    tpu.vector_store %arg10[%31, %c0_10, %c0_11], %34 {strides = array<i32>} : memref<1x8x256xf32, #tpu.memory_space<vmem>>, vector<1x8x256xf32>,
    %35 = arith.cmpi ne, %4, %6 : i32
    %36 = arith.extui %35 : i1 to i32
    %c0_i32_12 = arith.constant 0 : i32
    %37 = arith.cmpi ne, %36, %c0_i32_12 : i32
    scf.if %37 {
      %41 = arith.index_cast %6 : i32 to index
      %c0_15 = arith.constant 0 : index
      %c0_16 = arith.constant 0 : index
      %42 = vector.load %arg10[%41, %c0_15, %c0_16] : memref<1x8x256xf32, #tpu.memory_space<vmem>>, vector<1x8x256xf32>
      %43 = vector.shape_cast %42 : vector<1x8x256xf32> to vector<8x256xf32>
      %cst_17 = arith.constant dense<0.000000e+00> : vector<8x256xf32>
      %44 = vector.multi_reduction <add>, %25, %cst_17 [2] : vector<8x256x256xf32> to vector<8x256xf32>
      %cst_18 = arith.constant 0.000000e+00 : f32
      %45 = vector.broadcast %cst_18 : f32 to vector<8x256xf32>
      %46 = arith.subf %45, %44 : vector<8x256xf32>
      %47 = arith.addf %43, %46 : vector<8x256xf32>
      %48 = arith.index_cast %6 : i32 to index
      %c0_19 = arith.constant 0 : index
      %c0_20 = arith.constant 0 : index
      %49 = vector.load %arg10[%48, %c0_19, %c0_20] : memref<1x8x256xf32, #tpu.memory_space<vmem>>, vector<1x8x256xf32>
      %50 = vector.shape_cast %49 : vector<1x8x256xf32> to vector<8x256xf32>
      %51 = vector.shape_cast %47 : vector<8x256xf32> to vector<1x8x256xf32>
      tpu.vector_store %arg10[%48, %c0_19, %c0_20], %51 {strides = array<i32>} : memref<1x8x256xf32, #tpu.memory_space<vmem>>, vector<1x8x256xf32>,
    } else {
    }
    %c0_i32_13 = arith.constant 0 : i32
    %38 = arith.cmpi eq, %arg1, %c0_i32_13 : i32
    %39 = arith.extui %38 : i1 to i32
    %c0_i32_14 = arith.constant 0 : i32
    %40 = arith.cmpi ne, %39, %c0_i32_14 : i32
    scf.if %40 {
      %c0_15 = arith.constant 0 : index
      %c0_16 = arith.constant 0 : index
      %41 = vector.load %arg7[%c0_15, %c0_16] : memref<1x256xf32, #tpu.memory_space<vmem>>, vector<1x256xf32>
      %c0_17 = arith.constant 0 : index
      %c0_18 = arith.constant 0 : index
      %42 = vector.load %arg8[%c0_17, %c0_18] : memref<1x256xf32, #tpu.memory_space<vmem>>, vector<1x256xf32>
      %c0_19 = arith.constant 0 : index
      %c0_20 = arith.constant 0 : index
      %c0_21 = arith.constant 0 : index
      %43 = vector.load %arg10[%c0_19, %c0_20, %c0_21] : memref<1x8x256xf32, #tpu.memory_space<vmem>>, vector<1x8x256xf32>
      %44 = vector.shape_cast %43 : vector<1x8x256xf32> to vector<8x256xf32>
      %cst_22 = arith.constant 3.906250e-03 : f32
      %45 = vector.broadcast %cst_22 : f32 to vector<8x256xf32>
      %46 = arith.mulf %44, %45 : vector<8x256xf32>
      %cst_23 = arith.constant 1.000000e+00 : f32
      %47 = vector.broadcast %cst_23 : f32 to vector<8x256xf32>
      %48 = arith.subf %47, %46 : vector<8x256xf32>
      %cst_24 = arith.constant 1.000000e+00 : f32
      %49 = vector.broadcast %cst_24 : f32 to vector<8x256xf32>
      %50 = arith.addf %49, %46 : vector<8x256xf32>
      %51 = arith.mulf %48, %50 : vector<8x256xf32>
      %cst_25 = arith.constant 1.000000e-30 : f32
      %52 = vector.broadcast %cst_25 : f32 to vector<8x256xf32>
      %53 = arith.maximumf %51, %52 : vector<8x256xf32>
      %54 = math.log %53 : vector<8x256xf32>
      %cst_26 = arith.constant 0.000000e+00 : f32
      %55 = vector.broadcast %cst_26 : f32 to vector<8x256xf32>
      %56 = arith.subf %55, %54 : vector<8x256xf32>
      %cst_27 = arith.constant 2.500000e+00 : f32
      %57 = vector.broadcast %cst_27 : f32 to vector<8x256xf32>
      %58 = arith.subf %56, %57 : vector<8x256xf32>
      %cst_28 = arith.constant 2.81022636E-8 : f32
      %59 = vector.broadcast %cst_28 : f32 to vector<8x256xf32>
      %60 = arith.mulf %59, %58 : vector<8x256xf32>
      %cst_29 = arith.constant 3.43273939E-7 : f32
      %61 = vector.broadcast %cst_29 : f32 to vector<8x256xf32>
      %62 = arith.addf %60, %61 : vector<8x256xf32>
      %63 = arith.mulf %62, %58 : vector<8x256xf32>
      %cst_30 = arith.constant -3.5233877E-6 : f32
      %64 = vector.broadcast %cst_30 : f32 to vector<8x256xf32>
      %65 = arith.addf %63, %64 : vector<8x256xf32>
      %66 = arith.mulf %65, %58 : vector<8x256xf32>
      %cst_31 = arith.constant -4.39150654E-6 : f32
      %67 = vector.broadcast %cst_31 : f32 to vector<8x256xf32>
      %68 = arith.addf %66, %67 : vector<8x256xf32>
      %69 = arith.mulf %68, %58 : vector<8x256xf32>
      %cst_32 = arith.constant 2.1858087E-4 : f32
      %70 = vector.broadcast %cst_32 : f32 to vector<8x256xf32>
      %71 = arith.addf %69, %70 : vector<8x256xf32>
      %72 = arith.mulf %71, %58 : vector<8x256xf32>
      %cst_33 = arith.constant -0.00125372503 : f32
      %73 = vector.broadcast %cst_33 : f32 to vector<8x256xf32>
      %74 = arith.addf %72, %73 : vector<8x256xf32>
      %75 = arith.mulf %74, %58 : vector<8x256xf32>
      %cst_34 = arith.constant -0.00417768164 : f32
      %76 = vector.broadcast %cst_34 : f32 to vector<8x256xf32>
      %77 = arith.addf %75, %76 : vector<8x256xf32>
      %78 = arith.mulf %77, %58 : vector<8x256xf32>
      %cst_35 = arith.constant 0.246640727 : f32
      %79 = vector.broadcast %cst_35 : f32 to vector<8x256xf32>
      %80 = arith.addf %78, %79 : vector<8x256xf32>
      %81 = arith.mulf %80, %58 : vector<8x256xf32>
      %cst_36 = arith.constant 1.50140941 : f32
      %82 = vector.broadcast %cst_36 : f32 to vector<8x256xf32>
      %83 = arith.addf %81, %82 : vector<8x256xf32>
      %84 = math.sqrt %56 : vector<8x256xf32>
      %cst_37 = arith.constant 3.000000e+00 : f32
      %85 = vector.broadcast %cst_37 : f32 to vector<8x256xf32>
      %86 = arith.subf %84, %85 : vector<8x256xf32>
      %cst_38 = arith.constant -2.00214257E-4 : f32
      %87 = vector.broadcast %cst_38 : f32 to vector<8x256xf32>
      %88 = arith.mulf %87, %86 : vector<8x256xf32>
      %cst_39 = arith.constant 1.00950558E-4 : f32
      %89 = vector.broadcast %cst_39 : f32 to vector<8x256xf32>
      %90 = arith.addf %88, %89 : vector<8x256xf32>
      %91 = arith.mulf %90, %86 : vector<8x256xf32>
      %cst_40 = arith.constant 0.00134934322 : f32
      %92 = vector.broadcast %cst_40 : f32 to vector<8x256xf32>
      %93 = arith.addf %91, %92 : vector<8x256xf32>
      %94 = arith.mulf %93, %86 : vector<8x256xf32>
      %cst_41 = arith.constant -0.00367342844 : f32
      %95 = vector.broadcast %cst_41 : f32 to vector<8x256xf32>
      %96 = arith.addf %94, %95 : vector<8x256xf32>
      %97 = arith.mulf %96, %86 : vector<8x256xf32>
      %cst_42 = arith.constant 0.00573950773 : f32
      %98 = vector.broadcast %cst_42 : f32 to vector<8x256xf32>
      %99 = arith.addf %97, %98 : vector<8x256xf32>
      %100 = arith.mulf %99, %86 : vector<8x256xf32>
      %cst_43 = arith.constant -0.0076224613 : f32
      %101 = vector.broadcast %cst_43 : f32 to vector<8x256xf32>
      %102 = arith.addf %100, %101 : vector<8x256xf32>
      %103 = arith.mulf %102, %86 : vector<8x256xf32>
      %cst_44 = arith.constant 0.00943887047 : f32
      %104 = vector.broadcast %cst_44 : f32 to vector<8x256xf32>
      %105 = arith.addf %103, %104 : vector<8x256xf32>
      %106 = arith.mulf %105, %86 : vector<8x256xf32>
      %cst_45 = arith.constant 1.00167406 : f32
      %107 = vector.broadcast %cst_45 : f32 to vector<8x256xf32>
      %108 = arith.addf %106, %107 : vector<8x256xf32>
      %109 = arith.mulf %108, %86 : vector<8x256xf32>
      %cst_46 = arith.constant 2.83297682 : f32
      %110 = vector.broadcast %cst_46 : f32 to vector<8x256xf32>
      %111 = arith.addf %109, %110 : vector<8x256xf32>
      %cst_47 = arith.constant 5.000000e+00 : f32
      %112 = vector.broadcast %cst_47 : f32 to vector<8x256xf32>
      %113 = arith.cmpf olt, %56, %112 : vector<8x256xf32>
      %114 = arith.select %113, %83, %111 : vector<8x256xi1>, vector<8x256xf32>
      %115 = arith.mulf %114, %46 : vector<8x256xf32>
      %cst_48 = arith.constant 1.41421354 : f32
      %116 = vector.broadcast %cst_48 : f32 to vector<8x256xf32>
      %117 = arith.mulf %115, %116 : vector<8x256xf32>
      %118 = vector.broadcast %41 : vector<1x256xf32> to vector<8x256xf32>
      %119 = arith.mulf %117, %118 : vector<8x256xf32>
      %120 = vector.broadcast %42 : vector<1x256xf32> to vector<8x256xf32>
      %121 = arith.addf %119, %120 : vector<8x256xf32>
      %c0_49 = arith.constant 0 : index
      %c0_50 = arith.constant 0 : index
      %122 = vector.load %arg9[%c0_49, %c0_50] : memref<8x256xf32, #tpu.memory_space<vmem>>, vector<8x256xf32>
      tpu.vector_store %arg9[%c0_49, %c0_50], %121 {strides = array<i32>} : memref<8x256xf32, #tpu.memory_space<vmem>>, vector<8x256xf32>,
    } else {
    }
    return
  }
  func.func @transform_0(%arg0: i32, %arg1: i32, %arg2: memref<1xi32, #tpu.memory_space<smem>>, %arg3: memref<1xi32, #tpu.memory_space<smem>>) -> (i32, i32) {
    %0 = arith.index_cast %arg1 : i32 to index
    %1 = memref.load %arg2[%0] : memref<1xi32, #tpu.memory_space<smem>>
    %c0_i32 = arith.constant 0 : i32
    return %arg0, %1 : i32, i32
  }
  func.func @transform_1(%arg0: i32, %arg1: i32, %arg2: memref<1xi32, #tpu.memory_space<smem>>, %arg3: memref<1xi32, #tpu.memory_space<smem>>) -> (i32, i32) {
    %0 = arith.index_cast %arg1 : i32 to index
    %1 = memref.load %arg3[%0] : memref<1xi32, #tpu.memory_space<smem>>
    %c0_i32 = arith.constant 0 : i32
    return %arg0, %1 : i32, i32
  }
  func.func @transform_2(%arg0: i32, %arg1: i32, %arg2: memref<1xi32, #tpu.memory_space<smem>>, %arg3: memref<1xi32, #tpu.memory_space<smem>>) -> (i32, i32) {
    %c0_i32 = arith.constant 0 : i32
    %c0_i32_0 = arith.constant 0 : i32
    return %arg0, %c0_i32 : i32, i32
  }
  func.func @transform_3(%arg0: i32, %arg1: i32, %arg2: memref<1xi32, #tpu.memory_space<smem>>, %arg3: memref<1xi32, #tpu.memory_space<smem>>) -> (i32, i32) {
    %c0_i32 = arith.constant 0 : i32
    %c0_i32_0 = arith.constant 0 : i32
    %c0_i32_1 = arith.constant 0 : i32
    return %c0_i32, %c0_i32_0 : i32, i32
  }
  func.func @transform_4(%arg0: i32, %arg1: i32, %arg2: memref<1xi32, #tpu.memory_space<smem>>, %arg3: memref<1xi32, #tpu.memory_space<smem>>) -> (i32, i32) {
    %c0_i32 = arith.constant 0 : i32
    %c0_i32_0 = arith.constant 0 : i32
    %c0_i32_1 = arith.constant 0 : i32
    return %c0_i32, %c0_i32_0 : i32, i32
  }
  func.func @transform_5(%arg0: i32, %arg1: i32, %arg2: memref<1xi32, #tpu.memory_space<smem>>, %arg3: memref<1xi32, #tpu.memory_space<smem>>) -> (i32, i32) {
    %c0_i32 = arith.constant 0 : i32
    %c0_i32_0 = arith.constant 0 : i32
    return %arg0, %c0_i32 : i32, i32
  }
}

</mosaic_0001>

<llo_original>
// kernel: tpu_custom_call.1
$region0: #{tpu_custom_call.1}
  #allocation0 [shape = 'u32[]', space=smem, size = 0x4, offset = 0x4, fixed_abs, tag = 'smem constant byte address 0x4 - core index']
  #allocation1 [shape = 'u32[144,128]{1,0:T(1,128)}', space=vmem, size = 0x12000, scoped, tag = 'internal scratch']
  #allocation2 [shape = 'f32[1,8,256]{2,1,0:T(8,128)}', space=vmem, size = 0x2000, scoped, tag = 'scratch operand']
  #allocation3 [shape = 's32[1]{0}', space=sflag, size = 0x4, scoped, tag = 'scoped memory for tpu_custom_call.1']
  #allocation4 [shape = 's32[1]{0:T(128)S(6)}', space=smem, size = 0x200, scoped, tag = 'prefetched SMEM operand 0']
  #allocation5 [shape = 's32[1]{0:T(128)S(6)}', space=smem, size = 0x200, scoped, tag = 'prefetched SMEM operand 1']
  %s0 = inlined_call_operand.<no memory space> [shape: s32[1], index: 0, kind: input, shape index: {}]
  %s1 = inlined_call_operand.<no memory space> [shape: s32[1], index: 1, kind: input, shape index: {}]
  %s2 = inlined_call_operand.vmem [shape: f32[8,256], index: 2, kind: input, shape index: {}]
  %s3 = inlined_call_operand.hbm [shape: f32[8,256], index: 3, kind: input, shape index: {}]
  %s4 = inlined_call_operand.vmem [shape: f32[8,1], index: 4, kind: input, shape index: {}]
  %s5 = inlined_call_operand.vmem [shape: f32[1,256], index: 5, kind: input, shape index: {}]
  %s6 = inlined_call_operand.vmem [shape: f32[1,256], index: 6, kind: input, shape index: {}]
  %s7 = inlined_call_operand.hbm [shape: f32[8,256], index: 7, kind: output, shape index: {}]
  %s8 = sld [smem:[#allocation0]]
  $region46: #{tpu_custom_call.1} parent=0
    _
  %s10 = ssub.s32 1, %s8
  %s11 = scalar_select 0, %s10, %s8
  %12 = sst [smem:[#allocation4]] %s0
  %13 = sst [smem:[#allocation5]] %s1
  $region1: #{tpu_custom_call.1} parent=0
    #allocation6 [shape = 'u8[8192]{0}', space=vmem, size = 0x2000, scoped, tag = 'input window, operand 3, single buffered']
    #allocation7 [shape = 's32[1]{0}', space=sflag, size = 0x4, scoped, tag = 'scoped memory for tpu_custom_call.1']
    #allocation8 [shape = 's32[1]{0}', space=sflag, size = 0x4, scoped, tag = 'scoped memory for tpu_custom_call.1']
    #allocation9 [shape = 'u8[8192]{0}', space=vmem, size = 0x2000, scoped, tag = 'output window, operand 0, single buffered']
    %14 = vsyncpa [#allocation7], 0
    %15 = vsyncpa [#allocation8], 0
    // Predicated region
    $region2: #{tpu_custom_call.1} parent=1 // pred_check
      _
    $region3: #{tpu_custom_call.1} parent=1 // pred_check_branch
      %17 = sbr.rel (0) target = $region5
    $region4: #{tpu_custom_call.1} parent=1 // pred_region
      %s18 = sld [smem:[#allocation4]]
      %s19 = smul.u32 2, %s18
      %p20 = scmp.lt.s32.totalorder %s19, 1
      %s21 = scalar_select %p20, %s19, 1
      %s22 = smul.addr %s21, 8
      %s23 = scalar_lea.vmem %s2, %s22
      %s24 = sld [smem:[#allocation4]]
      %s25 = smul.u32 2, %s24
    $region5: #{tpu_custom_call.1} parent=1 // pred_fallthru
      _
    // Predicated region
    $region6: #{tpu_custom_call.1} parent=1 // pred_check
      _
    $region7: #{tpu_custom_call.1} parent=1 // pred_check_branch
      %27 = sbr.rel (0) target = $region9
    $region8: #{tpu_custom_call.1} parent=1 // pred_region
      %s28 = sld [smem:[#allocation5]]
      %s29 = smul.u32 2, %s28
      %s31 = ssub.s32 256, 256
      %32 = vsyncadd [#allocation7], %s31
      %s33 = smul.addr %s29, 128
      %s34 = scalar_lea.hbm %s3, %s33
      %s36 = sshll.u32 [#allocation6], 4
      %s37 = int_to_ptr.vmem [resolvable:$true] %s36
      %39 = dma.hbm_to_vmem [thread:$0]  %s34, 256, %s37, [#allocation7]
    $region9: #{tpu_custom_call.1} parent=1 // pred_fallthru
      _
    // Predicated region
    $region10: #{tpu_custom_call.1} parent=1 // pred_check
      _
    $region11: #{tpu_custom_call.1} parent=1 // pred_check_branch
      %41 = sbr.rel (0) target = $region13
    $region12: #{tpu_custom_call.1} parent=1 // pred_region
      _
    $region13: #{tpu_custom_call.1} parent=1 // pred_fallthru
      _
    // Predicated region
    $region14: #{tpu_custom_call.1} parent=1 // pred_check
      _
    $region15: #{tpu_custom_call.1} parent=1 // pred_check_branch
      %43 = sbr.rel (0) target = $region17
    $region16: #{tpu_custom_call.1} parent=1 // pred_region
      _
    $region17: #{tpu_custom_call.1} parent=1 // pred_fallthru
      _
    // Predicated region
    $region18: #{tpu_custom_call.1} parent=1 // pred_check
      _
    $region19: #{tpu_custom_call.1} parent=1 // pred_check_branch
      %45 = sbr.rel (0) target = $region21
    $region20: #{tpu_custom_call.1} parent=1 // pred_region
      _
    $region21: #{tpu_custom_call.1} parent=1 // pred_fallthru
      _
    // Predicated region
    $region22: #{tpu_custom_call.1} parent=1 // pred_check
      _
    $region23: #{tpu_custom_call.1} parent=1 // pred_check_branch
      %47 = sbr.rel (0) target = $region25
    $region24: #{tpu_custom_call.1} parent=1 // pred_region
      %48 = dma.done [#allocation7], 256
    $region25: #{tpu_custom_call.1} parent=1 // pred_fallthru
      _
    %s49 = sld [smem:[#allocation4]]
    %s50 = smul.u32 2, %s49
    %p51 = scmp.lt.s32.totalorder %s50, 1
    %s52 = scalar_select %p51, %s50, 1
    %s53 = smul.addr %s52, 8
    %s54 = scalar_lea.vmem %s2, %s53
    %s55 = sld [smem:[#allocation4]]
    %s56 = smul.u32 2, %s55
    %p57 = scmp.lt.s32.totalorder %s56, 1
    %s58 = scalar_select %p57, %s56, 1
    %s59 = smul.addr %s58, 8
    %s60 = scalar_lea.vmem %s2, %s59
    %s61 = sld [smem:[#allocation4]]
    %s62 = smul.u32 2, %s61
    %s63 = sld [smem:[#allocation5]]
    %s64 = smul.u32 2, %s63
    %p65 = scmp.eq.s32.totalorder 0, 0
    // Predicated region
    $region26: #{tpu_custom_call.1} parent=1 // pred_check
      %p66 = pneg %p65
    $region27: #{tpu_custom_call.1} parent=1 // pred_check_branch
      %68 = sbr.rel (%p66) target = $region29
    $region28: #{tpu_custom_call.1} parent=1 // pred_region
      %69 = vst [vmem:[#allocation2] sm:$0xff] 0.0
      %70 = vst [vmem:[#allocation2 + $0x8] sm:$0xff] 0.0
    $region29: #{tpu_custom_call.1} parent=1 // pred_fallthru
      _
    %s71 = sld [smem:[#allocation4]]
    %s72 = sld [smem:[#allocation5]]
    %v73 = vld [vmem:[%s4] sm:$0xff]
    %v74 = vld [vmem:[%s60] sm:$0xff]
    %v75 = vld [vmem:[%s60 + $0x8] sm:$0xff]
    %77 = vset.pattern.permute.xlu0 0
    %78 = vperm.xlu0 %77, %v73
    %v79 = vpop.permute.xlu0 %78
    %v81 = vmul.f32 %v74, %v79
    %v82 = vmul.f32 %v75, %v79
    %v83 = vld [vmem:[#allocation6] sm:$0xff]
    %v84 = vld [vmem:[#allocation6 + $0x8] sm:$0xff]
    %v85 = vmul.f32 %v83, %v79
    %v86 = vmul.f32 %v84, %v79
    %v89 = vcombine.low %v81, %v82
    %v90 = vcombine.high %v81, %v82
    %v92 = vunpack.c.l.s4 1966171168
    %v93 = vunpack.c.0.s8 %v92
    %v94 = vlaneseq
    %v95 = vshrl.u32 %v94, 7
    %v96 = vsub.s32 %v93, %v95
    %v97 = vrot.slane %v89, %v96
    %v99 = vunpack.c.l.s4 1966171168
    %v100 = vunpack.c.0.s8 %v99
    %v101 = vlaneseq
    %v102 = vshrl.u32 %v101, 7
    %v103 = vsub.s32 %v100, %v102
    %v104 = vrot.slane %v90, %v103
    %v105 = vcombine.high %v97, %v97
    %v106 = vcombine.high %v104, %v104
    %v108 = vunpack.c.l.s4 1966171168
    %v109 = vunpack.c.0.s8 %v108
    %v110 = vlaneseq
    %v111 = vshrl.u32 %v110, 7
    %v112 = vsub.s32 %v109, %v111
    %v113 = vrot.slane %v97, %v112
    %v115 = vunpack.c.l.s4 1966171168
    %v116 = vunpack.c.0.s8 %v115
    %v117 = vlaneseq
    %v118 = vshrl.u32 %v117, 7
    %v119 = vsub.s32 %v116, %v118
    %v120 = vrot.slane %v104, %v119
    %v122 = vunpack.c.l.s4 1966171168
    %v123 = vunpack.c.0.s8 %v122
    %v124 = vlaneseq
    %v125 = vshrl.u32 %v124, 7
    %v126 = vsub.s32 %v123, %v125
    %v127 = vrot.slane %v105, %v126
    %v129 = vunpack.c.l.s4 1966171168
    %v130 = vunpack.c.0.s8 %v129
    %v131 = vlaneseq
    %v132 = vshrl.u32 %v131, 7
    %v133 = vsub.s32 %v130, %v132
    %v134 = vrot.slane %v106, %v133
    %v135 = vcombine.high %v113, %v113
    %v136 = vcombine.high %v120, %v120
    %v137 = vcombine.high %v127, %v127
    %v138 = vcombine.high %v134, %v134
    %v139 = vlaneseq
    %v140 = vshrl.u32 %v139, 7
    %v141 = vsub.s32 0, %v140
    %v142 = vrot.slane %v85, %v141
    %144 = vbcast.lane.b32.xlu0 %v142, 256
    %v145 = vpop.permute.xlu0 %144
    %s147 = sor.u32 256, 8
    %148 = vbcast.lane.b32.xlu0 %v142, %s147
    %v149 = vpop.permute.xlu0 %148
    %s151 = sor.u32 256, 16
    %152 = vbcast.lane.b32.xlu0 %v142, %s151
    %v153 = vpop.permute.xlu0 %152
    %s155 = sor.u32 256, 24
    %156 = vbcast.lane.b32.xlu0 %v142, %s155
    %v157 = vpop.permute.xlu0 %156
    %s159 = sor.u32 256, 32
    %160 = vbcast.lane.b32.xlu0 %v142, %s159
    %v161 = vpop.permute.xlu0 %160
    %s163 = sor.u32 256, 40
    %164 = vbcast.lane.b32.xlu0 %v142, %s163
    %v165 = vpop.permute.xlu0 %164
    %s167 = sor.u32 256, 48
    %168 = vbcast.lane.b32.xlu0 %v142, %s167
    %v169 = vpop.permute.xlu0 %168
    %s171 = sor.u32 256, 56
    %172 = vbcast.lane.b32.xlu0 %v142, %s171
    %v173 = vpop.permute.xlu0 %172
    %s175 = sor.u32 256, 64
    %176 = vbcast.lane.b32.xlu0 %v142, %s175
    %v177 = vpop.permute.xlu0 %176
    %s179 = sor.u32 256, 72
    %180 = vbcast.lane.b32.xlu0 %v142, %s179
    %v181 = vpop.permute.xlu0 %180
    %s183 = sor.u32 256, 80
    %184 = vbcast.lane.b32.xlu0 %v142, %s183
    %v185 = vpop.permute.xlu0 %184
    %s187 = sor.u32 256, 88
    %188 = vbcast.lane.b32.xlu0 %v142, %s187
    %v189 = vpop.permute.xlu0 %188
    %s191 = sor.u32 256, 96
    %192 = vbcast.lane.b32.xlu0 %v142, %s191
    %v193 = vpop.permute.xlu0 %192
    %s195 = sor.u32 256, 104
    %196 = vbcast.lane.b32.xlu0 %v142, %s195
    %v197 = vpop.permute.xlu0 %196
    %s199 = sor.u32 256, 112
    %200 = vbcast.lane.b32.xlu0 %v142, %s199
    %v201 = vpop.permute.xlu0 %200
    %s203 = sor.u32 256, 120
    %204 = vbcast.lane.b32.xlu0 %v142, %s203
    %v205 = vpop.permute.xlu0 %204
    %v206 = vlaneseq
    %v207 = vshrl.u32 %v206, 7
    %v208 = vsub.s32 0, %v207
    %v209 = vrot.slane %v86, %v208
    %211 = vbcast.lane.b32.xlu0 %v209, 256
    %v212 = vpop.permute.xlu0 %211
    %s214 = sor.u32 256, 8
    %215 = vbcast.lane.b32.xlu0 %v209, %s214
    %v216 = vpop.permute.xlu0 %215
    %s218 = sor.u32 256, 16
    %219 = vbcast.lane.b32.xlu0 %v209, %s218
    %v220 = vpop.permute.xlu0 %219
    %s222 = sor.u32 256, 24
    %223 = vbcast.lane.b32.xlu0 %v209, %s222
    %v224 = vpop.permute.xlu0 %223
    %s226 = sor.u32 256, 32
    %227 = vbcast.lane.b32.xlu0 %v209, %s226
    %v228 = vpop.permute.xlu0 %227
    %s230 = sor.u32 256, 40
    %231 = vbcast.lane.b32.xlu0 %v209, %s230
    %v232 = vpop.permute.xlu0 %231
    %s234 = sor.u32 256, 48
    %235 = vbcast.lane.b32.xlu0 %v209, %s234
    %v236 = vpop.permute.xlu0 %235
    %s238 = sor.u32 256, 56
    %239 = vbcast.lane.b32.xlu0 %v209, %s238
    %v240 = vpop.permute.xlu0 %239
    %s242 = sor.u32 256, 64
    %243 = vbcast.lane.b32.xlu0 %v209, %s242
    %v244 = vpop.permute.xlu0 %243
    %s246 = sor.u32 256, 72
    %247 = vbcast.lane.b32.xlu0 %v209, %s246
    %v248 = vpop.permute.xlu0 %247
    %s250 = sor.u32 256, 80
    %251 = vbcast.lane.b32.xlu0 %v209, %s250
    %v252 = vpop.permute.xlu0 %251
    %s254 = sor.u32 256, 88
    %255 = vbcast.lane.b32.xlu0 %v209, %s254
    %v256 = vpop.permute.xlu0 %255
    %s258 = sor.u32 256, 96
    %259 = vbcast.lane.b32.xlu0 %v209, %s258
    %v260 = vpop.permute.xlu0 %259
    %s262 = sor.u32 256, 104
    %263 = vbcast.lane.b32.xlu0 %v209, %s262
    %v264 = vpop.permute.xlu0 %263
    %s266 = sor.u32 256, 112
    %267 = vbcast.lane.b32.xlu0 %v209, %s266
    %v268 = vpop.permute.xlu0 %267
    %s270 = sor.u32 256, 120
    %271 = vbcast.lane.b32.xlu0 %v209, %s270
    %v272 = vpop.permute.xlu0 %271
    %v273 = vlaneseq
    %v274 = vshrl.u32 %v273, 7
    %v275 = vsub.s32 1, %v274
    %v276 = vrot.slane %v85, %v275
    %278 = vbcast.lane.b32.xlu0 %v276, 256
    %v279 = vpop.permute.xlu0 %278
    %s281 = sor.u32 256, 8
    %282 = vbcast.lane.b32.xlu0 %v276, %s281
    %v283 = vpop.permute.xlu0 %282
    %s285 = sor.u32 256, 16
    %286 = vbcast.lane.b32.xlu0 %v276, %s285
    %v287 = vpop.permute.xlu0 %286
    %s289 = sor.u32 256, 24
    %290 = vbcast.lane.b32.xlu0 %v276, %s289
    %v291 = vpop.permute.xlu0 %290
    %s293 = sor.u32 256, 32
    %294 = vbcast.lane.b32.xlu0 %v276, %s293
    %v295 = vpop.permute.xlu0 %294
    %s297 = sor.u32 256, 40
    %298 = vbcast.lane.b32.xlu0 %v276, %s297
    %v299 = vpop.permute.xlu0 %298
    %s301 = sor.u32 256, 48
    %302 = vbcast.lane.b32.xlu0 %v276, %s301
    %v303 = vpop.permute.xlu0 %302
    %s305 = sor.u32 256, 56
    %306 = vbcast.lane.b32.xlu0 %v276, %s305
    %v307 = vpop.permute.xlu0 %306
    %s309 = sor.u32 256, 64
    %310 = vbcast.lane.b32.xlu0 %v276, %s309
    %v311 = vpop.permute.xlu0 %310
    %s313 = sor.u32 256, 72
    %314 = vbcast.lane.b32.xlu0 %v276, %s313
    %v315 = vpop.permute.xlu0 %314
    %s317 = sor.u32 256, 80
    %318 = vbcast.lane.b32.xlu0 %v276, %s317
    %v319 = vpop.permute.xlu0 %318
    %s321 = sor.u32 256, 88
    %322 = vbcast.lane.b32.xlu0 %v276, %s321
    %v323 = vpop.permute.xlu0 %322
    %s325 = sor.u32 256, 96
    %326 = vbcast.lane.b32.xlu0 %v276, %s325
    %v327 = vpop.permute.xlu0 %326
    %s329 = sor.u32 256, 104
    %330 = vbcast.lane.b32.xlu0 %v276, %s329
    %v331 = vpop.permute.xlu0 %330
    %s333 = sor.u32 256, 112
    %334 = vbcast.lane.b32.xlu0 %v276, %s333
    %v335 = vpop.permute.xlu0 %334
    %s337 = sor.u32 256, 120
    %338 = vbcast.lane.b32.xlu0 %v276, %s337
    %v339 = vpop.permute.xlu0 %338
    %v340 = vlaneseq
    %v341 = vshrl.u32 %v340, 7
    %v342 = vsub.s32 1, %v341
    %v343 = vrot.slane %v86, %v342
    %345 = vbcast.lane.b32.xlu0 %v343, 256
    %v346 = vpop.permute.xlu0 %345
    %s348 = sor.u32 256, 8
    %349 = vbcast.lane.b32.xlu0 %v343, %s348
    %v350 = vpop.permute.xlu0 %349
    %s352 = sor.u32 256, 16
    %353 = vbcast.lane.b32.xlu0 %v343, %s352
    %v354 = vpop.permute.xlu0 %353
    %s356 = sor.u32 256, 24
    %357 = vbcast.lane.b32.xlu0 %v343, %s356
    %v358 = vpop.permute.xlu0 %357
    %s360 = sor.u32 256, 32
    %361 = vbcast.lane.b32.xlu0 %v343, %s360
    %v362 = vpop.permute.xlu0 %361
    %s364 = sor.u32 256, 40
    %365 = vbcast.lane.b32.xlu0 %v343, %s364
    %v366 = vpop.permute.xlu0 %365
    %s368 = sor.u32 256, 48
    %369 = vbcast.lane.b32.xlu0 %v343, %s368
    %v370 = vpop.permute.xlu0 %369
    %s372 = sor.u32 256, 56
    %373 = vbcast.lane.b32.xlu0 %v343, %s372
    %v374 = vpop.permute.xlu0 %373
    %s376 = sor.u32 256, 64
    %377 = vbcast.lane.b32.xlu0 %v343, %s376
    %v378 = vpop.permute.xlu0 %377
    %s380 = sor.u32 256, 72
    %381 = vbcast.lane.b32.xlu0 %v343, %s380
    %v382 = vpop.permute.xlu0 %381
    %s384 = sor.u32 256, 80
    %385 = vbcast.lane.b32.xlu0 %v343, %s384
    %v386 = vpop.permute.xlu0 %385
    %s388 = sor.u32 256, 88
    %389 = vbcast.lane.b32.xlu0 %v343, %s388
    %v390 = vpop.permute.xlu0 %389
    %s392 = sor.u32 256, 96
    %393 = vbcast.lane.b32.xlu0 %v343, %s392
    %v394 = vpop.permute.xlu0 %393
    %s396 = sor.u32 256, 104
    %397 = vbcast.lane.b32.xlu0 %v343, %s396
    %v398 = vpop.permute.xlu0 %397
    %s400 = sor.u32 256, 112
    %401 = vbcast.lane.b32.xlu0 %v343, %s400
    %v402 = vpop.permute.xlu0 %401
    %s404 = sor.u32 256, 120
    %405 = vbcast.lane.b32.xlu0 %v343, %s404
    %v406 = vpop.permute.xlu0 %405
    %v407 = vlaneseq
    %v408 = vshrl.u32 %v407, 7
    %v409 = vsub.s32 2, %v408
    %v410 = vrot.slane %v85, %v409
    %412 = vbcast.lane.b32.xlu0 %v410, 256
    %v413 = vpop.permute.xlu0 %412
    %s415 = sor.u32 256, 8
    %416 = vbcast.lane.b32.xlu0 %v410, %s415
    %v417 = vpop.permute.xlu0 %416
    %s419 = sor.u32 256, 16
    %420 = vbcast.lane.b32.xlu0 %v410, %s419
    %v421 = vpop.permute.xlu0 %420
    %s423 = sor.u32 256, 24
    %424 = vbcast.lane.b32.xlu0 %v410, %s423
    %v425 = vpop.permute.xlu0 %424
    %s427 = sor.u32 256, 32
    %428 = vbcast.lane.b32.xlu0 %v410, %s427
    %v429 = vpop.permute.xlu0 %428
    %s431 = sor.u32 256, 40
    %432 = vbcast.lane.b32.xlu0 %v410, %s431
    %v433 = vpop.permute.xlu0 %432
    %s435 = sor.u32 256, 48
    %436 = vbcast.lane.b32.xlu0 %v410, %s435
    %v437 = vpop.permute.xlu0 %436
    %s439 = sor.u32 256, 56
    %440 = vbcast.lane.b32.xlu0 %v410, %s439
    %v441 = vpop.permute.xlu0 %440
    %s443 = sor.u32 256, 64
    %444 = vbcast.lane.b32.xlu0 %v410, %s443
    %v445 = vpop.permute.xlu0 %444
    %s447 = sor.u32 256, 72
    %448 = vbcast.lane.b32.xlu0 %v410, %s447
    %v449 = vpop.permute.xlu0 %448
    %s451 = sor.u32 256, 80
    %452 = vbcast.lane.b32.xlu0 %v410, %s451
    %v453 = vpop.permute.xlu0 %452
    %s455 = sor.u32 256, 88
    %456 = vbcast.lane.b32.xlu0 %v410, %s455
    %v457 = vpop.permute.xlu0 %456
    %s459 = sor.u32 256, 96
    %460 = vbcast.lane.b32.xlu0 %v410, %s459
    %v461 = vpop.permute.xlu0 %460
    %s463 = sor.u32 256, 104
    %464 = vbcast.lane.b32.xlu0 %v410, %s463
    %v465 = vpop.permute.xlu0 %464
    %s467 = sor.u32 256, 112
    %468 = vbcast.lane.b32.xlu0 %v410, %s467
    %v469 = vpop.permute.xlu0 %468
    %s471 = sor.u32 256, 120
    %472 = vbcast.lane.b32.xlu0 %v410, %s471
    %v473 = vpop.permute.xlu0 %472
    %v474 = vlaneseq
    %v475 = vshrl.u32 %v474, 7
    %v476 = vsub.s32 2, %v475
    %v477 = vrot.slane %v86, %v476
    %479 = vbcast.lane.b32.xlu0 %v477, 256
    %v480 = vpop.permute.xlu0 %479
    %s482 = sor.u32 256, 8
    %483 = vbcast.lane.b32.xlu0 %v477, %s482
    %v484 = vpop.permute.xlu0 %483
    %s486 = sor.u32 256, 16
    %487 = vbcast.lane.b32.xlu0 %v477, %s486
    %v488 = vpop.permute.xlu0 %487
    %s490 = sor.u32 256, 24
    %491 = vbcast.lane.b32.xlu0 %v477, %s490
    %v492 = vpop.permute.xlu0 %491
    %s494 = sor.u32 256, 32
    %495 = vbcast.lane.b32.xlu0 %v477, %s494
    %v496 = vpop.permute.xlu0 %495
    %s498 = sor.u32 256, 40
    %499 = vbcast.lane.b32.xlu0 %v477, %s498
    %v500 = vpop.permute.xlu0 %499
    %s502 = sor.u32 256, 48
    %503 = vbcast.lane.b32.xlu0 %v477, %s502
    %v504 = vpop.permute.xlu0 %503
    %s506 = sor.u32 256, 56
    %507 = vbcast.lane.b32.xlu0 %v477, %s506
    %v508 = vpop.permute.xlu0 %507
    %s510 = sor.u32 256, 64
    %511 = vbcast.lane.b32.xlu0 %v477, %s510
    %v512 = vpop.permute.xlu0 %511
    %s514 = sor.u32 256, 72
    %515 = vbcast.lane.b32.xlu0 %v477, %s514
    %v516 = vpop.permute.xlu0 %515
    %s518 = sor.u32 256, 80
    %519 = vbcast.lane.b32.xlu0 %v477, %s518
    %v520 = vpop.permute.xlu0 %519
    %s522 = sor.u32 256, 88
    %523 = vbcast.lane.b32.xlu0 %v477, %s522
    %v524 = vpop.permute.xlu0 %523
    %s526 = sor.u32 256, 96
    %527 = vbcast.lane.b32.xlu0 %v477, %s526
    %v528 = vpop.permute.xlu0 %527
    %s530 = sor.u32 256, 104
    %531 = vbcast.lane.b32.xlu0 %v477, %s530
    %v532 = vpop.permute.xlu0 %531
    %s534 = sor.u32 256, 112
    %535 = vbcast.lane.b32.xlu0 %v477, %s534
    %v536 = vpop.permute.xlu0 %535
    %s538 = sor.u32 256, 120
    %539 = vbcast.lane.b32.xlu0 %v477, %s538
    %v540 = vpop.permute.xlu0 %539
    %v541 = vlaneseq
    %v542 = vshrl.u32 %v541, 7
    %v543 = vsub.s32 3, %v542
    %v544 = vrot.slane %v85, %v543
    %546 = vbcast.lane.b32.xlu0 %v544, 256
    %v547 = vpop.permute.xlu0 %546
    %s549 = sor.u32 256, 8
    %550 = vbcast.lane.b32.xlu0 %v544, %s549
    %v551 = vpop.permute.xlu0 %550
    %s553 = sor.u32 256, 16
    %554 = vbcast.lane.b32.xlu0 %v544, %s553
    %v555 = vpop.permute.xlu0 %554
    %s557 = sor.u32 256, 24
    %558 = vbcast.lane.b32.xlu0 %v544, %s557
    %v559 = vpop.permute.xlu0 %558
    %s561 = sor.u32 256, 32
    %562 = vbcast.lane.b32.xlu0 %v544, %s561
    %v563 = vpop.permute.xlu0 %562
    %s565 = sor.u32 256, 40
    %566 = vbcast.lane.b32.xlu0 %v544, %s565
    %v567 = vpop.permute.xlu0 %566
    %s569 = sor.u32 256, 48
    %570 = vbcast.lane.b32.xlu0 %v544, %s569
    %v571 = vpop.permute.xlu0 %570
    %s573 = sor.u32 256, 56
    %574 = vbcast.lane.b32.xlu0 %v544, %s573
    %v575 = vpop.permute.xlu0 %574
    %s577 = sor.u32 256, 64
    %578 = vbcast.lane.b32.xlu0 %v544, %s577
    %v579 = vpop.permute.xlu0 %578
    %s581 = sor.u32 256, 72
    %582 = vbcast.lane.b32.xlu0 %v544, %s581
    %v583 = vpop.permute.xlu0 %582
    %s585 = sor.u32 256, 80
    %586 = vbcast.lane.b32.xlu0 %v544, %s585
    %v587 = vpop.permute.xlu0 %586
    %s589 = sor.u32 256, 88
    %590 = vbcast.lane.b32.xlu0 %v544, %s589
    %v591 = vpop.permute.xlu0 %590
    %s593 = sor.u32 256, 96
    %594 = vbcast.lane.b32.xlu0 %v544, %s593
    %v595 = vpop.permute.xlu0 %594
    %s597 = sor.u32 256, 104
    %598 = vbcast.lane.b32.xlu0 %v544, %s597
    %v599 = vpop.permute.xlu0 %598
    %s601 = sor.u32 256, 112
    %602 = vbcast.lane.b32.xlu0 %v544, %s601
    %v603 = vpop.permute.xlu0 %602
    %s605 = sor.u32 256, 120
    %606 = vbcast.lane.b32.xlu0 %v544, %s605
    %v607 = vpop.permute.xlu0 %606
    %v608 = vlaneseq
    %v609 = vshrl.u32 %v608, 7
    %v610 = vsub.s32 3, %v609
    %v611 = vrot.slane %v86, %v610
    %613 = vbcast.lane.b32.xlu0 %v611, 256
    %v614 = vpop.permute.xlu0 %613
    %s616 = sor.u32 256, 8
    %617 = vbcast.lane.b32.xlu0 %v611, %s616
    %v618 = vpop.permute.xlu0 %617
    %s620 = sor.u32 256, 16
    %621 = vbcast.lane.b32.xlu0 %v611, %s620
    %v622 = vpop.permute.xlu0 %621
    %s624 = sor.u32 256, 24
    %625 = vbcast.lane.b32.xlu0 %v611, %s624
    %v626 = vpop.permute.xlu0 %625
    %s628 = sor.u32 256, 32
    %629 = vbcast.lane.b32.xlu0 %v611, %s628
    %v630 = vpop.permute.xlu0 %629
    %s632 = sor.u32 256, 40
    %633 = vbcast.lane.b32.xlu0 %v611, %s632
    %v634 = vpop.permute.xlu0 %633
    %s636 = sor.u32 256, 48
    %637 = vbcast.lane.b32.xlu0 %v611, %s636
    %v638 = vpop.permute.xlu0 %637
    %s640 = sor.u32 256, 56
    %641 = vbcast.lane.b32.xlu0 %v611, %s640
    %v642 = vpop.permute.xlu0 %641
    %s644 = sor.u32 256, 64
    %645 = vbcast.lane.b32.xlu0 %v611, %s644
    %v646 = vpop.permute.xlu0 %645
    %s648 = sor.u32 256, 72
    %649 = vbcast.lane.b32.xlu0 %v611, %s648
    %v650 = vpop.permute.xlu0 %649
    %s652 = sor.u32 256, 80
    %653 = vbcast.lane.b32.xlu0 %v611, %s652
    %v654 = vpop.permute.xlu0 %653
    %s656 = sor.u32 256, 88
    %657 = vbcast.lane.b32.xlu0 %v611, %s656
    %v658 = vpop.permute.xlu0 %657
    %s660 = sor.u32 256, 96
    %661 = vbcast.lane.b32.xlu0 %v611, %s660
    %v662 = vpop.permute.xlu0 %661
    %s664 = sor.u32 256, 104
    %665 = vbcast.lane.b32.xlu0 %v611, %s664
    %v666 = vpop.permute.xlu0 %665
    %s668 = sor.u32 256, 112
    %669 = vbcast.lane.b32.xlu0 %v611, %s668
    %v670 = vpop.permute.xlu0 %669
    %s672 = sor.u32 256, 120
    %673 = vbcast.lane.b32.xlu0 %v611, %s672
    %v674 = vpop.permute.xlu0 %673
    %v675 = vlaneseq
    %v676 = vshrl.u32 %v675, 7
    %v677 = vsub.s32 4, %v676
    %v678 = vrot.slane %v85, %v677
    %680 = vbcast.lane.b32.xlu0 %v678, 256
    %v681 = vpop.permute.xlu0 %680
    %s683 = sor.u32 256, 8
    %684 = vbcast.lane.b32.xlu0 %v678, %s683
    %v685 = vpop.permute.xlu0 %684
    %s687 = sor.u32 256, 16
    %688 = vbcast.lane.b32.xlu0 %v678, %s687
    %v689 = vpop.permute.xlu0 %688
    %s691 = sor.u32 256, 24
    %692 = vbcast.lane.b32.xlu0 %v678, %s691
    %v693 = vpop.permute.xlu0 %692
    %s695 = sor.u32 256, 32
    %696 = vbcast.lane.b32.xlu0 %v678, %s695
    %v697 = vpop.permute.xlu0 %696
    %s699 = sor.u32 256, 40
    %700 = vbcast.lane.b32.xlu0 %v678, %s699
    %v701 = vpop.permute.xlu0 %700
    %s703 = sor.u32 256, 48
    %704 = vbcast.lane.b32.xlu0 %v678, %s703
    %v705 = vpop.permute.xlu0 %704
    %s707 = sor.u32 256, 56
    %708 = vbcast.lane.b32.xlu0 %v678, %s707
    %v709 = vpop.permute.xlu0 %708
    %s711 = sor.u32 256, 64
    %712 = vbcast.lane.b32.xlu0 %v678, %s711
    %v713 = vpop.permute.xlu0 %712
    %s715 = sor.u32 256, 72
    %716 = vbcast.lane.b32.xlu0 %v678, %s715
    %v717 = vpop.permute.xlu0 %716
    %s719 = sor.u32 256, 80
    %720 = vbcast.lane.b32.xlu0 %v678, %s719
    %v721 = vpop.permute.xlu0 %720
    %s723 = sor.u32 256, 88
    %724 = vbcast.lane.b32.xlu0 %v678, %s723
    %v725 = vpop.permute.xlu0 %724
    %s727 = sor.u32 256, 96
    %728 = vbcast.lane.b32.xlu0 %v678, %s727
    %v729 = vpop.permute.xlu0 %728
    %s731 = sor.u32 256, 104
    %732 = vbcast.lane.b32.xlu0 %v678, %s731
    %v733 = vpop.permute.xlu0 %732
    %s735 = sor.u32 256, 112
    %736 = vbcast.lane.b32.xlu0 %v678, %s735
    %v737 = vpop.permute.xlu0 %736
    %s739 = sor.u32 256, 120
    %740 = vbcast.lane.b32.xlu0 %v678, %s739
    %v741 = vpop.permute.xlu0 %740
    %v742 = vlaneseq
    %v743 = vshrl.u32 %v742, 7
    %v744 = vsub.s32 4, %v743
    %v745 = vrot.slane %v86, %v744
    %747 = vbcast.lane.b32.xlu0 %v745, 256
    %v748 = vpop.permute.xlu0 %747
    %s750 = sor.u32 256, 8
    %751 = vbcast.lane.b32.xlu0 %v745, %s750
    %v752 = vpop.permute.xlu0 %751
    %s754 = sor.u32 256, 16
    %755 = vbcast.lane.b32.xlu0 %v745, %s754
    %v756 = vpop.permute.xlu0 %755
    %s758 = sor.u32 256, 24
    %759 = vbcast.lane.b32.xlu0 %v745, %s758
    %v760 = vpop.permute.xlu0 %759
    %s762 = sor.u32 256, 32
    %763 = vbcast.lane.b32.xlu0 %v745, %s762
    %v764 = vpop.permute.xlu0 %763
    %s766 = sor.u32 256, 40
    %767 = vbcast.lane.b32.xlu0 %v745, %s766
    %v768 = vpop.permute.xlu0 %767
    %s770 = sor.u32 256, 48
    %771 = vbcast.lane.b32.xlu0 %v745, %s770
    %v772 = vpop.permute.xlu0 %771
    %s774 = sor.u32 256, 56
    %775 = vbcast.lane.b32.xlu0 %v745, %s774
    %v776 = vpop.permute.xlu0 %775
    %s778 = sor.u32 256, 64
    %779 = vbcast.lane.b32.xlu0 %v745, %s778
    %v780 = vpop.permute.xlu0 %779
    %s782 = sor.u32 256, 72
    %783 = vbcast.lane.b32.xlu0 %v745, %s782
    %v784 = vpop.permute.xlu0 %783
    %s786 = sor.u32 256, 80
    %787 = vbcast.lane.b32.xlu0 %v745, %s786
    %v788 = vpop.permute.xlu0 %787
    %s790 = sor.u32 256, 88
    %791 = vbcast.lane.b32.xlu0 %v745, %s790
    %v792 = vpop.permute.xlu0 %791
    %s794 = sor.u32 256, 96
    %795 = vbcast.lane.b32.xlu0 %v745, %s794
    %v796 = vpop.permute.xlu0 %795
    %s798 = sor.u32 256, 104
    %799 = vbcast.lane.b32.xlu0 %v745, %s798
    %v800 = vpop.permute.xlu0 %799
    %s802 = sor.u32 256, 112
    %803 = vbcast.lane.b32.xlu0 %v745, %s802
    %v804 = vpop.permute.xlu0 %803
    %s806 = sor.u32 256, 120
    %807 = vbcast.lane.b32.xlu0 %v745, %s806
    %v808 = vpop.permute.xlu0 %807
    %v809 = vlaneseq
    %v810 = vshrl.u32 %v809, 7
    %v811 = vsub.s32 5, %v810
    %v812 = vrot.slane %v85, %v811
    %814 = vbcast.lane.b32.xlu0 %v812, 256
    %v815 = vpop.permute.xlu0 %814
    %s817 = sor.u32 256, 8
    %818 = vbcast.lane.b32.xlu0 %v812, %s817
    %v819 = vpop.permute.xlu0 %818
    %s821 = sor.u32 256, 16
    %822 = vbcast.lane.b32.xlu0 %v812, %s821
    %v823 = vpop.permute.xlu0 %822
    %s825 = sor.u32 256, 24
    %826 = vbcast.lane.b32.xlu0 %v812, %s825
    %v827 = vpop.permute.xlu0 %826
    %s829 = sor.u32 256, 32
    %830 = vbcast.lane.b32.xlu0 %v812, %s829
    %v831 = vpop.permute.xlu0 %830
    %s833 = sor.u32 256, 40
    %834 = vbcast.lane.b32.xlu0 %v812, %s833
    %v835 = vpop.permute.xlu0 %834
    %s837 = sor.u32 256, 48
    %838 = vbcast.lane.b32.xlu0 %v812, %s837
    %v839 = vpop.permute.xlu0 %838
    %s841 = sor.u32 256, 56
    %842 = vbcast.lane.b32.xlu0 %v812, %s841
    %v843 = vpop.permute.xlu0 %842
    %s845 = sor.u32 256, 64
    %846 = vbcast.lane.b32.xlu0 %v812, %s845
    %v847 = vpop.permute.xlu0 %846
    %s849 = sor.u32 256, 72
    %850 = vbcast.lane.b32.xlu0 %v812, %s849
    %v851 = vpop.permute.xlu0 %850
    %s853 = sor.u32 256, 80
    %854 = vbcast.lane.b32.xlu0 %v812, %s853
    %v855 = vpop.permute.xlu0 %854
    %s857 = sor.u32 256, 88
    %858 = vbcast.lane.b32.xlu0 %v812, %s857
    %v859 = vpop.permute.xlu0 %858
    %s861 = sor.u32 256, 96
    %862 = vbcast.lane.b32.xlu0 %v812, %s861
    %v863 = vpop.permute.xlu0 %862
    %s865 = sor.u32 256, 104
    %866 = vbcast.lane.b32.xlu0 %v812, %s865
    %v867 = vpop.permute.xlu0 %866
    %s869 = sor.u32 256, 112
    %870 = vbcast.lane.b32.xlu0 %v812, %s869
    %v871 = vpop.permute.xlu0 %870
    %s873 = sor.u32 256, 120
    %874 = vbcast.lane.b32.xlu0 %v812, %s873
    %v875 = vpop.permute.xlu0 %874
    %v876 = vlaneseq
    %v877 = vshrl.u32 %v876, 7
    %v878 = vsub.s32 5, %v877
    %v879 = vrot.slane %v86, %v878
    %881 = vbcast.lane.b32.xlu0 %v879, 256
    %v882 = vpop.permute.xlu0 %881
    %s884 = sor.u32 256, 8
    %885 = vbcast.lane.b32.xlu0 %v879, %s884
    %v886 = vpop.permute.xlu0 %885
    %s888 = sor.u32 256, 16
    %889 = vbcast.lane.b32.xlu0 %v879, %s888
    %v890 = vpop.permute.xlu0 %889
    %s892 = sor.u32 256, 24
    %893 = vbcast.lane.b32.xlu0 %v879, %s892
    %v894 = vpop.permute.xlu0 %893
    %s896 = sor.u32 256, 32
    %897 = vbcast.lane.b32.xlu0 %v879, %s896
    %v898 = vpop.permute.xlu0 %897
    %s900 = sor.u32 256, 40
    %901 = vbcast.lane.b32.xlu0 %v879, %s900
    %v902 = vpop.permute.xlu0 %901
    %s904 = sor.u32 256, 48
    %905 = vbcast.lane.b32.xlu0 %v879, %s904
    %v906 = vpop.permute.xlu0 %905
    %s908 = sor.u32 256, 56
    %909 = vbcast.lane.b32.xlu0 %v879, %s908
    %v910 = vpop.permute.xlu0 %909
    %s912 = sor.u32 256, 64
    %913 = vbcast.lane.b32.xlu0 %v879, %s912
    %v914 = vpop.permute.xlu0 %913
    %s916 = sor.u32 256, 72
    %917 = vbcast.lane.b32.xlu0 %v879, %s916
    %v918 = vpop.permute.xlu0 %917
    %s920 = sor.u32 256, 80
    %921 = vbcast.lane.b32.xlu0 %v879, %s920
    %v922 = vpop.permute.xlu0 %921
    %s924 = sor.u32 256, 88
    %925 = vbcast.lane.b32.xlu0 %v879, %s924
    %v926 = vpop.permute.xlu0 %925
    %s928 = sor.u32 256, 96
    %929 = vbcast.lane.b32.xlu0 %v879, %s928
    %v930 = vpop.permute.xlu0 %929
    %s932 = sor.u32 256, 104
    %933 = vbcast.lane.b32.xlu0 %v879, %s932
    %v934 = vpop.permute.xlu0 %933
    %s936 = sor.u32 256, 112
    %937 = vbcast.lane.b32.xlu0 %v879, %s936
    %v938 = vpop.permute.xlu0 %937
    %s940 = sor.u32 256, 120
    %941 = vbcast.lane.b32.xlu0 %v879, %s940
    %v942 = vpop.permute.xlu0 %941
    %v943 = vlaneseq
    %v944 = vshrl.u32 %v943, 7
    %v945 = vsub.s32 6, %v944
    %v946 = vrot.slane %v85, %v945
    %948 = vbcast.lane.b32.xlu0 %v946, 256
    %v949 = vpop.permute.xlu0 %948
    %s951 = sor.u32 256, 8
    %952 = vbcast.lane.b32.xlu0 %v946, %s951
    %v953 = vpop.permute.xlu0 %952
    %s955 = sor.u32 256, 16
    %956 = vbcast.lane.b32.xlu0 %v946, %s955
    %v957 = vpop.permute.xlu0 %956
    %s959 = sor.u32 256, 24
    %960 = vbcast.lane.b32.xlu0 %v946, %s959
    %v961 = vpop.permute.xlu0 %960
    %s963 = sor.u32 256, 32
    %964 = vbcast.lane.b32.xlu0 %v946, %s963
    %v965 = vpop.permute.xlu0 %964
    %s967 = sor.u32 256, 40
    %968 = vbcast.lane.b32.xlu0 %v946, %s967
    %v969 = vpop.permute.xlu0 %968
    %s971 = sor.u32 256, 48
    %972 = vbcast.lane.b32.xlu0 %v946, %s971
    %v973 = vpop.permute.xlu0 %972
    %s975 = sor.u32 256, 56
    %976 = vbcast.lane.b32.xlu0 %v946, %s975
    %v977 = vpop.permute.xlu0 %976
    %s979 = sor.u32 256, 64
    %980 = vbcast.lane.b32.xlu0 %v946, %s979
    %v981 = vpop.permute.xlu0 %980
    %s983 = sor.u32 256, 72
    %984 = vbcast.lane.b32.xlu0 %v946, %s983
    %v985 = vpop.permute.xlu0 %984
    %s987 = sor.u32 256, 80
    %988 = vbcast.lane.b32.xlu0 %v946, %s987
    %v989 = vpop.permute.xlu0 %988
    %s991 = sor.u32 256, 88
    %992 = vbcast.lane.b32.xlu0 %v946, %s991
    %v993 = vpop.permute.xlu0 %992
    %s995 = sor.u32 256, 96
    %996 = vbcast.lane.b32.xlu0 %v946, %s995
    %v997 = vpop.permute.xlu0 %996
    %s999 = sor.u32 256, 104
    %1000 = vbcast.lane.b32.xlu0 %v946, %s999
    %v1001 = vpop.permute.xlu0 %1000
    %s1003 = sor.u32 256, 112
    %1004 = vbcast.lane.b32.xlu0 %v946, %s1003
    %v1005 = vpop.permute.xlu0 %1004
    %s1007 = sor.u32 256, 120
    %1008 = vbcast.lane.b32.xlu0 %v946, %s1007
    %v1009 = vpop.permute.xlu0 %1008
    %v1010 = vlaneseq
    %v1011 = vshrl.u32 %v1010, 7
    %v1012 = vsub.s32 6, %v1011
    %v1013 = vrot.slane %v86, %v1012
    %1015 = vbcast.lane.b32.xlu0 %v1013, 256
    %v1016 = vpop.permute.xlu0 %1015
    %s1018 = sor.u32 256, 8
    %1019 = vbcast.lane.b32.xlu0 %v1013, %s1018
    %v1020 = vpop.permute.xlu0 %1019
    %s1022 = sor.u32 256, 16
    %1023 = vbcast.lane.b32.xlu0 %v1013, %s1022
    %v1024 = vpop.permute.xlu0 %1023
    %s1026 = sor.u32 256, 24
    %1027 = vbcast.lane.b32.xlu0 %v1013, %s1026
    %v1028 = vpop.permute.xlu0 %1027
    %s1030 = sor.u32 256, 32
    %1031 = vbcast.lane.b32.xlu0 %v1013, %s1030
    %v1032 = vpop.permute.xlu0 %1031
    %s1034 = sor.u32 256, 40
    %1035 = vbcast.lane.b32.xlu0 %v1013, %s1034
    %v1036 = vpop.permute.xlu0 %1035
    %s1038 = sor.u32 256, 48
    %1039 = vbcast.lane.b32.xlu0 %v1013, %s1038
    %v1040 = vpop.permute.xlu0 %1039
    %s1042 = sor.u32 256, 56
    %1043 = vbcast.lane.b32.xlu0 %v1013, %s1042
    %v1044 = vpop.permute.xlu0 %1043
    %s1046 = sor.u32 256, 64
    %1047 = vbcast.lane.b32.xlu0 %v1013, %s1046
    %v1048 = vpop.permute.xlu0 %1047
    %s1050 = sor.u32 256, 72
    %1051 = vbcast.lane.b32.xlu0 %v1013, %s1050
    %v1052 = vpop.permute.xlu0 %1051
    %s1054 = sor.u32 256, 80
    %1055 = vbcast.lane.b32.xlu0 %v1013, %s1054
    %v1056 = vpop.permute.xlu0 %1055
    %s1058 = sor.u32 256, 88
    %1059 = vbcast.lane.b32.xlu0 %v1013, %s1058
    %v1060 = vpop.permute.xlu0 %1059
    %s1062 = sor.u32 256, 96
    %1063 = vbcast.lane.b32.xlu0 %v1013, %s1062
    %v1064 = vpop.permute.xlu0 %1063
    %s1066 = sor.u32 256, 104
    %1067 = vbcast.lane.b32.xlu0 %v1013, %s1066
    %v1068 = vpop.permute.xlu0 %1067
    %s1070 = sor.u32 256, 112
    %1071 = vbcast.lane.b32.xlu0 %v1013, %s1070
    %v1072 = vpop.permute.xlu0 %1071
    %s1074 = sor.u32 256, 120
    %1075 = vbcast.lane.b32.xlu0 %v1013, %s1074
    %v1076 = vpop.permute.xlu0 %1075
    %v1077 = vlaneseq
    %v1078 = vshrl.u32 %v1077, 7
    %v1079 = vsub.s32 7, %v1078
    %v1080 = vrot.slane %v85, %v1079
    %1082 = vbcast.lane.b32.xlu0 %v1080, 256
    %v1083 = vpop.permute.xlu0 %1082
    %s1085 = sor.u32 256, 8
    %1086 = vbcast.lane.b32.xlu0 %v1080, %s1085
    %v1087 = vpop.permute.xlu0 %1086
    %s1089 = sor.u32 256, 16
    %1090 = vbcast.lane.b32.xlu0 %v1080, %s1089
    %v1091 = vpop.permute.xlu0 %1090
    %s1093 = sor.u32 256, 24
    %1094 = vbcast.lane.b32.xlu0 %v1080, %s1093
    %v1095 = vpop.permute.xlu0 %1094
    %s1097 = sor.u32 256, 32
    %1098 = vbcast.lane.b32.xlu0 %v1080, %s1097
    %v1099 = vpop.permute.xlu0 %1098
    %s1101 = sor.u32 256, 40
    %1102 = vbcast.lane.b32.xlu0 %v1080, %s1101
    %v1103 = vpop.permute.xlu0 %1102
    %s1105 = sor.u32 256, 48
    %1106 = vbcast.lane.b32.xlu0 %v1080, %s1105
    %v1107 = vpop.permute.xlu0 %1106
    %s1109 = sor.u32 256, 56
    %1110 = vbcast.lane.b32.xlu0 %v1080, %s1109
    %v1111 = vpop.permute.xlu0 %1110
    %s1113 = sor.u32 256, 64
    %1114 = vbcast.lane.b32.xlu0 %v1080, %s1113
    %v1115 = vpop.permute.xlu0 %1114
    %s1117 = sor.u32 256, 72
    %1118 = vbcast.lane.b32.xlu0 %v1080, %s1117
    %v1119 = vpop.permute.xlu0 %1118
    %s1121 = sor.u32 256, 80
    %1122 = vbcast.lane.b32.xlu0 %v1080, %s1121
    %v1123 = vpop.permute.xlu0 %1122
    %s1125 = sor.u32 256, 88
    %1126 = vbcast.lane.b32.xlu0 %v1080, %s1125
    %v1127 = vpop.permute.xlu0 %1126
    %s1129 = sor.u32 256, 96
    %1130 = vbcast.lane.b32.xlu0 %v1080, %s1129
    %v1131 = vpop.permute.xlu0 %1130
    %s1133 = sor.u32 256, 104
    %1134 = vbcast.lane.b32.xlu0 %v1080, %s1133
    %v1135 = vpop.permute.xlu0 %1134
    %s1137 = sor.u32 256, 112
    %1138 = vbcast.lane.b32.xlu0 %v1080, %s1137
    %v1139 = vpop.permute.xlu0 %1138
    %s1141 = sor.u32 256, 120
    %1142 = vbcast.lane.b32.xlu0 %v1080, %s1141
    %v1143 = vpop.permute.xlu0 %1142
    %v1144 = vlaneseq
    %v1145 = vshrl.u32 %v1144, 7
    %v1146 = vsub.s32 7, %v1145
    %v1147 = vrot.slane %v86, %v1146
    %1149 = vbcast.lane.b32.xlu0 %v1147, 256
    %v1150 = vpop.permute.xlu0 %1149
    %s1152 = sor.u32 256, 8
    %1153 = vbcast.lane.b32.xlu0 %v1147, %s1152
    %v1154 = vpop.permute.xlu0 %1153
    %s1156 = sor.u32 256, 16
    %1157 = vbcast.lane.b32.xlu0 %v1147, %s1156
    %v1158 = vpop.permute.xlu0 %1157
    %s1160 = sor.u32 256, 24
    %1161 = vbcast.lane.b32.xlu0 %v1147, %s1160
    %v1162 = vpop.permute.xlu0 %1161
    %s1164 = sor.u32 256, 32
    %1165 = vbcast.lane.b32.xlu0 %v1147, %s1164
    %v1166 = vpop.permute.xlu0 %1165
    %s1168 = sor.u32 256, 40
    %1169 = vbcast.lane.b32.xlu0 %v1147, %s1168
    %v1170 = vpop.permute.xlu0 %1169
    %s1172 = sor.u32 256, 48
    %1173 = vbcast.lane.b32.xlu0 %v1147, %s1172
    %v1174 = vpop.permute.xlu0 %1173
    %s1176 = sor.u32 256, 56
    %1177 = vbcast.lane.b32.xlu0 %v1147, %s1176
    %v1178 = vpop.permute.xlu0 %1177
    %s1180 = sor.u32 256, 64
    %1181 = vbcast.lane.b32.xlu0 %v1147, %s1180
    %v1182 = vpop.permute.xlu0 %1181
    %s1184 = sor.u32 256, 72
    %1185 = vbcast.lane.b32.xlu0 %v1147, %s1184
    %v1186 = vpop.permute.xlu0 %1185
    %s1188 = sor.u32 256, 80
    %1189 = vbcast.lane.b32.xlu0 %v1147, %s1188
    %v1190 = vpop.permute.xlu0 %1189
    %s1192 = sor.u32 256, 88
    %1193 = vbcast.lane.b32.xlu0 %v1147, %s1192
    %v1194 = vpop.permute.xlu0 %1193
    %s1196 = sor.u32 256, 96
    %1197 = vbcast.lane.b32.xlu0 %v1147, %s1196
    %v1198 = vpop.permute.xlu0 %1197
    %s1200 = sor.u32 256, 104
    %1201 = vbcast.lane.b32.xlu0 %v1147, %s1200
    %v1202 = vpop.permute.xlu0 %1201
    %s1204 = sor.u32 256, 112
    %1205 = vbcast.lane.b32.xlu0 %v1147, %s1204
    %v1206 = vpop.permute.xlu0 %1205
    %s1208 = sor.u32 256, 120
    %1209 = vbcast.lane.b32.xlu0 %v1147, %s1208
    %v1210 = vpop.permute.xlu0 %1209
    %v1211 = vlaneseq
    %v1212 = vshrl.u32 %v1211, 7
    %v1213 = vsub.s32 0, %v1212
    %v1214 = vrot.slane %v113, %v1213
    %v1215 = vlaneseq
    %v1216 = vshrl.u32 %v1215, 7
    %v1217 = vsub.s32 1, %v1216
    %v1218 = vrot.slane %v113, %v1217
    %v1219 = vlaneseq
    %v1220 = vshrl.u32 %v1219, 7
    %v1221 = vsub.s32 0, %v1220
    %v1222 = vrot.slane %v127, %v1221
    %v1223 = vlaneseq
    %v1224 = vshrl.u32 %v1223, 7
    %v1225 = vsub.s32 1, %v1224
    %v1226 = vrot.slane %v127, %v1225
    %v1227 = vlaneseq
    %v1228 = vshrl.u32 %v1227, 7
    %v1229 = vsub.s32 0, %v1228
    %v1230 = vrot.slane %v135, %v1229
    %v1231 = vlaneseq
    %v1232 = vshrl.u32 %v1231, 7
    %v1233 = vsub.s32 1, %v1232
    %v1234 = vrot.slane %v135, %v1233
    %v1235 = vlaneseq
    %v1236 = vshrl.u32 %v1235, 7
    %v1237 = vsub.s32 0, %v1236
    %v1238 = vrot.slane %v137, %v1237
    %v1239 = vlaneseq
    %v1240 = vshrl.u32 %v1239, 7
    %v1241 = vsub.s32 1, %v1240
    %v1242 = vrot.slane %v137, %v1241
    %v1243 = vlaneseq
    %v1244 = vshrl.u32 %v1243, 7
    %v1245 = vsub.s32 0, %v1244
    %v1246 = vrot.slane %v120, %v1245
    %v1247 = vlaneseq
    %v1248 = vshrl.u32 %v1247, 7
    %v1249 = vsub.s32 1, %v1248
    %v1250 = vrot.slane %v120, %v1249
    %v1251 = vlaneseq
    %v1252 = vshrl.u32 %v1251, 7
    %v1253 = vsub.s32 0, %v1252
    %v1254 = vrot.slane %v134, %v1253
    %v1255 = vlaneseq
    %v1256 = vshrl.u32 %v1255, 7
    %v1257 = vsub.s32 1, %v1256
    %v1258 = vrot.slane %v134, %v1257
    %v1259 = vlaneseq
    %v1260 = vshrl.u32 %v1259, 7
    %v1261 = vsub.s32 0, %v1260
    %v1262 = vrot.slane %v136, %v1261
    %v1263 = vlaneseq
    %v1264 = vshrl.u32 %v1263, 7
    %v1265 = vsub.s32 1, %v1264
    %v1266 = vrot.slane %v136, %v1265
    %v1267 = vlaneseq
    %v1268 = vshrl.u32 %v1267, 7
    %v1269 = vsub.s32 0, %v1268
    %v1270 = vrot.slane %v138, %v1269
    %v1271 = vlaneseq
    %v1272 = vshrl.u32 %v1271, 7
    %v1273 = vsub.s32 1, %v1272
    %v1274 = vrot.slane %v138, %v1273
    %v1291 = vsub.f32 %v1214, %v145
    %v1292 = vsub.f32 %v1218, %v145
    %v1293 = vsub.f32 %v1214, %v149
    %v1294 = vsub.f32 %v1218, %v149
    %v1295 = vsub.f32 %v1214, %v153
    %v1296 = vsub.f32 %v1218, %v153
    %v1297 = vsub.f32 %v1214, %v157
    %v1298 = vsub.f32 %v1218, %v157
    %v1299 = vsub.f32 %v1214, %v161
    %v1300 = vsub.f32 %v1218, %v161
    %v1301 = vsub.f32 %v1214, %v165
    %v1302 = vsub.f32 %v1218, %v165
    %v1303 = vsub.f32 %v1214, %v169
    %v1304 = vsub.f32 %v1218, %v169
    %v1305 = vsub.f32 %v1214, %v173
    %v1306 = vsub.f32 %v1218, %v173
    %v1307 = vsub.f32 %v1214, %v177
    %v1308 = vsub.f32 %v1218, %v177
    %v1309 = vsub.f32 %v1214, %v181
    %v1310 = vsub.f32 %v1218, %v181
    %v1311 = vsub.f32 %v1214, %v185
    %v1312 = vsub.f32 %v1218, %v185
    %v1313 = vsub.f32 %v1214, %v189
    %v1314 = vsub.f32 %v1218, %v189
    %v1315 = vsub.f32 %v1214, %v193
    %v1316 = vsub.f32 %v1218, %v193
    %v1317 = vsub.f32 %v1214, %v197
    %v1318 = vsub.f32 %v1218, %v197
    %v1319 = vsub.f32 %v1214, %v201
    %v1320 = vsub.f32 %v1218, %v201
    %v1321 = vsub.f32 %v1214, %v205
    %v1322 = vsub.f32 %v1218, %v205
    %v1323 = vsub.f32 %v1214, %v212
    %v1324 = vsub.f32 %v1218, %v212
    %v1325 = vsub.f32 %v1214, %v216
    %v1326 = vsub.f32 %v1218, %v216
    %v1327 = vsub.f32 %v1214, %v220
    %v1328 = vsub.f32 %v1218, %v220
    %v1329 = vsub.f32 %v1214, %v224
    %v1330 = vsub.f32 %v1218, %v224
    %v1331 = vsub.f32 %v1214, %v228
    %v1332 = vsub.f32 %v1218, %v228
    %v1333 = vsub.f32 %v1214, %v232
    %v1334 = vsub.f32 %v1218, %v232
    %v1335 = vsub.f32 %v1214, %v236
    %v1336 = vsub.f32 %v1218, %v236
    %v1337 = vsub.f32 %v1214, %v240
    %v1338 = vsub.f32 %v1218, %v240
    %v1339 = vsub.f32 %v1214, %v244
    %v1340 = vsub.f32 %v1218, %v244
    %v1341 = vsub.f32 %v1214, %v248
    %v1342 = vsub.f32 %v1218, %v248
    %v1343 = vsub.f32 %v1214, %v252
    %v1344 = vsub.f32 %v1218, %v252
    %v1345 = vsub.f32 %v1214, %v256
    %v1346 = vsub.f32 %v1218, %v256
    %v1347 = vsub.f32 %v1214, %v260
    %v1348 = vsub.f32 %v1218, %v260
    %v1349 = vsub.f32 %v1214, %v264
    %v1350 = vsub.f32 %v1218, %v264
    %v1351 = vsub.f32 %v1214, %v268
    %v1352 = vsub.f32 %v1218, %v268
    %v1353 = vsub.f32 %v1214, %v272
    %v1354 = vsub.f32 %v1218, %v272
    %v1355 = vsub.f32 %v1222, %v279
    %v1356 = vsub.f32 %v1226, %v279
    %v1357 = vsub.f32 %v1222, %v283
    %v1358 = vsub.f32 %v1226, %v283
    %v1359 = vsub.f32 %v1222, %v287
    %v1360 = vsub.f32 %v1226, %v287
    %v1361 = vsub.f32 %v1222, %v291
    %v1362 = vsub.f32 %v1226, %v291
    %v1363 = vsub.f32 %v1222, %v295
    %v1364 = vsub.f32 %v1226, %v295
    %v1365 = vsub.f32 %v1222, %v299
    %v1366 = vsub.f32 %v1226, %v299
    %v1367 = vsub.f32 %v1222, %v303
    %v1368 = vsub.f32 %v1226, %v303
    %v1369 = vsub.f32 %v1222, %v307
    %v1370 = vsub.f32 %v1226, %v307
    %v1371 = vsub.f32 %v1222, %v311
    %v1372 = vsub.f32 %v1226, %v311
    %v1373 = vsub.f32 %v1222, %v315
    %v1374 = vsub.f32 %v1226, %v315
    %v1375 = vsub.f32 %v1222, %v319
    %v1376 = vsub.f32 %v1226, %v319
    %v1377 = vsub.f32 %v1222, %v323
    %v1378 = vsub.f32 %v1226, %v323
    %v1379 = vsub.f32 %v1222, %v327
    %v1380 = vsub.f32 %v1226, %v327
    %v1381 = vsub.f32 %v1222, %v331
    %v1382 = vsub.f32 %v1226, %v331
    %v1383 = vsub.f32 %v1222, %v335
    %v1384 = vsub.f32 %v1226, %v335
    %v1385 = vsub.f32 %v1222, %v339
    %v1386 = vsub.f32 %v1226, %v339
    %v1387 = vsub.f32 %v1222, %v346
    %v1388 = vsub.f32 %v1226, %v346
    %v1389 = vsub.f32 %v1222, %v350
    %v1390 = vsub.f32 %v1226, %v350
    %v1391 = vsub.f32 %v1222, %v354
    %v1392 = vsub.f32 %v1226, %v354
    %v1393 = vsub.f32 %v1222, %v358
    %v1394 = vsub.f32 %v1226, %v358
    %v1395 = vsub.f32 %v1222, %v362
    %v1396 = vsub.f32 %v1226, %v362
    %v1397 = vsub.f32 %v1222, %v366
    %v1398 = vsub.f32 %v1226, %v366
    %v1399 = vsub.f32 %v1222, %v370
    %v1400 = vsub.f32 %v1226, %v370
    %v1401 = vsub.f32 %v1222, %v374
    %v1402 = vsub.f32 %v1226, %v374
    %v1403 = vsub.f32 %v1222, %v378
    %v1404 = vsub.f32 %v1226, %v378
    %v1405 = vsub.f32 %v1222, %v382
    %v1406 = vsub.f32 %v1226, %v382
    %v1407 = vsub.f32 %v1222, %v386
    %v1408 = vsub.f32 %v1226, %v386
    %v1409 = vsub.f32 %v1222, %v390
    %v1410 = vsub.f32 %v1226, %v390
    %v1411 = vsub.f32 %v1222, %v394
    %v1412 = vsub.f32 %v1226, %v394
    %v1413 = vsub.f32 %v1222, %v398
    %v1414 = vsub.f32 %v1226, %v398
    %v1415 = vsub.f32 %v1222, %v402
    %v1416 = vsub.f32 %v1226, %v402
    %v1417 = vsub.f32 %v1222, %v406
    %v1418 = vsub.f32 %v1226, %v406
    %v1419 = vsub.f32 %v1230, %v413
    %v1420 = vsub.f32 %v1234, %v413
    %v1421 = vsub.f32 %v1230, %v417
    %v1422 = vsub.f32 %v1234, %v417
    %v1423 = vsub.f32 %v1230, %v421
    %v1424 = vsub.f32 %v1234, %v421
    %v1425 = vsub.f32 %v1230, %v425
    %v1426 = vsub.f32 %v1234, %v425
    %v1427 = vsub.f32 %v1230, %v429
    %v1428 = vsub.f32 %v1234, %v429
    %v1429 = vsub.f32 %v1230, %v433
    %v1430 = vsub.f32 %v1234, %v433
    %v1431 = vsub.f32 %v1230, %v437
    %v1432 = vsub.f32 %v1234, %v437
    %v1433 = vsub.f32 %v1230, %v441
    %v1434 = vsub.f32 %v1234, %v441
    %v1435 = vsub.f32 %v1230, %v445
    %v1436 = vsub.f32 %v1234, %v445
    %v1437 = vsub.f32 %v1230, %v449
    %v1438 = vsub.f32 %v1234, %v449
    %v1439 = vsub.f32 %v1230, %v453
    %v1440 = vsub.f32 %v1234, %v453
    %v1441 = vsub.f32 %v1230, %v457
    %v1442 = vsub.f32 %v1234, %v457
    %v1443 = vsub.f32 %v1230, %v461
    %v1444 = vsub.f32 %v1234, %v461
    %v1445 = vsub.f32 %v1230, %v465
    %v1446 = vsub.f32 %v1234, %v465
    %v1447 = vsub.f32 %v1230, %v469
    %v1448 = vsub.f32 %v1234, %v469
    %v1449 = vsub.f32 %v1230, %v473
    %v1450 = vsub.f32 %v1234, %v473
    %v1451 = vsub.f32 %v1230, %v480
    %v1452 = vsub.f32 %v1234, %v480
    %v1453 = vsub.f32 %v1230, %v484
    %v1454 = vsub.f32 %v1234, %v484
    %v1455 = vsub.f32 %v1230, %v488
    %v1456 = vsub.f32 %v1234, %v488
    %v1457 = vsub.f32 %v1230, %v492
    %v1458 = vsub.f32 %v1234, %v492
    %v1459 = vsub.f32 %v1230, %v496
    %v1460 = vsub.f32 %v1234, %v496
    %v1461 = vsub.f32 %v1230, %v500
    %v1462 = vsub.f32 %v1234, %v500
    %v1463 = vsub.f32 %v1230, %v504
    %v1464 = vsub.f32 %v1234, %v504
    %v1465 = vsub.f32 %v1230, %v508
    %v1466 = vsub.f32 %v1234, %v508
    %v1467 = vsub.f32 %v1230, %v512
    %v1468 = vsub.f32 %v1234, %v512
    %v1469 = vsub.f32 %v1230, %v516
    %v1470 = vsub.f32 %v1234, %v516
    %v1471 = vsub.f32 %v1230, %v520
    %v1472 = vsub.f32 %v1234, %v520
    %v1473 = vsub.f32 %v1230, %v524
    %v1474 = vsub.f32 %v1234, %v524
    %v1475 = vsub.f32 %v1230, %v528
    %v1476 = vsub.f32 %v1234, %v528
    %v1477 = vsub.f32 %v1230, %v532
    %v1478 = vsub.f32 %v1234, %v532
    %v1479 = vsub.f32 %v1230, %v536
    %v1480 = vsub.f32 %v1234, %v536
    %v1481 = vsub.f32 %v1230, %v540
    %v1482 = vsub.f32 %v1234, %v540
    %v1483 = vsub.f32 %v1238, %v547
    %v1484 = vsub.f32 %v1242, %v547
    %v1485 = vsub.f32 %v1238, %v551
    %v1486 = vsub.f32 %v1242, %v551
    %v1487 = vsub.f32 %v1238, %v555
    %v1488 = vsub.f32 %v1242, %v555
    %v1489 = vsub.f32 %v1238, %v559
    %v1490 = vsub.f32 %v1242, %v559
    %v1491 = vsub.f32 %v1238, %v563
    %v1492 = vsub.f32 %v1242, %v563
    %v1493 = vsub.f32 %v1238, %v567
    %v1494 = vsub.f32 %v1242, %v567
    %v1495 = vsub.f32 %v1238, %v571
    %v1496 = vsub.f32 %v1242, %v571
    %v1497 = vsub.f32 %v1238, %v575
    %v1498 = vsub.f32 %v1242, %v575
    %v1499 = vsub.f32 %v1238, %v579
    %v1500 = vsub.f32 %v1242, %v579
    %v1501 = vsub.f32 %v1238, %v583
    %v1502 = vsub.f32 %v1242, %v583
    %v1503 = vsub.f32 %v1238, %v587
    %v1504 = vsub.f32 %v1242, %v587
    %v1505 = vsub.f32 %v1238, %v591
    %v1506 = vsub.f32 %v1242, %v591
    %v1507 = vsub.f32 %v1238, %v595
    %v1508 = vsub.f32 %v1242, %v595
    %v1509 = vsub.f32 %v1238, %v599
    %v1510 = vsub.f32 %v1242, %v599
    %v1511 = vsub.f32 %v1238, %v603
    %v1512 = vsub.f32 %v1242, %v603
    %v1513 = vsub.f32 %v1238, %v607
    %v1514 = vsub.f32 %v1242, %v607
    %v1515 = vsub.f32 %v1238, %v614
    %v1516 = vsub.f32 %v1242, %v614
    %v1517 = vsub.f32 %v1238, %v618
    %v1518 = vsub.f32 %v1242, %v618
    %v1519 = vsub.f32 %v1238, %v622
    %v1520 = vsub.f32 %v1242, %v622
    %v1521 = vsub.f32 %v1238, %v626
    %v1522 = vsub.f32 %v1242, %v626
    %v1523 = vsub.f32 %v1238, %v630
    %v1524 = vsub.f32 %v1242, %v630
    %v1525 = vsub.f32 %v1238, %v634
    %v1526 = vsub.f32 %v1242, %v634
    %v1527 = vsub.f32 %v1238, %v638
    %v1528 = vsub.f32 %v1242, %v638
    %v1529 = vsub.f32 %v1238, %v642
    %v1530 = vsub.f32 %v1242, %v642
    %v1531 = vsub.f32 %v1238, %v646
    %v1532 = vsub.f32 %v1242, %v646
    %v1533 = vsub.f32 %v1238, %v650
    %v1534 = vsub.f32 %v1242, %v650
    %v1535 = vsub.f32 %v1238, %v654
    %v1536 = vsub.f32 %v1242, %v654
    %v1537 = vsub.f32 %v1238, %v658
    %v1538 = vsub.f32 %v1242, %v658
    %v1539 = vsub.f32 %v1238, %v662
    %v1540 = vsub.f32 %v1242, %v662
    %v1541 = vsub.f32 %v1238, %v666
    %v1542 = vsub.f32 %v1242, %v666
    %v1543 = vsub.f32 %v1238, %v670
    %v1544 = vsub.f32 %v1242, %v670
    %v1545 = vsub.f32 %v1238, %v674
    %v1546 = vsub.f32 %v1242, %v674
    %v1547 = vsub.f32 %v1246, %v681
    %v1548 = vsub.f32 %v1250, %v681
    %v1549 = vsub.f32 %v1246, %v685
    %v1550 = vsub.f32 %v1250, %v685
    %v1551 = vsub.f32 %v1246, %v689
    %v1552 = vsub.f32 %v1250, %v689
    %v1553 = vsub.f32 %v1246, %v693
    %v1554 = vsub.f32 %v1250, %v693
    %v1555 = vsub.f32 %v1246, %v697
    %v1556 = vsub.f32 %v1250, %v697
    %v1557 = vsub.f32 %v1246, %v701
    %v1558 = vsub.f32 %v1250, %v701
    %v1559 = vsub.f32 %v1246, %v705
    %v1560 = vsub.f32 %v1250, %v705
    %v1561 = vsub.f32 %v1246, %v709
    %v1562 = vsub.f32 %v1250, %v709
    %v1563 = vsub.f32 %v1246, %v713
    %v1564 = vsub.f32 %v1250, %v713
    %v1565 = vsub.f32 %v1246, %v717
    %v1566 = vsub.f32 %v1250, %v717
    %v1567 = vsub.f32 %v1246, %v721
    %v1568 = vsub.f32 %v1250, %v721
    %v1569 = vsub.f32 %v1246, %v725
    %v1570 = vsub.f32 %v1250, %v725
    %v1571 = vsub.f32 %v1246, %v729
    %v1572 = vsub.f32 %v1250, %v729
    %v1573 = vsub.f32 %v1246, %v733
    %v1574 = vsub.f32 %v1250, %v733
    %v1575 = vsub.f32 %v1246, %v737
    %v1576 = vsub.f32 %v1250, %v737
    %v1577 = vsub.f32 %v1246, %v741
    %v1578 = vsub.f32 %v1250, %v741
    %v1579 = vsub.f32 %v1246, %v748
    %v1580 = vsub.f32 %v1250, %v748
    %v1581 = vsub.f32 %v1246, %v752
    %v1582 = vsub.f32 %v1250, %v752
    %v1583 = vsub.f32 %v1246, %v756
    %v1584 = vsub.f32 %v1250, %v756
    %v1585 = vsub.f32 %v1246, %v760
    %v1586 = vsub.f32 %v1250, %v760
    %v1587 = vsub.f32 %v1246, %v764
    %v1588 = vsub.f32 %v1250, %v764
    %v1589 = vsub.f32 %v1246, %v768
    %v1590 = vsub.f32 %v1250, %v768
    %v1591 = vsub.f32 %v1246, %v772
    %v1592 = vsub.f32 %v1250, %v772
    %v1593 = vsub.f32 %v1246, %v776
    %v1594 = vsub.f32 %v1250, %v776
    %v1595 = vsub.f32 %v1246, %v780
    %v1596 = vsub.f32 %v1250, %v780
    %v1597 = vsub.f32 %v1246, %v784
    %v1598 = vsub.f32 %v1250, %v784
    %v1599 = vsub.f32 %v1246, %v788
    %v1600 = vsub.f32 %v1250, %v788
    %v1601 = vsub.f32 %v1246, %v792
    %v1602 = vsub.f32 %v1250, %v792
    %v1603 = vsub.f32 %v1246, %v796
    %v1604 = vsub.f32 %v1250, %v796
    %v1605 = vsub.f32 %v1246, %v800
    %v1606 = vsub.f32 %v1250, %v800
    %v1607 = vsub.f32 %v1246, %v804
    %v1608 = vsub.f32 %v1250, %v804
    %v1609 = vsub.f32 %v1246, %v808
    %v1610 = vsub.f32 %v1250, %v808
    %v1611 = vsub.f32 %v1254, %v815
    %v1612 = vsub.f32 %v1258, %v815
    %v1613 = vsub.f32 %v1254, %v819
    %v1614 = vsub.f32 %v1258, %v819
    %v1615 = vsub.f32 %v1254, %v823
    %v1616 = vsub.f32 %v1258, %v823
    %v1617 = vsub.f32 %v1254, %v827
    %v1618 = vsub.f32 %v1258, %v827
    %v1619 = vsub.f32 %v1254, %v831
    %v1620 = vsub.f32 %v1258, %v831
    %v1621 = vsub.f32 %v1254, %v835
    %v1622 = vsub.f32 %v1258, %v835
    %v1623 = vsub.f32 %v1254, %v839
    %v1624 = vsub.f32 %v1258, %v839
    %v1625 = vsub.f32 %v1254, %v843
    %v1626 = vsub.f32 %v1258, %v843
    %v1627 = vsub.f32 %v1254, %v847
    %v1628 = vsub.f32 %v1258, %v847
    %v1629 = vsub.f32 %v1254, %v851
    %v1630 = vsub.f32 %v1258, %v851
    %v1631 = vsub.f32 %v1254, %v855
    %v1632 = vsub.f32 %v1258, %v855
    %v1633 = vsub.f32 %v1254, %v859
    %v1634 = vsub.f32 %v1258, %v859
    %v1635 = vsub.f32 %v1254, %v863
    %v1636 = vsub.f32 %v1258, %v863
    %v1637 = vsub.f32 %v1254, %v867
    %v1638 = vsub.f32 %v1258, %v867
    %v1639 = vsub.f32 %v1254, %v871
    %v1640 = vsub.f32 %v1258, %v871
    %v1641 = vsub.f32 %v1254, %v875
    %v1642 = vsub.f32 %v1258, %v875
    %v1643 = vsub.f32 %v1254, %v882
    %v1644 = vsub.f32 %v1258, %v882
    %v1645 = vsub.f32 %v1254, %v886
    %v1646 = vsub.f32 %v1258, %v886
    %v1647 = vsub.f32 %v1254, %v890
    %v1648 = vsub.f32 %v1258, %v890
    %v1649 = vsub.f32 %v1254, %v894
    %v1650 = vsub.f32 %v1258, %v894
    %v1651 = vsub.f32 %v1254, %v898
    %v1652 = vsub.f32 %v1258, %v898
    %v1653 = vsub.f32 %v1254, %v902
    %v1654 = vsub.f32 %v1258, %v902
    %v1655 = vsub.f32 %v1254, %v906
    %v1656 = vsub.f32 %v1258, %v906
    %v1657 = vsub.f32 %v1254, %v910
    %v1658 = vsub.f32 %v1258, %v910
    %v1659 = vsub.f32 %v1254, %v914
    %v1660 = vsub.f32 %v1258, %v914
    %v1661 = vsub.f32 %v1254, %v918
    %v1662 = vsub.f32 %v1258, %v918
    %v1663 = vsub.f32 %v1254, %v922
    %v1664 = vsub.f32 %v1258, %v922
    %v1665 = vsub.f32 %v1254, %v926
    %v1666 = vsub.f32 %v1258, %v926
    %v1667 = vsub.f32 %v1254, %v930
    %v1668 = vsub.f32 %v1258, %v930
    %v1669 = vsub.f32 %v1254, %v934
    %v1670 = vsub.f32 %v1258, %v934
    %v1671 = vsub.f32 %v1254, %v938
    %v1672 = vsub.f32 %v1258, %v938
    %v1673 = vsub.f32 %v1254, %v942
    %v1674 = vsub.f32 %v1258, %v942
    %v1675 = vsub.f32 %v1262, %v949
    %v1676 = vsub.f32 %v1266, %v949
    %v1677 = vsub.f32 %v1262, %v953
    %v1678 = vsub.f32 %v1266, %v953
    %v1679 = vsub.f32 %v1262, %v957
    %v1680 = vsub.f32 %v1266, %v957
    %v1681 = vsub.f32 %v1262, %v961
    %v1682 = vsub.f32 %v1266, %v961
    %v1683 = vsub.f32 %v1262, %v965
    %v1684 = vsub.f32 %v1266, %v965
    %v1685 = vsub.f32 %v1262, %v969
    %v1686 = vsub.f32 %v1266, %v969
    %v1687 = vsub.f32 %v1262, %v973
    %v1688 = vsub.f32 %v1266, %v973
    %v1689 = vsub.f32 %v1262, %v977
    %v1690 = vsub.f32 %v1266, %v977
    %v1691 = vsub.f32 %v1262, %v981
    %v1692 = vsub.f32 %v1266, %v981
    %v1693 = vsub.f32 %v1262, %v985
    %v1694 = vsub.f32 %v1266, %v985
    %v1695 = vsub.f32 %v1262, %v989
    %v1696 = vsub.f32 %v1266, %v989
    %v1697 = vsub.f32 %v1262, %v993
    %v1698 = vsub.f32 %v1266, %v993
    %v1699 = vsub.f32 %v1262, %v997
    %v1700 = vsub.f32 %v1266, %v997
    %v1701 = vsub.f32 %v1262, %v1001
    %v1702 = vsub.f32 %v1266, %v1001
    %v1703 = vsub.f32 %v1262, %v1005
    %v1704 = vsub.f32 %v1266, %v1005
    %v1705 = vsub.f32 %v1262, %v1009
    %v1706 = vsub.f32 %v1266, %v1009
    %v1707 = vsub.f32 %v1262, %v1016
    %v1708 = vsub.f32 %v1266, %v1016
    %v1709 = vsub.f32 %v1262, %v1020
    %v1710 = vsub.f32 %v1266, %v1020
    %v1711 = vsub.f32 %v1262, %v1024
    %v1712 = vsub.f32 %v1266, %v1024
    %v1713 = vsub.f32 %v1262, %v1028
    %v1714 = vsub.f32 %v1266, %v1028
    %v1715 = vsub.f32 %v1262, %v1032
    %v1716 = vsub.f32 %v1266, %v1032
    %v1717 = vsub.f32 %v1262, %v1036
    %v1718 = vsub.f32 %v1266, %v1036
    %v1719 = vsub.f32 %v1262, %v1040
    %v1720 = vsub.f32 %v1266, %v1040
    %v1721 = vsub.f32 %v1262, %v1044
    %v1722 = vsub.f32 %v1266, %v1044
    %v1723 = vsub.f32 %v1262, %v1048
    %v1724 = vsub.f32 %v1266, %v1048
    %v1725 = vsub.f32 %v1262, %v1052
    %v1726 = vsub.f32 %v1266, %v1052
    %v1727 = vsub.f32 %v1262, %v1056
    %v1728 = vsub.f32 %v1266, %v1056
    %v1729 = vsub.f32 %v1262, %v1060
    %v1730 = vsub.f32 %v1266, %v1060
    %v1731 = vsub.f32 %v1262, %v1064
    %v1732 = vsub.f32 %v1266, %v1064
    %v1733 = vsub.f32 %v1262, %v1068
    %v1734 = vsub.f32 %v1266, %v1068
    %v1735 = vsub.f32 %v1262, %v1072
    %v1736 = vsub.f32 %v1266, %v1072
    %v1737 = vsub.f32 %v1262, %v1076
    %v1738 = vsub.f32 %v1266, %v1076
    %v1739 = vsub.f32 %v1270, %v1083
    %v1740 = vsub.f32 %v1274, %v1083
    %v1741 = vsub.f32 %v1270, %v1087
    %v1742 = vsub.f32 %v1274, %v1087
    %v1743 = vsub.f32 %v1270, %v1091
    %v1744 = vsub.f32 %v1274, %v1091
    %v1745 = vsub.f32 %v1270, %v1095
    %v1746 = vsub.f32 %v1274, %v1095
    %v1747 = vsub.f32 %v1270, %v1099
    %v1748 = vsub.f32 %v1274, %v1099
    %v1749 = vsub.f32 %v1270, %v1103
    %v1750 = vsub.f32 %v1274, %v1103
    %v1751 = vsub.f32 %v1270, %v1107
    %v1752 = vsub.f32 %v1274, %v1107
    %v1753 = vsub.f32 %v1270, %v1111
    %v1754 = vsub.f32 %v1274, %v1111
    %v1755 = vsub.f32 %v1270, %v1115
    %v1756 = vsub.f32 %v1274, %v1115
    %v1757 = vsub.f32 %v1270, %v1119
    %v1758 = vsub.f32 %v1274, %v1119
    %v1759 = vsub.f32 %v1270, %v1123
    %v1760 = vsub.f32 %v1274, %v1123
    %v1761 = vsub.f32 %v1270, %v1127
    %v1762 = vsub.f32 %v1274, %v1127
    %v1763 = vsub.f32 %v1270, %v1131
    %v1764 = vsub.f32 %v1274, %v1131
    %v1765 = vsub.f32 %v1270, %v1135
    %v1766 = vsub.f32 %v1274, %v1135
    %v1767 = vsub.f32 %v1270, %v1139
    %v1768 = vsub.f32 %v1274, %v1139
    %v1769 = vsub.f32 %v1270, %v1143
    %v1770 = vsub.f32 %v1274, %v1143
    %v1771 = vsub.f32 %v1270, %v1150
    %v1772 = vsub.f32 %v1274, %v1150
    %v1773 = vsub.f32 %v1270, %v1154
    %v1774 = vsub.f32 %v1274, %v1154
    %v1775 = vsub.f32 %v1270, %v1158
    %v1776 = vsub.f32 %v1274, %v1158
    %v1777 = vsub.f32 %v1270, %v1162
    %v1778 = vsub.f32 %v1274, %v1162
    %v1779 = vsub.f32 %v1270, %v1166
    %v1780 = vsub.f32 %v1274, %v1166
    %v1781 = vsub.f32 %v1270, %v1170
    %v1782 = vsub.f32 %v1274, %v1170
    %v1783 = vsub.f32 %v1270, %v1174
    %v1784 = vsub.f32 %v1274, %v1174
    %v1785 = vsub.f32 %v1270, %v1178
    %v1786 = vsub.f32 %v1274, %v1178
    %v1787 = vsub.f32 %v1270, %v1182
    %v1788 = vsub.f32 %v1274, %v1182
    %v1789 = vsub.f32 %v1270, %v1186
    %v1790 = vsub.f32 %v1274, %v1186
    %v1791 = vsub.f32 %v1270, %v1190
    %v1792 = vsub.f32 %v1274, %v1190
    %v1793 = vsub.f32 %v1270, %v1194
    %v1794 = vsub.f32 %v1274, %v1194
    %v1795 = vsub.f32 %v1270, %v1198
    %v1796 = vsub.f32 %v1274, %v1198
    %v1797 = vsub.f32 %v1270, %v1202
    %v1798 = vsub.f32 %v1274, %v1202
    %v1799 = vsub.f32 %v1270, %v1206
    %v1800 = vsub.f32 %v1274, %v1206
    %v1801 = vsub.f32 %v1270, %v1210
    %v1802 = vsub.f32 %v1274, %v1210
    %v1803 = vmul.f32 %v1291, %v1291
    %v1804 = vmul.f32 %v1292, %v1292
    %v1805 = vmul.f32 %v1293, %v1293
    %v1806 = vmul.f32 %v1294, %v1294
    %v1807 = vmul.f32 %v1295, %v1295
    %v1808 = vmul.f32 %v1296, %v1296
    %v1809 = vmul.f32 %v1297, %v1297
    %v1810 = vmul.f32 %v1298, %v1298
    %v1811 = vmul.f32 %v1299, %v1299
    %v1812 = vmul.f32 %v1300, %v1300
    %v1813 = vmul.f32 %v1301, %v1301
    %v1814 = vmul.f32 %v1302, %v1302
    %v1815 = vmul.f32 %v1303, %v1303
    %v1816 = vmul.f32 %v1304, %v1304
    %v1817 = vmul.f32 %v1305, %v1305
    %v1818 = vmul.f32 %v1306, %v1306
    %v1819 = vmul.f32 %v1307, %v1307
    %v1820 = vmul.f32 %v1308, %v1308
    %v1821 = vmul.f32 %v1309, %v1309
    %v1822 = vmul.f32 %v1310, %v1310
    %v1823 = vmul.f32 %v1311, %v1311
    %v1824 = vmul.f32 %v1312, %v1312
    %v1825 = vmul.f32 %v1313, %v1313
    %v1826 = vmul.f32 %v1314, %v1314
    %v1827 = vmul.f32 %v1315, %v1315
    %v1828 = vmul.f32 %v1316, %v1316
    %v1829 = vmul.f32 %v1317, %v1317
    %v1830 = vmul.f32 %v1318, %v1318
    %v1831 = vmul.f32 %v1319, %v1319
    %v1832 = vmul.f32 %v1320, %v1320
    %v1833 = vmul.f32 %v1321, %v1321
    %v1834 = vmul.f32 %v1322, %v1322
    %v1835 = vmul.f32 %v1323, %v1323
    %v1836 = vmul.f32 %v1324, %v1324
    %v1837 = vmul.f32 %v1325, %v1325
    %v1838 = vmul.f32 %v1326, %v1326
    %v1839 = vmul.f32 %v1327, %v1327
    %v1840 = vmul.f32 %v1328, %v1328
    %v1841 = vmul.f32 %v1329, %v1329
    %v1842 = vmul.f32 %v1330, %v1330
    %v1843 = vmul.f32 %v1331, %v1331
    %v1844 = vmul.f32 %v1332, %v1332
    %v1845 = vmul.f32 %v1333, %v1333
    %v1846 = vmul.f32 %v1334, %v1334
    %v1847 = vmul.f32 %v1335, %v1335
    %v1848 = vmul.f32 %v1336, %v1336
    %v1849 = vmul.f32 %v1337, %v1337
    %v1850 = vmul.f32 %v1338, %v1338
    %v1851 = vmul.f32 %v1339, %v1339
    %v1852 = vmul.f32 %v1340, %v1340
    %v1853 = vmul.f32 %v1341, %v1341
    %v1854 = vmul.f32 %v1342, %v1342
    %v1855 = vmul.f32 %v1343, %v1343
    %v1856 = vmul.f32 %v1344, %v1344
    %v1857 = vmul.f32 %v1345, %v1345
    %v1858 = vmul.f32 %v1346, %v1346
    %v1859 = vmul.f32 %v1347, %v1347
    %v1860 = vmul.f32 %v1348, %v1348
    %v1861 = vmul.f32 %v1349, %v1349
    %v1862 = vmul.f32 %v1350, %v1350
    %v1863 = vmul.f32 %v1351, %v1351
    %v1864 = vmul.f32 %v1352, %v1352
    %v1865 = vmul.f32 %v1353, %v1353
    %v1866 = vmul.f32 %v1354, %v1354
    %v1867 = vmul.f32 %v1355, %v1355
    %v1868 = vmul.f32 %v1356, %v1356
    %v1869 = vmul.f32 %v1357, %v1357
    %v1870 = vmul.f32 %v1358, %v1358
    %v1871 = vmul.f32 %v1359, %v1359
    %v1872 = vmul.f32 %v1360, %v1360
    %v1873 = vmul.f32 %v1361, %v1361
    %v1874 = vmul.f32 %v1362, %v1362
    %v1875 = vmul.f32 %v1363, %v1363
    %v1876 = vmul.f32 %v1364, %v1364
    %v1877 = vmul.f32 %v1365, %v1365
    %v1878 = vmul.f32 %v1366, %v1366
    %v1879 = vmul.f32 %v1367, %v1367
    %v1880 = vmul.f32 %v1368, %v1368
    %v1881 = vmul.f32 %v1369, %v1369
    %v1882 = vmul.f32 %v1370, %v1370
    %v1883 = vmul.f32 %v1371, %v1371
    %v1884 = vmul.f32 %v1372, %v1372
    %v1885 = vmul.f32 %v1373, %v1373
    %v1886 = vmul.f32 %v1374, %v1374
    %v1887 = vmul.f32 %v1375, %v1375
    %v1888 = vmul.f32 %v1376, %v1376
    %v1889 = vmul.f32 %v1377, %v1377
    %v1890 = vmul.f32 %v1378, %v1378
    %v1891 = vmul.f32 %v1379, %v1379
    %v1892 = vmul.f32 %v1380, %v1380
    %v1893 = vmul.f32 %v1381, %v1381
    %v1894 = vmul.f32 %v1382, %v1382
    %v1895 = vmul.f32 %v1383, %v1383
    %v1896 = vmul.f32 %v1384, %v1384
    %v1897 = vmul.f32 %v1385, %v1385
    %v1898 = vmul.f32 %v1386, %v1386
    %v1899 = vmul.f32 %v1387, %v1387
    %v1900 = vmul.f32 %v1388, %v1388
    %v1901 = vmul.f32 %v1389, %v1389
    %v1902 = vmul.f32 %v1390, %v1390
    %v1903 = vmul.f32 %v1391, %v1391
    %v1904 = vmul.f32 %v1392, %v1392
    %v1905 = vmul.f32 %v1393, %v1393
    %v1906 = vmul.f32 %v1394, %v1394
    %v1907 = vmul.f32 %v1395, %v1395
    %v1908 = vmul.f32 %v1396, %v1396
    %v1909 = vmul.f32 %v1397, %v1397
    %v1910 = vmul.f32 %v1398, %v1398
    %v1911 = vmul.f32 %v1399, %v1399
    %v1912 = vmul.f32 %v1400, %v1400
    %v1913 = vmul.f32 %v1401, %v1401
    %v1914 = vmul.f32 %v1402, %v1402
    %v1915 = vmul.f32 %v1403, %v1403
    %v1916 = vmul.f32 %v1404, %v1404
    %v1917 = vmul.f32 %v1405, %v1405
    %v1918 = vmul.f32 %v1406, %v1406
    %v1919 = vmul.f32 %v1407, %v1407
    %v1920 = vmul.f32 %v1408, %v1408
    %v1921 = vmul.f32 %v1409, %v1409
    %v1922 = vmul.f32 %v1410, %v1410
    %v1923 = vmul.f32 %v1411, %v1411
    %v1924 = vmul.f32 %v1412, %v1412
    %v1925 = vmul.f32 %v1413, %v1413
    %v1926 = vmul.f32 %v1414, %v1414
    %v1927 = vmul.f32 %v1415, %v1415
    %v1928 = vmul.f32 %v1416, %v1416
    %v1929 = vmul.f32 %v1417, %v1417
    %v1930 = vmul.f32 %v1418, %v1418
    %v1931 = vmul.f32 %v1419, %v1419
    %v1932 = vmul.f32 %v1420, %v1420
    %v1933 = vmul.f32 %v1421, %v1421
    %v1934 = vmul.f32 %v1422, %v1422
    %v1935 = vmul.f32 %v1423, %v1423
    %v1936 = vmul.f32 %v1424, %v1424
    %v1937 = vmul.f32 %v1425, %v1425
    %v1938 = vmul.f32 %v1426, %v1426
    %v1939 = vmul.f32 %v1427, %v1427
    %v1940 = vmul.f32 %v1428, %v1428
    %v1941 = vmul.f32 %v1429, %v1429
    %v1942 = vmul.f32 %v1430, %v1430
    %v1943 = vmul.f32 %v1431, %v1431
    %v1944 = vmul.f32 %v1432, %v1432
    %v1945 = vmul.f32 %v1433, %v1433
    %v1946 = vmul.f32 %v1434, %v1434
    %v1947 = vmul.f32 %v1435, %v1435
    %v1948 = vmul.f32 %v1436, %v1436
    %v1949 = vmul.f32 %v1437, %v1437
    %v1950 = vmul.f32 %v1438, %v1438
    %v1951 = vmul.f32 %v1439, %v1439
    %v1952 = vmul.f32 %v1440, %v1440
    %v1953 = vmul.f32 %v1441, %v1441
    %v1954 = vmul.f32 %v1442, %v1442
    %v1955 = vmul.f32 %v1443, %v1443
    %v1956 = vmul.f32 %v1444, %v1444
    %v1957 = vmul.f32 %v1445, %v1445
    %v1958 = vmul.f32 %v1446, %v1446
    %v1959 = vmul.f32 %v1447, %v1447
    %v1960 = vmul.f32 %v1448, %v1448
    %v1961 = vmul.f32 %v1449, %v1449
    %v1962 = vmul.f32 %v1450, %v1450
    %v1963 = vmul.f32 %v1451, %v1451
    %v1964 = vmul.f32 %v1452, %v1452
    %v1965 = vmul.f32 %v1453, %v1453
    %v1966 = vmul.f32 %v1454, %v1454
    %v1967 = vmul.f32 %v1455, %v1455
    %v1968 = vmul.f32 %v1456, %v1456
    %v1969 = vmul.f32 %v1457, %v1457
    %v1970 = vmul.f32 %v1458, %v1458
    %v1971 = vmul.f32 %v1459, %v1459
    %v1972 = vmul.f32 %v1460, %v1460
    %v1973 = vmul.f32 %v1461, %v1461
    %v1974 = vmul.f32 %v1462, %v1462
    %v1975 = vmul.f32 %v1463, %v1463
    %v1976 = vmul.f32 %v1464, %v1464
    %v1977 = vmul.f32 %v1465, %v1465
    %v1978 = vmul.f32 %v1466, %v1466
    %v1979 = vmul.f32 %v1467, %v1467
    %v1980 = vmul.f32 %v1468, %v1468
    %v1981 = vmul.f32 %v1469, %v1469
    %v1982 = vmul.f32 %v1470, %v1470
    %v1983 = vmul.f32 %v1471, %v1471
    %v1984 = vmul.f32 %v1472, %v1472
    %v1985 = vmul.f32 %v1473, %v1473
    %v1986 = vmul.f32 %v1474, %v1474
    %v1987 = vmul.f32 %v1475, %v1475
    %v1988 = vmul.f32 %v1476, %v1476
    %v1989 = vmul.f32 %v1477, %v1477
    %v1990 = vmul.f32 %v1478, %v1478
    %v1991 = vmul.f32 %v1479, %v1479
    %v1992 = vmul.f32 %v1480, %v1480
    %v1993 = vmul.f32 %v1481, %v1481
    %v1994 = vmul.f32 %v1482, %v1482
    %v1995 = vmul.f32 %v1483, %v1483
    %v1996 = vmul.f32 %v1484, %v1484
    %v1997 = vmul.f32 %v1485, %v1485
    %v1998 = vmul.f32 %v1486, %v1486
    %v1999 = vmul.f32 %v1487, %v1487
    %v2000 = vmul.f32 %v1488, %v1488
    %v2001 = vmul.f32 %v1489, %v1489
    %v2002 = vmul.f32 %v1490, %v1490
    %v2003 = vmul.f32 %v1491, %v1491
    %v2004 = vmul.f32 %v1492, %v1492
    %v2005 = vmul.f32 %v1493, %v1493
    %v2006 = vmul.f32 %v1494, %v1494
    %v2007 = vmul.f32 %v1495, %v1495
    %v2008 = vmul.f32 %v1496, %v1496
    %v2009 = vmul.f32 %v1497, %v1497
    %v2010 = vmul.f32 %v1498, %v1498
    %v2011 = vmul.f32 %v1499, %v1499
    %v2012 = vmul.f32 %v1500, %v1500
    %v2013 = vmul.f32 %v1501, %v1501
    %v2014 = vmul.f32 %v1502, %v1502
    %v2015 = vmul.f32 %v1503, %v1503
    %v2016 = vmul.f32 %v1504, %v1504
    %v2017 = vmul.f32 %v1505, %v1505
    %v2018 = vmul.f32 %v1506, %v1506
    %v2019 = vmul.f32 %v1507, %v1507
    %v2020 = vmul.f32 %v1508, %v1508
    %v2021 = vmul.f32 %v1509, %v1509
    %v2022 = vmul.f32 %v1510, %v1510
    %v2023 = vmul.f32 %v1511, %v1511
    %v2024 = vmul.f32 %v1512, %v1512
    %v2025 = vmul.f32 %v1513, %v1513
    %v2026 = vmul.f32 %v1514, %v1514
    %v2027 = vmul.f32 %v1515, %v1515
    %v2028 = vmul.f32 %v1516, %v1516
    %v2029 = vmul.f32 %v1517, %v1517
    %v2030 = vmul.f32 %v1518, %v1518
    %v2031 = vmul.f32 %v1519, %v1519
    %v2032 = vmul.f32 %v1520, %v1520
    %v2033 = vmul.f32 %v1521, %v1521
    %v2034 = vmul.f32 %v1522, %v1522
    %v2035 = vmul.f32 %v1523, %v1523
    %v2036 = vmul.f32 %v1524, %v1524
    %v2037 = vmul.f32 %v1525, %v1525
    %v2038 = vmul.f32 %v1526, %v1526
    %v2039 = vmul.f32 %v1527, %v1527
    %v2040 = vmul.f32 %v1528, %v1528
    %v2041 = vmul.f32 %v1529, %v1529
    %v2042 = vmul.f32 %v1530, %v1530
    %v2043 = vmul.f32 %v1531, %v1531
    %v2044 = vmul.f32 %v1532, %v1532
    %v2045 = vmul.f32 %v1533, %v1533
    %v2046 = vmul.f32 %v1534, %v1534
    %v2047 = vmul.f32 %v1535, %v1535
    %v2048 = vmul.f32 %v1536, %v1536
    %v2049 = vmul.f32 %v1537, %v1537
    %v2050 = vmul.f32 %v1538, %v1538
    %v2051 = vmul.f32 %v1539, %v1539
    %v2052 = vmul.f32 %v1540, %v1540
    %v2053 = vmul.f32 %v1541, %v1541
    %v2054 = vmul.f32 %v1542, %v1542
    %v2055 = vmul.f32 %v1543, %v1543
    %v2056 = vmul.f32 %v1544, %v1544
    %v2057 = vmul.f32 %v1545, %v1545
    %v2058 = vmul.f32 %v1546, %v1546
    %v2059 = vmul.f32 %v1547, %v1547
    %v2060 = vmul.f32 %v1548, %v1548
    %v2061 = vmul.f32 %v1549, %v1549
    %v2062 = vmul.f32 %v1550, %v1550
    %v2063 = vmul.f32 %v1551, %v1551
    %v2064 = vmul.f32 %v1552, %v1552
    %v2065 = vmul.f32 %v1553, %v1553
    %v2066 = vmul.f32 %v1554, %v1554
    %v2067 = vmul.f32 %v1555, %v1555
    %v2068 = vmul.f32 %v1556, %v1556
    %v2069 = vmul.f32 %v1557, %v1557
    %v2070 = vmul.f32 %v1558, %v1558
    %v2071 = vmul.f32 %v1559, %v1559
    %v2072 = vmul.f32 %v1560, %v1560
    %v2073 = vmul.f32 %v1561, %v1561
    %v2074 = vmul.f32 %v1562, %v1562
    %v2075 = vmul.f32 %v1563, %v1563
    %v2076 = vmul.f32 %v1564, %v1564
    %v2077 = vmul.f32 %v1565, %v1565
    %v2078 = vmul.f32 %v1566, %v1566
    %v2079 = vmul.f32 %v1567, %v1567
    %v2080 = vmul.f32 %v1568, %v1568
    %v2081 = vmul.f32 %v1569, %v1569
    %v2082 = vmul.f32 %v1570, %v1570
    %v2083 = vmul.f32 %v1571, %v1571
    %v2084 = vmul.f32 %v1572, %v1572
    %v2085 = vmul.f32 %v1573, %v1573
    %v2086 = vmul.f32 %v1574, %v1574
    %v2087 = vmul.f32 %v1575, %v1575
    %v2088 = vmul.f32 %v1576, %v1576
    %v2089 = vmul.f32 %v1577, %v1577
    %v2090 = vmul.f32 %v1578, %v1578
    %v2091 = vmul.f32 %v1579, %v1579
    %v2092 = vmul.f32 %v1580, %v1580
    %v2093 = vmul.f32 %v1581, %v1581
    %v2094 = vmul.f32 %v1582, %v1582
    %v2095 = vmul.f32 %v1583, %v1583
    %v2096 = vmul.f32 %v1584, %v1584
    %v2097 = vmul.f32 %v1585, %v1585
    %v2098 = vmul.f32 %v1586, %v1586
    %v2099 = vmul.f32 %v1587, %v1587
    %v2100 = vmul.f32 %v1588, %v1588
    %v2101 = vmul.f32 %v1589, %v1589
    %v2102 = vmul.f32 %v1590, %v1590
    %v2103 = vmul.f32 %v1591, %v1591
    %v2104 = vmul.f32 %v1592, %v1592
    %v2105 = vmul.f32 %v1593, %v1593
    %v2106 = vmul.f32 %v1594, %v1594
    %v2107 = vmul.f32 %v1595, %v1595
    %v2108 = vmul.f32 %v1596, %v1596
    %v2109 = vmul.f32 %v1597, %v1597
    %v2110 = vmul.f32 %v1598, %v1598
    %v2111 = vmul.f32 %v1599, %v1599
    %v2112 = vmul.f32 %v1600, %v1600
    %v2113 = vmul.f32 %v1601, %v1601
    %v2114 = vmul.f32 %v1602, %v1602
    %v2115 = vmul.f32 %v1603, %v1603
    %v2116 = vmul.f32 %v1604, %v1604
    %v2117 = vmul.f32 %v1605, %v1605
    %v2118 = vmul.f32 %v1606, %v1606
    %v2119 = vmul.f32 %v1607, %v1607
    %v2120 = vmul.f32 %v1608, %v1608
    %v2121 = vmul.f32 %v1609, %v1609
    %v2122 = vmul.f32 %v1610, %v1610
    %v2123 = vmul.f32 %v1611, %v1611
    %v2124 = vmul.f32 %v1612, %v1612
    %v2125 = vmul.f32 %v1613, %v1613
    %v2126 = vmul.f32 %v1614, %v1614
    %v2127 = vmul.f32 %v1615, %v1615
    %v2128 = vmul.f32 %v1616, %v1616
    %v2129 = vmul.f32 %v1617, %v1617
    %v2130 = vmul.f32 %v1618, %v1618
    %v2131 = vmul.f32 %v1619, %v1619
    %v2132 = vmul.f32 %v1620, %v1620
    %v2133 = vmul.f32 %v1621, %v1621
    %v2134 = vmul.f32 %v1622, %v1622
    %v2135 = vmul.f32 %v1623, %v1623
    %v2136 = vmul.f32 %v1624, %v1624
    %v2137 = vmul.f32 %v1625, %v1625
    %v2138 = vmul.f32 %v1626, %v1626
    %v2139 = vmul.f32 %v1627, %v1627
    %v2140 = vmul.f32 %v1628, %v1628
    %v2141 = vmul.f32 %v1629, %v1629
    %v2142 = vmul.f32 %v1630, %v1630
    %v2143 = vmul.f32 %v1631, %v1631
    %v2144 = vmul.f32 %v1632, %v1632
    %v2145 = vmul.f32 %v1633, %v1633
    %v2146 = vmul.f32 %v1634, %v1634
    %v2147 = vmul.f32 %v1635, %v1635
    %v2148 = vmul.f32 %v1636, %v1636
    %v2149 = vmul.f32 %v1637, %v1637
    %v2150 = vmul.f32 %v1638, %v1638
    %v2151 = vmul.f32 %v1639, %v1639
    %v2152 = vmul.f32 %v1640, %v1640
    %v2153 = vmul.f32 %v1641, %v1641
    %v2154 = vmul.f32 %v1642, %v1642
    %v2155 = vmul.f32 %v1643, %v1643
    %v2156 = vmul.f32 %v1644, %v1644
    %v2157 = vmul.f32 %v1645, %v1645
    %v2158 = vmul.f32 %v1646, %v1646
    %v2159 = vmul.f32 %v1647, %v1647
    %v2160 = vmul.f32 %v1648, %v1648
    %v2161 = vmul.f32 %v1649, %v1649
    %v2162 = vmul.f32 %v1650, %v1650
    %v2163 = vmul.f32 %v1651, %v1651
    %v2164 = vmul.f32 %v1652, %v1652
    %v2165 = vmul.f32 %v1653, %v1653
    %v2166 = vmul.f32 %v1654, %v1654
    %v2167 = vmul.f32 %v1655, %v1655
    %v2168 = vmul.f32 %v1656, %v1656
    %v2169 = vmul.f32 %v1657, %v1657
    %v2170 = vmul.f32 %v1658, %v1658
    %v2171 = vmul.f32 %v1659, %v1659
    %v2172 = vmul.f32 %v1660, %v1660
    %v2173 = vmul.f32 %v1661, %v1661
    %v2174 = vmul.f32 %v1662, %v1662
    %v2175 = vmul.f32 %v1663, %v1663
    %v2176 = vmul.f32 %v1664, %v1664
    %v2177 = vmul.f32 %v1665, %v1665
    %v2178 = vmul.f32 %v1666, %v1666
    %v2179 = vmul.f32 %v1667, %v1667
    %v2180 = vmul.f32 %v1668, %v1668
    %v2181 = vmul.f32 %v1669, %v1669
    %v2182 = vmul.f32 %v1670, %v1670
    %v2183 = vmul.f32 %v1671, %v1671
    %v2184 = vmul.f32 %v1672, %v1672
    %v2185 = vmul.f32 %v1673, %v1673
    %v2186 = vmul.f32 %v1674, %v1674
    %v2187 = vmul.f32 %v1675, %v1675
    %v2188 = vmul.f32 %v1676, %v1676
    %v2189 = vmul.f32 %v1677, %v1677
    %v2190 = vmul.f32 %v1678, %v1678
    %v2191 = vmul.f32 %v1679, %v1679
    %v2192 = vmul.f32 %v1680, %v1680
    %v2193 = vmul.f32 %v1681, %v1681
    %v2194 = vmul.f32 %v1682, %v1682
    %v2195 = vmul.f32 %v1683, %v1683
    %v2196 = vmul.f32 %v1684, %v1684
    %v2197 = vmul.f32 %v1685, %v1685
    %v2198 = vmul.f32 %v1686, %v1686
    %v2199 = vmul.f32 %v1687, %v1687
    %v2200 = vmul.f32 %v1688, %v1688
    %v2201 = vmul.f32 %v1689, %v1689
    %v2202 = vmul.f32 %v1690, %v1690
    %v2203 = vmul.f32 %v1691, %v1691
    %v2204 = vmul.f32 %v1692, %v1692
    %v2205 = vmul.f32 %v1693, %v1693
    %v2206 = vmul.f32 %v1694, %v1694
    %v2207 = vmul.f32 %v1695, %v1695
    %v2208 = vmul.f32 %v1696, %v1696
    %v2209 = vmul.f32 %v1697, %v1697
    %v2210 = vmul.f32 %v1698, %v1698
    %v2211 = vmul.f32 %v1699, %v1699
    %v2212 = vmul.f32 %v1700, %v1700
    %v2213 = vmul.f32 %v1701, %v1701
    %v2214 = vmul.f32 %v1702, %v1702
    %v2215 = vmul.f32 %v1703, %v1703
    %v2216 = vmul.f32 %v1704, %v1704
    %v2217 = vmul.f32 %v1705, %v1705
    %v2218 = vmul.f32 %v1706, %v1706
    %v2219 = vmul.f32 %v1707, %v1707
    %v2220 = vmul.f32 %v1708, %v1708
    %v2221 = vmul.f32 %v1709, %v1709
    %v2222 = vmul.f32 %v1710, %v1710
    %v2223 = vmul.f32 %v1711, %v1711
    %v2224 = vmul.f32 %v1712, %v1712
    %v2225 = vmul.f32 %v1713, %v1713
    %v2226 = vmul.f32 %v1714, %v1714
    %v2227 = vmul.f32 %v1715, %v1715
    %v2228 = vmul.f32 %v1716, %v1716
    %v2229 = vmul.f32 %v1717, %v1717
    %v2230 = vmul.f32 %v1718, %v1718
    %v2231 = vmul.f32 %v1719, %v1719
    %v2232 = vmul.f32 %v1720, %v1720
    %v2233 = vmul.f32 %v1721, %v1721
    %v2234 = vmul.f32 %v1722, %v1722
    %v2235 = vmul.f32 %v1723, %v1723
    %v2236 = vmul.f32 %v1724, %v1724
    %v2237 = vmul.f32 %v1725, %v1725
    %v2238 = vmul.f32 %v1726, %v1726
    %v2239 = vmul.f32 %v1727, %v1727
    %v2240 = vmul.f32 %v1728, %v1728
    %v2241 = vmul.f32 %v1729, %v1729
    %v2242 = vmul.f32 %v1730, %v1730
    %v2243 = vmul.f32 %v1731, %v1731
    %v2244 = vmul.f32 %v1732, %v1732
    %v2245 = vmul.f32 %v1733, %v1733
    %v2246 = vmul.f32 %v1734, %v1734
    %v2247 = vmul.f32 %v1735, %v1735
    %v2248 = vmul.f32 %v1736, %v1736
    %v2249 = vmul.f32 %v1737, %v1737
    %v2250 = vmul.f32 %v1738, %v1738
    %v2251 = vmul.f32 %v1739, %v1739
    %v2252 = vmul.f32 %v1740, %v1740
    %v2253 = vmul.f32 %v1741, %v1741
    %v2254 = vmul.f32 %v1742, %v1742
    %v2255 = vmul.f32 %v1743, %v1743
    %v2256 = vmul.f32 %v1744, %v1744
    %v2257 = vmul.f32 %v1745, %v1745
    %v2258 = vmul.f32 %v1746, %v1746
    %v2259 = vmul.f32 %v1747, %v1747
    %v2260 = vmul.f32 %v1748, %v1748
    %v2261 = vmul.f32 %v1749, %v1749
    %v2262 = vmul.f32 %v1750, %v1750
    %v2263 = vmul.f32 %v1751, %v1751
    %v2264 = vmul.f32 %v1752, %v1752
    %v2265 = vmul.f32 %v1753, %v1753
    %v2266 = vmul.f32 %v1754, %v1754
    %v2267 = vmul.f32 %v1755, %v1755
    %v2268 = vmul.f32 %v1756, %v1756
    %v2269 = vmul.f32 %v1757, %v1757
    %v2270 = vmul.f32 %v1758, %v1758
    %v2271 = vmul.f32 %v1759, %v1759
    %v2272 = vmul.f32 %v1760, %v1760
    %v2273 = vmul.f32 %v1761, %v1761
    %v2274 = vmul.f32 %v1762, %v1762
    %v2275 = vmul.f32 %v1763, %v1763
    %v2276 = vmul.f32 %v1764, %v1764
    %v2277 = vmul.f32 %v1765, %v1765
    %v2278 = vmul.f32 %v1766, %v1766
    %v2279 = vmul.f32 %v1767, %v1767
    %v2280 = vmul.f32 %v1768, %v1768
    %v2281 = vmul.f32 %v1769, %v1769
    %v2282 = vmul.f32 %v1770, %v1770
    %v2283 = vmul.f32 %v1771, %v1771
    %v2284 = vmul.f32 %v1772, %v1772
    %v2285 = vmul.f32 %v1773, %v1773
    %v2286 = vmul.f32 %v1774, %v1774
    %v2287 = vmul.f32 %v1775, %v1775
    %v2288 = vmul.f32 %v1776, %v1776
    %v2289 = vmul.f32 %v1777, %v1777
    %v2290 = vmul.f32 %v1778, %v1778
    %v2291 = vmul.f32 %v1779, %v1779
    %v2292 = vmul.f32 %v1780, %v1780
    %v2293 = vmul.f32 %v1781, %v1781
    %v2294 = vmul.f32 %v1782, %v1782
    %v2295 = vmul.f32 %v1783, %v1783
    %v2296 = vmul.f32 %v1784, %v1784
    %v2297 = vmul.f32 %v1785, %v1785
    %v2298 = vmul.f32 %v1786, %v1786
    %v2299 = vmul.f32 %v1787, %v1787
    %v2300 = vmul.f32 %v1788, %v1788
    %v2301 = vmul.f32 %v1789, %v1789
    %v2302 = vmul.f32 %v1790, %v1790
    %v2303 = vmul.f32 %v1791, %v1791
    %v2304 = vmul.f32 %v1792, %v1792
    %v2305 = vmul.f32 %v1793, %v1793
    %v2306 = vmul.f32 %v1794, %v1794
    %v2307 = vmul.f32 %v1795, %v1795
    %v2308 = vmul.f32 %v1796, %v1796
    %v2309 = vmul.f32 %v1797, %v1797
    %v2310 = vmul.f32 %v1798, %v1798
    %v2311 = vmul.f32 %v1799, %v1799
    %v2312 = vmul.f32 %v1800, %v1800
    %v2313 = vmul.f32 %v1801, %v1801
    %v2314 = vmul.f32 %v1802, %v1802
    %v2315 = vmul.f32 %v1803, 0.035677407
    %v2316 = vmul.f32 %v1804, 0.035677407
    %v2317 = vmul.f32 %v1805, 0.035677407
    %v2318 = vmul.f32 %v1806, 0.035677407
    %v2319 = vmul.f32 %v1807, 0.035677407
    %v2320 = vmul.f32 %v1808, 0.035677407
    %v2321 = vmul.f32 %v1809, 0.035677407
    %v2322 = vmul.f32 %v1810, 0.035677407
    %v2323 = vmul.f32 %v1811, 0.035677407
    %v2324 = vmul.f32 %v1812, 0.035677407
    %v2325 = vmul.f32 %v1813, 0.035677407
    %v2326 = vmul.f32 %v1814, 0.035677407
    %v2327 = vmul.f32 %v1815, 0.035677407
    %v2328 = vmul.f32 %v1816, 0.035677407
    %v2329 = vmul.f32 %v1817, 0.035677407
    %v2330 = vmul.f32 %v1818, 0.035677407
    %v2331 = vmul.f32 %v1819, 0.035677407
    %v2332 = vmul.f32 %v1820, 0.035677407
    %v2333 = vmul.f32 %v1821, 0.035677407
    %v2334 = vmul.f32 %v1822, 0.035677407
    %v2335 = vmul.f32 %v1823, 0.035677407
    %v2336 = vmul.f32 %v1824, 0.035677407
    %v2337 = vmul.f32 %v1825, 0.035677407
    %v2338 = vmul.f32 %v1826, 0.035677407
    %v2339 = vmul.f32 %v1827, 0.035677407
    %v2340 = vmul.f32 %v1828, 0.035677407
    %v2341 = vmul.f32 %v1829, 0.035677407
    %v2342 = vmul.f32 %v1830, 0.035677407
    %v2343 = vmul.f32 %v1831, 0.035677407
    %v2344 = vmul.f32 %v1832, 0.035677407
    %v2345 = vmul.f32 %v1833, 0.035677407
    %v2346 = vmul.f32 %v1834, 0.035677407
    %v2347 = vmul.f32 %v1835, 0.035677407
    %v2348 = vmul.f32 %v1836, 0.035677407
    %v2349 = vmul.f32 %v1837, 0.035677407
    %v2350 = vmul.f32 %v1838, 0.035677407
    %v2351 = vmul.f32 %v1839, 0.035677407
    %v2352 = vmul.f32 %v1840, 0.035677407
    %v2353 = vmul.f32 %v1841, 0.035677407
    %v2354 = vmul.f32 %v1842, 0.035677407
    %v2355 = vmul.f32 %v1843, 0.035677407
    %v2356 = vmul.f32 %v1844, 0.035677407
    %v2357 = vmul.f32 %v1845, 0.035677407
    %v2358 = vmul.f32 %v1846, 0.035677407
    %v2359 = vmul.f32 %v1847, 0.035677407
    %v2360 = vmul.f32 %v1848, 0.035677407
    %v2361 = vmul.f32 %v1849, 0.035677407
    %v2362 = vmul.f32 %v1850, 0.035677407
    %v2363 = vmul.f32 %v1851, 0.035677407
    %v2364 = vmul.f32 %v1852, 0.035677407
    %v2365 = vmul.f32 %v1853, 0.035677407
    %v2366 = vmul.f32 %v1854, 0.035677407
    %v2367 = vmul.f32 %v1855, 0.035677407
    %v2368 = vmul.f32 %v1856, 0.035677407
    %v2369 = vmul.f32 %v1857, 0.035677407
    %v2370 = vmul.f32 %v1858, 0.035677407
    %v2371 = vmul.f32 %v1859, 0.035677407
    %v2372 = vmul.f32 %v1860, 0.035677407
    %v2373 = vmul.f32 %v1861, 0.035677407
    %v2374 = vmul.f32 %v1862, 0.035677407
    %v2375 = vmul.f32 %v1863, 0.035677407
    %v2376 = vmul.f32 %v1864, 0.035677407
    %v2377 = vmul.f32 %v1865, 0.035677407
    %v2378 = vmul.f32 %v1866, 0.035677407
    %v2379 = vmul.f32 %v1867, 0.035677407
    %v2380 = vmul.f32 %v1868, 0.035677407
    %v2381 = vmul.f32 %v1869, 0.035677407
    %v2382 = vmul.f32 %v1870, 0.035677407
    %v2383 = vmul.f32 %v1871, 0.035677407
    %v2384 = vmul.f32 %v1872, 0.035677407
    %v2385 = vmul.f32 %v1873, 0.035677407
    %v2386 = vmul.f32 %v1874, 0.035677407
    %v2387 = vmul.f32 %v1875, 0.035677407
    %v2388 = vmul.f32 %v1876, 0.035677407
    %v2389 = vmul.f32 %v1877, 0.035677407
    %v2390 = vmul.f32 %v1878, 0.035677407
    %v2391 = vmul.f32 %v1879, 0.035677407
    %v2392 = vmul.f32 %v1880, 0.035677407
    %v2393 = vmul.f32 %v1881, 0.035677407
    %v2394 = vmul.f32 %v1882, 0.035677407
    %v2395 = vmul.f32 %v1883, 0.035677407
    %v2396 = vmul.f32 %v1884, 0.035677407
    %v2397 = vmul.f32 %v1885, 0.035677407
    %v2398 = vmul.f32 %v1886, 0.035677407
    %v2399 = vmul.f32 %v1887, 0.035677407
    %v2400 = vmul.f32 %v1888, 0.035677407
    %v2401 = vmul.f32 %v1889, 0.035677407
    %v2402 = vmul.f32 %v1890, 0.035677407
    %v2403 = vmul.f32 %v1891, 0.035677407
    %v2404 = vmul.f32 %v1892, 0.035677407
    %v2405 = vmul.f32 %v1893, 0.035677407
    %v2406 = vmul.f32 %v1894, 0.035677407
    %v2407 = vmul.f32 %v1895, 0.035677407
    %v2408 = vmul.f32 %v1896, 0.035677407
    %v2409 = vmul.f32 %v1897, 0.035677407
    %v2410 = vmul.f32 %v1898, 0.035677407
    %v2411 = vmul.f32 %v1899, 0.035677407
    %v2412 = vmul.f32 %v1900, 0.035677407
    %v2413 = vmul.f32 %v1901, 0.035677407
    %v2414 = vmul.f32 %v1902, 0.035677407
    %v2415 = vmul.f32 %v1903, 0.035677407
    %v2416 = vmul.f32 %v1904, 0.035677407
    %v2417 = vmul.f32 %v1905, 0.035677407
    %v2418 = vmul.f32 %v1906, 0.035677407
    %v2419 = vmul.f32 %v1907, 0.035677407
    %v2420 = vmul.f32 %v1908, 0.035677407
    %v2421 = vmul.f32 %v1909, 0.035677407
    %v2422 = vmul.f32 %v1910, 0.035677407
    %v2423 = vmul.f32 %v1911, 0.035677407
    %v2424 = vmul.f32 %v1912, 0.035677407
    %v2425 = vmul.f32 %v1913, 0.035677407
    %v2426 = vmul.f32 %v1914, 0.035677407
    %v2427 = vmul.f32 %v1915, 0.035677407
    %v2428 = vmul.f32 %v1916, 0.035677407
    %v2429 = vmul.f32 %v1917, 0.035677407
    %v2430 = vmul.f32 %v1918, 0.035677407
    %v2431 = vmul.f32 %v1919, 0.035677407
    %v2432 = vmul.f32 %v1920, 0.035677407
    %v2433 = vmul.f32 %v1921, 0.035677407
    %v2434 = vmul.f32 %v1922, 0.035677407
    %v2435 = vmul.f32 %v1923, 0.035677407
    %v2436 = vmul.f32 %v1924, 0.035677407
    %v2437 = vmul.f32 %v1925, 0.035677407
    %v2438 = vmul.f32 %v1926, 0.035677407
    %v2439 = vmul.f32 %v1927, 0.035677407
    %v2440 = vmul.f32 %v1928, 0.035677407
    %v2441 = vmul.f32 %v1929, 0.035677407
    %v2442 = vmul.f32 %v1930, 0.035677407
    %v2443 = vmul.f32 %v1931, 0.035677407
    %v2444 = vmul.f32 %v1932, 0.035677407
    %v2445 = vmul.f32 %v1933, 0.035677407
    %v2446 = vmul.f32 %v1934, 0.035677407
    %v2447 = vmul.f32 %v1935, 0.035677407
    %v2448 = vmul.f32 %v1936, 0.035677407
    %v2449 = vmul.f32 %v1937, 0.035677407
    %v2450 = vmul.f32 %v1938, 0.035677407
    %v2451 = vmul.f32 %v1939, 0.035677407
    %v2452 = vmul.f32 %v1940, 0.035677407
    %v2453 = vmul.f32 %v1941, 0.035677407
    %v2454 = vmul.f32 %v1942, 0.035677407
    %v2455 = vmul.f32 %v1943, 0.035677407
    %v2456 = vmul.f32 %v1944, 0.035677407
    %v2457 = vmul.f32 %v1945, 0.035677407
    %v2458 = vmul.f32 %v1946, 0.035677407
    %v2459 = vmul.f32 %v1947, 0.035677407
    %v2460 = vmul.f32 %v1948, 0.035677407
    %v2461 = vmul.f32 %v1949, 0.035677407
    %v2462 = vmul.f32 %v1950, 0.035677407
    %v2463 = vmul.f32 %v1951, 0.035677407
    %v2464 = vmul.f32 %v1952, 0.035677407
    %v2465 = vmul.f32 %v1953, 0.035677407
    %v2466 = vmul.f32 %v1954, 0.035677407
    %v2467 = vmul.f32 %v1955, 0.035677407
    %v2468 = vmul.f32 %v1956, 0.035677407
    %v2469 = vmul.f32 %v1957, 0.035677407
    %v2470 = vmul.f32 %v1958, 0.035677407
    %v2471 = vmul.f32 %v1959, 0.035677407
    %v2472 = vmul.f32 %v1960, 0.035677407
    %v2473 = vmul.f32 %v1961, 0.035677407
    %v2474 = vmul.f32 %v1962, 0.035677407
    %v2475 = vmul.f32 %v1963, 0.035677407
    %v2476 = vmul.f32 %v1964, 0.035677407
    %v2477 = vmul.f32 %v1965, 0.035677407
    %v2478 = vmul.f32 %v1966, 0.035677407
    %v2479 = vmul.f32 %v1967, 0.035677407
    %v2480 = vmul.f32 %v1968, 0.035677407
    %v2481 = vmul.f32 %v1969, 0.035677407
    %v2482 = vmul.f32 %v1970, 0.035677407
    %v2483 = vmul.f32 %v1971, 0.035677407
    %v2484 = vmul.f32 %v1972, 0.035677407
    %v2485 = vmul.f32 %v1973, 0.035677407
    %v2486 = vmul.f32 %v1974, 0.035677407
    %v2487 = vmul.f32 %v1975, 0.035677407
    %v2488 = vmul.f32 %v1976, 0.035677407
    %v2489 = vmul.f32 %v1977, 0.035677407
    %v2490 = vmul.f32 %v1978, 0.035677407
    %v2491 = vmul.f32 %v1979, 0.035677407
    %v2492 = vmul.f32 %v1980, 0.035677407
    %v2493 = vmul.f32 %v1981, 0.035677407
    %v2494 = vmul.f32 %v1982, 0.035677407
    %v2495 = vmul.f32 %v1983, 0.035677407
    %v2496 = vmul.f32 %v1984, 0.035677407
    %v2497 = vmul.f32 %v1985, 0.035677407
    %v2498 = vmul.f32 %v1986, 0.035677407
    %v2499 = vmul.f32 %v1987, 0.035677407
    %v2500 = vmul.f32 %v1988, 0.035677407
    %v2501 = vmul.f32 %v1989, 0.035677407
    %v2502 = vmul.f32 %v1990, 0.035677407
    %v2503 = vmul.f32 %v1991, 0.035677407
    %v2504 = vmul.f32 %v1992, 0.035677407
    %v2505 = vmul.f32 %v1993, 0.035677407
    %v2506 = vmul.f32 %v1994, 0.035677407
    %v2507 = vmul.f32 %v1995, 0.035677407
    %v2508 = vmul.f32 %v1996, 0.035677407
    %v2509 = vmul.f32 %v1997, 0.035677407
    %v2510 = vmul.f32 %v1998, 0.035677407
    %v2511 = vmul.f32 %v1999, 0.035677407
    %v2512 = vmul.f32 %v2000, 0.035677407
    %v2513 = vmul.f32 %v2001, 0.035677407
    %v2514 = vmul.f32 %v2002, 0.035677407
    %v2515 = vmul.f32 %v2003, 0.035677407
    %v2516 = vmul.f32 %v2004, 0.035677407
    %v2517 = vmul.f32 %v2005, 0.035677407
    %v2518 = vmul.f32 %v2006, 0.035677407
    %v2519 = vmul.f32 %v2007, 0.035677407
    %v2520 = vmul.f32 %v2008, 0.035677407
    %v2521 = vmul.f32 %v2009, 0.035677407
    %v2522 = vmul.f32 %v2010, 0.035677407
    %v2523 = vmul.f32 %v2011, 0.035677407
    %v2524 = vmul.f32 %v2012, 0.035677407
    %v2525 = vmul.f32 %v2013, 0.035677407
    %v2526 = vmul.f32 %v2014, 0.035677407
    %v2527 = vmul.f32 %v2015, 0.035677407
    %v2528 = vmul.f32 %v2016, 0.035677407
    %v2529 = vmul.f32 %v2017, 0.035677407
    %v2530 = vmul.f32 %v2018, 0.035677407
    %v2531 = vmul.f32 %v2019, 0.035677407
    %v2532 = vmul.f32 %v2020, 0.035677407
    %v2533 = vmul.f32 %v2021, 0.035677407
    %v2534 = vmul.f32 %v2022, 0.035677407
    %v2535 = vmul.f32 %v2023, 0.035677407
    %v2536 = vmul.f32 %v2024, 0.035677407
    %v2537 = vmul.f32 %v2025, 0.035677407
    %v2538 = vmul.f32 %v2026, 0.035677407
    %v2539 = vmul.f32 %v2027, 0.035677407
    %v2540 = vmul.f32 %v2028, 0.035677407
    %v2541 = vmul.f32 %v2029, 0.035677407
    %v2542 = vmul.f32 %v2030, 0.035677407
    %v2543 = vmul.f32 %v2031, 0.035677407
    %v2544 = vmul.f32 %v2032, 0.035677407
    %v2545 = vmul.f32 %v2033, 0.035677407
    %v2546 = vmul.f32 %v2034, 0.035677407
    %v2547 = vmul.f32 %v2035, 0.035677407
    %v2548 = vmul.f32 %v2036, 0.035677407
    %v2549 = vmul.f32 %v2037, 0.035677407
    %v2550 = vmul.f32 %v2038, 0.035677407
    %v2551 = vmul.f32 %v2039, 0.035677407
    %v2552 = vmul.f32 %v2040, 0.035677407
    %v2553 = vmul.f32 %v2041, 0.035677407
    %v2554 = vmul.f32 %v2042, 0.035677407
    %v2555 = vmul.f32 %v2043, 0.035677407
    %v2556 = vmul.f32 %v2044, 0.035677407
    %v2557 = vmul.f32 %v2045, 0.035677407
    %v2558 = vmul.f32 %v2046, 0.035677407
    %v2559 = vmul.f32 %v2047, 0.035677407
    %v2560 = vmul.f32 %v2048, 0.035677407
    %v2561 = vmul.f32 %v2049, 0.035677407
    %v2562 = vmul.f32 %v2050, 0.035677407
    %v2563 = vmul.f32 %v2051, 0.035677407
    %v2564 = vmul.f32 %v2052, 0.035677407
    %v2565 = vmul.f32 %v2053, 0.035677407
    %v2566 = vmul.f32 %v2054, 0.035677407
    %v2567 = vmul.f32 %v2055, 0.035677407
    %v2568 = vmul.f32 %v2056, 0.035677407
    %v2569 = vmul.f32 %v2057, 0.035677407
    %v2570 = vmul.f32 %v2058, 0.035677407
    %v2571 = vmul.f32 %v2059, 0.035677407
    %v2572 = vmul.f32 %v2060, 0.035677407
    %v2573 = vmul.f32 %v2061, 0.035677407
    %v2574 = vmul.f32 %v2062, 0.035677407
    %v2575 = vmul.f32 %v2063, 0.035677407
    %v2576 = vmul.f32 %v2064, 0.035677407
    %v2577 = vmul.f32 %v2065, 0.035677407
    %v2578 = vmul.f32 %v2066, 0.035677407
    %v2579 = vmul.f32 %v2067, 0.035677407
    %v2580 = vmul.f32 %v2068, 0.035677407
    %v2581 = vmul.f32 %v2069, 0.035677407
    %v2582 = vmul.f32 %v2070, 0.035677407
    %v2583 = vmul.f32 %v2071, 0.035677407
    %v2584 = vmul.f32 %v2072, 0.035677407
    %v2585 = vmul.f32 %v2073, 0.035677407
    %v2586 = vmul.f32 %v2074, 0.035677407
    %v2587 = vmul.f32 %v2075, 0.035677407
    %v2588 = vmul.f32 %v2076, 0.035677407
    %v2589 = vmul.f32 %v2077, 0.035677407
    %v2590 = vmul.f32 %v2078, 0.035677407
    %v2591 = vmul.f32 %v2079, 0.035677407
    %v2592 = vmul.f32 %v2080, 0.035677407
    %v2593 = vmul.f32 %v2081, 0.035677407
    %v2594 = vmul.f32 %v2082, 0.035677407
    %v2595 = vmul.f32 %v2083, 0.035677407
    %v2596 = vmul.f32 %v2084, 0.035677407
    %v2597 = vmul.f32 %v2085, 0.035677407
    %v2598 = vmul.f32 %v2086, 0.035677407
    %v2599 = vmul.f32 %v2087, 0.035677407
    %v2600 = vmul.f32 %v2088, 0.035677407
    %v2601 = vmul.f32 %v2089, 0.035677407
    %v2602 = vmul.f32 %v2090, 0.035677407
    %v2603 = vmul.f32 %v2091, 0.035677407
    %v2604 = vmul.f32 %v2092, 0.035677407
    %v2605 = vmul.f32 %v2093, 0.035677407
    %v2606 = vmul.f32 %v2094, 0.035677407
    %v2607 = vmul.f32 %v2095, 0.035677407
    %v2608 = vmul.f32 %v2096, 0.035677407
    %v2609 = vmul.f32 %v2097, 0.035677407
    %v2610 = vmul.f32 %v2098, 0.035677407
    %v2611 = vmul.f32 %v2099, 0.035677407
    %v2612 = vmul.f32 %v2100, 0.035677407
    %v2613 = vmul.f32 %v2101, 0.035677407
    %v2614 = vmul.f32 %v2102, 0.035677407
    %v2615 = vmul.f32 %v2103, 0.035677407
    %v2616 = vmul.f32 %v2104, 0.035677407
    %v2617 = vmul.f32 %v2105, 0.035677407
    %v2618 = vmul.f32 %v2106, 0.035677407
    %v2619 = vmul.f32 %v2107, 0.035677407
    %v2620 = vmul.f32 %v2108, 0.035677407
    %v2621 = vmul.f32 %v2109, 0.035677407
    %v2622 = vmul.f32 %v2110, 0.035677407
    %v2623 = vmul.f32 %v2111, 0.035677407
    %v2624 = vmul.f32 %v2112, 0.035677407
    %v2625 = vmul.f32 %v2113, 0.035677407
    %v2626 = vmul.f32 %v2114, 0.035677407
    %v2627 = vmul.f32 %v2115, 0.035677407
    %v2628 = vmul.f32 %v2116, 0.035677407
    %v2629 = vmul.f32 %v2117, 0.035677407
    %v2630 = vmul.f32 %v2118, 0.035677407
    %v2631 = vmul.f32 %v2119, 0.035677407
    %v2632 = vmul.f32 %v2120, 0.035677407
    %v2633 = vmul.f32 %v2121, 0.035677407
    %v2634 = vmul.f32 %v2122, 0.035677407
    %v2635 = vmul.f32 %v2123, 0.035677407
    %v2636 = vmul.f32 %v2124, 0.035677407
    %v2637 = vmul.f32 %v2125, 0.035677407
    %v2638 = vmul.f32 %v2126, 0.035677407
    %v2639 = vmul.f32 %v2127, 0.035677407
    %v2640 = vmul.f32 %v2128, 0.035677407
    %v2641 = vmul.f32 %v2129, 0.035677407
    %v2642 = vmul.f32 %v2130, 0.035677407
    %v2643 = vmul.f32 %v2131, 0.035677407
    %v2644 = vmul.f32 %v2132, 0.035677407
    %v2645 = vmul.f32 %v2133, 0.035677407
    %v2646 = vmul.f32 %v2134, 0.035677407
    %v2647 = vmul.f32 %v2135, 0.035677407
    %v2648 = vmul.f32 %v2136, 0.035677407
    %v2649 = vmul.f32 %v2137, 0.035677407
    %v2650 = vmul.f32 %v2138, 0.035677407
    %v2651 = vmul.f32 %v2139, 0.035677407
    %v2652 = vmul.f32 %v2140, 0.035677407
    %v2653 = vmul.f32 %v2141, 0.035677407
    %v2654 = vmul.f32 %v2142, 0.035677407
    %v2655 = vmul.f32 %v2143, 0.035677407
    %v2656 = vmul.f32 %v2144, 0.035677407
    %v2657 = vmul.f32 %v2145, 0.035677407
    %v2658 = vmul.f32 %v2146, 0.035677407
    %v2659 = vmul.f32 %v2147, 0.035677407
    %v2660 = vmul.f32 %v2148, 0.035677407
    %v2661 = vmul.f32 %v2149, 0.035677407
    %v2662 = vmul.f32 %v2150, 0.035677407
    %v2663 = vmul.f32 %v2151, 0.035677407
    %v2664 = vmul.f32 %v2152, 0.035677407
    %v2665 = vmul.f32 %v2153, 0.035677407
    %v2666 = vmul.f32 %v2154, 0.035677407
    %v2667 = vmul.f32 %v2155, 0.035677407
    %v2668 = vmul.f32 %v2156, 0.035677407
    %v2669 = vmul.f32 %v2157, 0.035677407
    %v2670 = vmul.f32 %v2158, 0.035677407
    %v2671 = vmul.f32 %v2159, 0.035677407
    %v2672 = vmul.f32 %v2160, 0.035677407
    %v2673 = vmul.f32 %v2161, 0.035677407
    %v2674 = vmul.f32 %v2162, 0.035677407
    %v2675 = vmul.f32 %v2163, 0.035677407
    %v2676 = vmul.f32 %v2164, 0.035677407
    %v2677 = vmul.f32 %v2165, 0.035677407
    %v2678 = vmul.f32 %v2166, 0.035677407
    %v2679 = vmul.f32 %v2167, 0.035677407
    %v2680 = vmul.f32 %v2168, 0.035677407
    %v2681 = vmul.f32 %v2169, 0.035677407
    %v2682 = vmul.f32 %v2170, 0.035677407
    %v2683 = vmul.f32 %v2171, 0.035677407
    %v2684 = vmul.f32 %v2172, 0.035677407
    %v2685 = vmul.f32 %v2173, 0.035677407
    %v2686 = vmul.f32 %v2174, 0.035677407
    %v2687 = vmul.f32 %v2175, 0.035677407
    %v2688 = vmul.f32 %v2176, 0.035677407
    %v2689 = vmul.f32 %v2177, 0.035677407
    %v2690 = vmul.f32 %v2178, 0.035677407
    %v2691 = vmul.f32 %v2179, 0.035677407
    %v2692 = vmul.f32 %v2180, 0.035677407
    %v2693 = vmul.f32 %v2181, 0.035677407
    %v2694 = vmul.f32 %v2182, 0.035677407
    %v2695 = vmul.f32 %v2183, 0.035677407
    %v2696 = vmul.f32 %v2184, 0.035677407
    %v2697 = vmul.f32 %v2185, 0.035677407
    %v2698 = vmul.f32 %v2186, 0.035677407
    %v2699 = vmul.f32 %v2187, 0.035677407
    %v2700 = vmul.f32 %v2188, 0.035677407
    %v2701 = vmul.f32 %v2189, 0.035677407
    %v2702 = vmul.f32 %v2190, 0.035677407
    %v2703 = vmul.f32 %v2191, 0.035677407
    %v2704 = vmul.f32 %v2192, 0.035677407
    %v2705 = vmul.f32 %v2193, 0.035677407
    %v2706 = vmul.f32 %v2194, 0.035677407
    %v2707 = vmul.f32 %v2195, 0.035677407
    %v2708 = vmul.f32 %v2196, 0.035677407
    %v2709 = vmul.f32 %v2197, 0.035677407
    %v2710 = vmul.f32 %v2198, 0.035677407
    %v2711 = vmul.f32 %v2199, 0.035677407
    %v2712 = vmul.f32 %v2200, 0.035677407
    %v2713 = vmul.f32 %v2201, 0.035677407
    %v2714 = vmul.f32 %v2202, 0.035677407
    %v2715 = vmul.f32 %v2203, 0.035677407
    %v2716 = vmul.f32 %v2204, 0.035677407
    %v2717 = vmul.f32 %v2205, 0.035677407
    %v2718 = vmul.f32 %v2206, 0.035677407
    %v2719 = vmul.f32 %v2207, 0.035677407
    %v2720 = vmul.f32 %v2208, 0.035677407
    %v2721 = vmul.f32 %v2209, 0.035677407
    %v2722 = vmul.f32 %v2210, 0.035677407
    %v2723 = vmul.f32 %v2211, 0.035677407
    %v2724 = vmul.f32 %v2212, 0.035677407
    %v2725 = vmul.f32 %v2213, 0.035677407
    %v2726 = vmul.f32 %v2214, 0.035677407
    %v2727 = vmul.f32 %v2215, 0.035677407
    %v2728 = vmul.f32 %v2216, 0.035677407
    %v2729 = vmul.f32 %v2217, 0.035677407
    %v2730 = vmul.f32 %v2218, 0.035677407
    %v2731 = vmul.f32 %v2219, 0.035677407
    %v2732 = vmul.f32 %v2220, 0.035677407
    %v2733 = vmul.f32 %v2221, 0.035677407
    %v2734 = vmul.f32 %v2222, 0.035677407
    %v2735 = vmul.f32 %v2223, 0.035677407
    %v2736 = vmul.f32 %v2224, 0.035677407
    %v2737 = vmul.f32 %v2225, 0.035677407
    %v2738 = vmul.f32 %v2226, 0.035677407
    %v2739 = vmul.f32 %v2227, 0.035677407
    %v2740 = vmul.f32 %v2228, 0.035677407
    %v2741 = vmul.f32 %v2229, 0.035677407
    %v2742 = vmul.f32 %v2230, 0.035677407
    %v2743 = vmul.f32 %v2231, 0.035677407
    %v2744 = vmul.f32 %v2232, 0.035677407
    %v2745 = vmul.f32 %v2233, 0.035677407
    %v2746 = vmul.f32 %v2234, 0.035677407
    %v2747 = vmul.f32 %v2235, 0.035677407
    %v2748 = vmul.f32 %v2236, 0.035677407
    %v2749 = vmul.f32 %v2237, 0.035677407
    %v2750 = vmul.f32 %v2238, 0.035677407
    %v2751 = vmul.f32 %v2239, 0.035677407
    %v2752 = vmul.f32 %v2240, 0.035677407
    %v2753 = vmul.f32 %v2241, 0.035677407
    %v2754 = vmul.f32 %v2242, 0.035677407
    %v2755 = vmul.f32 %v2243, 0.035677407
    %v2756 = vmul.f32 %v2244, 0.035677407
    %v2757 = vmul.f32 %v2245, 0.035677407
    %v2758 = vmul.f32 %v2246, 0.035677407
    %v2759 = vmul.f32 %v2247, 0.035677407
    %v2760 = vmul.f32 %v2248, 0.035677407
    %v2761 = vmul.f32 %v2249, 0.035677407
    %v2762 = vmul.f32 %v2250, 0.035677407
    %v2763 = vmul.f32 %v2251, 0.035677407
    %v2764 = vmul.f32 %v2252, 0.035677407
    %v2765 = vmul.f32 %v2253, 0.035677407
    %v2766 = vmul.f32 %v2254, 0.035677407
    %v2767 = vmul.f32 %v2255, 0.035677407
    %v2768 = vmul.f32 %v2256, 0.035677407
    %v2769 = vmul.f32 %v2257, 0.035677407
    %v2770 = vmul.f32 %v2258, 0.035677407
    %v2771 = vmul.f32 %v2259, 0.035677407
    %v2772 = vmul.f32 %v2260, 0.035677407
    %v2773 = vmul.f32 %v2261, 0.035677407
    %v2774 = vmul.f32 %v2262, 0.035677407
    %v2775 = vmul.f32 %v2263, 0.035677407
    %v2776 = vmul.f32 %v2264, 0.035677407
    %v2777 = vmul.f32 %v2265, 0.035677407
    %v2778 = vmul.f32 %v2266, 0.035677407
    %v2779 = vmul.f32 %v2267, 0.035677407
    %v2780 = vmul.f32 %v2268, 0.035677407
    %v2781 = vmul.f32 %v2269, 0.035677407
    %v2782 = vmul.f32 %v2270, 0.035677407
    %v2783 = vmul.f32 %v2271, 0.035677407
    %v2784 = vmul.f32 %v2272, 0.035677407
    %v2785 = vmul.f32 %v2273, 0.035677407
    %v2786 = vmul.f32 %v2274, 0.035677407
    %v2787 = vmul.f32 %v2275, 0.035677407
    %v2788 = vmul.f32 %v2276, 0.035677407
    %v2789 = vmul.f32 %v2277, 0.035677407
    %v2790 = vmul.f32 %v2278, 0.035677407
    %v2791 = vmul.f32 %v2279, 0.035677407
    %v2792 = vmul.f32 %v2280, 0.035677407
    %v2793 = vmul.f32 %v2281, 0.035677407
    %v2794 = vmul.f32 %v2282, 0.035677407
    %v2795 = vmul.f32 %v2283, 0.035677407
    %v2796 = vmul.f32 %v2284, 0.035677407
    %v2797 = vmul.f32 %v2285, 0.035677407
    %v2798 = vmul.f32 %v2286, 0.035677407
    %v2799 = vmul.f32 %v2287, 0.035677407
    %v2800 = vmul.f32 %v2288, 0.035677407
    %v2801 = vmul.f32 %v2289, 0.035677407
    %v2802 = vmul.f32 %v2290, 0.035677407
    %v2803 = vmul.f32 %v2291, 0.035677407
    %v2804 = vmul.f32 %v2292, 0.035677407
    %v2805 = vmul.f32 %v2293, 0.035677407
    %v2806 = vmul.f32 %v2294, 0.035677407
    %v2807 = vmul.f32 %v2295, 0.035677407
    %v2808 = vmul.f32 %v2296, 0.035677407
    %v2809 = vmul.f32 %v2297, 0.035677407
    %v2810 = vmul.f32 %v2298, 0.035677407
    %v2811 = vmul.f32 %v2299, 0.035677407
    %v2812 = vmul.f32 %v2300, 0.035677407
    %v2813 = vmul.f32 %v2301, 0.035677407
    %v2814 = vmul.f32 %v2302, 0.035677407
    %v2815 = vmul.f32 %v2303, 0.035677407
    %v2816 = vmul.f32 %v2304, 0.035677407
    %v2817 = vmul.f32 %v2305, 0.035677407
    %v2818 = vmul.f32 %v2306, 0.035677407
    %v2819 = vmul.f32 %v2307, 0.035677407
    %v2820 = vmul.f32 %v2308, 0.035677407
    %v2821 = vmul.f32 %v2309, 0.035677407
    %v2822 = vmul.f32 %v2310, 0.035677407
    %v2823 = vmul.f32 %v2311, 0.035677407
    %v2824 = vmul.f32 %v2312, 0.035677407
    %v2825 = vmul.f32 %v2313, 0.035677407
    %v2826 = vmul.f32 %v2314, 0.035677407
    %v2827 = vadd.f32 %v2315, 0.7978846
    %v2828 = vadd.f32 %v2316, 0.7978846
    %v2829 = vadd.f32 %v2317, 0.7978846
    %v2830 = vadd.f32 %v2318, 0.7978846
    %v2831 = vadd.f32 %v2319, 0.7978846
    %v2832 = vadd.f32 %v2320, 0.7978846
    %v2833 = vadd.f32 %v2321, 0.7978846
    %v2834 = vadd.f32 %v2322, 0.7978846
    %v2835 = vadd.f32 %v2323, 0.7978846
    %v2836 = vadd.f32 %v2324, 0.7978846
    %v2837 = vadd.f32 %v2325, 0.7978846
    %v2838 = vadd.f32 %v2326, 0.7978846
    %v2839 = vadd.f32 %v2327, 0.7978846
    %v2840 = vadd.f32 %v2328, 0.7978846
    %v2841 = vadd.f32 %v2329, 0.7978846
    %v2842 = vadd.f32 %v2330, 0.7978846
    %v2843 = vadd.f32 %v2331, 0.7978846
    %v2844 = vadd.f32 %v2332, 0.7978846
    %v2845 = vadd.f32 %v2333, 0.7978846
    %v2846 = vadd.f32 %v2334, 0.7978846
    %v2847 = vadd.f32 %v2335, 0.7978846
    %v2848 = vadd.f32 %v2336, 0.7978846
    %v2849 = vadd.f32 %v2337, 0.7978846
    %v2850 = vadd.f32 %v2338, 0.7978846
    %v2851 = vadd.f32 %v2339, 0.7978846
    %v2852 = vadd.f32 %v2340, 0.7978846
    %v2853 = vadd.f32 %v2341, 0.7978846
    %v2854 = vadd.f32 %v2342, 0.7978846
    %v2855 = vadd.f32 %v2343, 0.7978846
    %v2856 = vadd.f32 %v2344, 0.7978846
    %v2857 = vadd.f32 %v2345, 0.7978846
    %v2858 = vadd.f32 %v2346, 0.7978846
    %v2859 = vadd.f32 %v2347, 0.7978846
    %v2860 = vadd.f32 %v2348, 0.7978846
    %v2861 = vadd.f32 %v2349, 0.7978846
    %v2862 = vadd.f32 %v2350, 0.7978846
    %v2863 = vadd.f32 %v2351, 0.7978846
    %v2864 = vadd.f32 %v2352, 0.7978846
    %v2865 = vadd.f32 %v2353, 0.7978846
    %v2866 = vadd.f32 %v2354, 0.7978846
    %v2867 = vadd.f32 %v2355, 0.7978846
    %v2868 = vadd.f32 %v2356, 0.7978846
    %v2869 = vadd.f32 %v2357, 0.7978846
    %v2870 = vadd.f32 %v2358, 0.7978846
    %v2871 = vadd.f32 %v2359, 0.7978846
    %v2872 = vadd.f32 %v2360, 0.7978846
    %v2873 = vadd.f32 %v2361, 0.7978846
    %v2874 = vadd.f32 %v2362, 0.7978846
    %v2875 = vadd.f32 %v2363, 0.7978846
    %v2876 = vadd.f32 %v2364, 0.7978846
    %v2877 = vadd.f32 %v2365, 0.7978846
    %v2878 = vadd.f32 %v2366, 0.7978846
    %v2879 = vadd.f32 %v2367, 0.7978846
    %v2880 = vadd.f32 %v2368, 0.7978846
    %v2881 = vadd.f32 %v2369, 0.7978846
    %v2882 = vadd.f32 %v2370, 0.7978846
    %v2883 = vadd.f32 %v2371, 0.7978846
    %v2884 = vadd.f32 %v2372, 0.7978846
    %v2885 = vadd.f32 %v2373, 0.7978846
    %v2886 = vadd.f32 %v2374, 0.7978846
    %v2887 = vadd.f32 %v2375, 0.7978846
    %v2888 = vadd.f32 %v2376, 0.7978846
    %v2889 = vadd.f32 %v2377, 0.7978846
    %v2890 = vadd.f32 %v2378, 0.7978846
    %v2891 = vadd.f32 %v2379, 0.7978846
    %v2892 = vadd.f32 %v2380, 0.7978846
    %v2893 = vadd.f32 %v2381, 0.7978846
    %v2894 = vadd.f32 %v2382, 0.7978846
    %v2895 = vadd.f32 %v2383, 0.7978846
    %v2896 = vadd.f32 %v2384, 0.7978846
    %v2897 = vadd.f32 %v2385, 0.7978846
    %v2898 = vadd.f32 %v2386, 0.7978846
    %v2899 = vadd.f32 %v2387, 0.7978846
    %v2900 = vadd.f32 %v2388, 0.7978846
    %v2901 = vadd.f32 %v2389, 0.7978846
    %v2902 = vadd.f32 %v2390, 0.7978846
    %v2903 = vadd.f32 %v2391, 0.7978846
    %v2904 = vadd.f32 %v2392, 0.7978846
    %v2905 = vadd.f32 %v2393, 0.7978846
    %v2906 = vadd.f32 %v2394, 0.7978846
    %v2907 = vadd.f32 %v2395, 0.7978846
    %v2908 = vadd.f32 %v2396, 0.7978846
    %v2909 = vadd.f32 %v2397, 0.7978846
    %v2910 = vadd.f32 %v2398, 0.7978846
    %v2911 = vadd.f32 %v2399, 0.7978846
    %v2912 = vadd.f32 %v2400, 0.7978846
    %v2913 = vadd.f32 %v2401, 0.7978846
    %v2914 = vadd.f32 %v2402, 0.7978846
    %v2915 = vadd.f32 %v2403, 0.7978846
    %v2916 = vadd.f32 %v2404, 0.7978846
    %v2917 = vadd.f32 %v2405, 0.7978846
    %v2918 = vadd.f32 %v2406, 0.7978846
    %v2919 = vadd.f32 %v2407, 0.7978846
    %v2920 = vadd.f32 %v2408, 0.7978846
    %v2921 = vadd.f32 %v2409, 0.7978846
    %v2922 = vadd.f32 %v2410, 0.7978846
    %v2923 = vadd.f32 %v2411, 0.7978846
    %v2924 = vadd.f32 %v2412, 0.7978846
    %v2925 = vadd.f32 %v2413, 0.7978846
    %v2926 = vadd.f32 %v2414, 0.7978846
    %v2927 = vadd.f32 %v2415, 0.7978846
    %v2928 = vadd.f32 %v2416, 0.7978846
    %v2929 = vadd.f32 %v2417, 0.7978846
    %v2930 = vadd.f32 %v2418, 0.7978846
    %v2931 = vadd.f32 %v2419, 0.7978846
    %v2932 = vadd.f32 %v2420, 0.7978846
    %v2933 = vadd.f32 %v2421, 0.7978846
    %v2934 = vadd.f32 %v2422, 0.7978846
    %v2935 = vadd.f32 %v2423, 0.7978846
    %v2936 = vadd.f32 %v2424, 0.7978846
    %v2937 = vadd.f32 %v2425, 0.7978846
    %v2938 = vadd.f32 %v2426, 0.7978846
    %v2939 = vadd.f32 %v2427, 0.7978846
    %v2940 = vadd.f32 %v2428, 0.7978846
    %v2941 = vadd.f32 %v2429, 0.7978846
    %v2942 = vadd.f32 %v2430, 0.7978846
    %v2943 = vadd.f32 %v2431, 0.7978846
    %v2944 = vadd.f32 %v2432, 0.7978846
    %v2945 = vadd.f32 %v2433, 0.7978846
    %v2946 = vadd.f32 %v2434, 0.7978846
    %v2947 = vadd.f32 %v2435, 0.7978846
    %v2948 = vadd.f32 %v2436, 0.7978846
    %v2949 = vadd.f32 %v2437, 0.7978846
    %v2950 = vadd.f32 %v2438, 0.7978846
    %v2951 = vadd.f32 %v2439, 0.7978846
    %v2952 = vadd.f32 %v2440, 0.7978846
    %v2953 = vadd.f32 %v2441, 0.7978846
    %v2954 = vadd.f32 %v2442, 0.7978846
    %v2955 = vadd.f32 %v2443, 0.7978846
    %v2956 = vadd.f32 %v2444, 0.7978846
    %v2957 = vadd.f32 %v2445, 0.7978846
    %v2958 = vadd.f32 %v2446, 0.7978846
    %v2959 = vadd.f32 %v2447, 0.7978846
    %v2960 = vadd.f32 %v2448, 0.7978846
    %v2961 = vadd.f32 %v2449, 0.7978846
    %v2962 = vadd.f32 %v2450, 0.7978846
    %v2963 = vadd.f32 %v2451, 0.7978846
    %v2964 = vadd.f32 %v2452, 0.7978846
    %v2965 = vadd.f32 %v2453, 0.7978846
    %v2966 = vadd.f32 %v2454, 0.7978846
    %v2967 = vadd.f32 %v2455, 0.7978846
    %v2968 = vadd.f32 %v2456, 0.7978846
    %v2969 = vadd.f32 %v2457, 0.7978846
    %v2970 = vadd.f32 %v2458, 0.7978846
    %v2971 = vadd.f32 %v2459, 0.7978846
    %v2972 = vadd.f32 %v2460, 0.7978846
    %v2973 = vadd.f32 %v2461, 0.7978846
    %v2974 = vadd.f32 %v2462, 0.7978846
    %v2975 = vadd.f32 %v2463, 0.7978846
    %v2976 = vadd.f32 %v2464, 0.7978846
    %v2977 = vadd.f32 %v2465, 0.7978846
    %v2978 = vadd.f32 %v2466, 0.7978846
    %v2979 = vadd.f32 %v2467, 0.7978846
    %v2980 = vadd.f32 %v2468, 0.7978846
    %v2981 = vadd.f32 %v2469, 0.7978846
    %v2982 = vadd.f32 %v2470, 0.7978846
    %v2983 = vadd.f32 %v2471, 0.7978846
    %v2984 = vadd.f32 %v2472, 0.7978846
    %v2985 = vadd.f32 %v2473, 0.7978846
    %v2986 = vadd.f32 %v2474, 0.7978846
    %v2987 = vadd.f32 %v2475, 0.7978846
    %v2988 = vadd.f32 %v2476, 0.7978846
    %v2989 = vadd.f32 %v2477, 0.7978846
    %v2990 = vadd.f32 %v2478, 0.7978846
    %v2991 = vadd.f32 %v2479, 0.7978846
    %v2992 = vadd.f32 %v2480, 0.7978846
    %v2993 = vadd.f32 %v2481, 0.7978846
    %v2994 = vadd.f32 %v2482, 0.7978846
    %v2995 = vadd.f32 %v2483, 0.7978846
    %v2996 = vadd.f32 %v2484, 0.7978846
    %v2997 = vadd.f32 %v2485, 0.7978846
    %v2998 = vadd.f32 %v2486, 0.7978846
    %v2999 = vadd.f32 %v2487, 0.7978846
    %v3000 = vadd.f32 %v2488, 0.7978846
    %v3001 = vadd.f32 %v2489, 0.7978846
    %v3002 = vadd.f32 %v2490, 0.7978846
    %v3003 = vadd.f32 %v2491, 0.7978846
    %v3004 = vadd.f32 %v2492, 0.7978846
    %v3005 = vadd.f32 %v2493, 0.7978846
    %v3006 = vadd.f32 %v2494, 0.7978846
    %v3007 = vadd.f32 %v2495, 0.7978846
    %v3008 = vadd.f32 %v2496, 0.7978846
    %v3009 = vadd.f32 %v2497, 0.7978846
    %v3010 = vadd.f32 %v2498, 0.7978846
    %v3011 = vadd.f32 %v2499, 0.7978846
    %v3012 = vadd.f32 %v2500, 0.7978846
    %v3013 = vadd.f32 %v2501, 0.7978846
    %v3014 = vadd.f32 %v2502, 0.7978846
    %v3015 = vadd.f32 %v2503, 0.7978846
    %v3016 = vadd.f32 %v2504, 0.7978846
    %v3017 = vadd.f32 %v2505, 0.7978846
    %v3018 = vadd.f32 %v2506, 0.7978846
    %v3019 = vadd.f32 %v2507, 0.7978846
    %v3020 = vadd.f32 %v2508, 0.7978846
    %v3021 = vadd.f32 %v2509, 0.7978846
    %v3022 = vadd.f32 %v2510, 0.7978846
    %v3023 = vadd.f32 %v2511, 0.7978846
    %v3024 = vadd.f32 %v2512, 0.7978846
    %v3025 = vadd.f32 %v2513, 0.7978846
    %v3026 = vadd.f32 %v2514, 0.7978846
    %v3027 = vadd.f32 %v2515, 0.7978846
    %v3028 = vadd.f32 %v2516, 0.7978846
    %v3029 = vadd.f32 %v2517, 0.7978846
    %v3030 = vadd.f32 %v2518, 0.7978846
    %v3031 = vadd.f32 %v2519, 0.7978846
    %v3032 = vadd.f32 %v2520, 0.7978846
    %v3033 = vadd.f32 %v2521, 0.7978846
    %v3034 = vadd.f32 %v2522, 0.7978846
    %v3035 = vadd.f32 %v2523, 0.7978846
    %v3036 = vadd.f32 %v2524, 0.7978846
    %v3037 = vadd.f32 %v2525, 0.7978846
    %v3038 = vadd.f32 %v2526, 0.7978846
    %v3039 = vadd.f32 %v2527, 0.7978846
    %v3040 = vadd.f32 %v2528, 0.7978846
    %v3041 = vadd.f32 %v2529, 0.7978846
    %v3042 = vadd.f32 %v2530, 0.7978846
    %v3043 = vadd.f32 %v2531, 0.7978846
    %v3044 = vadd.f32 %v2532, 0.7978846
    %v3045 = vadd.f32 %v2533, 0.7978846
    %v3046 = vadd.f32 %v2534, 0.7978846
    %v3047 = vadd.f32 %v2535, 0.7978846
    %v3048 = vadd.f32 %v2536, 0.7978846
    %v3049 = vadd.f32 %v2537, 0.7978846
    %v3050 = vadd.f32 %v2538, 0.7978846
    %v3051 = vadd.f32 %v2539, 0.7978846
    %v3052 = vadd.f32 %v2540, 0.7978846
    %v3053 = vadd.f32 %v2541, 0.7978846
    %v3054 = vadd.f32 %v2542, 0.7978846
    %v3055 = vadd.f32 %v2543, 0.7978846
    %v3056 = vadd.f32 %v2544, 0.7978846
    %v3057 = vadd.f32 %v2545, 0.7978846
    %v3058 = vadd.f32 %v2546, 0.7978846
    %v3059 = vadd.f32 %v2547, 0.7978846
    %v3060 = vadd.f32 %v2548, 0.7978846
    %v3061 = vadd.f32 %v2549, 0.7978846
    %v3062 = vadd.f32 %v2550, 0.7978846
    %v3063 = vadd.f32 %v2551, 0.7978846
    %v3064 = vadd.f32 %v2552, 0.7978846
    %v3065 = vadd.f32 %v2553, 0.7978846
    %v3066 = vadd.f32 %v2554, 0.7978846
    %v3067 = vadd.f32 %v2555, 0.7978846
    %v3068 = vadd.f32 %v2556, 0.7978846
    %v3069 = vadd.f32 %v2557, 0.7978846
    %v3070 = vadd.f32 %v2558, 0.7978846
    %v3071 = vadd.f32 %v2559, 0.7978846
    %v3072 = vadd.f32 %v2560, 0.7978846
    %v3073 = vadd.f32 %v2561, 0.7978846
    %v3074 = vadd.f32 %v2562, 0.7978846
    %v3075 = vadd.f32 %v2563, 0.7978846
    %v3076 = vadd.f32 %v2564, 0.7978846
    %v3077 = vadd.f32 %v2565, 0.7978846
    %v3078 = vadd.f32 %v2566, 0.7978846
    %v3079 = vadd.f32 %v2567, 0.7978846
    %v3080 = vadd.f32 %v2568, 0.7978846
    %v3081 = vadd.f32 %v2569, 0.7978846
    %v3082 = vadd.f32 %v2570, 0.7978846
    %v3083 = vadd.f32 %v2571, 0.7978846
    %v3084 = vadd.f32 %v2572, 0.7978846
    %v3085 = vadd.f32 %v2573, 0.7978846
    %v3086 = vadd.f32 %v2574, 0.7978846
    %v3087 = vadd.f32 %v2575, 0.7978846
    %v3088 = vadd.f32 %v2576, 0.7978846
    %v3089 = vadd.f32 %v2577, 0.7978846
    %v3090 = vadd.f32 %v2578, 0.7978846
    %v3091 = vadd.f32 %v2579, 0.7978846
    %v3092 = vadd.f32 %v2580, 0.7978846
    %v3093 = vadd.f32 %v2581, 0.7978846
    %v3094 = vadd.f32 %v2582, 0.7978846
    %v3095 = vadd.f32 %v2583, 0.7978846
    %v3096 = vadd.f32 %v2584, 0.7978846
    %v3097 = vadd.f32 %v2585, 0.7978846
    %v3098 = vadd.f32 %v2586, 0.7978846
    %v3099 = vadd.f32 %v2587, 0.7978846
    %v3100 = vadd.f32 %v2588, 0.7978846
    %v3101 = vadd.f32 %v2589, 0.7978846
    %v3102 = vadd.f32 %v2590, 0.7978846
    %v3103 = vadd.f32 %v2591, 0.7978846
    %v3104 = vadd.f32 %v2592, 0.7978846
    %v3105 = vadd.f32 %v2593, 0.7978846
    %v3106 = vadd.f32 %v2594, 0.7978846
    %v3107 = vadd.f32 %v2595, 0.7978846
    %v3108 = vadd.f32 %v2596, 0.7978846
    %v3109 = vadd.f32 %v2597, 0.7978846
    %v3110 = vadd.f32 %v2598, 0.7978846
    %v3111 = vadd.f32 %v2599, 0.7978846
    %v3112 = vadd.f32 %v2600, 0.7978846
    %v3113 = vadd.f32 %v2601, 0.7978846
    %v3114 = vadd.f32 %v2602, 0.7978846
    %v3115 = vadd.f32 %v2603, 0.7978846
    %v3116 = vadd.f32 %v2604, 0.7978846
    %v3117 = vadd.f32 %v2605, 0.7978846
    %v3118 = vadd.f32 %v2606, 0.7978846
    %v3119 = vadd.f32 %v2607, 0.7978846
    %v3120 = vadd.f32 %v2608, 0.7978846
    %v3121 = vadd.f32 %v2609, 0.7978846
    %v3122 = vadd.f32 %v2610, 0.7978846
    %v3123 = vadd.f32 %v2611, 0.7978846
    %v3124 = vadd.f32 %v2612, 0.7978846
    %v3125 = vadd.f32 %v2613, 0.7978846
    %v3126 = vadd.f32 %v2614, 0.7978846
    %v3127 = vadd.f32 %v2615, 0.7978846
    %v3128 = vadd.f32 %v2616, 0.7978846
    %v3129 = vadd.f32 %v2617, 0.7978846
    %v3130 = vadd.f32 %v2618, 0.7978846
    %v3131 = vadd.f32 %v2619, 0.7978846
    %v3132 = vadd.f32 %v2620, 0.7978846
    %v3133 = vadd.f32 %v2621, 0.7978846
    %v3134 = vadd.f32 %v2622, 0.7978846
    %v3135 = vadd.f32 %v2623, 0.7978846
    %v3136 = vadd.f32 %v2624, 0.7978846
    %v3137 = vadd.f32 %v2625, 0.7978846
    %v3138 = vadd.f32 %v2626, 0.7978846
    %v3139 = vadd.f32 %v2627, 0.7978846
    %v3140 = vadd.f32 %v2628, 0.7978846
    %v3141 = vadd.f32 %v2629, 0.7978846
    %v3142 = vadd.f32 %v2630, 0.7978846
    %v3143 = vadd.f32 %v2631, 0.7978846
    %v3144 = vadd.f32 %v2632, 0.7978846
    %v3145 = vadd.f32 %v2633, 0.7978846
    %v3146 = vadd.f32 %v2634, 0.7978846
    %v3147 = vadd.f32 %v2635, 0.7978846
    %v3148 = vadd.f32 %v2636, 0.7978846
    %v3149 = vadd.f32 %v2637, 0.7978846
    %v3150 = vadd.f32 %v2638, 0.7978846
    %v3151 = vadd.f32 %v2639, 0.7978846
    %v3152 = vadd.f32 %v2640, 0.7978846
    %v3153 = vadd.f32 %v2641, 0.7978846
    %v3154 = vadd.f32 %v2642, 0.7978846
    %v3155 = vadd.f32 %v2643, 0.7978846
    %v3156 = vadd.f32 %v2644, 0.7978846
    %v3157 = vadd.f32 %v2645, 0.7978846
    %v3158 = vadd.f32 %v2646, 0.7978846
    %v3159 = vadd.f32 %v2647, 0.7978846
    %v3160 = vadd.f32 %v2648, 0.7978846
    %v3161 = vadd.f32 %v2649, 0.7978846
    %v3162 = vadd.f32 %v2650, 0.7978846
    %v3163 = vadd.f32 %v2651, 0.7978846
    %v3164 = vadd.f32 %v2652, 0.7978846
    %v3165 = vadd.f32 %v2653, 0.7978846
    %v3166 = vadd.f32 %v2654, 0.7978846
    %v3167 = vadd.f32 %v2655, 0.7978846
    %v3168 = vadd.f32 %v2656, 0.7978846
    %v3169 = vadd.f32 %v2657, 0.7978846
    %v3170 = vadd.f32 %v2658, 0.7978846
    %v3171 = vadd.f32 %v2659, 0.7978846
    %v3172 = vadd.f32 %v2660, 0.7978846
    %v3173 = vadd.f32 %v2661, 0.7978846
    %v3174 = vadd.f32 %v2662, 0.7978846
    %v3175 = vadd.f32 %v2663, 0.7978846
    %v3176 = vadd.f32 %v2664, 0.7978846
    %v3177 = vadd.f32 %v2665, 0.7978846
    %v3178 = vadd.f32 %v2666, 0.7978846
    %v3179 = vadd.f32 %v2667, 0.7978846
    %v3180 = vadd.f32 %v2668, 0.7978846
    %v3181 = vadd.f32 %v2669, 0.7978846
    %v3182 = vadd.f32 %v2670, 0.7978846
    %v3183 = vadd.f32 %v2671, 0.7978846
    %v3184 = vadd.f32 %v2672, 0.7978846
    %v3185 = vadd.f32 %v2673, 0.7978846
    %v3186 = vadd.f32 %v2674, 0.7978846
    %v3187 = vadd.f32 %v2675, 0.7978846
    %v3188 = vadd.f32 %v2676, 0.7978846
    %v3189 = vadd.f32 %v2677, 0.7978846
    %v3190 = vadd.f32 %v2678, 0.7978846
    %v3191 = vadd.f32 %v2679, 0.7978846
    %v3192 = vadd.f32 %v2680, 0.7978846
    %v3193 = vadd.f32 %v2681, 0.7978846
    %v3194 = vadd.f32 %v2682, 0.7978846
    %v3195 = vadd.f32 %v2683, 0.7978846
    %v3196 = vadd.f32 %v2684, 0.7978846
    %v3197 = vadd.f32 %v2685, 0.7978846
    %v3198 = vadd.f32 %v2686, 0.7978846
    %v3199 = vadd.f32 %v2687, 0.7978846
    %v3200 = vadd.f32 %v2688, 0.7978846
    %v3201 = vadd.f32 %v2689, 0.7978846
    %v3202 = vadd.f32 %v2690, 0.7978846
    %v3203 = vadd.f32 %v2691, 0.7978846
    %v3204 = vadd.f32 %v2692, 0.7978846
    %v3205 = vadd.f32 %v2693, 0.7978846
    %v3206 = vadd.f32 %v2694, 0.7978846
    %v3207 = vadd.f32 %v2695, 0.7978846
    %v3208 = vadd.f32 %v2696, 0.7978846
    %v3209 = vadd.f32 %v2697, 0.7978846
    %v3210 = vadd.f32 %v2698, 0.7978846
    %v3211 = vadd.f32 %v2699, 0.7978846
    %v3212 = vadd.f32 %v2700, 0.7978846
    %v3213 = vadd.f32 %v2701, 0.7978846
    %v3214 = vadd.f32 %v2702, 0.7978846
    %v3215 = vadd.f32 %v2703, 0.7978846
    %v3216 = vadd.f32 %v2704, 0.7978846
    %v3217 = vadd.f32 %v2705, 0.7978846
    %v3218 = vadd.f32 %v2706, 0.7978846
    %v3219 = vadd.f32 %v2707, 0.7978846
    %v3220 = vadd.f32 %v2708, 0.7978846
    %v3221 = vadd.f32 %v2709, 0.7978846
    %v3222 = vadd.f32 %v2710, 0.7978846
    %v3223 = vadd.f32 %v2711, 0.7978846
    %v3224 = vadd.f32 %v2712, 0.7978846
    %v3225 = vadd.f32 %v2713, 0.7978846
    %v3226 = vadd.f32 %v2714, 0.7978846
    %v3227 = vadd.f32 %v2715, 0.7978846
    %v3228 = vadd.f32 %v2716, 0.7978846
    %v3229 = vadd.f32 %v2717, 0.7978846
    %v3230 = vadd.f32 %v2718, 0.7978846
    %v3231 = vadd.f32 %v2719, 0.7978846
    %v3232 = vadd.f32 %v2720, 0.7978846
    %v3233 = vadd.f32 %v2721, 0.7978846
    %v3234 = vadd.f32 %v2722, 0.7978846
    %v3235 = vadd.f32 %v2723, 0.7978846
    %v3236 = vadd.f32 %v2724, 0.7978846
    %v3237 = vadd.f32 %v2725, 0.7978846
    %v3238 = vadd.f32 %v2726, 0.7978846
    %v3239 = vadd.f32 %v2727, 0.7978846
    %v3240 = vadd.f32 %v2728, 0.7978846
    %v3241 = vadd.f32 %v2729, 0.7978846
    %v3242 = vadd.f32 %v2730, 0.7978846
    %v3243 = vadd.f32 %v2731, 0.7978846
    %v3244 = vadd.f32 %v2732, 0.7978846
    %v3245 = vadd.f32 %v2733, 0.7978846
    %v3246 = vadd.f32 %v2734, 0.7978846
    %v3247 = vadd.f32 %v2735, 0.7978846
    %v3248 = vadd.f32 %v2736, 0.7978846
    %v3249 = vadd.f32 %v2737, 0.7978846
    %v3250 = vadd.f32 %v2738, 0.7978846
    %v3251 = vadd.f32 %v2739, 0.7978846
    %v3252 = vadd.f32 %v2740, 0.7978846
    %v3253 = vadd.f32 %v2741, 0.7978846
    %v3254 = vadd.f32 %v2742, 0.7978846
    %v3255 = vadd.f32 %v2743, 0.7978846
    %v3256 = vadd.f32 %v2744, 0.7978846
    %v3257 = vadd.f32 %v2745, 0.7978846
    %v3258 = vadd.f32 %v2746, 0.7978846
    %v3259 = vadd.f32 %v2747, 0.7978846
    %v3260 = vadd.f32 %v2748, 0.7978846
    %v3261 = vadd.f32 %v2749, 0.7978846
    %v3262 = vadd.f32 %v2750, 0.7978846
    %v3263 = vadd.f32 %v2751, 0.7978846
    %v3264 = vadd.f32 %v2752, 0.7978846
    %v3265 = vadd.f32 %v2753, 0.7978846
    %v3266 = vadd.f32 %v2754, 0.7978846
    %v3267 = vadd.f32 %v2755, 0.7978846
    %v3268 = vadd.f32 %v2756, 0.7978846
    %v3269 = vadd.f32 %v2757, 0.7978846
    %v3270 = vadd.f32 %v2758, 0.7978846
    %v3271 = vadd.f32 %v2759, 0.7978846
    %v3272 = vadd.f32 %v2760, 0.7978846
    %v3273 = vadd.f32 %v2761, 0.7978846
    %v3274 = vadd.f32 %v2762, 0.7978846
    %v3275 = vadd.f32 %v2763, 0.7978846
    %v3276 = vadd.f32 %v2764, 0.7978846
    %v3277 = vadd.f32 %v2765, 0.7978846
    %v3278 = vadd.f32 %v2766, 0.7978846
    %v3279 = vadd.f32 %v2767, 0.7978846
    %v3280 = vadd.f32 %v2768, 0.7978846
    %v3281 = vadd.f32 %v2769, 0.7978846
    %v3282 = vadd.f32 %v2770, 0.7978846
    %v3283 = vadd.f32 %v2771, 0.7978846
    %v3284 = vadd.f32 %v2772, 0.7978846
    %v3285 = vadd.f32 %v2773, 0.7978846
    %v3286 = vadd.f32 %v2774, 0.7978846
    %v3287 = vadd.f32 %v2775, 0.7978846
    %v3288 = vadd.f32 %v2776, 0.7978846
    %v3289 = vadd.f32 %v2777, 0.7978846
    %v3290 = vadd.f32 %v2778, 0.7978846
    %v3291 = vadd.f32 %v2779, 0.7978846
    %v3292 = vadd.f32 %v2780, 0.7978846
    %v3293 = vadd.f32 %v2781, 0.7978846
    %v3294 = vadd.f32 %v2782, 0.7978846
    %v3295 = vadd.f32 %v2783, 0.7978846
    %v3296 = vadd.f32 %v2784, 0.7978846
    %v3297 = vadd.f32 %v2785, 0.7978846
    %v3298 = vadd.f32 %v2786, 0.7978846
    %v3299 = vadd.f32 %v2787, 0.7978846
    %v3300 = vadd.f32 %v2788, 0.7978846
    %v3301 = vadd.f32 %v2789, 0.7978846
    %v3302 = vadd.f32 %v2790, 0.7978846
    %v3303 = vadd.f32 %v2791, 0.7978846
    %v3304 = vadd.f32 %v2792, 0.7978846
    %v3305 = vadd.f32 %v2793, 0.7978846
    %v3306 = vadd.f32 %v2794, 0.7978846
    %v3307 = vadd.f32 %v2795, 0.7978846
    %v3308 = vadd.f32 %v2796, 0.7978846
    %v3309 = vadd.f32 %v2797, 0.7978846
    %v3310 = vadd.f32 %v2798, 0.7978846
    %v3311 = vadd.f32 %v2799, 0.7978846
    %v3312 = vadd.f32 %v2800, 0.7978846
    %v3313 = vadd.f32 %v2801, 0.7978846
    %v3314 = vadd.f32 %v2802, 0.7978846
    %v3315 = vadd.f32 %v2803, 0.7978846
    %v3316 = vadd.f32 %v2804, 0.7978846
    %v3317 = vadd.f32 %v2805, 0.7978846
    %v3318 = vadd.f32 %v2806, 0.7978846
    %v3319 = vadd.f32 %v2807, 0.7978846
    %v3320 = vadd.f32 %v2808, 0.7978846
    %v3321 = vadd.f32 %v2809, 0.7978846
    %v3322 = vadd.f32 %v2810, 0.7978846
    %v3323 = vadd.f32 %v2811, 0.7978846
    %v3324 = vadd.f32 %v2812, 0.7978846
    %v3325 = vadd.f32 %v2813, 0.7978846
    %v3326 = vadd.f32 %v2814, 0.7978846
    %v3327 = vadd.f32 %v2815, 0.7978846
    %v3328 = vadd.f32 %v2816, 0.7978846
    %v3329 = vadd.f32 %v2817, 0.7978846
    %v3330 = vadd.f32 %v2818, 0.7978846
    %v3331 = vadd.f32 %v2819, 0.7978846
    %v3332 = vadd.f32 %v2820, 0.7978846
    %v3333 = vadd.f32 %v2821, 0.7978846
    %v3334 = vadd.f32 %v2822, 0.7978846
    %v3335 = vadd.f32 %v2823, 0.7978846
    %v3336 = vadd.f32 %v2824, 0.7978846
    %v3337 = vadd.f32 %v2825, 0.7978846
    %v3338 = vadd.f32 %v2826, 0.7978846
    %v3339 = vmul.f32 %v1291, %v2827
    %v3340 = vmul.f32 %v1292, %v2828
    %v3341 = vmul.f32 %v1293, %v2829
    %v3342 = vmul.f32 %v1294, %v2830
    %v3343 = vmul.f32 %v1295, %v2831
    %v3344 = vmul.f32 %v1296, %v2832
    %v3345 = vmul.f32 %v1297, %v2833
    %v3346 = vmul.f32 %v1298, %v2834
    %v3347 = vmul.f32 %v1299, %v2835
    %v3348 = vmul.f32 %v1300, %v2836
    %v3349 = vmul.f32 %v1301, %v2837
    %v3350 = vmul.f32 %v1302, %v2838
    %v3351 = vmul.f32 %v1303, %v2839
    %v3352 = vmul.f32 %v1304, %v2840
    %v3353 = vmul.f32 %v1305, %v2841
    %v3354 = vmul.f32 %v1306, %v2842
    %v3355 = vmul.f32 %v1307, %v2843
    %v3356 = vmul.f32 %v1308, %v2844
    %v3357 = vmul.f32 %v1309, %v2845
    %v3358 = vmul.f32 %v1310, %v2846
    %v3359 = vmul.f32 %v1311, %v2847
    %v3360 = vmul.f32 %v1312, %v2848
    %v3361 = vmul.f32 %v1313, %v2849
    %v3362 = vmul.f32 %v1314, %v2850
    %v3363 = vmul.f32 %v1315, %v2851
    %v3364 = vmul.f32 %v1316, %v2852
    %v3365 = vmul.f32 %v1317, %v2853
    %v3366 = vmul.f32 %v1318, %v2854
    %v3367 = vmul.f32 %v1319, %v2855
    %v3368 = vmul.f32 %v1320, %v2856
    %v3369 = vmul.f32 %v1321, %v2857
    %v3370 = vmul.f32 %v1322, %v2858
    %v3371 = vmul.f32 %v1323, %v2859
    %v3372 = vmul.f32 %v1324, %v2860
    %v3373 = vmul.f32 %v1325, %v2861
    %v3374 = vmul.f32 %v1326, %v2862
    %v3375 = vmul.f32 %v1327, %v2863
    %v3376 = vmul.f32 %v1328, %v2864
    %v3377 = vmul.f32 %v1329, %v2865
    %v3378 = vmul.f32 %v1330, %v2866
    %v3379 = vmul.f32 %v1331, %v2867
    %v3380 = vmul.f32 %v1332, %v2868
    %v3381 = vmul.f32 %v1333, %v2869
    %v3382 = vmul.f32 %v1334, %v2870
    %v3383 = vmul.f32 %v1335, %v2871
    %v3384 = vmul.f32 %v1336, %v2872
    %v3385 = vmul.f32 %v1337, %v2873
    %v3386 = vmul.f32 %v1338, %v2874
    %v3387 = vmul.f32 %v1339, %v2875
    %v3388 = vmul.f32 %v1340, %v2876
    %v3389 = vmul.f32 %v1341, %v2877
    %v3390 = vmul.f32 %v1342, %v2878
    %v3391 = vmul.f32 %v1343, %v2879
    %v3392 = vmul.f32 %v1344, %v2880
    %v3393 = vmul.f32 %v1345, %v2881
    %v3394 = vmul.f32 %v1346, %v2882
    %v3395 = vmul.f32 %v1347, %v2883
    %v3396 = vmul.f32 %v1348, %v2884
    %v3397 = vmul.f32 %v1349, %v2885
    %v3398 = vmul.f32 %v1350, %v2886
    %v3399 = vmul.f32 %v1351, %v2887
    %v3400 = vmul.f32 %v1352, %v2888
    %v3401 = vmul.f32 %v1353, %v2889
    %v3402 = vmul.f32 %v1354, %v2890
    %v3403 = vmul.f32 %v1355, %v2891
    %v3404 = vmul.f32 %v1356, %v2892
    %v3405 = vmul.f32 %v1357, %v2893
    %v3406 = vmul.f32 %v1358, %v2894
    %v3407 = vmul.f32 %v1359, %v2895
    %v3408 = vmul.f32 %v1360, %v2896
    %v3409 = vmul.f32 %v1361, %v2897
    %v3410 = vmul.f32 %v1362, %v2898
    %v3411 = vmul.f32 %v1363, %v2899
    %v3412 = vmul.f32 %v1364, %v2900
    %v3413 = vmul.f32 %v1365, %v2901
    %v3414 = vmul.f32 %v1366, %v2902
    %v3415 = vmul.f32 %v1367, %v2903
    %v3416 = vmul.f32 %v1368, %v2904
    %v3417 = vmul.f32 %v1369, %v2905
    %v3418 = vmul.f32 %v1370, %v2906
    %v3419 = vmul.f32 %v1371, %v2907
    %v3420 = vmul.f32 %v1372, %v2908
    %v3421 = vmul.f32 %v1373, %v2909
    %v3422 = vmul.f32 %v1374, %v2910
    %v3423 = vmul.f32 %v1375, %v2911
    %v3424 = vmul.f32 %v1376, %v2912
    %v3425 = vmul.f32 %v1377, %v2913
    %v3426 = vmul.f32 %v1378, %v2914
    %v3427 = vmul.f32 %v1379, %v2915
    %v3428 = vmul.f32 %v1380, %v2916
    %v3429 = vmul.f32 %v1381, %v2917
    %v3430 = vmul.f32 %v1382, %v2918
    %v3431 = vmul.f32 %v1383, %v2919
    %v3432 = vmul.f32 %v1384, %v2920
    %v3433 = vmul.f32 %v1385, %v2921
    %v3434 = vmul.f32 %v1386, %v2922
    %v3435 = vmul.f32 %v1387, %v2923
    %v3436 = vmul.f32 %v1388, %v2924
    %v3437 = vmul.f32 %v1389, %v2925
    %v3438 = vmul.f32 %v1390, %v2926
    %v3439 = vmul.f32 %v1391, %v2927
    %v3440 = vmul.f32 %v1392, %v2928
    %v3441 = vmul.f32 %v1393, %v2929
    %v3442 = vmul.f32 %v1394, %v2930
    %v3443 = vmul.f32 %v1395, %v2931
    %v3444 = vmul.f32 %v1396, %v2932
    %v3445 = vmul.f32 %v1397, %v2933
    %v3446 = vmul.f32 %v1398, %v2934
    %v3447 = vmul.f32 %v1399, %v2935
    %v3448 = vmul.f32 %v1400, %v2936
    %v3449 = vmul.f32 %v1401, %v2937
    %v3450 = vmul.f32 %v1402, %v2938
    %v3451 = vmul.f32 %v1403, %v2939
    %v3452 = vmul.f32 %v1404, %v2940
    %v3453 = vmul.f32 %v1405, %v2941
    %v3454 = vmul.f32 %v1406, %v2942
    %v3455 = vmul.f32 %v1407, %v2943
    %v3456 = vmul.f32 %v1408, %v2944
    %v3457 = vmul.f32 %v1409, %v2945
    %v3458 = vmul.f32 %v1410, %v2946
    %v3459 = vmul.f32 %v1411, %v2947
    %v3460 = vmul.f32 %v1412, %v2948
    %v3461 = vmul.f32 %v1413, %v2949
    %v3462 = vmul.f32 %v1414, %v2950
    %v3463 = vmul.f32 %v1415, %v2951
    %v3464 = vmul.f32 %v1416, %v2952
    %v3465 = vmul.f32 %v1417, %v2953
    %v3466 = vmul.f32 %v1418, %v2954
    %v3467 = vmul.f32 %v1419, %v2955
    %v3468 = vmul.f32 %v1420, %v2956
    %v3469 = vmul.f32 %v1421, %v2957
    %v3470 = vmul.f32 %v1422, %v2958
    %v3471 = vmul.f32 %v1423, %v2959
    %v3472 = vmul.f32 %v1424, %v2960
    %v3473 = vmul.f32 %v1425, %v2961
    %v3474 = vmul.f32 %v1426, %v2962
    %v3475 = vmul.f32 %v1427, %v2963
    %v3476 = vmul.f32 %v1428, %v2964
    %v3477 = vmul.f32 %v1429, %v2965
    %v3478 = vmul.f32 %v1430, %v2966
    %v3479 = vmul.f32 %v1431, %v2967
    %v3480 = vmul.f32 %v1432, %v2968
    %v3481 = vmul.f32 %v1433, %v2969
    %v3482 = vmul.f32 %v1434, %v2970
    %v3483 = vmul.f32 %v1435, %v2971
    %v3484 = vmul.f32 %v1436, %v2972
    %v3485 = vmul.f32 %v1437, %v2973
    %v3486 = vmul.f32 %v1438, %v2974
    %v3487 = vmul.f32 %v1439, %v2975
    %v3488 = vmul.f32 %v1440, %v2976
    %v3489 = vmul.f32 %v1441, %v2977
    %v3490 = vmul.f32 %v1442, %v2978
    %v3491 = vmul.f32 %v1443, %v2979
    %v3492 = vmul.f32 %v1444, %v2980
    %v3493 = vmul.f32 %v1445, %v2981
    %v3494 = vmul.f32 %v1446, %v2982
    %v3495 = vmul.f32 %v1447, %v2983
    %v3496 = vmul.f32 %v1448, %v2984
    %v3497 = vmul.f32 %v1449, %v2985
    %v3498 = vmul.f32 %v1450, %v2986
    %v3499 = vmul.f32 %v1451, %v2987
    %v3500 = vmul.f32 %v1452, %v2988
    %v3501 = vmul.f32 %v1453, %v2989
    %v3502 = vmul.f32 %v1454, %v2990
    %v3503 = vmul.f32 %v1455, %v2991
    %v3504 = vmul.f32 %v1456, %v2992
    %v3505 = vmul.f32 %v1457, %v2993
    %v3506 = vmul.f32 %v1458, %v2994
    %v3507 = vmul.f32 %v1459, %v2995
    %v3508 = vmul.f32 %v1460, %v2996
    %v3509 = vmul.f32 %v1461, %v2997
    %v3510 = vmul.f32 %v1462, %v2998
    %v3511 = vmul.f32 %v1463, %v2999
    %v3512 = vmul.f32 %v1464, %v3000
    %v3513 = vmul.f32 %v1465, %v3001
    %v3514 = vmul.f32 %v1466, %v3002
    %v3515 = vmul.f32 %v1467, %v3003
    %v3516 = vmul.f32 %v1468, %v3004
    %v3517 = vmul.f32 %v1469, %v3005
    %v3518 = vmul.f32 %v1470, %v3006
    %v3519 = vmul.f32 %v1471, %v3007
    %v3520 = vmul.f32 %v1472, %v3008
    %v3521 = vmul.f32 %v1473, %v3009
    %v3522 = vmul.f32 %v1474, %v3010
    %v3523 = vmul.f32 %v1475, %v3011
    %v3524 = vmul.f32 %v1476, %v3012
    %v3525 = vmul.f32 %v1477, %v3013
    %v3526 = vmul.f32 %v1478, %v3014
    %v3527 = vmul.f32 %v1479, %v3015
    %v3528 = vmul.f32 %v1480, %v3016
    %v3529 = vmul.f32 %v1481, %v3017
    %v3530 = vmul.f32 %v1482, %v3018
    %v3531 = vmul.f32 %v1483, %v3019
    %v3532 = vmul.f32 %v1484, %v3020
    %v3533 = vmul.f32 %v1485, %v3021
    %v3534 = vmul.f32 %v1486, %v3022
    %v3535 = vmul.f32 %v1487, %v3023
    %v3536 = vmul.f32 %v1488, %v3024
    %v3537 = vmul.f32 %v1489, %v3025
    %v3538 = vmul.f32 %v1490, %v3026
    %v3539 = vmul.f32 %v1491, %v3027
    %v3540 = vmul.f32 %v1492, %v3028
    %v3541 = vmul.f32 %v1493, %v3029
    %v3542 = vmul.f32 %v1494, %v3030
    %v3543 = vmul.f32 %v1495, %v3031
    %v3544 = vmul.f32 %v1496, %v3032
    %v3545 = vmul.f32 %v1497, %v3033
    %v3546 = vmul.f32 %v1498, %v3034
    %v3547 = vmul.f32 %v1499, %v3035
    %v3548 = vmul.f32 %v1500, %v3036
    %v3549 = vmul.f32 %v1501, %v3037
    %v3550 = vmul.f32 %v1502, %v3038
    %v3551 = vmul.f32 %v1503, %v3039
    %v3552 = vmul.f32 %v1504, %v3040
    %v3553 = vmul.f32 %v1505, %v3041
    %v3554 = vmul.f32 %v1506, %v3042
    %v3555 = vmul.f32 %v1507, %v3043
    %v3556 = vmul.f32 %v1508, %v3044
    %v3557 = vmul.f32 %v1509, %v3045
    %v3558 = vmul.f32 %v1510, %v3046
    %v3559 = vmul.f32 %v1511, %v3047
    %v3560 = vmul.f32 %v1512, %v3048
    %v3561 = vmul.f32 %v1513, %v3049
    %v3562 = vmul.f32 %v1514, %v3050
    %v3563 = vmul.f32 %v1515, %v3051
    %v3564 = vmul.f32 %v1516, %v3052
    %v3565 = vmul.f32 %v1517, %v3053
    %v3566 = vmul.f32 %v1518, %v3054
    %v3567 = vmul.f32 %v1519, %v3055
    %v3568 = vmul.f32 %v1520, %v3056
    %v3569 = vmul.f32 %v1521, %v3057
    %v3570 = vmul.f32 %v1522, %v3058
    %v3571 = vmul.f32 %v1523, %v3059
    %v3572 = vmul.f32 %v1524, %v3060
    %v3573 = vmul.f32 %v1525, %v3061
    %v3574 = vmul.f32 %v1526, %v3062
    %v3575 = vmul.f32 %v1527, %v3063
    %v3576 = vmul.f32 %v1528, %v3064
    %v3577 = vmul.f32 %v1529, %v3065
    %v3578 = vmul.f32 %v1530, %v3066
    %v3579 = vmul.f32 %v1531, %v3067
    %v3580 = vmul.f32 %v1532, %v3068
    %v3581 = vmul.f32 %v1533, %v3069
    %v3582 = vmul.f32 %v1534, %v3070
    %v3583 = vmul.f32 %v1535, %v3071
    %v3584 = vmul.f32 %v1536, %v3072
    %v3585 = vmul.f32 %v1537, %v3073
    %v3586 = vmul.f32 %v1538, %v3074
    %v3587 = vmul.f32 %v1539, %v3075
    %v3588 = vmul.f32 %v1540, %v3076
    %v3589 = vmul.f32 %v1541, %v3077
    %v3590 = vmul.f32 %v1542, %v3078
    %v3591 = vmul.f32 %v1543, %v3079
    %v3592 = vmul.f32 %v1544, %v3080
    %v3593 = vmul.f32 %v1545, %v3081
    %v3594 = vmul.f32 %v1546, %v3082
    %v3595 = vmul.f32 %v1547, %v3083
    %v3596 = vmul.f32 %v1548, %v3084
    %v3597 = vmul.f32 %v1549, %v3085
    %v3598 = vmul.f32 %v1550, %v3086
    %v3599 = vmul.f32 %v1551, %v3087
    %v3600 = vmul.f32 %v1552, %v3088
    %v3601 = vmul.f32 %v1553, %v3089
    %v3602 = vmul.f32 %v1554, %v3090
    %v3603 = vmul.f32 %v1555, %v3091
    %v3604 = vmul.f32 %v1556, %v3092
    %v3605 = vmul.f32 %v1557, %v3093
    %v3606 = vmul.f32 %v1558, %v3094
    %v3607 = vmul.f32 %v1559, %v3095
    %v3608 = vmul.f32 %v1560, %v3096
    %v3609 = vmul.f32 %v1561, %v3097
    %v3610 = vmul.f32 %v1562, %v3098
    %v3611 = vmul.f32 %v1563, %v3099
    %v3612 = vmul.f32 %v1564, %v3100
    %v3613 = vmul.f32 %v1565, %v3101
    %v3614 = vmul.f32 %v1566, %v3102
    %v3615 = vmul.f32 %v1567, %v3103
    %v3616 = vmul.f32 %v1568, %v3104
    %v3617 = vmul.f32 %v1569, %v3105
    %v3618 = vmul.f32 %v1570, %v3106
    %v3619 = vmul.f32 %v1571, %v3107
    %v3620 = vmul.f32 %v1572, %v3108
    %v3621 = vmul.f32 %v1573, %v3109
    %v3622 = vmul.f32 %v1574, %v3110
    %v3623 = vmul.f32 %v1575, %v3111
    %v3624 = vmul.f32 %v1576, %v3112
    %v3625 = vmul.f32 %v1577, %v3113
    %v3626 = vmul.f32 %v1578, %v3114
    %v3627 = vmul.f32 %v1579, %v3115
    %v3628 = vmul.f32 %v1580, %v3116
    %v3629 = vmul.f32 %v1581, %v3117
    %v3630 = vmul.f32 %v1582, %v3118
    %v3631 = vmul.f32 %v1583, %v3119
    %v3632 = vmul.f32 %v1584, %v3120
    %v3633 = vmul.f32 %v1585, %v3121
    %v3634 = vmul.f32 %v1586, %v3122
    %v3635 = vmul.f32 %v1587, %v3123
    %v3636 = vmul.f32 %v1588, %v3124
    %v3637 = vmul.f32 %v1589, %v3125
    %v3638 = vmul.f32 %v1590, %v3126
    %v3639 = vmul.f32 %v1591, %v3127
    %v3640 = vmul.f32 %v1592, %v3128
    %v3641 = vmul.f32 %v1593, %v3129
    %v3642 = vmul.f32 %v1594, %v3130
    %v3643 = vmul.f32 %v1595, %v3131
    %v3644 = vmul.f32 %v1596, %v3132
    %v3645 = vmul.f32 %v1597, %v3133
    %v3646 = vmul.f32 %v1598, %v3134
    %v3647 = vmul.f32 %v1599, %v3135
    %v3648 = vmul.f32 %v1600, %v3136
    %v3649 = vmul.f32 %v1601, %v3137
    %v3650 = vmul.f32 %v1602, %v3138
    %v3651 = vmul.f32 %v1603, %v3139
    %v3652 = vmul.f32 %v1604, %v3140
    %v3653 = vmul.f32 %v1605, %v3141
    %v3654 = vmul.f32 %v1606, %v3142
    %v3655 = vmul.f32 %v1607, %v3143
    %v3656 = vmul.f32 %v1608, %v3144
    %v3657 = vmul.f32 %v1609, %v3145
    %v3658 = vmul.f32 %v1610, %v3146
    %v3659 = vmul.f32 %v1611, %v3147
    %v3660 = vmul.f32 %v1612, %v3148
    %v3661 = vmul.f32 %v1613, %v3149
    %v3662 = vmul.f32 %v1614, %v3150
    %v3663 = vmul.f32 %v1615, %v3151
    %v3664 = vmul.f32 %v1616, %v3152
    %v3665 = vmul.f32 %v1617, %v3153
    %v3666 = vmul.f32 %v1618, %v3154
    %v3667 = vmul.f32 %v1619, %v3155
    %v3668 = vmul.f32 %v1620, %v3156
    %v3669 = vmul.f32 %v1621, %v3157
    %v3670 = vmul.f32 %v1622, %v3158
    %v3671 = vmul.f32 %v1623, %v3159
    %v3672 = vmul.f32 %v1624, %v3160
    %v3673 = vmul.f32 %v1625, %v3161
    %v3674 = vmul.f32 %v1626, %v3162
    %v3675 = vmul.f32 %v1627, %v3163
    %v3676 = vmul.f32 %v1628, %v3164
    %v3677 = vmul.f32 %v1629, %v3165
    %v3678 = vmul.f32 %v1630, %v3166
    %v3679 = vmul.f32 %v1631, %v3167
    %v3680 = vmul.f32 %v1632, %v3168
    %v3681 = vmul.f32 %v1633, %v3169
    %v3682 = vmul.f32 %v1634, %v3170
    %v3683 = vmul.f32 %v1635, %v3171
    %v3684 = vmul.f32 %v1636, %v3172
    %v3685 = vmul.f32 %v1637, %v3173
    %v3686 = vmul.f32 %v1638, %v3174
    %v3687 = vmul.f32 %v1639, %v3175
    %v3688 = vmul.f32 %v1640, %v3176
    %v3689 = vmul.f32 %v1641, %v3177
    %v3690 = vmul.f32 %v1642, %v3178
    %v3691 = vmul.f32 %v1643, %v3179
    %v3692 = vmul.f32 %v1644, %v3180
    %v3693 = vmul.f32 %v1645, %v3181
    %v3694 = vmul.f32 %v1646, %v3182
    %v3695 = vmul.f32 %v1647, %v3183
    %v3696 = vmul.f32 %v1648, %v3184
    %v3697 = vmul.f32 %v1649, %v3185
    %v3698 = vmul.f32 %v1650, %v3186
    %v3699 = vmul.f32 %v1651, %v3187
    %v3700 = vmul.f32 %v1652, %v3188
    %v3701 = vmul.f32 %v1653, %v3189
    %v3702 = vmul.f32 %v1654, %v3190
    %v3703 = vmul.f32 %v1655, %v3191
    %v3704 = vmul.f32 %v1656, %v3192
    %v3705 = vmul.f32 %v1657, %v3193
    %v3706 = vmul.f32 %v1658, %v3194
    %v3707 = vmul.f32 %v1659, %v3195
    %v3708 = vmul.f32 %v1660, %v3196
    %v3709 = vmul.f32 %v1661, %v3197
    %v3710 = vmul.f32 %v1662, %v3198
    %v3711 = vmul.f32 %v1663, %v3199
    %v3712 = vmul.f32 %v1664, %v3200
    %v3713 = vmul.f32 %v1665, %v3201
    %v3714 = vmul.f32 %v1666, %v3202
    %v3715 = vmul.f32 %v1667, %v3203
    %v3716 = vmul.f32 %v1668, %v3204
    %v3717 = vmul.f32 %v1669, %v3205
    %v3718 = vmul.f32 %v1670, %v3206
    %v3719 = vmul.f32 %v1671, %v3207
    %v3720 = vmul.f32 %v1672, %v3208
    %v3721 = vmul.f32 %v1673, %v3209
    %v3722 = vmul.f32 %v1674, %v3210
    %v3723 = vmul.f32 %v1675, %v3211
    %v3724 = vmul.f32 %v1676, %v3212
    %v3725 = vmul.f32 %v1677, %v3213
    %v3726 = vmul.f32 %v1678, %v3214
    %v3727 = vmul.f32 %v1679, %v3215
    %v3728 = vmul.f32 %v1680, %v3216
    %v3729 = vmul.f32 %v1681, %v3217
    %v3730 = vmul.f32 %v1682, %v3218
    %v3731 = vmul.f32 %v1683, %v3219
    %v3732 = vmul.f32 %v1684, %v3220
    %v3733 = vmul.f32 %v1685, %v3221
    %v3734 = vmul.f32 %v1686, %v3222
    %v3735 = vmul.f32 %v1687, %v3223
    %v3736 = vmul.f32 %v1688, %v3224
    %v3737 = vmul.f32 %v1689, %v3225
    %v3738 = vmul.f32 %v1690, %v3226
    %v3739 = vmul.f32 %v1691, %v3227
    %v3740 = vmul.f32 %v1692, %v3228
    %v3741 = vmul.f32 %v1693, %v3229
    %v3742 = vmul.f32 %v1694, %v3230
    %v3743 = vmul.f32 %v1695, %v3231
    %v3744 = vmul.f32 %v1696, %v3232
    %v3745 = vmul.f32 %v1697, %v3233
    %v3746 = vmul.f32 %v1698, %v3234
    %v3747 = vmul.f32 %v1699, %v3235
    %v3748 = vmul.f32 %v1700, %v3236
    %v3749 = vmul.f32 %v1701, %v3237
    %v3750 = vmul.f32 %v1702, %v3238
    %v3751 = vmul.f32 %v1703, %v3239
    %v3752 = vmul.f32 %v1704, %v3240
    %v3753 = vmul.f32 %v1705, %v3241
    %v3754 = vmul.f32 %v1706, %v3242
    %v3755 = vmul.f32 %v1707, %v3243
    %v3756 = vmul.f32 %v1708, %v3244
    %v3757 = vmul.f32 %v1709, %v3245
    %v3758 = vmul.f32 %v1710, %v3246
    %v3759 = vmul.f32 %v1711, %v3247
    %v3760 = vmul.f32 %v1712, %v3248
    %v3761 = vmul.f32 %v1713, %v3249
    %v3762 = vmul.f32 %v1714, %v3250
    %v3763 = vmul.f32 %v1715, %v3251
    %v3764 = vmul.f32 %v1716, %v3252
    %v3765 = vmul.f32 %v1717, %v3253
    %v3766 = vmul.f32 %v1718, %v3254
    %v3767 = vmul.f32 %v1719, %v3255
    %v3768 = vmul.f32 %v1720, %v3256
    %v3769 = vmul.f32 %v1721, %v3257
    %v3770 = vmul.f32 %v1722, %v3258
    %v3771 = vmul.f32 %v1723, %v3259
    %v3772 = vmul.f32 %v1724, %v3260
    %v3773 = vmul.f32 %v1725, %v3261
    %v3774 = vmul.f32 %v1726, %v3262
    %v3775 = vmul.f32 %v1727, %v3263
    %v3776 = vmul.f32 %v1728, %v3264
    %v3777 = vmul.f32 %v1729, %v3265
    %v3778 = vmul.f32 %v1730, %v3266
    %v3779 = vmul.f32 %v1731, %v3267
    %v3780 = vmul.f32 %v1732, %v3268
    %v3781 = vmul.f32 %v1733, %v3269
    %v3782 = vmul.f32 %v1734, %v3270
    %v3783 = vmul.f32 %v1735, %v3271
    %v3784 = vmul.f32 %v1736, %v3272
    %v3785 = vmul.f32 %v1737, %v3273
    %v3786 = vmul.f32 %v1738, %v3274
    %v3787 = vmul.f32 %v1739, %v3275
    %v3788 = vmul.f32 %v1740, %v3276
    %v3789 = vmul.f32 %v1741, %v3277
    %v3790 = vmul.f32 %v1742, %v3278
    %v3791 = vmul.f32 %v1743, %v3279
    %v3792 = vmul.f32 %v1744, %v3280
    %v3793 = vmul.f32 %v1745, %v3281
    %v3794 = vmul.f32 %v1746, %v3282
    %v3795 = vmul.f32 %v1747, %v3283
    %v3796 = vmul.f32 %v1748, %v3284
    %v3797 = vmul.f32 %v1749, %v3285
    %v3798 = vmul.f32 %v1750, %v3286
    %v3799 = vmul.f32 %v1751, %v3287
    %v3800 = vmul.f32 %v1752, %v3288
    %v3801 = vmul.f32 %v1753, %v3289
    %v3802 = vmul.f32 %v1754, %v3290
    %v3803 = vmul.f32 %v1755, %v3291
    %v3804 = vmul.f32 %v1756, %v3292
    %v3805 = vmul.f32 %v1757, %v3293
    %v3806 = vmul.f32 %v1758, %v3294
    %v3807 = vmul.f32 %v1759, %v3295
    %v3808 = vmul.f32 %v1760, %v3296
    %v3809 = vmul.f32 %v1761, %v3297
    %v3810 = vmul.f32 %v1762, %v3298
    %v3811 = vmul.f32 %v1763, %v3299
    %v3812 = vmul.f32 %v1764, %v3300
    %v3813 = vmul.f32 %v1765, %v3301
    %v3814 = vmul.f32 %v1766, %v3302
    %v3815 = vmul.f32 %v1767, %v3303
    %v3816 = vmul.f32 %v1768, %v3304
    %v3817 = vmul.f32 %v1769, %v3305
    %v3818 = vmul.f32 %v1770, %v3306
    %v3819 = vmul.f32 %v1771, %v3307
    %v3820 = vmul.f32 %v1772, %v3308
    %v3821 = vmul.f32 %v1773, %v3309
    %v3822 = vmul.f32 %v1774, %v3310
    %v3823 = vmul.f32 %v1775, %v3311
    %v3824 = vmul.f32 %v1776, %v3312
    %v3825 = vmul.f32 %v1777, %v3313
    %v3826 = vmul.f32 %v1778, %v3314
    %v3827 = vmul.f32 %v1779, %v3315
    %v3828 = vmul.f32 %v1780, %v3316
    %v3829 = vmul.f32 %v1781, %v3317
    %v3830 = vmul.f32 %v1782, %v3318
    %v3831 = vmul.f32 %v1783, %v3319
    %v3832 = vmul.f32 %v1784, %v3320
    %v3833 = vmul.f32 %v1785, %v3321
    %v3834 = vmul.f32 %v1786, %v3322
    %v3835 = vmul.f32 %v1787, %v3323
    %v3836 = vmul.f32 %v1788, %v3324
    %v3837 = vmul.f32 %v1789, %v3325
    %v3838 = vmul.f32 %v1790, %v3326
    %v3839 = vmul.f32 %v1791, %v3327
    %v3840 = vmul.f32 %v1792, %v3328
    %v3841 = vmul.f32 %v1793, %v3329
    %v3842 = vmul.f32 %v1794, %v3330
    %v3843 = vmul.f32 %v1795, %v3331
    %v3844 = vmul.f32 %v1796, %v3332
    %v3845 = vmul.f32 %v1797, %v3333
    %v3846 = vmul.f32 %v1798, %v3334
    %v3847 = vmul.f32 %v1799, %v3335
    %v3848 = vmul.f32 %v1800, %v3336
    %v3849 = vmul.f32 %v1801, %v3337
    %v3850 = vmul.f32 %v1802, %v3338
    %v3851 = vtanh.pop %v3339
    %v3852 = vtanh.pop %v3340
    %v3853 = vtanh.pop %v3341
    %v3854 = vtanh.pop %v3342
    %v3855 = vtanh.pop %v3343
    %v3856 = vtanh.pop %v3344
    %v3857 = vtanh.pop %v3345
    %v3858 = vtanh.pop %v3346
    %v3859 = vtanh.pop %v3347
    %v3860 = vtanh.pop %v3348
    %v3861 = vtanh.pop %v3349
    %v3862 = vtanh.pop %v3350
    %v3863 = vtanh.pop %v3351
    %v3864 = vtanh.pop %v3352
    %v3865 = vtanh.pop %v3353
    %v3866 = vtanh.pop %v3354
    %v3867 = vtanh.pop %v3355
    %v3868 = vtanh.pop %v3356
    %v3869 = vtanh.pop %v3357
    %v3870 = vtanh.pop %v3358
    %v3871 = vtanh.pop %v3359
    %v3872 = vtanh.pop %v3360
    %v3873 = vtanh.pop %v3361
    %v3874 = vtanh.pop %v3362
    %v3875 = vtanh.pop %v3363
    %v3876 = vtanh.pop %v3364
    %v3877 = vtanh.pop %v3365
    %v3878 = vtanh.pop %v3366
    %v3879 = vtanh.pop %v3367
    %v3880 = vtanh.pop %v3368
    %v3881 = vtanh.pop %v3369
    %v3882 = vtanh.pop %v3370
    %v3883 = vtanh.pop %v3371
    %v3884 = vtanh.pop %v3372
    %v3885 = vtanh.pop %v3373
    %v3886 = vtanh.pop %v3374
    %v3887 = vtanh.pop %v3375
    %v3888 = vtanh.pop %v3376
    %v3889 = vtanh.pop %v3377
    %v3890 = vtanh.pop %v3378
    %v3891 = vtanh.pop %v3379
    %v3892 = vtanh.pop %v3380
    %v3893 = vtanh.pop %v3381
    %v3894 = vtanh.pop %v3382
    %v3895 = vtanh.pop %v3383
    %v3896 = vtanh.pop %v3384
    %v3897 = vtanh.pop %v3385
    %v3898 = vtanh.pop %v3386
    %v3899 = vtanh.pop %v3387
    %v3900 = vtanh.pop %v3388
    %v3901 = vtanh.pop %v3389
    %v3902 = vtanh.pop %v3390
    %v3903 = vtanh.pop %v3391
    %v3904 = vtanh.pop %v3392
    %v3905 = vtanh.pop %v3393
    %v3906 = vtanh.pop %v3394
    %v3907 = vtanh.pop %v3395
    %v3908 = vtanh.pop %v3396
    %v3909 = vtanh.pop %v3397
    %v3910 = vtanh.pop %v3398
    %v3911 = vtanh.pop %v3399
    %v3912 = vtanh.pop %v3400
    %v3913 = vtanh.pop %v3401
    %v3914 = vtanh.pop %v3402
    %v3915 = vtanh.pop %v3403
    %v3916 = vtanh.pop %v3404
    %v3917 = vtanh.pop %v3405
    %v3918 = vtanh.pop %v3406
    %v3919 = vtanh.pop %v3407
    %v3920 = vtanh.pop %v3408
    %v3921 = vtanh.pop %v3409
    %v3922 = vtanh.pop %v3410
    %v3923 = vtanh.pop %v3411
    %v3924 = vtanh.pop %v3412
    %v3925 = vtanh.pop %v3413
    %v3926 = vtanh.pop %v3414
    %v3927 = vtanh.pop %v3415
    %v3928 = vtanh.pop %v3416
    %v3929 = vtanh.pop %v3417
    %v3930 = vtanh.pop %v3418
    %v3931 = vtanh.pop %v3419
    %v3932 = vtanh.pop %v3420
    %v3933 = vtanh.pop %v3421
    %v3934 = vtanh.pop %v3422
    %v3935 = vtanh.pop %v3423
    %v3936 = vtanh.pop %v3424
    %v3937 = vtanh.pop %v3425
    %v3938 = vtanh.pop %v3426
    %v3939 = vtanh.pop %v3427
    %v3940 = vtanh.pop %v3428
    %v3941 = vtanh.pop %v3429
    %v3942 = vtanh.pop %v3430
    %v3943 = vtanh.pop %v3431
    %v3944 = vtanh.pop %v3432
    %v3945 = vtanh.pop %v3433
    %v3946 = vtanh.pop %v3434
    %v3947 = vtanh.pop %v3435
    %v3948 = vtanh.pop %v3436
    %v3949 = vtanh.pop %v3437
    %v3950 = vtanh.pop %v3438
    %v3951 = vtanh.pop %v3439
    %v3952 = vtanh.pop %v3440
    %v3953 = vtanh.pop %v3441
    %v3954 = vtanh.pop %v3442
    %v3955 = vtanh.pop %v3443
    %v3956 = vtanh.pop %v3444
    %v3957 = vtanh.pop %v3445
    %v3958 = vtanh.pop %v3446
    %v3959 = vtanh.pop %v3447
    %v3960 = vtanh.pop %v3448
    %v3961 = vtanh.pop %v3449
    %v3962 = vtanh.pop %v3450
    %v3963 = vtanh.pop %v3451
    %v3964 = vtanh.pop %v3452
    %v3965 = vtanh.pop %v3453
    %v3966 = vtanh.pop %v3454
    %v3967 = vtanh.pop %v3455
    %v3968 = vtanh.pop %v3456
    %v3969 = vtanh.pop %v3457
    %v3970 = vtanh.pop %v3458
    %v3971 = vtanh.pop %v3459
    %v3972 = vtanh.pop %v3460
    %v3973 = vtanh.pop %v3461
    %v3974 = vtanh.pop %v3462
    %v3975 = vtanh.pop %v3463
    %v3976 = vtanh.pop %v3464
    %v3977 = vtanh.pop %v3465
    %v3978 = vtanh.pop %v3466
    %v3979 = vtanh.pop %v3467
    %v3980 = vtanh.pop %v3468
    %v3981 = vtanh.pop %v3469
    %v3982 = vtanh.pop %v3470
    %v3983 = vtanh.pop %v3471
    %v3984 = vtanh.pop %v3472
    %v3985 = vtanh.pop %v3473
    %v3986 = vtanh.pop %v3474
    %v3987 = vtanh.pop %v3475
    %v3988 = vtanh.pop %v3476
    %v3989 = vtanh.pop %v3477
    %v3990 = vtanh.pop %v3478
    %v3991 = vtanh.pop %v3479
    %v3992 = vtanh.pop %v3480
    %v3993 = vtanh.pop %v3481
    %v3994 = vtanh.pop %v3482
    %v3995 = vtanh.pop %v3483
    %v3996 = vtanh.pop %v3484
    %v3997 = vtanh.pop %v3485
    %v3998 = vtanh.pop %v3486
    %v3999 = vtanh.pop %v3487
    %v4000 = vtanh.pop %v3488
    %v4001 = vtanh.pop %v3489
    %v4002 = vtanh.pop %v3490
    %v4003 = vtanh.pop %v3491
    %v4004 = vtanh.pop %v3492
    %v4005 = vtanh.pop %v3493
    %v4006 = vtanh.pop %v3494
    %v4007 = vtanh.pop %v3495
    %v4008 = vtanh.pop %v3496
    %v4009 = vtanh.pop %v3497
    %v4010 = vtanh.pop %v3498
    %v4011 = vtanh.pop %v3499
    %v4012 = vtanh.pop %v3500
    %v4013 = vtanh.pop %v3501
    %v4014 = vtanh.pop %v3502
    %v4015 = vtanh.pop %v3503
    %v4016 = vtanh.pop %v3504
    %v4017 = vtanh.pop %v3505
    %v4018 = vtanh.pop %v3506
    %v4019 = vtanh.pop %v3507
    %v4020 = vtanh.pop %v3508
    %v4021 = vtanh.pop %v3509
    %v4022 = vtanh.pop %v3510
    %v4023 = vtanh.pop %v3511
    %v4024 = vtanh.pop %v3512
    %v4025 = vtanh.pop %v3513
    %v4026 = vtanh.pop %v3514
    %v4027 = vtanh.pop %v3515
    %v4028 = vtanh.pop %v3516
    %v4029 = vtanh.pop %v3517
    %v4030 = vtanh.pop %v3518
    %v4031 = vtanh.pop %v3519
    %v4032 = vtanh.pop %v3520
    %v4033 = vtanh.pop %v3521
    %v4034 = vtanh.pop %v3522
    %v4035 = vtanh.pop %v3523
    %v4036 = vtanh.pop %v3524
    %v4037 = vtanh.pop %v3525
    %v4038 = vtanh.pop %v3526
    %v4039 = vtanh.pop %v3527
    %v4040 = vtanh.pop %v3528
    %v4041 = vtanh.pop %v3529
    %v4042 = vtanh.pop %v3530
    %v4043 = vtanh.pop %v3531
    %v4044 = vtanh.pop %v3532
    %v4045 = vtanh.pop %v3533
    %v4046 = vtanh.pop %v3534
    %v4047 = vtanh.pop %v3535
    %v4048 = vtanh.pop %v3536
    %v4049 = vtanh.pop %v3537
    %v4050 = vtanh.pop %v3538
    %v4051 = vtanh.pop %v3539
    %v4052 = vtanh.pop %v3540
    %v4053 = vtanh.pop %v3541
    %v4054 = vtanh.pop %v3542
    %v4055 = vtanh.pop %v3543
    %v4056 = vtanh.pop %v3544
    %v4057 = vtanh.pop %v3545
    %v4058 = vtanh.pop %v3546
    %v4059 = vtanh.pop %v3547
    %v4060 = vtanh.pop %v3548
    %v4061 = vtanh.pop %v3549
    %v4062 = vtanh.pop %v3550
    %v4063 = vtanh.pop %v3551
    %v4064 = vtanh.pop %v3552
    %v4065 = vtanh.pop %v3553
    %v4066 = vtanh.pop %v3554
    %v4067 = vtanh.pop %v3555
    %v4068 = vtanh.pop %v3556
    %v4069 = vtanh.pop %v3557
    %v4070 = vtanh.pop %v3558
    %v4071 = vtanh.pop %v3559
    %v4072 = vtanh.pop %v3560
    %v4073 = vtanh.pop %v3561
    %v4074 = vtanh.pop %v3562
    %v4075 = vtanh.pop %v3563
    %v4076 = vtanh.pop %v3564
    %v4077 = vtanh.pop %v3565
    %v4078 = vtanh.pop %v3566
    %v4079 = vtanh.pop %v3567
    %v4080 = vtanh.pop %v3568
    %v4081 = vtanh.pop %v3569
    %v4082 = vtanh.pop %v3570
    %v4083 = vtanh.pop %v3571
    %v4084 = vtanh.pop %v3572
    %v4085 = vtanh.pop %v3573
    %v4086 = vtanh.pop %v3574
    %v4087 = vtanh.pop %v3575
    %v4088 = vtanh.pop %v3576
    %v4089 = vtanh.pop %v3577
    %v4090 = vtanh.pop %v3578
    %v4091 = vtanh.pop %v3579
    %v4092 = vtanh.pop %v3580
    %v4093 = vtanh.pop %v3581
    %v4094 = vtanh.pop %v3582
    %v4095 = vtanh.pop %v3583
    %v4096 = vtanh.pop %v3584
    %v4097 = vtanh.pop %v3585
    %v4098 = vtanh.pop %v3586
    %v4099 = vtanh.pop %v3587
    %v4100 = vtanh.pop %v3588
    %v4101 = vtanh.pop %v3589
    %v4102 = vtanh.pop %v3590
    %v4103 = vtanh.pop %v3591
    %v4104 = vtanh.pop %v3592
    %v4105 = vtanh.pop %v3593
    %v4106 = vtanh.pop %v3594
    %v4107 = vtanh.pop %v3595
    %v4108 = vtanh.pop %v3596
    %v4109 = vtanh.pop %v3597
    %v4110 = vtanh.pop %v3598
    %v4111 = vtanh.pop %v3599
    %v4112 = vtanh.pop %v3600
    %v4113 = vtanh.pop %v3601
    %v4114 = vtanh.pop %v3602
    %v4115 = vtanh.pop %v3603
    %v4116 = vtanh.pop %v3604
    %v4117 = vtanh.pop %v3605
    %v4118 = vtanh.pop %v3606
    %v4119 = vtanh.pop %v3607
    %v4120 = vtanh.pop %v3608
    %v4121 = vtanh.pop %v3609
    %v4122 = vtanh.pop %v3610
    %v4123 = vtanh.pop %v3611
    %v4124 = vtanh.pop %v3612
    %v4125 = vtanh.pop %v3613
    %v4126 = vtanh.pop %v3614
    %v4127 = vtanh.pop %v3615
    %v4128 = vtanh.pop %v3616
    %v4129 = vtanh.pop %v3617
    %v4130 = vtanh.pop %v3618
    %v4131 = vtanh.pop %v3619
    %v4132 = vtanh.pop %v3620
    %v4133 = vtanh.pop %v3621
    %v4134 = vtanh.pop %v3622
    %v4135 = vtanh.pop %v3623
    %v4136 = vtanh.pop %v3624
    %v4137 = vtanh.pop %v3625
    %v4138 = vtanh.pop %v3626
    %v4139 = vtanh.pop %v3627
    %v4140 = vtanh.pop %v3628
    %v4141 = vtanh.pop %v3629
    %v4142 = vtanh.pop %v3630
    %v4143 = vtanh.pop %v3631
    %v4144 = vtanh.pop %v3632
    %v4145 = vtanh.pop %v3633
    %v4146 = vtanh.pop %v3634
    %v4147 = vtanh.pop %v3635
    %v4148 = vtanh.pop %v3636
    %v4149 = vtanh.pop %v3637
    %v4150 = vtanh.pop %v3638
    %v4151 = vtanh.pop %v3639
    %v4152 = vtanh.pop %v3640
    %v4153 = vtanh.pop %v3641
    %v4154 = vtanh.pop %v3642
    %v4155 = vtanh.pop %v3643
    %v4156 = vtanh.pop %v3644
    %v4157 = vtanh.pop %v3645
    %v4158 = vtanh.pop %v3646
    %v4159 = vtanh.pop %v3647
    %v4160 = vtanh.pop %v3648
    %v4161 = vtanh.pop %v3649
    %v4162 = vtanh.pop %v3650
    %v4163 = vtanh.pop %v3651
    %v4164 = vtanh.pop %v3652
    %v4165 = vtanh.pop %v3653
    %v4166 = vtanh.pop %v3654
    %v4167 = vtanh.pop %v3655
    %v4168 = vtanh.pop %v3656
    %v4169 = vtanh.pop %v3657
    %v4170 = vtanh.pop %v3658
    %v4171 = vtanh.pop %v3659
    %v4172 = vtanh.pop %v3660
    %v4173 = vtanh.pop %v3661
    %v4174 = vtanh.pop %v3662
    %v4175 = vtanh.pop %v3663
    %v4176 = vtanh.pop %v3664
    %v4177 = vtanh.pop %v3665
    %v4178 = vtanh.pop %v3666
    %v4179 = vtanh.pop %v3667
    %v4180 = vtanh.pop %v3668
    %v4181 = vtanh.pop %v3669
    %v4182 = vtanh.pop %v3670
    %v4183 = vtanh.pop %v3671
    %v4184 = vtanh.pop %v3672
    %v4185 = vtanh.pop %v3673
    %v4186 = vtanh.pop %v3674
    %v4187 = vtanh.pop %v3675
    %v4188 = vtanh.pop %v3676
    %v4189 = vtanh.pop %v3677
    %v4190 = vtanh.pop %v3678
    %v4191 = vtanh.pop %v3679
    %v4192 = vtanh.pop %v3680
    %v4193 = vtanh.pop %v3681
    %v4194 = vtanh.pop %v3682
    %v4195 = vtanh.pop %v3683
    %v4196 = vtanh.pop %v3684
    %v4197 = vtanh.pop %v3685
    %v4198 = vtanh.pop %v3686
    %v4199 = vtanh.pop %v3687
    %v4200 = vtanh.pop %v3688
    %v4201 = vtanh.pop %v3689
    %v4202 = vtanh.pop %v3690
    %v4203 = vtanh.pop %v3691
    %v4204 = vtanh.pop %v3692
    %v4205 = vtanh.pop %v3693
    %v4206 = vtanh.pop %v3694
    %v4207 = vtanh.pop %v3695
    %v4208 = vtanh.pop %v3696
    %v4209 = vtanh.pop %v3697
    %v4210 = vtanh.pop %v3698
    %v4211 = vtanh.pop %v3699
    %v4212 = vtanh.pop %v3700
    %v4213 = vtanh.pop %v3701
    %v4214 = vtanh.pop %v3702
    %v4215 = vtanh.pop %v3703
    %v4216 = vtanh.pop %v3704
    %v4217 = vtanh.pop %v3705
    %v4218 = vtanh.pop %v3706
    %v4219 = vtanh.pop %v3707
    %v4220 = vtanh.pop %v3708
    %v4221 = vtanh.pop %v3709
    %v4222 = vtanh.pop %v3710
    %v4223 = vtanh.pop %v3711
    %v4224 = vtanh.pop %v3712
    %v4225 = vtanh.pop %v3713
    %v4226 = vtanh.pop %v3714
    %v4227 = vtanh.pop %v3715
    %v4228 = vtanh.pop %v3716
    %v4229 = vtanh.pop %v3717
    %v4230 = vtanh.pop %v3718
    %v4231 = vtanh.pop %v3719
    %v4232 = vtanh.pop %v3720
    %v4233 = vtanh.pop %v3721
    %v4234 = vtanh.pop %v3722
    %v4235 = vtanh.pop %v3723
    %v4236 = vtanh.pop %v3724
    %v4237 = vtanh.pop %v3725
    %v4238 = vtanh.pop %v3726
    %v4239 = vtanh.pop %v3727
    %v4240 = vtanh.pop %v3728
    %v4241 = vtanh.pop %v3729
    %v4242 = vtanh.pop %v3730
    %v4243 = vtanh.pop %v3731
    %v4244 = vtanh.pop %v3732
    %v4245 = vtanh.pop %v3733
    %v4246 = vtanh.pop %v3734
    %v4247 = vtanh.pop %v3735
    %v4248 = vtanh.pop %v3736
    %v4249 = vtanh.pop %v3737
    %v4250 = vtanh.pop %v3738
    %v4251 = vtanh.pop %v3739
    %v4252 = vtanh.pop %v3740
    %v4253 = vtanh.pop %v3741
    %v4254 = vtanh.pop %v3742
    %v4255 = vtanh.pop %v3743
    %v4256 = vtanh.pop %v3744
    %v4257 = vtanh.pop %v3745
    %v4258 = vtanh.pop %v3746
    %v4259 = vtanh.pop %v3747
    %v4260 = vtanh.pop %v3748
    %v4261 = vtanh.pop %v3749
    %v4262 = vtanh.pop %v3750
    %v4263 = vtanh.pop %v3751
    %v4264 = vtanh.pop %v3752
    %v4265 = vtanh.pop %v3753
    %v4266 = vtanh.pop %v3754
    %v4267 = vtanh.pop %v3755
    %v4268 = vtanh.pop %v3756
    %v4269 = vtanh.pop %v3757
    %v4270 = vtanh.pop %v3758
    %v4271 = vtanh.pop %v3759
    %v4272 = vtanh.pop %v3760
    %v4273 = vtanh.pop %v3761
    %v4274 = vtanh.pop %v3762
    %v4275 = vtanh.pop %v3763
    %v4276 = vtanh.pop %v3764
    %v4277 = vtanh.pop %v3765
    %v4278 = vtanh.pop %v3766
    %v4279 = vtanh.pop %v3767
    %v4280 = vtanh.pop %v3768
    %v4281 = vtanh.pop %v3769
    %v4282 = vtanh.pop %v3770
    %v4283 = vtanh.pop %v3771
    %v4284 = vtanh.pop %v3772
    %v4285 = vtanh.pop %v3773
    %v4286 = vtanh.pop %v3774
    %v4287 = vtanh.pop %v3775
    %v4288 = vtanh.pop %v3776
    %v4289 = vtanh.pop %v3777
    %v4290 = vtanh.pop %v3778
    %v4291 = vtanh.pop %v3779
    %v4292 = vtanh.pop %v3780
    %v4293 = vtanh.pop %v3781
    %v4294 = vtanh.pop %v3782
    %v4295 = vtanh.pop %v3783
    %v4296 = vtanh.pop %v3784
    %v4297 = vtanh.pop %v3785
    %v4298 = vtanh.pop %v3786
    %v4299 = vtanh.pop %v3787
    %v4300 = vtanh.pop %v3788
    %v4301 = vtanh.pop %v3789
    %v4302 = vtanh.pop %v3790
    %v4303 = vtanh.pop %v3791
    %v4304 = vtanh.pop %v3792
    %v4305 = vtanh.pop %v3793
    %v4306 = vtanh.pop %v3794
    %v4307 = vtanh.pop %v3795
    %v4308 = vtanh.pop %v3796
    %v4309 = vtanh.pop %v3797
    %v4310 = vtanh.pop %v3798
    %v4311 = vtanh.pop %v3799
    %v4312 = vtanh.pop %v3800
    %v4313 = vtanh.pop %v3801
    %v4314 = vtanh.pop %v3802
    %v4315 = vtanh.pop %v3803
    %v4316 = vtanh.pop %v3804
    %v4317 = vtanh.pop %v3805
    %v4318 = vtanh.pop %v3806
    %v4319 = vtanh.pop %v3807
    %v4320 = vtanh.pop %v3808
    %v4321 = vtanh.pop %v3809
    %v4322 = vtanh.pop %v3810
    %v4323 = vtanh.pop %v3811
    %v4324 = vtanh.pop %v3812
    %v4325 = vtanh.pop %v3813
    %v4326 = vtanh.pop %v3814
    %v4327 = vtanh.pop %v3815
    %v4328 = vtanh.pop %v3816
    %v4329 = vtanh.pop %v3817
    %v4330 = vtanh.pop %v3818
    %v4331 = vtanh.pop %v3819
    %v4332 = vtanh.pop %v3820
    %v4333 = vtanh.pop %v3821
    %v4334 = vtanh.pop %v3822
    %v4335 = vtanh.pop %v3823
    %v4336 = vtanh.pop %v3824
    %v4337 = vtanh.pop %v3825
    %v4338 = vtanh.pop %v3826
    %v4339 = vtanh.pop %v3827
    %v4340 = vtanh.pop %v3828
    %v4341 = vtanh.pop %v3829
    %v4342 = vtanh.pop %v3830
    %v4343 = vtanh.pop %v3831
    %v4344 = vtanh.pop %v3832
    %v4345 = vtanh.pop %v3833
    %v4346 = vtanh.pop %v3834
    %v4347 = vtanh.pop %v3835
    %v4348 = vtanh.pop %v3836
    %v4349 = vtanh.pop %v3837
    %v4350 = vtanh.pop %v3838
    %v4351 = vtanh.pop %v3839
    %v4352 = vtanh.pop %v3840
    %v4353 = vtanh.pop %v3841
    %v4354 = vtanh.pop %v3842
    %v4355 = vtanh.pop %v3843
    %v4356 = vtanh.pop %v3844
    %v4357 = vtanh.pop %v3845
    %v4358 = vtanh.pop %v3846
    %v4359 = vtanh.pop %v3847
    %v4360 = vtanh.pop %v3848
    %v4361 = vtanh.pop %v3849
    %v4362 = vtanh.pop %v3850
    %s4363 = smul.u32 %s71, 2
    %s4364 = smul.addr %s4363, 8
    %s4365 = scalar_lea.vmem [#allocation2], %s4364
    %v4366 = vld [vmem:[%s4365] sm:$0xff]
    %v4367 = vld [vmem:[%s4365 + $0x8] sm:$0xff]
    %v4368 = vadd.f32 %v3851, %v3853
    %v4369 = vadd.f32 %v4368, %v3855
    %v4370 = vadd.f32 %v4369, %v3857
    %v4371 = vadd.f32 %v4370, %v3859
    %v4372 = vadd.f32 %v4371, %v3861
    %v4373 = vadd.f32 %v4372, %v3863
    %v4374 = vadd.f32 %v4373, %v3865
    %v4375 = vadd.f32 %v4374, %v3867
    %v4376 = vadd.f32 %v4375, %v3869
    %v4377 = vadd.f32 %v4376, %v3871
    %v4378 = vadd.f32 %v4377, %v3873
    %v4379 = vadd.f32 %v4378, %v3875
    %v4380 = vadd.f32 %v4379, %v3877
    %v4381 = vadd.f32 %v4380, %v3879
    %v4382 = vadd.f32 %v4381, %v3881
    %v4383 = vadd.f32 %v4382, %v3883
    %v4384 = vadd.f32 %v4383, %v3885
    %v4385 = vadd.f32 %v4384, %v3887
    %v4386 = vadd.f32 %v4385, %v3889
    %v4387 = vadd.f32 %v4386, %v3891
    %v4388 = vadd.f32 %v4387, %v3893
    %v4389 = vadd.f32 %v4388, %v3895
    %v4390 = vadd.f32 %v4389, %v3897
    %v4391 = vadd.f32 %v4390, %v3899
    %v4392 = vadd.f32 %v4391, %v3901
    %v4393 = vadd.f32 %v4392, %v3903
    %v4394 = vadd.f32 %v4393, %v3905
    %v4395 = vadd.f32 %v4394, %v3907
    %v4396 = vadd.f32 %v4395, %v3909
    %v4397 = vadd.f32 %v4396, %v3911
    %v4398 = vadd.f32 %v4397, %v3913
    %v4399 = vrot.slane %v4398, 4
    %v4400 = vadd.f32 %v4398, %v4399
    %v4401 = vrot.slane %v4400, 2
    %v4402 = vadd.f32 %v4400, %v4401
    %v4403 = vrot.slane %v4402, 1
    %v4404 = vadd.f32 %v4402, %v4403
    %v4405 = vadd.f32 %v3852, %v3854
    %v4406 = vadd.f32 %v4405, %v3856
    %v4407 = vadd.f32 %v4406, %v3858
    %v4408 = vadd.f32 %v4407, %v3860
    %v4409 = vadd.f32 %v4408, %v3862
    %v4410 = vadd.f32 %v4409, %v3864
    %v4411 = vadd.f32 %v4410, %v3866
    %v4412 = vadd.f32 %v4411, %v3868
    %v4413 = vadd.f32 %v4412, %v3870
    %v4414 = vadd.f32 %v4413, %v3872
    %v4415 = vadd.f32 %v4414, %v3874
    %v4416 = vadd.f32 %v4415, %v3876
    %v4417 = vadd.f32 %v4416, %v3878
    %v4418 = vadd.f32 %v4417, %v3880
    %v4419 = vadd.f32 %v4418, %v3882
    %v4420 = vadd.f32 %v4419, %v3884
    %v4421 = vadd.f32 %v4420, %v3886
    %v4422 = vadd.f32 %v4421, %v3888
    %v4423 = vadd.f32 %v4422, %v3890
    %v4424 = vadd.f32 %v4423, %v3892
    %v4425 = vadd.f32 %v4424, %v3894
    %v4426 = vadd.f32 %v4425, %v3896
    %v4427 = vadd.f32 %v4426, %v3898
    %v4428 = vadd.f32 %v4427, %v3900
    %v4429 = vadd.f32 %v4428, %v3902
    %v4430 = vadd.f32 %v4429, %v3904
    %v4431 = vadd.f32 %v4430, %v3906
    %v4432 = vadd.f32 %v4431, %v3908
    %v4433 = vadd.f32 %v4432, %v3910
    %v4434 = vadd.f32 %v4433, %v3912
    %v4435 = vadd.f32 %v4434, %v3914
    %v4436 = vrot.slane %v4435, 4
    %v4437 = vadd.f32 %v4435, %v4436
    %v4438 = vrot.slane %v4437, 2
    %v4439 = vadd.f32 %v4437, %v4438
    %v4440 = vrot.slane %v4439, 1
    %v4441 = vadd.f32 %v4439, %v4440
    %v4442 = vadd.f32 %v3915, %v3917
    %v4443 = vadd.f32 %v4442, %v3919
    %v4444 = vadd.f32 %v4443, %v3921
    %v4445 = vadd.f32 %v4444, %v3923
    %v4446 = vadd.f32 %v4445, %v3925
    %v4447 = vadd.f32 %v4446, %v3927
    %v4448 = vadd.f32 %v4447, %v3929
    %v4449 = vadd.f32 %v4448, %v3931
    %v4450 = vadd.f32 %v4449, %v3933
    %v4451 = vadd.f32 %v4450, %v3935
    %v4452 = vadd.f32 %v4451, %v3937
    %v4453 = vadd.f32 %v4452, %v3939
    %v4454 = vadd.f32 %v4453, %v3941
    %v4455 = vadd.f32 %v4454, %v3943
    %v4456 = vadd.f32 %v4455, %v3945
    %v4457 = vadd.f32 %v4456, %v3947
    %v4458 = vadd.f32 %v4457, %v3949
    %v4459 = vadd.f32 %v4458, %v3951
    %v4460 = vadd.f32 %v4459, %v3953
    %v4461 = vadd.f32 %v4460, %v3955
    %v4462 = vadd.f32 %v4461, %v3957
    %v4463 = vadd.f32 %v4462, %v3959
    %v4464 = vadd.f32 %v4463, %v3961
    %v4465 = vadd.f32 %v4464, %v3963
    %v4466 = vadd.f32 %v4465, %v3965
    %v4467 = vadd.f32 %v4466, %v3967
    %v4468 = vadd.f32 %v4467, %v3969
    %v4469 = vadd.f32 %v4468, %v3971
    %v4470 = vadd.f32 %v4469, %v3973
    %v4471 = vadd.f32 %v4470, %v3975
    %v4472 = vadd.f32 %v4471, %v3977
    %v4473 = vrot.slane %v4472, 4
    %v4474 = vadd.f32 %v4472, %v4473
    %v4475 = vrot.slane %v4474, 2
    %v4476 = vadd.f32 %v4474, %v4475
    %v4477 = vrot.slane %v4476, 1
    %v4478 = vadd.f32 %v4476, %v4477
    %v4479 = vadd.f32 %v3916, %v3918
    %v4480 = vadd.f32 %v4479, %v3920
    %v4481 = vadd.f32 %v4480, %v3922
    %v4482 = vadd.f32 %v4481, %v3924
    %v4483 = vadd.f32 %v4482, %v3926
    %v4484 = vadd.f32 %v4483, %v3928
    %v4485 = vadd.f32 %v4484, %v3930
    %v4486 = vadd.f32 %v4485, %v3932
    %v4487 = vadd.f32 %v4486, %v3934
    %v4488 = vadd.f32 %v4487, %v3936
    %v4489 = vadd.f32 %v4488, %v3938
    %v4490 = vadd.f32 %v4489, %v3940
    %v4491 = vadd.f32 %v4490, %v3942
    %v4492 = vadd.f32 %v4491, %v3944
    %v4493 = vadd.f32 %v4492, %v3946
    %v4494 = vadd.f32 %v4493, %v3948
    %v4495 = vadd.f32 %v4494, %v3950
    %v4496 = vadd.f32 %v4495, %v3952
    %v4497 = vadd.f32 %v4496, %v3954
    %v4498 = vadd.f32 %v4497, %v3956
    %v4499 = vadd.f32 %v4498, %v3958
    %v4500 = vadd.f32 %v4499, %v3960
    %v4501 = vadd.f32 %v4500, %v3962
    %v4502 = vadd.f32 %v4501, %v3964
    %v4503 = vadd.f32 %v4502, %v3966
    %v4504 = vadd.f32 %v4503, %v3968
    %v4505 = vadd.f32 %v4504, %v3970
    %v4506 = vadd.f32 %v4505, %v3972
    %v4507 = vadd.f32 %v4506, %v3974
    %v4508 = vadd.f32 %v4507, %v3976
    %v4509 = vadd.f32 %v4508, %v3978
    %v4510 = vrot.slane %v4509, 4
    %v4511 = vadd.f32 %v4509, %v4510
    %v4512 = vrot.slane %v4511, 2
    %v4513 = vadd.f32 %v4511, %v4512
    %v4514 = vrot.slane %v4513, 1
    %v4515 = vadd.f32 %v4513, %v4514
    %v4516 = vadd.f32 %v3979, %v3981
    %v4517 = vadd.f32 %v4516, %v3983
    %v4518 = vadd.f32 %v4517, %v3985
    %v4519 = vadd.f32 %v4518, %v3987
    %v4520 = vadd.f32 %v4519, %v3989
    %v4521 = vadd.f32 %v4520, %v3991
    %v4522 = vadd.f32 %v4521, %v3993
    %v4523 = vadd.f32 %v4522, %v3995
    %v4524 = vadd.f32 %v4523, %v3997
    %v4525 = vadd.f32 %v4524, %v3999
    %v4526 = vadd.f32 %v4525, %v4001
    %v4527 = vadd.f32 %v4526, %v4003
    %v4528 = vadd.f32 %v4527, %v4005
    %v4529 = vadd.f32 %v4528, %v4007
    %v4530 = vadd.f32 %v4529, %v4009
    %v4531 = vadd.f32 %v4530, %v4011
    %v4532 = vadd.f32 %v4531, %v4013
    %v4533 = vadd.f32 %v4532, %v4015
    %v4534 = vadd.f32 %v4533, %v4017
    %v4535 = vadd.f32 %v4534, %v4019
    %v4536 = vadd.f32 %v4535, %v4021
    %v4537 = vadd.f32 %v4536, %v4023
    %v4538 = vadd.f32 %v4537, %v4025
    %v4539 = vadd.f32 %v4538, %v4027
    %v4540 = vadd.f32 %v4539, %v4029
    %v4541 = vadd.f32 %v4540, %v4031
    %v4542 = vadd.f32 %v4541, %v4033
    %v4543 = vadd.f32 %v4542, %v4035
    %v4544 = vadd.f32 %v4543, %v4037
    %v4545 = vadd.f32 %v4544, %v4039
    %v4546 = vadd.f32 %v4545, %v4041
    %v4547 = vrot.slane %v4546, 4
    %v4548 = vadd.f32 %v4546, %v4547
    %v4549 = vrot.slane %v4548, 2
    %v4550 = vadd.f32 %v4548, %v4549
    %v4551 = vrot.slane %v4550, 1
    %v4552 = vadd.f32 %v4550, %v4551
    %v4553 = vadd.f32 %v3980, %v3982
    %v4554 = vadd.f32 %v4553, %v3984
    %v4555 = vadd.f32 %v4554, %v3986
    %v4556 = vadd.f32 %v4555, %v3988
    %v4557 = vadd.f32 %v4556, %v3990
    %v4558 = vadd.f32 %v4557, %v3992
    %v4559 = vadd.f32 %v4558, %v3994
    %v4560 = vadd.f32 %v4559, %v3996
    %v4561 = vadd.f32 %v4560, %v3998
    %v4562 = vadd.f32 %v4561, %v4000
    %v4563 = vadd.f32 %v4562, %v4002
    %v4564 = vadd.f32 %v4563, %v4004
    %v4565 = vadd.f32 %v4564, %v4006
    %v4566 = vadd.f32 %v4565, %v4008
    %v4567 = vadd.f32 %v4566, %v4010
    %v4568 = vadd.f32 %v4567, %v4012
    %v4569 = vadd.f32 %v4568, %v4014
    %v4570 = vadd.f32 %v4569, %v4016
    %v4571 = vadd.f32 %v4570, %v4018
    %v4572 = vadd.f32 %v4571, %v4020
    %v4573 = vadd.f32 %v4572, %v4022
    %v4574 = vadd.f32 %v4573, %v4024
    %v4575 = vadd.f32 %v4574, %v4026
    %v4576 = vadd.f32 %v4575, %v4028
    %v4577 = vadd.f32 %v4576, %v4030
    %v4578 = vadd.f32 %v4577, %v4032
    %v4579 = vadd.f32 %v4578, %v4034
    %v4580 = vadd.f32 %v4579, %v4036
    %v4581 = vadd.f32 %v4580, %v4038
    %v4582 = vadd.f32 %v4581, %v4040
    %v4583 = vadd.f32 %v4582, %v4042
    %v4584 = vrot.slane %v4583, 4
    %v4585 = vadd.f32 %v4583, %v4584
    %v4586 = vrot.slane %v4585, 2
    %v4587 = vadd.f32 %v4585, %v4586
    %v4588 = vrot.slane %v4587, 1
    %v4589 = vadd.f32 %v4587, %v4588
    %v4590 = vadd.f32 %v4043, %v4045
    %v4591 = vadd.f32 %v4590, %v4047
    %v4592 = vadd.f32 %v4591, %v4049
    %v4593 = vadd.f32 %v4592, %v4051
    %v4594 = vadd.f32 %v4593, %v4053
    %v4595 = vadd.f32 %v4594, %v4055
    %v4596 = vadd.f32 %v4595, %v4057
    %v4597 = vadd.f32 %v4596, %v4059
    %v4598 = vadd.f32 %v4597, %v4061
    %v4599 = vadd.f32 %v4598, %v4063
    %v4600 = vadd.f32 %v4599, %v4065
    %v4601 = vadd.f32 %v4600, %v4067
    %v4602 = vadd.f32 %v4601, %v4069
    %v4603 = vadd.f32 %v4602, %v4071
    %v4604 = vadd.f32 %v4603, %v4073
    %v4605 = vadd.f32 %v4604, %v4075
    %v4606 = vadd.f32 %v4605, %v4077
    %v4607 = vadd.f32 %v4606, %v4079
    %v4608 = vadd.f32 %v4607, %v4081
    %v4609 = vadd.f32 %v4608, %v4083
    %v4610 = vadd.f32 %v4609, %v4085
    %v4611 = vadd.f32 %v4610, %v4087
    %v4612 = vadd.f32 %v4611, %v4089
    %v4613 = vadd.f32 %v4612, %v4091
    %v4614 = vadd.f32 %v4613, %v4093
    %v4615 = vadd.f32 %v4614, %v4095
    %v4616 = vadd.f32 %v4615, %v4097
    %v4617 = vadd.f32 %v4616, %v4099
    %v4618 = vadd.f32 %v4617, %v4101
    %v4619 = vadd.f32 %v4618, %v4103
    %v4620 = vadd.f32 %v4619, %v4105
    %v4621 = vrot.slane %v4620, 4
    %v4622 = vadd.f32 %v4620, %v4621
    %v4623 = vrot.slane %v4622, 2
    %v4624 = vadd.f32 %v4622, %v4623
    %v4625 = vrot.slane %v4624, 1
    %v4626 = vadd.f32 %v4624, %v4625
    %v4627 = vadd.f32 %v4044, %v4046
    %v4628 = vadd.f32 %v4627, %v4048
    %v4629 = vadd.f32 %v4628, %v4050
    %v4630 = vadd.f32 %v4629, %v4052
    %v4631 = vadd.f32 %v4630, %v4054
    %v4632 = vadd.f32 %v4631, %v4056
    %v4633 = vadd.f32 %v4632, %v4058
    %v4634 = vadd.f32 %v4633, %v4060
    %v4635 = vadd.f32 %v4634, %v4062
    %v4636 = vadd.f32 %v4635, %v4064
    %v4637 = vadd.f32 %v4636, %v4066
    %v4638 = vadd.f32 %v4637, %v4068
    %v4639 = vadd.f32 %v4638, %v4070
    %v4640 = vadd.f32 %v4639, %v4072
    %v4641 = vadd.f32 %v4640, %v4074
    %v4642 = vadd.f32 %v4641, %v4076
    %v4643 = vadd.f32 %v4642, %v4078
    %v4644 = vadd.f32 %v4643, %v4080
    %v4645 = vadd.f32 %v4644, %v4082
    %v4646 = vadd.f32 %v4645, %v4084
    %v4647 = vadd.f32 %v4646, %v4086
    %v4648 = vadd.f32 %v4647, %v4088
    %v4649 = vadd.f32 %v4648, %v4090
    %v4650 = vadd.f32 %v4649, %v4092
    %v4651 = vadd.f32 %v4650, %v4094
    %v4652 = vadd.f32 %v4651, %v4096
    %v4653 = vadd.f32 %v4652, %v4098
    %v4654 = vadd.f32 %v4653, %v4100
    %v4655 = vadd.f32 %v4654, %v4102
    %v4656 = vadd.f32 %v4655, %v4104
    %v4657 = vadd.f32 %v4656, %v4106
    %v4658 = vrot.slane %v4657, 4
    %v4659 = vadd.f32 %v4657, %v4658
    %v4660 = vrot.slane %v4659, 2
    %v4661 = vadd.f32 %v4659, %v4660
    %v4662 = vrot.slane %v4661, 1
    %v4663 = vadd.f32 %v4661, %v4662
    %v4664 = vadd.f32 %v4107, %v4109
    %v4665 = vadd.f32 %v4664, %v4111
    %v4666 = vadd.f32 %v4665, %v4113
    %v4667 = vadd.f32 %v4666, %v4115
    %v4668 = vadd.f32 %v4667, %v4117
    %v4669 = vadd.f32 %v4668, %v4119
    %v4670 = vadd.f32 %v4669, %v4121
    %v4671 = vadd.f32 %v4670, %v4123
    %v4672 = vadd.f32 %v4671, %v4125
    %v4673 = vadd.f32 %v4672, %v4127
    %v4674 = vadd.f32 %v4673, %v4129
    %v4675 = vadd.f32 %v4674, %v4131
    %v4676 = vadd.f32 %v4675, %v4133
    %v4677 = vadd.f32 %v4676, %v4135
    %v4678 = vadd.f32 %v4677, %v4137
    %v4679 = vadd.f32 %v4678, %v4139
    %v4680 = vadd.f32 %v4679, %v4141
    %v4681 = vadd.f32 %v4680, %v4143
    %v4682 = vadd.f32 %v4681, %v4145
    %v4683 = vadd.f32 %v4682, %v4147
    %v4684 = vadd.f32 %v4683, %v4149
    %v4685 = vadd.f32 %v4684, %v4151
    %v4686 = vadd.f32 %v4685, %v4153
    %v4687 = vadd.f32 %v4686, %v4155
    %v4688 = vadd.f32 %v4687, %v4157
    %v4689 = vadd.f32 %v4688, %v4159
    %v4690 = vadd.f32 %v4689, %v4161
    %v4691 = vadd.f32 %v4690, %v4163
    %v4692 = vadd.f32 %v4691, %v4165
    %v4693 = vadd.f32 %v4692, %v4167
    %v4694 = vadd.f32 %v4693, %v4169
    %v4695 = vrot.slane %v4694, 4
    %v4696 = vadd.f32 %v4694, %v4695
    %v4697 = vrot.slane %v4696, 2
    %v4698 = vadd.f32 %v4696, %v4697
    %v4699 = vrot.slane %v4698, 1
    %v4700 = vadd.f32 %v4698, %v4699
    %v4701 = vadd.f32 %v4108, %v4110
    %v4702 = vadd.f32 %v4701, %v4112
    %v4703 = vadd.f32 %v4702, %v4114
    %v4704 = vadd.f32 %v4703, %v4116
    %v4705 = vadd.f32 %v4704, %v4118
    %v4706 = vadd.f32 %v4705, %v4120
    %v4707 = vadd.f32 %v4706, %v4122
    %v4708 = vadd.f32 %v4707, %v4124
    %v4709 = vadd.f32 %v4708, %v4126
    %v4710 = vadd.f32 %v4709, %v4128
    %v4711 = vadd.f32 %v4710, %v4130
    %v4712 = vadd.f32 %v4711, %v4132
    %v4713 = vadd.f32 %v4712, %v4134
    %v4714 = vadd.f32 %v4713, %v4136
    %v4715 = vadd.f32 %v4714, %v4138
    %v4716 = vadd.f32 %v4715, %v4140
    %v4717 = vadd.f32 %v4716, %v4142
    %v4718 = vadd.f32 %v4717, %v4144
    %v4719 = vadd.f32 %v4718, %v4146
    %v4720 = vadd.f32 %v4719, %v4148
    %v4721 = vadd.f32 %v4720, %v4150
    %v4722 = vadd.f32 %v4721, %v4152
    %v4723 = vadd.f32 %v4722, %v4154
    %v4724 = vadd.f32 %v4723, %v4156
    %v4725 = vadd.f32 %v4724, %v4158
    %v4726 = vadd.f32 %v4725, %v4160
    %v4727 = vadd.f32 %v4726, %v4162
    %v4728 = vadd.f32 %v4727, %v4164
    %v4729 = vadd.f32 %v4728, %v4166
    %v4730 = vadd.f32 %v4729, %v4168
    %v4731 = vadd.f32 %v4730, %v4170
    %v4732 = vrot.slane %v4731, 4
    %v4733 = vadd.f32 %v4731, %v4732
    %v4734 = vrot.slane %v4733, 2
    %v4735 = vadd.f32 %v4733, %v4734
    %v4736 = vrot.slane %v4735, 1
    %v4737 = vadd.f32 %v4735, %v4736
    %v4738 = vadd.f32 %v4171, %v4173
    %v4739 = vadd.f32 %v4738, %v4175
    %v4740 = vadd.f32 %v4739, %v4177
    %v4741 = vadd.f32 %v4740, %v4179
    %v4742 = vadd.f32 %v4741, %v4181
    %v4743 = vadd.f32 %v4742, %v4183
    %v4744 = vadd.f32 %v4743, %v4185
    %v4745 = vadd.f32 %v4744, %v4187
    %v4746 = vadd.f32 %v4745, %v4189
    %v4747 = vadd.f32 %v4746, %v4191
    %v4748 = vadd.f32 %v4747, %v4193
    %v4749 = vadd.f32 %v4748, %v4195
    %v4750 = vadd.f32 %v4749, %v4197
    %v4751 = vadd.f32 %v4750, %v4199
    %v4752 = vadd.f32 %v4751, %v4201
    %v4753 = vadd.f32 %v4752, %v4203
    %v4754 = vadd.f32 %v4753, %v4205
    %v4755 = vadd.f32 %v4754, %v4207
    %v4756 = vadd.f32 %v4755, %v4209
    %v4757 = vadd.f32 %v4756, %v4211
    %v4758 = vadd.f32 %v4757, %v4213
    %v4759 = vadd.f32 %v4758, %v4215
    %v4760 = vadd.f32 %v4759, %v4217
    %v4761 = vadd.f32 %v4760, %v4219
    %v4762 = vadd.f32 %v4761, %v4221
    %v4763 = vadd.f32 %v4762, %v4223
    %v4764 = vadd.f32 %v4763, %v4225
    %v4765 = vadd.f32 %v4764, %v4227
    %v4766 = vadd.f32 %v4765, %v4229
    %v4767 = vadd.f32 %v4766, %v4231
    %v4768 = vadd.f32 %v4767, %v4233
    %v4769 = vrot.slane %v4768, 4
    %v4770 = vadd.f32 %v4768, %v4769
    %v4771 = vrot.slane %v4770, 2
    %v4772 = vadd.f32 %v4770, %v4771
    %v4773 = vrot.slane %v4772, 1
    %v4774 = vadd.f32 %v4772, %v4773
    %v4775 = vadd.f32 %v4172, %v4174
    %v4776 = vadd.f32 %v4775, %v4176
    %v4777 = vadd.f32 %v4776, %v4178
    %v4778 = vadd.f32 %v4777, %v4180
    %v4779 = vadd.f32 %v4778, %v4182
    %v4780 = vadd.f32 %v4779, %v4184
    %v4781 = vadd.f32 %v4780, %v4186
    %v4782 = vadd.f32 %v4781, %v4188
    %v4783 = vadd.f32 %v4782, %v4190
    %v4784 = vadd.f32 %v4783, %v4192
    %v4785 = vadd.f32 %v4784, %v4194
    %v4786 = vadd.f32 %v4785, %v4196
    %v4787 = vadd.f32 %v4786, %v4198
    %v4788 = vadd.f32 %v4787, %v4200
    %v4789 = vadd.f32 %v4788, %v4202
    %v4790 = vadd.f32 %v4789, %v4204
    %v4791 = vadd.f32 %v4790, %v4206
    %v4792 = vadd.f32 %v4791, %v4208
    %v4793 = vadd.f32 %v4792, %v4210
    %v4794 = vadd.f32 %v4793, %v4212
    %v4795 = vadd.f32 %v4794, %v4214
    %v4796 = vadd.f32 %v4795, %v4216
    %v4797 = vadd.f32 %v4796, %v4218
    %v4798 = vadd.f32 %v4797, %v4220
    %v4799 = vadd.f32 %v4798, %v4222
    %v4800 = vadd.f32 %v4799, %v4224
    %v4801 = vadd.f32 %v4800, %v4226
    %v4802 = vadd.f32 %v4801, %v4228
    %v4803 = vadd.f32 %v4802, %v4230
    %v4804 = vadd.f32 %v4803, %v4232
    %v4805 = vadd.f32 %v4804, %v4234
    %v4806 = vrot.slane %v4805, 4
    %v4807 = vadd.f32 %v4805, %v4806
    %v4808 = vrot.slane %v4807, 2
    %v4809 = vadd.f32 %v4807, %v4808
    %v4810 = vrot.slane %v4809, 1
    %v4811 = vadd.f32 %v4809, %v4810
    %v4812 = vadd.f32 %v4235, %v4237
    %v4813 = vadd.f32 %v4812, %v4239
    %v4814 = vadd.f32 %v4813, %v4241
    %v4815 = vadd.f32 %v4814, %v4243
    %v4816 = vadd.f32 %v4815, %v4245
    %v4817 = vadd.f32 %v4816, %v4247
    %v4818 = vadd.f32 %v4817, %v4249
    %v4819 = vadd.f32 %v4818, %v4251
    %v4820 = vadd.f32 %v4819, %v4253
    %v4821 = vadd.f32 %v4820, %v4255
    %v4822 = vadd.f32 %v4821, %v4257
    %v4823 = vadd.f32 %v4822, %v4259
    %v4824 = vadd.f32 %v4823, %v4261
    %v4825 = vadd.f32 %v4824, %v4263
    %v4826 = vadd.f32 %v4825, %v4265
    %v4827 = vadd.f32 %v4826, %v4267
    %v4828 = vadd.f32 %v4827, %v4269
    %v4829 = vadd.f32 %v4828, %v4271
    %v4830 = vadd.f32 %v4829, %v4273
    %v4831 = vadd.f32 %v4830, %v4275
    %v4832 = vadd.f32 %v4831, %v4277
    %v4833 = vadd.f32 %v4832, %v4279
    %v4834 = vadd.f32 %v4833, %v4281
    %v4835 = vadd.f32 %v4834, %v4283
    %v4836 = vadd.f32 %v4835, %v4285
    %v4837 = vadd.f32 %v4836, %v4287
    %v4838 = vadd.f32 %v4837, %v4289
    %v4839 = vadd.f32 %v4838, %v4291
    %v4840 = vadd.f32 %v4839, %v4293
    %v4841 = vadd.f32 %v4840, %v4295
    %v4842 = vadd.f32 %v4841, %v4297
    %v4843 = vrot.slane %v4842, 4
    %v4844 = vadd.f32 %v4842, %v4843
    %v4845 = vrot.slane %v4844, 2
    %v4846 = vadd.f32 %v4844, %v4845
    %v4847 = vrot.slane %v4846, 1
    %v4848 = vadd.f32 %v4846, %v4847
    %v4849 = vadd.f32 %v4236, %v4238
    %v4850 = vadd.f32 %v4849, %v4240
    %v4851 = vadd.f32 %v4850, %v4242
    %v4852 = vadd.f32 %v4851, %v4244
    %v4853 = vadd.f32 %v4852, %v4246
    %v4854 = vadd.f32 %v4853, %v4248
    %v4855 = vadd.f32 %v4854, %v4250
    %v4856 = vadd.f32 %v4855, %v4252
    %v4857 = vadd.f32 %v4856, %v4254
    %v4858 = vadd.f32 %v4857, %v4256
    %v4859 = vadd.f32 %v4858, %v4258
    %v4860 = vadd.f32 %v4859, %v4260
    %v4861 = vadd.f32 %v4860, %v4262
    %v4862 = vadd.f32 %v4861, %v4264
    %v4863 = vadd.f32 %v4862, %v4266
    %v4864 = vadd.f32 %v4863, %v4268
    %v4865 = vadd.f32 %v4864, %v4270
    %v4866 = vadd.f32 %v4865, %v4272
    %v4867 = vadd.f32 %v4866, %v4274
    %v4868 = vadd.f32 %v4867, %v4276
    %v4869 = vadd.f32 %v4868, %v4278
    %v4870 = vadd.f32 %v4869, %v4280
    %v4871 = vadd.f32 %v4870, %v4282
    %v4872 = vadd.f32 %v4871, %v4284
    %v4873 = vadd.f32 %v4872, %v4286
    %v4874 = vadd.f32 %v4873, %v4288
    %v4875 = vadd.f32 %v4874, %v4290
    %v4876 = vadd.f32 %v4875, %v4292
    %v4877 = vadd.f32 %v4876, %v4294
    %v4878 = vadd.f32 %v4877, %v4296
    %v4879 = vadd.f32 %v4878, %v4298
    %v4880 = vrot.slane %v4879, 4
    %v4881 = vadd.f32 %v4879, %v4880
    %v4882 = vrot.slane %v4881, 2
    %v4883 = vadd.f32 %v4881, %v4882
    %v4884 = vrot.slane %v4883, 1
    %v4885 = vadd.f32 %v4883, %v4884
    %v4886 = vadd.f32 %v4299, %v4301
    %v4887 = vadd.f32 %v4886, %v4303
    %v4888 = vadd.f32 %v4887, %v4305
    %v4889 = vadd.f32 %v4888, %v4307
    %v4890 = vadd.f32 %v4889, %v4309
    %v4891 = vadd.f32 %v4890, %v4311
    %v4892 = vadd.f32 %v4891, %v4313
    %v4893 = vadd.f32 %v4892, %v4315
    %v4894 = vadd.f32 %v4893, %v4317
    %v4895 = vadd.f32 %v4894, %v4319
    %v4896 = vadd.f32 %v4895, %v4321
    %v4897 = vadd.f32 %v4896, %v4323
    %v4898 = vadd.f32 %v4897, %v4325
    %v4899 = vadd.f32 %v4898, %v4327
    %v4900 = vadd.f32 %v4899, %v4329
    %v4901 = vadd.f32 %v4900, %v4331
    %v4902 = vadd.f32 %v4901, %v4333
    %v4903 = vadd.f32 %v4902, %v4335
    %v4904 = vadd.f32 %v4903, %v4337
    %v4905 = vadd.f32 %v4904, %v4339
    %v4906 = vadd.f32 %v4905, %v4341
    %v4907 = vadd.f32 %v4906, %v4343
    %v4908 = vadd.f32 %v4907, %v4345
    %v4909 = vadd.f32 %v4908, %v4347
    %v4910 = vadd.f32 %v4909, %v4349
    %v4911 = vadd.f32 %v4910, %v4351
    %v4912 = vadd.f32 %v4911, %v4353
    %v4913 = vadd.f32 %v4912, %v4355
    %v4914 = vadd.f32 %v4913, %v4357
    %v4915 = vadd.f32 %v4914, %v4359
    %v4916 = vadd.f32 %v4915, %v4361
    %v4917 = vrot.slane %v4916, 4
    %v4918 = vadd.f32 %v4916, %v4917
    %v4919 = vrot.slane %v4918, 2
    %v4920 = vadd.f32 %v4918, %v4919
    %v4921 = vrot.slane %v4920, 1
    %v4922 = vadd.f32 %v4920, %v4921
    %v4923 = vadd.f32 %v4300, %v4302
    %v4924 = vadd.f32 %v4923, %v4304
    %v4925 = vadd.f32 %v4924, %v4306
    %v4926 = vadd.f32 %v4925, %v4308
    %v4927 = vadd.f32 %v4926, %v4310
    %v4928 = vadd.f32 %v4927, %v4312
    %v4929 = vadd.f32 %v4928, %v4314
    %v4930 = vadd.f32 %v4929, %v4316
    %v4931 = vadd.f32 %v4930, %v4318
    %v4932 = vadd.f32 %v4931, %v4320
    %v4933 = vadd.f32 %v4932, %v4322
    %v4934 = vadd.f32 %v4933, %v4324
    %v4935 = vadd.f32 %v4934, %v4326
    %v4936 = vadd.f32 %v4935, %v4328
    %v4937 = vadd.f32 %v4936, %v4330
    %v4938 = vadd.f32 %v4937, %v4332
    %v4939 = vadd.f32 %v4938, %v4334
    %v4940 = vadd.f32 %v4939, %v4336
    %v4941 = vadd.f32 %v4940, %v4338
    %v4942 = vadd.f32 %v4941, %v4340
    %v4943 = vadd.f32 %v4942, %v4342
    %v4944 = vadd.f32 %v4943, %v4344
    %v4945 = vadd.f32 %v4944, %v4346
    %v4946 = vadd.f32 %v4945, %v4348
    %v4947 = vadd.f32 %v4946, %v4350
    %v4948 = vadd.f32 %v4947, %v4352
    %v4949 = vadd.f32 %v4948, %v4354
    %v4950 = vadd.f32 %v4949, %v4356
    %v4951 = vadd.f32 %v4950, %v4358
    %v4952 = vadd.f32 %v4951, %v4360
    %v4953 = vadd.f32 %v4952, %v4362
    %v4954 = vrot.slane %v4953, 4
    %v4955 = vadd.f32 %v4953, %v4954
    %v4956 = vrot.slane %v4955, 2
    %v4957 = vadd.f32 %v4955, %v4956
    %v4958 = vrot.slane %v4957, 1
    %v4959 = vadd.f32 %v4957, %v4958
    %vm4976 = vcmask 1041409
    %v4977 = vsel %vm4976, %v4478, %v4404
    %vm4978 = vcmask 1042434
    %v4979 = vsel %vm4978, %v4552, %v4977
    %vm4980 = vcmask 1043459
    %v4981 = vsel %vm4980, %v4626, %v4979
    %vm4982 = vcmask 1044484
    %v4983 = vsel %vm4982, %v4700, %v4981
    %vm4984 = vcmask 1045509
    %v4985 = vsel %vm4984, %v4774, %v4983
    %vm4986 = vcmask 1046534
    %v4987 = vsel %vm4986, %v4848, %v4985
    %vm4988 = vcmask 1047559
    %v4989 = vsel %vm4988, %v4922, %v4987
    %v4990 = vsel %vm4976, %v4515, %v4441
    %v4991 = vsel %vm4978, %v4589, %v4990
    %v4992 = vsel %vm4980, %v4663, %v4991
    %v4993 = vsel %vm4982, %v4737, %v4992
    %v4994 = vsel %vm4984, %v4811, %v4993
    %v4995 = vsel %vm4986, %v4885, %v4994
    %v4996 = vsel %vm4988, %v4959, %v4995
    %v4999 = vadd.f32 %v4366, %v4989
    %v5000 = vadd.f32 %v4367, %v4996
    %5001 = vst [vmem:[%s4365] sm:$0xff] %v4999
    %5002 = vst [vmem:[%s4365 + $0x8] sm:$0xff] %v5000
    %p5003 = scmp.ne.s32.totalorder %s71, %s72
    // Predicated region
    $region30: #{tpu_custom_call.1} parent=1 // pred_check
      %p5004 = pneg %p5003
    $region31: #{tpu_custom_call.1} parent=1 // pred_check_branch
      %5006 = sbr.rel (%p5004) target = $region33
    $region32: #{tpu_custom_call.1} parent=1 // pred_region
      %s5007 = smul.u32 %s72, 2
      %s5008 = smul.addr %s5007, 8
      %s5009 = scalar_lea.vmem [#allocation2], %s5008
      %v5010 = vld [vmem:[%s5009] sm:$0xff]
      %v5011 = vld [vmem:[%s5009 + $0x8] sm:$0xff]
      %v5012 = vadd.f32 %v3851, %v3852
      %5013 = vadd.xlane.f32.xlu0 %v5012
      %v5014 = vpop.xlane.xlu0 %5013
      %v5015 = vadd.f32 %v3853, %v3854
      %5016 = vadd.xlane.f32.xlu0 %v5015
      %v5017 = vpop.xlane.xlu0 %5016
      %v5018 = vadd.f32 %v3855, %v3856
      %5019 = vadd.xlane.f32.xlu0 %v5018
      %v5020 = vpop.xlane.xlu0 %5019
      %v5021 = vadd.f32 %v3857, %v3858
      %5022 = vadd.xlane.f32.xlu0 %v5021
      %v5023 = vpop.xlane.xlu0 %5022
      %v5024 = vadd.f32 %v3859, %v3860
      %5025 = vadd.xlane.f32.xlu0 %v5024
      %v5026 = vpop.xlane.xlu0 %5025
      %v5027 = vadd.f32 %v3861, %v3862
      %5028 = vadd.xlane.f32.xlu0 %v5027
      %v5029 = vpop.xlane.xlu0 %5028
      %v5030 = vadd.f32 %v3863, %v3864
      %5031 = vadd.xlane.f32.xlu0 %v5030
      %v5032 = vpop.xlane.xlu0 %5031
      %v5033 = vadd.f32 %v3865, %v3866
      %5034 = vadd.xlane.f32.xlu0 %v5033
      %v5035 = vpop.xlane.xlu0 %5034
      %v5036 = vadd.f32 %v3867, %v3868
      %5037 = vadd.xlane.f32.xlu0 %v5036
      %v5038 = vpop.xlane.xlu0 %5037
      %v5039 = vadd.f32 %v3869, %v3870
      %5040 = vadd.xlane.f32.xlu0 %v5039
      %v5041 = vpop.xlane.xlu0 %5040
      %v5042 = vadd.f32 %v3871, %v3872
      %5043 = vadd.xlane.f32.xlu0 %v5042
      %v5044 = vpop.xlane.xlu0 %5043
      %v5045 = vadd.f32 %v3873, %v3874
      %5046 = vadd.xlane.f32.xlu0 %v5045
      %v5047 = vpop.xlane.xlu0 %5046
      %v5048 = vadd.f32 %v3875, %v3876
      %5049 = vadd.xlane.f32.xlu0 %v5048
      %v5050 = vpop.xlane.xlu0 %5049
      %v5051 = vadd.f32 %v3877, %v3878
      %5052 = vadd.xlane.f32.xlu0 %v5051
      %v5053 = vpop.xlane.xlu0 %5052
      %v5054 = vadd.f32 %v3879, %v3880
      %5055 = vadd.xlane.f32.xlu0 %v5054
      %v5056 = vpop.xlane.xlu0 %5055
      %v5057 = vadd.f32 %v3881, %v3882
      %5058 = vadd.xlane.f32.xlu0 %v5057
      %v5059 = vpop.xlane.xlu0 %5058
      %v5060 = vadd.f32 %v3883, %v3884
      %5061 = vadd.xlane.f32.xlu0 %v5060
      %v5062 = vpop.xlane.xlu0 %5061
      %v5063 = vadd.f32 %v3885, %v3886
      %5064 = vadd.xlane.f32.xlu0 %v5063
      %v5065 = vpop.xlane.xlu0 %5064
      %v5066 = vadd.f32 %v3887, %v3888
      %5067 = vadd.xlane.f32.xlu0 %v5066
      %v5068 = vpop.xlane.xlu0 %5067
      %v5069 = vadd.f32 %v3889, %v3890
      %5070 = vadd.xlane.f32.xlu0 %v5069
      %v5071 = vpop.xlane.xlu0 %5070
      %v5072 = vadd.f32 %v3891, %v3892
      %5073 = vadd.xlane.f32.xlu0 %v5072
      %v5074 = vpop.xlane.xlu0 %5073
      %v5075 = vadd.f32 %v3893, %v3894
      %5076 = vadd.xlane.f32.xlu0 %v5075
      %v5077 = vpop.xlane.xlu0 %5076
      %v5078 = vadd.f32 %v3895, %v3896
      %5079 = vadd.xlane.f32.xlu0 %v5078
      %v5080 = vpop.xlane.xlu0 %5079
      %v5081 = vadd.f32 %v3897, %v3898
      %5082 = vadd.xlane.f32.xlu0 %v5081
      %v5083 = vpop.xlane.xlu0 %5082
      %v5084 = vadd.f32 %v3899, %v3900
      %5085 = vadd.xlane.f32.xlu0 %v5084
      %v5086 = vpop.xlane.xlu0 %5085
      %v5087 = vadd.f32 %v3901, %v3902
      %5088 = vadd.xlane.f32.xlu0 %v5087
      %v5089 = vpop.xlane.xlu0 %5088
      %v5090 = vadd.f32 %v3903, %v3904
      %5091 = vadd.xlane.f32.xlu0 %v5090
      %v5092 = vpop.xlane.xlu0 %5091
      %v5093 = vadd.f32 %v3905, %v3906
      %5094 = vadd.xlane.f32.xlu0 %v5093
      %v5095 = vpop.xlane.xlu0 %5094
      %v5096 = vadd.f32 %v3907, %v3908
      %5097 = vadd.xlane.f32.xlu0 %v5096
      %v5098 = vpop.xlane.xlu0 %5097
      %v5099 = vadd.f32 %v3909, %v3910
      %5100 = vadd.xlane.f32.xlu0 %v5099
      %v5101 = vpop.xlane.xlu0 %5100
      %v5102 = vadd.f32 %v3911, %v3912
      %5103 = vadd.xlane.f32.xlu0 %v5102
      %v5104 = vpop.xlane.xlu0 %5103
      %v5105 = vadd.f32 %v3913, %v3914
      %5106 = vadd.xlane.f32.xlu0 %v5105
      %v5107 = vpop.xlane.xlu0 %5106
      %v5108 = vadd.f32 %v3915, %v3916
      %5109 = vadd.xlane.f32.xlu0 %v5108
      %v5110 = vpop.xlane.xlu0 %5109
      %v5111 = vadd.f32 %v3917, %v3918
      %5112 = vadd.xlane.f32.xlu0 %v5111
      %v5113 = vpop.xlane.xlu0 %5112
      %v5114 = vadd.f32 %v3919, %v3920
      %5115 = vadd.xlane.f32.xlu0 %v5114
      %v5116 = vpop.xlane.xlu0 %5115
      %v5117 = vadd.f32 %v3921, %v3922
      %5118 = vadd.xlane.f32.xlu0 %v5117
      %v5119 = vpop.xlane.xlu0 %5118
      %v5120 = vadd.f32 %v3923, %v3924
      %5121 = vadd.xlane.f32.xlu0 %v5120
      %v5122 = vpop.xlane.xlu0 %5121
      %v5123 = vadd.f32 %v3925, %v3926
      %5124 = vadd.xlane.f32.xlu0 %v5123
      %v5125 = vpop.xlane.xlu0 %5124
      %v5126 = vadd.f32 %v3927, %v3928
      %5127 = vadd.xlane.f32.xlu0 %v5126
      %v5128 = vpop.xlane.xlu0 %5127
      %v5129 = vadd.f32 %v3929, %v3930
      %5130 = vadd.xlane.f32.xlu0 %v5129
      %v5131 = vpop.xlane.xlu0 %5130
      %v5132 = vadd.f32 %v3931, %v3932
      %5133 = vadd.xlane.f32.xlu0 %v5132
      %v5134 = vpop.xlane.xlu0 %5133
      %v5135 = vadd.f32 %v3933, %v3934
      %5136 = vadd.xlane.f32.xlu0 %v5135
      %v5137 = vpop.xlane.xlu0 %5136
      %v5138 = vadd.f32 %v3935, %v3936
      %5139 = vadd.xlane.f32.xlu0 %v5138
      %v5140 = vpop.xlane.xlu0 %5139
      %v5141 = vadd.f32 %v3937, %v3938
      %5142 = vadd.xlane.f32.xlu0 %v5141
      %v5143 = vpop.xlane.xlu0 %5142
      %v5144 = vadd.f32 %v3939, %v3940
      %5145 = vadd.xlane.f32.xlu0 %v5144
      %v5146 = vpop.xlane.xlu0 %5145
      %v5147 = vadd.f32 %v3941, %v3942
      %5148 = vadd.xlane.f32.xlu0 %v5147
      %v5149 = vpop.xlane.xlu0 %5148
      %v5150 = vadd.f32 %v3943, %v3944
      %5151 = vadd.xlane.f32.xlu0 %v5150
      %v5152 = vpop.xlane.xlu0 %5151
      %v5153 = vadd.f32 %v3945, %v3946
      %5154 = vadd.xlane.f32.xlu0 %v5153
      %v5155 = vpop.xlane.xlu0 %5154
      %v5156 = vadd.f32 %v3947, %v3948
      %5157 = vadd.xlane.f32.xlu0 %v5156
      %v5158 = vpop.xlane.xlu0 %5157
      %v5159 = vadd.f32 %v3949, %v3950
      %5160 = vadd.xlane.f32.xlu0 %v5159
      %v5161 = vpop.xlane.xlu0 %5160
      %v5162 = vadd.f32 %v3951, %v3952
      %5163 = vadd.xlane.f32.xlu0 %v5162
      %v5164 = vpop.xlane.xlu0 %5163
      %v5165 = vadd.f32 %v3953, %v3954
      %5166 = vadd.xlane.f32.xlu0 %v5165
      %v5167 = vpop.xlane.xlu0 %5166
      %v5168 = vadd.f32 %v3955, %v3956
      %5169 = vadd.xlane.f32.xlu0 %v5168
      %v5170 = vpop.xlane.xlu0 %5169
      %v5171 = vadd.f32 %v3957, %v3958
      %5172 = vadd.xlane.f32.xlu0 %v5171
      %v5173 = vpop.xlane.xlu0 %5172
      %v5174 = vadd.f32 %v3959, %v3960
      %5175 = vadd.xlane.f32.xlu0 %v5174
      %v5176 = vpop.xlane.xlu0 %5175
      %v5177 = vadd.f32 %v3961, %v3962
      %5178 = vadd.xlane.f32.xlu0 %v5177
      %v5179 = vpop.xlane.xlu0 %5178
      %v5180 = vadd.f32 %v3963, %v3964
      %5181 = vadd.xlane.f32.xlu0 %v5180
      %v5182 = vpop.xlane.xlu0 %5181
      %v5183 = vadd.f32 %v3965, %v3966
      %5184 = vadd.xlane.f32.xlu0 %v5183
      %v5185 = vpop.xlane.xlu0 %5184
      %v5186 = vadd.f32 %v3967, %v3968
      %5187 = vadd.xlane.f32.xlu0 %v5186
      %v5188 = vpop.xlane.xlu0 %5187
      %v5189 = vadd.f32 %v3969, %v3970
      %5190 = vadd.xlane.f32.xlu0 %v5189
      %v5191 = vpop.xlane.xlu0 %5190
      %v5192 = vadd.f32 %v3971, %v3972
      %5193 = vadd.xlane.f32.xlu0 %v5192
      %v5194 = vpop.xlane.xlu0 %5193
      %v5195 = vadd.f32 %v3973, %v3974
      %5196 = vadd.xlane.f32.xlu0 %v5195
      %v5197 = vpop.xlane.xlu0 %5196
      %v5198 = vadd.f32 %v3975, %v3976
      %5199 = vadd.xlane.f32.xlu0 %v5198
      %v5200 = vpop.xlane.xlu0 %5199
      %v5201 = vadd.f32 %v3977, %v3978
      %5202 = vadd.xlane.f32.xlu0 %v5201
      %v5203 = vpop.xlane.xlu0 %5202
      %v5204 = vadd.f32 %v3979, %v3980
      %5205 = vadd.xlane.f32.xlu0 %v5204
      %v5206 = vpop.xlane.xlu0 %5205
      %v5207 = vadd.f32 %v3981, %v3982
      %5208 = vadd.xlane.f32.xlu0 %v5207
      %v5209 = vpop.xlane.xlu0 %5208
      %v5210 = vadd.f32 %v3983, %v3984
      %5211 = vadd.xlane.f32.xlu0 %v5210
      %v5212 = vpop.xlane.xlu0 %5211
      %v5213 = vadd.f32 %v3985, %v3986
      %5214 = vadd.xlane.f32.xlu0 %v5213
      %v5215 = vpop.xlane.xlu0 %5214
      %v5216 = vadd.f32 %v3987, %v3988
      %5217 = vadd.xlane.f32.xlu0 %v5216
      %v5218 = vpop.xlane.xlu0 %5217
      %v5219 = vadd.f32 %v3989, %v3990
      %5220 = vadd.xlane.f32.xlu0 %v5219
      %v5221 = vpop.xlane.xlu0 %5220
      %v5222 = vadd.f32 %v3991, %v3992
      %5223 = vadd.xlane.f32.xlu0 %v5222
      %v5224 = vpop.xlane.xlu0 %5223
      %v5225 = vadd.f32 %v3993, %v3994
      %5226 = vadd.xlane.f32.xlu0 %v5225
      %v5227 = vpop.xlane.xlu0 %5226
      %v5228 = vadd.f32 %v3995, %v3996
      %5229 = vadd.xlane.f32.xlu0 %v5228
      %v5230 = vpop.xlane.xlu0 %5229
      %v5231 = vadd.f32 %v3997, %v3998
      %5232 = vadd.xlane.f32.xlu0 %v5231
      %v5233 = vpop.xlane.xlu0 %5232
      %v5234 = vadd.f32 %v3999, %v4000
      %5235 = vadd.xlane.f32.xlu0 %v5234
      %v5236 = vpop.xlane.xlu0 %5235
      %v5237 = vadd.f32 %v4001, %v4002
      %5238 = vadd.xlane.f32.xlu0 %v5237
      %v5239 = vpop.xlane.xlu0 %5238
      %v5240 = vadd.f32 %v4003, %v4004
      %5241 = vadd.xlane.f32.xlu0 %v5240
      %v5242 = vpop.xlane.xlu0 %5241
      %v5243 = vadd.f32 %v4005, %v4006
      %5244 = vadd.xlane.f32.xlu0 %v5243
      %v5245 = vpop.xlane.xlu0 %5244
      %v5246 = vadd.f32 %v4007, %v4008
      %5247 = vadd.xlane.f32.xlu0 %v5246
      %v5248 = vpop.xlane.xlu0 %5247
      %v5249 = vadd.f32 %v4009, %v4010
      %5250 = vadd.xlane.f32.xlu0 %v5249
      %v5251 = vpop.xlane.xlu0 %5250
      %v5252 = vadd.f32 %v4011, %v4012
      %5253 = vadd.xlane.f32.xlu0 %v5252
      %v5254 = vpop.xlane.xlu0 %5253
      %v5255 = vadd.f32 %v4013, %v4014
      %5256 = vadd.xlane.f32.xlu0 %v5255
      %v5257 = vpop.xlane.xlu0 %5256
      %v5258 = vadd.f32 %v4015, %v4016
      %5259 = vadd.xlane.f32.xlu0 %v5258
      %v5260 = vpop.xlane.xlu0 %5259
      %v5261 = vadd.f32 %v4017, %v4018
      %5262 = vadd.xlane.f32.xlu0 %v5261
      %v5263 = vpop.xlane.xlu0 %5262
      %v5264 = vadd.f32 %v4019, %v4020
      %5265 = vadd.xlane.f32.xlu0 %v5264
      %v5266 = vpop.xlane.xlu0 %5265
      %v5267 = vadd.f32 %v4021, %v4022
      %5268 = vadd.xlane.f32.xlu0 %v5267
      %v5269 = vpop.xlane.xlu0 %5268
      %v5270 = vadd.f32 %v4023, %v4024
      %5271 = vadd.xlane.f32.xlu0 %v5270
      %v5272 = vpop.xlane.xlu0 %5271
      %v5273 = vadd.f32 %v4025, %v4026
      %5274 = vadd.xlane.f32.xlu0 %v5273
      %v5275 = vpop.xlane.xlu0 %5274
      %v5276 = vadd.f32 %v4027, %v4028
      %5277 = vadd.xlane.f32.xlu0 %v5276
      %v5278 = vpop.xlane.xlu0 %5277
      %v5279 = vadd.f32 %v4029, %v4030
      %5280 = vadd.xlane.f32.xlu0 %v5279
      %v5281 = vpop.xlane.xlu0 %5280
      %v5282 = vadd.f32 %v4031, %v4032
      %5283 = vadd.xlane.f32.xlu0 %v5282
      %v5284 = vpop.xlane.xlu0 %5283
      %v5285 = vadd.f32 %v4033, %v4034
      %5286 = vadd.xlane.f32.xlu0 %v5285
      %v5287 = vpop.xlane.xlu0 %5286
      %v5288 = vadd.f32 %v4035, %v4036
      %5289 = vadd.xlane.f32.xlu0 %v5288
      %v5290 = vpop.xlane.xlu0 %5289
      %v5291 = vadd.f32 %v4037, %v4038
      %5292 = vadd.xlane.f32.xlu0 %v5291
      %v5293 = vpop.xlane.xlu0 %5292
      %v5294 = vadd.f32 %v4039, %v4040
      %5295 = vadd.xlane.f32.xlu0 %v5294
      %v5296 = vpop.xlane.xlu0 %5295
      %v5297 = vadd.f32 %v4041, %v4042
      %5298 = vadd.xlane.f32.xlu0 %v5297
      %v5299 = vpop.xlane.xlu0 %5298
      %v5300 = vadd.f32 %v4043, %v4044
      %5301 = vadd.xlane.f32.xlu0 %v5300
      %v5302 = vpop.xlane.xlu0 %5301
      %v5303 = vadd.f32 %v4045, %v4046
      %5304 = vadd.xlane.f32.xlu0 %v5303
      %v5305 = vpop.xlane.xlu0 %5304
      %v5306 = vadd.f32 %v4047, %v4048
      %5307 = vadd.xlane.f32.xlu0 %v5306
      %v5308 = vpop.xlane.xlu0 %5307
      %v5309 = vadd.f32 %v4049, %v4050
      %5310 = vadd.xlane.f32.xlu0 %v5309
      %v5311 = vpop.xlane.xlu0 %5310
      %v5312 = vadd.f32 %v4051, %v4052
      %5313 = vadd.xlane.f32.xlu0 %v5312
      %v5314 = vpop.xlane.xlu0 %5313
      %v5315 = vadd.f32 %v4053, %v4054
      %5316 = vadd.xlane.f32.xlu0 %v5315
      %v5317 = vpop.xlane.xlu0 %5316
      %v5318 = vadd.f32 %v4055, %v4056
      %5319 = vadd.xlane.f32.xlu0 %v5318
      %v5320 = vpop.xlane.xlu0 %5319
      %v5321 = vadd.f32 %v4057, %v4058
      %5322 = vadd.xlane.f32.xlu0 %v5321
      %v5323 = vpop.xlane.xlu0 %5322
      %v5324 = vadd.f32 %v4059, %v4060
      %5325 = vadd.xlane.f32.xlu0 %v5324
      %v5326 = vpop.xlane.xlu0 %5325
      %v5327 = vadd.f32 %v4061, %v4062
      %5328 = vadd.xlane.f32.xlu0 %v5327
      %v5329 = vpop.xlane.xlu0 %5328
      %v5330 = vadd.f32 %v4063, %v4064
      %5331 = vadd.xlane.f32.xlu0 %v5330
      %v5332 = vpop.xlane.xlu0 %5331
      %v5333 = vadd.f32 %v4065, %v4066
      %5334 = vadd.xlane.f32.xlu0 %v5333
      %v5335 = vpop.xlane.xlu0 %5334
      %v5336 = vadd.f32 %v4067, %v4068
      %5337 = vadd.xlane.f32.xlu0 %v5336
      %v5338 = vpop.xlane.xlu0 %5337
      %v5339 = vadd.f32 %v4069, %v4070
      %5340 = vadd.xlane.f32.xlu0 %v5339
      %v5341 = vpop.xlane.xlu0 %5340
      %v5342 = vadd.f32 %v4071, %v4072
      %5343 = vadd.xlane.f32.xlu0 %v5342
      %v5344 = vpop.xlane.xlu0 %5343
      %v5345 = vadd.f32 %v4073, %v4074
      %5346 = vadd.xlane.f32.xlu0 %v5345
      %v5347 = vpop.xlane.xlu0 %5346
      %v5348 = vadd.f32 %v4075, %v4076
      %5349 = vadd.xlane.f32.xlu0 %v5348
      %v5350 = vpop.xlane.xlu0 %5349
      %v5351 = vadd.f32 %v4077, %v4078
      %5352 = vadd.xlane.f32.xlu0 %v5351
      %v5353 = vpop.xlane.xlu0 %5352
      %v5354 = vadd.f32 %v4079, %v4080
      %5355 = vadd.xlane.f32.xlu0 %v5354
      %v5356 = vpop.xlane.xlu0 %5355
      %v5357 = vadd.f32 %v4081, %v4082
      %5358 = vadd.xlane.f32.xlu0 %v5357
      %v5359 = vpop.xlane.xlu0 %5358
      %v5360 = vadd.f32 %v4083, %v4084
      %5361 = vadd.xlane.f32.xlu0 %v5360
      %v5362 = vpop.xlane.xlu0 %5361
      %v5363 = vadd.f32 %v4085, %v4086
      %5364 = vadd.xlane.f32.xlu0 %v5363
      %v5365 = vpop.xlane.xlu0 %5364
      %v5366 = vadd.f32 %v4087, %v4088
      %5367 = vadd.xlane.f32.xlu0 %v5366
      %v5368 = vpop.xlane.xlu0 %5367
      %v5369 = vadd.f32 %v4089, %v4090
      %5370 = vadd.xlane.f32.xlu0 %v5369
      %v5371 = vpop.xlane.xlu0 %5370
      %v5372 = vadd.f32 %v4091, %v4092
      %5373 = vadd.xlane.f32.xlu0 %v5372
      %v5374 = vpop.xlane.xlu0 %5373
      %v5375 = vadd.f32 %v4093, %v4094
      %5376 = vadd.xlane.f32.xlu0 %v5375
      %v5377 = vpop.xlane.xlu0 %5376
      %v5378 = vadd.f32 %v4095, %v4096
      %5379 = vadd.xlane.f32.xlu0 %v5378
      %v5380 = vpop.xlane.xlu0 %5379
      %v5381 = vadd.f32 %v4097, %v4098
      %5382 = vadd.xlane.f32.xlu0 %v5381
      %v5383 = vpop.xlane.xlu0 %5382
      %v5384 = vadd.f32 %v4099, %v4100
      %5385 = vadd.xlane.f32.xlu0 %v5384
      %v5386 = vpop.xlane.xlu0 %5385
      %v5387 = vadd.f32 %v4101, %v4102
      %5388 = vadd.xlane.f32.xlu0 %v5387
      %v5389 = vpop.xlane.xlu0 %5388
      %v5390 = vadd.f32 %v4103, %v4104
      %5391 = vadd.xlane.f32.xlu0 %v5390
      %v5392 = vpop.xlane.xlu0 %5391
      %v5393 = vadd.f32 %v4105, %v4106
      %5394 = vadd.xlane.f32.xlu0 %v5393
      %v5395 = vpop.xlane.xlu0 %5394
      %v5396 = vadd.f32 %v4107, %v4108
      %5397 = vadd.xlane.f32.xlu0 %v5396
      %v5398 = vpop.xlane.xlu0 %5397
      %v5399 = vadd.f32 %v4109, %v4110
      %5400 = vadd.xlane.f32.xlu0 %v5399
      %v5401 = vpop.xlane.xlu0 %5400
      %v5402 = vadd.f32 %v4111, %v4112
      %5403 = vadd.xlane.f32.xlu0 %v5402
      %v5404 = vpop.xlane.xlu0 %5403
      %v5405 = vadd.f32 %v4113, %v4114
      %5406 = vadd.xlane.f32.xlu0 %v5405
      %v5407 = vpop.xlane.xlu0 %5406
      %v5408 = vadd.f32 %v4115, %v4116
      %5409 = vadd.xlane.f32.xlu0 %v5408
      %v5410 = vpop.xlane.xlu0 %5409
      %v5411 = vadd.f32 %v4117, %v4118
      %5412 = vadd.xlane.f32.xlu0 %v5411
      %v5413 = vpop.xlane.xlu0 %5412
      %v5414 = vadd.f32 %v4119, %v4120
      %5415 = vadd.xlane.f32.xlu0 %v5414
      %v5416 = vpop.xlane.xlu0 %5415
      %v5417 = vadd.f32 %v4121, %v4122
      %5418 = vadd.xlane.f32.xlu0 %v5417
      %v5419 = vpop.xlane.xlu0 %5418
      %v5420 = vadd.f32 %v4123, %v4124
      %5421 = vadd.xlane.f32.xlu0 %v5420
      %v5422 = vpop.xlane.xlu0 %5421
      %v5423 = vadd.f32 %v4125, %v4126
      %5424 = vadd.xlane.f32.xlu0 %v5423
      %v5425 = vpop.xlane.xlu0 %5424
      %v5426 = vadd.f32 %v4127, %v4128
      %5427 = vadd.xlane.f32.xlu0 %v5426
      %v5428 = vpop.xlane.xlu0 %5427
      %v5429 = vadd.f32 %v4129, %v4130
      %5430 = vadd.xlane.f32.xlu0 %v5429
      %v5431 = vpop.xlane.xlu0 %5430
      %v5432 = vadd.f32 %v4131, %v4132
      %5433 = vadd.xlane.f32.xlu0 %v5432
      %v5434 = vpop.xlane.xlu0 %5433
      %v5435 = vadd.f32 %v4133, %v4134
      %5436 = vadd.xlane.f32.xlu0 %v5435
      %v5437 = vpop.xlane.xlu0 %5436
      %v5438 = vadd.f32 %v4135, %v4136
      %5439 = vadd.xlane.f32.xlu0 %v5438
      %v5440 = vpop.xlane.xlu0 %5439
      %v5441 = vadd.f32 %v4137, %v4138
      %5442 = vadd.xlane.f32.xlu0 %v5441
      %v5443 = vpop.xlane.xlu0 %5442
      %v5444 = vadd.f32 %v4139, %v4140
      %5445 = vadd.xlane.f32.xlu0 %v5444
      %v5446 = vpop.xlane.xlu0 %5445
      %v5447 = vadd.f32 %v4141, %v4142
      %5448 = vadd.xlane.f32.xlu0 %v5447
      %v5449 = vpop.xlane.xlu0 %5448
      %v5450 = vadd.f32 %v4143, %v4144
      %5451 = vadd.xlane.f32.xlu0 %v5450
      %v5452 = vpop.xlane.xlu0 %5451
      %v5453 = vadd.f32 %v4145, %v4146
      %5454 = vadd.xlane.f32.xlu0 %v5453
      %v5455 = vpop.xlane.xlu0 %5454
      %v5456 = vadd.f32 %v4147, %v4148
      %5457 = vadd.xlane.f32.xlu0 %v5456
      %v5458 = vpop.xlane.xlu0 %5457
      %v5459 = vadd.f32 %v4149, %v4150
      %5460 = vadd.xlane.f32.xlu0 %v5459
      %v5461 = vpop.xlane.xlu0 %5460
      %v5462 = vadd.f32 %v4151, %v4152
      %5463 = vadd.xlane.f32.xlu0 %v5462
      %v5464 = vpop.xlane.xlu0 %5463
      %v5465 = vadd.f32 %v4153, %v4154
      %5466 = vadd.xlane.f32.xlu0 %v5465
      %v5467 = vpop.xlane.xlu0 %5466
      %v5468 = vadd.f32 %v4155, %v4156
      %5469 = vadd.xlane.f32.xlu0 %v5468
      %v5470 = vpop.xlane.xlu0 %5469
      %v5471 = vadd.f32 %v4157, %v4158
      %5472 = vadd.xlane.f32.xlu0 %v5471
      %v5473 = vpop.xlane.xlu0 %5472
      %v5474 = vadd.f32 %v4159, %v4160
      %5475 = vadd.xlane.f32.xlu0 %v5474
      %v5476 = vpop.xlane.xlu0 %5475
      %v5477 = vadd.f32 %v4161, %v4162
      %5478 = vadd.xlane.f32.xlu0 %v5477
      %v5479 = vpop.xlane.xlu0 %5478
      %v5480 = vadd.f32 %v4163, %v4164
      %5481 = vadd.xlane.f32.xlu0 %v5480
      %v5482 = vpop.xlane.xlu0 %5481
      %v5483 = vadd.f32 %v4165, %v4166
      %5484 = vadd.xlane.f32.xlu0 %v5483
      %v5485 = vpop.xlane.xlu0 %5484
      %v5486 = vadd.f32 %v4167, %v4168
      %5487 = vadd.xlane.f32.xlu0 %v5486
      %v5488 = vpop.xlane.xlu0 %5487
      %v5489 = vadd.f32 %v4169, %v4170
      %5490 = vadd.xlane.f32.xlu0 %v5489
      %v5491 = vpop.xlane.xlu0 %5490
      %v5492 = vadd.f32 %v4171, %v4172
      %5493 = vadd.xlane.f32.xlu0 %v5492
      %v5494 = vpop.xlane.xlu0 %5493
      %v5495 = vadd.f32 %v4173, %v4174
      %5496 = vadd.xlane.f32.xlu0 %v5495
      %v5497 = vpop.xlane.xlu0 %5496
      %v5498 = vadd.f32 %v4175, %v4176
      %5499 = vadd.xlane.f32.xlu0 %v5498
      %v5500 = vpop.xlane.xlu0 %5499
      %v5501 = vadd.f32 %v4177, %v4178
      %5502 = vadd.xlane.f32.xlu0 %v5501
      %v5503 = vpop.xlane.xlu0 %5502
      %v5504 = vadd.f32 %v4179, %v4180
      %5505 = vadd.xlane.f32.xlu0 %v5504
      %v5506 = vpop.xlane.xlu0 %5505
      %v5507 = vadd.f32 %v4181, %v4182
      %5508 = vadd.xlane.f32.xlu0 %v5507
      %v5509 = vpop.xlane.xlu0 %5508
      %v5510 = vadd.f32 %v4183, %v4184
      %5511 = vadd.xlane.f32.xlu0 %v5510
      %v5512 = vpop.xlane.xlu0 %5511
      %v5513 = vadd.f32 %v4185, %v4186
      %5514 = vadd.xlane.f32.xlu0 %v5513
      %v5515 = vpop.xlane.xlu0 %5514
      %v5516 = vadd.f32 %v4187, %v4188
      %5517 = vadd.xlane.f32.xlu0 %v5516
      %v5518 = vpop.xlane.xlu0 %5517
      %v5519 = vadd.f32 %v4189, %v4190
      %5520 = vadd.xlane.f32.xlu0 %v5519
      %v5521 = vpop.xlane.xlu0 %5520
      %v5522 = vadd.f32 %v4191, %v4192
      %5523 = vadd.xlane.f32.xlu0 %v5522
      %v5524 = vpop.xlane.xlu0 %5523
      %v5525 = vadd.f32 %v4193, %v4194
      %5526 = vadd.xlane.f32.xlu0 %v5525
      %v5527 = vpop.xlane.xlu0 %5526
      %v5528 = vadd.f32 %v4195, %v4196
      %5529 = vadd.xlane.f32.xlu0 %v5528
      %v5530 = vpop.xlane.xlu0 %5529
      %v5531 = vadd.f32 %v4197, %v4198
      %5532 = vadd.xlane.f32.xlu0 %v5531
      %v5533 = vpop.xlane.xlu0 %5532
      %v5534 = vadd.f32 %v4199, %v4200
      %5535 = vadd.xlane.f32.xlu0 %v5534
      %v5536 = vpop.xlane.xlu0 %5535
      %v5537 = vadd.f32 %v4201, %v4202
      %5538 = vadd.xlane.f32.xlu0 %v5537
      %v5539 = vpop.xlane.xlu0 %5538
      %v5540 = vadd.f32 %v4203, %v4204
      %5541 = vadd.xlane.f32.xlu0 %v5540
      %v5542 = vpop.xlane.xlu0 %5541
      %v5543 = vadd.f32 %v4205, %v4206
      %5544 = vadd.xlane.f32.xlu0 %v5543
      %v5545 = vpop.xlane.xlu0 %5544
      %v5546 = vadd.f32 %v4207, %v4208
      %5547 = vadd.xlane.f32.xlu0 %v5546
      %v5548 = vpop.xlane.xlu0 %5547
      %v5549 = vadd.f32 %v4209, %v4210
      %5550 = vadd.xlane.f32.xlu0 %v5549
      %v5551 = vpop.xlane.xlu0 %5550
      %v5552 = vadd.f32 %v4211, %v4212
      %5553 = vadd.xlane.f32.xlu0 %v5552
      %v5554 = vpop.xlane.xlu0 %5553
      %v5555 = vadd.f32 %v4213, %v4214
      %5556 = vadd.xlane.f32.xlu0 %v5555
      %v5557 = vpop.xlane.xlu0 %5556
      %v5558 = vadd.f32 %v4215, %v4216
      %5559 = vadd.xlane.f32.xlu0 %v5558
      %v5560 = vpop.xlane.xlu0 %5559
      %v5561 = vadd.f32 %v4217, %v4218
      %5562 = vadd.xlane.f32.xlu0 %v5561
      %v5563 = vpop.xlane.xlu0 %5562
      %v5564 = vadd.f32 %v4219, %v4220
      %5565 = vadd.xlane.f32.xlu0 %v5564
      %v5566 = vpop.xlane.xlu0 %5565
      %v5567 = vadd.f32 %v4221, %v4222
      %5568 = vadd.xlane.f32.xlu0 %v5567
      %v5569 = vpop.xlane.xlu0 %5568
      %v5570 = vadd.f32 %v4223, %v4224
      %5571 = vadd.xlane.f32.xlu0 %v5570
      %v5572 = vpop.xlane.xlu0 %5571
      %v5573 = vadd.f32 %v4225, %v4226
      %5574 = vadd.xlane.f32.xlu0 %v5573
      %v5575 = vpop.xlane.xlu0 %5574
      %v5576 = vadd.f32 %v4227, %v4228
      %5577 = vadd.xlane.f32.xlu0 %v5576
      %v5578 = vpop.xlane.xlu0 %5577
      %v5579 = vadd.f32 %v4229, %v4230
      %5580 = vadd.xlane.f32.xlu0 %v5579
      %v5581 = vpop.xlane.xlu0 %5580
      %v5582 = vadd.f32 %v4231, %v4232
      %5583 = vadd.xlane.f32.xlu0 %v5582
      %v5584 = vpop.xlane.xlu0 %5583
      %v5585 = vadd.f32 %v4233, %v4234
      %5586 = vadd.xlane.f32.xlu0 %v5585
      %v5587 = vpop.xlane.xlu0 %5586
      %v5588 = vadd.f32 %v4235, %v4236
      %5589 = vadd.xlane.f32.xlu0 %v5588
      %v5590 = vpop.xlane.xlu0 %5589
      %v5591 = vadd.f32 %v4237, %v4238
      %5592 = vadd.xlane.f32.xlu0 %v5591
      %v5593 = vpop.xlane.xlu0 %5592
      %v5594 = vadd.f32 %v4239, %v4240
      %5595 = vadd.xlane.f32.xlu0 %v5594
      %v5596 = vpop.xlane.xlu0 %5595
      %v5597 = vadd.f32 %v4241, %v4242
      %5598 = vadd.xlane.f32.xlu0 %v5597
      %v5599 = vpop.xlane.xlu0 %5598
      %v5600 = vadd.f32 %v4243, %v4244
      %5601 = vadd.xlane.f32.xlu0 %v5600
      %v5602 = vpop.xlane.xlu0 %5601
      %v5603 = vadd.f32 %v4245, %v4246
      %5604 = vadd.xlane.f32.xlu0 %v5603
      %v5605 = vpop.xlane.xlu0 %5604
      %v5606 = vadd.f32 %v4247, %v4248
      %5607 = vadd.xlane.f32.xlu0 %v5606
      %v5608 = vpop.xlane.xlu0 %5607
      %v5609 = vadd.f32 %v4249, %v4250
      %5610 = vadd.xlane.f32.xlu0 %v5609
      %v5611 = vpop.xlane.xlu0 %5610
      %v5612 = vadd.f32 %v4251, %v4252
      %5613 = vadd.xlane.f32.xlu0 %v5612
      %v5614 = vpop.xlane.xlu0 %5613
      %v5615 = vadd.f32 %v4253, %v4254
      %5616 = vadd.xlane.f32.xlu0 %v5615
      %v5617 = vpop.xlane.xlu0 %5616
      %v5618 = vadd.f32 %v4255, %v4256
      %5619 = vadd.xlane.f32.xlu0 %v5618
      %v5620 = vpop.xlane.xlu0 %5619
      %v5621 = vadd.f32 %v4257, %v4258
      %5622 = vadd.xlane.f32.xlu0 %v5621
      %v5623 = vpop.xlane.xlu0 %5622
      %v5624 = vadd.f32 %v4259, %v4260
      %5625 = vadd.xlane.f32.xlu0 %v5624
      %v5626 = vpop.xlane.xlu0 %5625
      %v5627 = vadd.f32 %v4261, %v4262
      %5628 = vadd.xlane.f32.xlu0 %v5627
      %v5629 = vpop.xlane.xlu0 %5628
      %v5630 = vadd.f32 %v4263, %v4264
      %5631 = vadd.xlane.f32.xlu0 %v5630
      %v5632 = vpop.xlane.xlu0 %5631
      %v5633 = vadd.f32 %v4265, %v4266
      %5634 = vadd.xlane.f32.xlu0 %v5633
      %v5635 = vpop.xlane.xlu0 %5634
      %v5636 = vadd.f32 %v4267, %v4268
      %5637 = vadd.xlane.f32.xlu0 %v5636
      %v5638 = vpop.xlane.xlu0 %5637
      %v5639 = vadd.f32 %v4269, %v4270
      %5640 = vadd.xlane.f32.xlu0 %v5639
      %v5641 = vpop.xlane.xlu0 %5640
      %v5642 = vadd.f32 %v4271, %v4272
      %5643 = vadd.xlane.f32.xlu0 %v5642
      %v5644 = vpop.xlane.xlu0 %5643
      %v5645 = vadd.f32 %v4273, %v4274
      %5646 = vadd.xlane.f32.xlu0 %v5645
      %v5647 = vpop.xlane.xlu0 %5646
      %v5648 = vadd.f32 %v4275, %v4276
      %5649 = vadd.xlane.f32.xlu0 %v5648
      %v5650 = vpop.xlane.xlu0 %5649
      %v5651 = vadd.f32 %v4277, %v4278
      %5652 = vadd.xlane.f32.xlu0 %v5651
      %v5653 = vpop.xlane.xlu0 %5652
      %v5654 = vadd.f32 %v4279, %v4280
      %5655 = vadd.xlane.f32.xlu0 %v5654
      %v5656 = vpop.xlane.xlu0 %5655
      %v5657 = vadd.f32 %v4281, %v4282
      %5658 = vadd.xlane.f32.xlu0 %v5657
      %v5659 = vpop.xlane.xlu0 %5658
      %v5660 = vadd.f32 %v4283, %v4284
      %5661 = vadd.xlane.f32.xlu0 %v5660
      %v5662 = vpop.xlane.xlu0 %5661
      %v5663 = vadd.f32 %v4285, %v4286
      %5664 = vadd.xlane.f32.xlu0 %v5663
      %v5665 = vpop.xlane.xlu0 %5664
      %v5666 = vadd.f32 %v4287, %v4288
      %5667 = vadd.xlane.f32.xlu0 %v5666
      %v5668 = vpop.xlane.xlu0 %5667
      %v5669 = vadd.f32 %v4289, %v4290
      %5670 = vadd.xlane.f32.xlu0 %v5669
      %v5671 = vpop.xlane.xlu0 %5670
      %v5672 = vadd.f32 %v4291, %v4292
      %5673 = vadd.xlane.f32.xlu0 %v5672
      %v5674 = vpop.xlane.xlu0 %5673
      %v5675 = vadd.f32 %v4293, %v4294
      %5676 = vadd.xlane.f32.xlu0 %v5675
      %v5677 = vpop.xlane.xlu0 %5676
      %v5678 = vadd.f32 %v4295, %v4296
      %5679 = vadd.xlane.f32.xlu0 %v5678
      %v5680 = vpop.xlane.xlu0 %5679
      %v5681 = vadd.f32 %v4297, %v4298
      %5682 = vadd.xlane.f32.xlu0 %v5681
      %v5683 = vpop.xlane.xlu0 %5682
      %v5684 = vadd.f32 %v4299, %v4300
      %5685 = vadd.xlane.f32.xlu0 %v5684
      %v5686 = vpop.xlane.xlu0 %5685
      %v5687 = vadd.f32 %v4301, %v4302
      %5688 = vadd.xlane.f32.xlu0 %v5687
      %v5689 = vpop.xlane.xlu0 %5688
      %v5690 = vadd.f32 %v4303, %v4304
      %5691 = vadd.xlane.f32.xlu0 %v5690
      %v5692 = vpop.xlane.xlu0 %5691
      %v5693 = vadd.f32 %v4305, %v4306
      %5694 = vadd.xlane.f32.xlu0 %v5693
      %v5695 = vpop.xlane.xlu0 %5694
      %v5696 = vadd.f32 %v4307, %v4308
      %5697 = vadd.xlane.f32.xlu0 %v5696
      %v5698 = vpop.xlane.xlu0 %5697
      %v5699 = vadd.f32 %v4309, %v4310
      %5700 = vadd.xlane.f32.xlu0 %v5699
      %v5701 = vpop.xlane.xlu0 %5700
      %v5702 = vadd.f32 %v4311, %v4312
      %5703 = vadd.xlane.f32.xlu0 %v5702
      %v5704 = vpop.xlane.xlu0 %5703
      %v5705 = vadd.f32 %v4313, %v4314
      %5706 = vadd.xlane.f32.xlu0 %v5705
      %v5707 = vpop.xlane.xlu0 %5706
      %v5708 = vadd.f32 %v4315, %v4316
      %5709 = vadd.xlane.f32.xlu0 %v5708
      %v5710 = vpop.xlane.xlu0 %5709
      %v5711 = vadd.f32 %v4317, %v4318
      %5712 = vadd.xlane.f32.xlu0 %v5711
      %v5713 = vpop.xlane.xlu0 %5712
      %v5714 = vadd.f32 %v4319, %v4320
      %5715 = vadd.xlane.f32.xlu0 %v5714
      %v5716 = vpop.xlane.xlu0 %5715
      %v5717 = vadd.f32 %v4321, %v4322
      %5718 = vadd.xlane.f32.xlu0 %v5717
      %v5719 = vpop.xlane.xlu0 %5718
      %v5720 = vadd.f32 %v4323, %v4324
      %5721 = vadd.xlane.f32.xlu0 %v5720
      %v5722 = vpop.xlane.xlu0 %5721
      %v5723 = vadd.f32 %v4325, %v4326
      %5724 = vadd.xlane.f32.xlu0 %v5723
      %v5725 = vpop.xlane.xlu0 %5724
      %v5726 = vadd.f32 %v4327, %v4328
      %5727 = vadd.xlane.f32.xlu0 %v5726
      %v5728 = vpop.xlane.xlu0 %5727
      %v5729 = vadd.f32 %v4329, %v4330
      %5730 = vadd.xlane.f32.xlu0 %v5729
      %v5731 = vpop.xlane.xlu0 %5730
      %v5732 = vadd.f32 %v4331, %v4332
      %5733 = vadd.xlane.f32.xlu0 %v5732
      %v5734 = vpop.xlane.xlu0 %5733
      %v5735 = vadd.f32 %v4333, %v4334
      %5736 = vadd.xlane.f32.xlu0 %v5735
      %v5737 = vpop.xlane.xlu0 %5736
      %v5738 = vadd.f32 %v4335, %v4336
      %5739 = vadd.xlane.f32.xlu0 %v5738
      %v5740 = vpop.xlane.xlu0 %5739
      %v5741 = vadd.f32 %v4337, %v4338
      %5742 = vadd.xlane.f32.xlu0 %v5741
      %v5743 = vpop.xlane.xlu0 %5742
      %v5744 = vadd.f32 %v4339, %v4340
      %5745 = vadd.xlane.f32.xlu0 %v5744
      %v5746 = vpop.xlane.xlu0 %5745
      %v5747 = vadd.f32 %v4341, %v4342
      %5748 = vadd.xlane.f32.xlu0 %v5747
      %v5749 = vpop.xlane.xlu0 %5748
      %v5750 = vadd.f32 %v4343, %v4344
      %5751 = vadd.xlane.f32.xlu0 %v5750
      %v5752 = vpop.xlane.xlu0 %5751
      %v5753 = vadd.f32 %v4345, %v4346
      %5754 = vadd.xlane.f32.xlu0 %v5753
      %v5755 = vpop.xlane.xlu0 %5754
      %v5756 = vadd.f32 %v4347, %v4348
      %5757 = vadd.xlane.f32.xlu0 %v5756
      %v5758 = vpop.xlane.xlu0 %5757
      %v5759 = vadd.f32 %v4349, %v4350
      %5760 = vadd.xlane.f32.xlu0 %v5759
      %v5761 = vpop.xlane.xlu0 %5760
      %v5762 = vadd.f32 %v4351, %v4352
      %5763 = vadd.xlane.f32.xlu0 %v5762
      %v5764 = vpop.xlane.xlu0 %5763
      %v5765 = vadd.f32 %v4353, %v4354
      %5766 = vadd.xlane.f32.xlu0 %v5765
      %v5767 = vpop.xlane.xlu0 %5766
      %v5768 = vadd.f32 %v4355, %v4356
      %5769 = vadd.xlane.f32.xlu0 %v5768
      %v5770 = vpop.xlane.xlu0 %5769
      %v5771 = vadd.f32 %v4357, %v4358
      %5772 = vadd.xlane.f32.xlu0 %v5771
      %v5773 = vpop.xlane.xlu0 %5772
      %v5774 = vadd.f32 %v4359, %v4360
      %5775 = vadd.xlane.f32.xlu0 %v5774
      %v5776 = vpop.xlane.xlu0 %5775
      %v5777 = vadd.f32 %v4361, %v4362
      %5778 = vadd.xlane.f32.xlu0 %v5777
      %v5779 = vpop.xlane.xlu0 %5778
      %v5780 = vsub.f32 0.0, %v5014
      %v5781 = vsub.f32 0.0, %v5017
      %v5782 = vsub.f32 0.0, %v5020
      %v5783 = vsub.f32 0.0, %v5023
      %v5784 = vsub.f32 0.0, %v5026
      %v5785 = vsub.f32 0.0, %v5029
      %v5786 = vsub.f32 0.0, %v5032
      %v5787 = vsub.f32 0.0, %v5035
      %v5788 = vsub.f32 0.0, %v5038
      %v5789 = vsub.f32 0.0, %v5041
      %v5790 = vsub.f32 0.0, %v5044
      %v5791 = vsub.f32 0.0, %v5047
      %v5792 = vsub.f32 0.0, %v5050
      %v5793 = vsub.f32 0.0, %v5053
      %v5794 = vsub.f32 0.0, %v5056
      %v5795 = vsub.f32 0.0, %v5059
      %v5796 = vsub.f32 0.0, %v5062
      %v5797 = vsub.f32 0.0, %v5065
      %v5798 = vsub.f32 0.0, %v5068
      %v5799 = vsub.f32 0.0, %v5071
      %v5800 = vsub.f32 0.0, %v5074
      %v5801 = vsub.f32 0.0, %v5077
      %v5802 = vsub.f32 0.0, %v5080
      %v5803 = vsub.f32 0.0, %v5083
      %v5804 = vsub.f32 0.0, %v5086
      %v5805 = vsub.f32 0.0, %v5089
      %v5806 = vsub.f32 0.0, %v5092
      %v5807 = vsub.f32 0.0, %v5095
      %v5808 = vsub.f32 0.0, %v5098
      %v5809 = vsub.f32 0.0, %v5101
      %v5810 = vsub.f32 0.0, %v5104
      %v5811 = vsub.f32 0.0, %v5107
      %v5812 = vsub.f32 0.0, %v5110
      %v5813 = vsub.f32 0.0, %v5113
      %v5814 = vsub.f32 0.0, %v5116
      %v5815 = vsub.f32 0.0, %v5119
      %v5816 = vsub.f32 0.0, %v5122
      %v5817 = vsub.f32 0.0, %v5125
      %v5818 = vsub.f32 0.0, %v5128
      %v5819 = vsub.f32 0.0, %v5131
      %v5820 = vsub.f32 0.0, %v5134
      %v5821 = vsub.f32 0.0, %v5137
      %v5822 = vsub.f32 0.0, %v5140
      %v5823 = vsub.f32 0.0, %v5143
      %v5824 = vsub.f32 0.0, %v5146
      %v5825 = vsub.f32 0.0, %v5149
      %v5826 = vsub.f32 0.0, %v5152
      %v5827 = vsub.f32 0.0, %v5155
      %v5828 = vsub.f32 0.0, %v5158
      %v5829 = vsub.f32 0.0, %v5161
      %v5830 = vsub.f32 0.0, %v5164
      %v5831 = vsub.f32 0.0, %v5167
      %v5832 = vsub.f32 0.0, %v5170
      %v5833 = vsub.f32 0.0, %v5173
      %v5834 = vsub.f32 0.0, %v5176
      %v5835 = vsub.f32 0.0, %v5179
      %v5836 = vsub.f32 0.0, %v5182
      %v5837 = vsub.f32 0.0, %v5185
      %v5838 = vsub.f32 0.0, %v5188
      %v5839 = vsub.f32 0.0, %v5191
      %v5840 = vsub.f32 0.0, %v5194
      %v5841 = vsub.f32 0.0, %v5197
      %v5842 = vsub.f32 0.0, %v5200
      %v5843 = vsub.f32 0.0, %v5203
      %v5844 = vsub.f32 0.0, %v5206
      %v5845 = vsub.f32 0.0, %v5209
      %v5846 = vsub.f32 0.0, %v5212
      %v5847 = vsub.f32 0.0, %v5215
      %v5848 = vsub.f32 0.0, %v5218
      %v5849 = vsub.f32 0.0, %v5221
      %v5850 = vsub.f32 0.0, %v5224
      %v5851 = vsub.f32 0.0, %v5227
      %v5852 = vsub.f32 0.0, %v5230
      %v5853 = vsub.f32 0.0, %v5233
      %v5854 = vsub.f32 0.0, %v5236
      %v5855 = vsub.f32 0.0, %v5239
      %v5856 = vsub.f32 0.0, %v5242
      %v5857 = vsub.f32 0.0, %v5245
      %v5858 = vsub.f32 0.0, %v5248
      %v5859 = vsub.f32 0.0, %v5251
      %v5860 = vsub.f32 0.0, %v5254
      %v5861 = vsub.f32 0.0, %v5257
      %v5862 = vsub.f32 0.0, %v5260
      %v5863 = vsub.f32 0.0, %v5263
      %v5864 = vsub.f32 0.0, %v5266
      %v5865 = vsub.f32 0.0, %v5269
      %v5866 = vsub.f32 0.0, %v5272
      %v5867 = vsub.f32 0.0, %v5275
      %v5868 = vsub.f32 0.0, %v5278
      %v5869 = vsub.f32 0.0, %v5281
      %v5870 = vsub.f32 0.0, %v5284
      %v5871 = vsub.f32 0.0, %v5287
      %v5872 = vsub.f32 0.0, %v5290
      %v5873 = vsub.f32 0.0, %v5293
      %v5874 = vsub.f32 0.0, %v5296
      %v5875 = vsub.f32 0.0, %v5299
      %v5876 = vsub.f32 0.0, %v5302
      %v5877 = vsub.f32 0.0, %v5305
      %v5878 = vsub.f32 0.0, %v5308
      %v5879 = vsub.f32 0.0, %v5311
      %v5880 = vsub.f32 0.0, %v5314
      %v5881 = vsub.f32 0.0, %v5317
      %v5882 = vsub.f32 0.0, %v5320
      %v5883 = vsub.f32 0.0, %v5323
      %v5884 = vsub.f32 0.0, %v5326
      %v5885 = vsub.f32 0.0, %v5329
      %v5886 = vsub.f32 0.0, %v5332
      %v5887 = vsub.f32 0.0, %v5335
      %v5888 = vsub.f32 0.0, %v5338
      %v5889 = vsub.f32 0.0, %v5341
      %v5890 = vsub.f32 0.0, %v5344
      %v5891 = vsub.f32 0.0, %v5347
      %v5892 = vsub.f32 0.0, %v5350
      %v5893 = vsub.f32 0.0, %v5353
      %v5894 = vsub.f32 0.0, %v5356
      %v5895 = vsub.f32 0.0, %v5359
      %v5896 = vsub.f32 0.0, %v5362
      %v5897 = vsub.f32 0.0, %v5365
      %v5898 = vsub.f32 0.0, %v5368
      %v5899 = vsub.f32 0.0, %v5371
      %v5900 = vsub.f32 0.0, %v5374
      %v5901 = vsub.f32 0.0, %v5377
      %v5902 = vsub.f32 0.0, %v5380
      %v5903 = vsub.f32 0.0, %v5383
      %v5904 = vsub.f32 0.0, %v5386
      %v5905 = vsub.f32 0.0, %v5389
      %v5906 = vsub.f32 0.0, %v5392
      %v5907 = vsub.f32 0.0, %v5395
      %v5908 = vsub.f32 0.0, %v5398
      %v5909 = vsub.f32 0.0, %v5401
      %v5910 = vsub.f32 0.0, %v5404
      %v5911 = vsub.f32 0.0, %v5407
      %v5912 = vsub.f32 0.0, %v5410
      %v5913 = vsub.f32 0.0, %v5413
      %v5914 = vsub.f32 0.0, %v5416
      %v5915 = vsub.f32 0.0, %v5419
      %v5916 = vsub.f32 0.0, %v5422
      %v5917 = vsub.f32 0.0, %v5425
      %v5918 = vsub.f32 0.0, %v5428
      %v5919 = vsub.f32 0.0, %v5431
      %v5920 = vsub.f32 0.0, %v5434
      %v5921 = vsub.f32 0.0, %v5437
      %v5922 = vsub.f32 0.0, %v5440
      %v5923 = vsub.f32 0.0, %v5443
      %v5924 = vsub.f32 0.0, %v5446
      %v5925 = vsub.f32 0.0, %v5449
      %v5926 = vsub.f32 0.0, %v5452
      %v5927 = vsub.f32 0.0, %v5455
      %v5928 = vsub.f32 0.0, %v5458
      %v5929 = vsub.f32 0.0, %v5461
      %v5930 = vsub.f32 0.0, %v5464
      %v5931 = vsub.f32 0.0, %v5467
      %v5932 = vsub.f32 0.0, %v5470
      %v5933 = vsub.f32 0.0, %v5473
      %v5934 = vsub.f32 0.0, %v5476
      %v5935 = vsub.f32 0.0, %v5479
      %v5936 = vsub.f32 0.0, %v5482
      %v5937 = vsub.f32 0.0, %v5485
      %v5938 = vsub.f32 0.0, %v5488
      %v5939 = vsub.f32 0.0, %v5491
      %v5940 = vsub.f32 0.0, %v5494
      %v5941 = vsub.f32 0.0, %v5497
      %v5942 = vsub.f32 0.0, %v5500
      %v5943 = vsub.f32 0.0, %v5503
      %v5944 = vsub.f32 0.0, %v5506
      %v5945 = vsub.f32 0.0, %v5509
      %v5946 = vsub.f32 0.0, %v5512
      %v5947 = vsub.f32 0.0, %v5515
      %v5948 = vsub.f32 0.0, %v5518
      %v5949 = vsub.f32 0.0, %v5521
      %v5950 = vsub.f32 0.0, %v5524
      %v5951 = vsub.f32 0.0, %v5527
      %v5952 = vsub.f32 0.0, %v5530
      %v5953 = vsub.f32 0.0, %v5533
      %v5954 = vsub.f32 0.0, %v5536
      %v5955 = vsub.f32 0.0, %v5539
      %v5956 = vsub.f32 0.0, %v5542
      %v5957 = vsub.f32 0.0, %v5545
      %v5958 = vsub.f32 0.0, %v5548
      %v5959 = vsub.f32 0.0, %v5551
      %v5960 = vsub.f32 0.0, %v5554
      %v5961 = vsub.f32 0.0, %v5557
      %v5962 = vsub.f32 0.0, %v5560
      %v5963 = vsub.f32 0.0, %v5563
      %v5964 = vsub.f32 0.0, %v5566
      %v5965 = vsub.f32 0.0, %v5569
      %v5966 = vsub.f32 0.0, %v5572
      %v5967 = vsub.f32 0.0, %v5575
      %v5968 = vsub.f32 0.0, %v5578
      %v5969 = vsub.f32 0.0, %v5581
      %v5970 = vsub.f32 0.0, %v5584
      %v5971 = vsub.f32 0.0, %v5587
      %v5972 = vsub.f32 0.0, %v5590
      %v5973 = vsub.f32 0.0, %v5593
      %v5974 = vsub.f32 0.0, %v5596
      %v5975 = vsub.f32 0.0, %v5599
      %v5976 = vsub.f32 0.0, %v5602
      %v5977 = vsub.f32 0.0, %v5605
      %v5978 = vsub.f32 0.0, %v5608
      %v5979 = vsub.f32 0.0, %v5611
      %v5980 = vsub.f32 0.0, %v5614
      %v5981 = vsub.f32 0.0, %v5617
      %v5982 = vsub.f32 0.0, %v5620
      %v5983 = vsub.f32 0.0, %v5623
      %v5984 = vsub.f32 0.0, %v5626
      %v5985 = vsub.f32 0.0, %v5629
      %v5986 = vsub.f32 0.0, %v5632
      %v5987 = vsub.f32 0.0, %v5635
      %v5988 = vsub.f32 0.0, %v5638
      %v5989 = vsub.f32 0.0, %v5641
      %v5990 = vsub.f32 0.0, %v5644
      %v5991 = vsub.f32 0.0, %v5647
      %v5992 = vsub.f32 0.0, %v5650
      %v5993 = vsub.f32 0.0, %v5653
      %v5994 = vsub.f32 0.0, %v5656
      %v5995 = vsub.f32 0.0, %v5659
      %v5996 = vsub.f32 0.0, %v5662
      %v5997 = vsub.f32 0.0, %v5665
      %v5998 = vsub.f32 0.0, %v5668
      %v5999 = vsub.f32 0.0, %v5671
      %v6000 = vsub.f32 0.0, %v5674
      %v6001 = vsub.f32 0.0, %v5677
      %v6002 = vsub.f32 0.0, %v5680
      %v6003 = vsub.f32 0.0, %v5683
      %v6004 = vsub.f32 0.0, %v5686
      %v6005 = vsub.f32 0.0, %v5689
      %v6006 = vsub.f32 0.0, %v5692
      %v6007 = vsub.f32 0.0, %v5695
      %v6008 = vsub.f32 0.0, %v5698
      %v6009 = vsub.f32 0.0, %v5701
      %v6010 = vsub.f32 0.0, %v5704
      %v6011 = vsub.f32 0.0, %v5707
      %v6012 = vsub.f32 0.0, %v5710
      %v6013 = vsub.f32 0.0, %v5713
      %v6014 = vsub.f32 0.0, %v5716
      %v6015 = vsub.f32 0.0, %v5719
      %v6016 = vsub.f32 0.0, %v5722
      %v6017 = vsub.f32 0.0, %v5725
      %v6018 = vsub.f32 0.0, %v5728
      %v6019 = vsub.f32 0.0, %v5731
      %v6020 = vsub.f32 0.0, %v5734
      %v6021 = vsub.f32 0.0, %v5737
      %v6022 = vsub.f32 0.0, %v5740
      %v6023 = vsub.f32 0.0, %v5743
      %v6024 = vsub.f32 0.0, %v5746
      %v6025 = vsub.f32 0.0, %v5749
      %v6026 = vsub.f32 0.0, %v5752
      %v6027 = vsub.f32 0.0, %v5755
      %v6028 = vsub.f32 0.0, %v5758
      %v6029 = vsub.f32 0.0, %v5761
      %v6030 = vsub.f32 0.0, %v5764
      %v6031 = vsub.f32 0.0, %v5767
      %v6032 = vsub.f32 0.0, %v5770
      %v6033 = vsub.f32 0.0, %v5773
      %v6034 = vsub.f32 0.0, %v5776
      %v6035 = vsub.f32 0.0, %v5779
      %v6292 = vlaneseq
      %v6293 = vand.u32 %v6292, 127
      %v6294 = vlaneseq
      %v6295 = vshrl.u32 %v6294, 7
      %v6296 = vsub.s32 %v6293, %v6295
      %v6297 = vrot.slane %v5780, %v6296
      %v6298 = vadd.s32 %v6293, 4294967288
      %v6299 = vlaneseq
      %v6300 = vshrl.u32 %v6299, 7
      %v6301 = vsub.s32 %v6298, %v6300
      %v6302 = vrot.slane %v5781, %v6301
      %vm6303 = vcmask 130112
      %v6304 = vsel %vm6303, %v6302, %v6297
      %v6305 = vadd.s32 %v6293, 4294967280
      %v6306 = vlaneseq
      %v6307 = vshrl.u32 %v6306, 7
      %v6308 = vsub.s32 %v6305, %v6307
      %v6309 = vrot.slane %v5782, %v6308
      %vm6310 = vcmask 195712
      %v6311 = vsel %vm6310, %v6309, %v6304
      %v6312 = vadd.s32 %v6293, 4294967272
      %v6313 = vlaneseq
      %v6314 = vshrl.u32 %v6313, 7
      %v6315 = vsub.s32 %v6312, %v6314
      %v6316 = vrot.slane %v5783, %v6315
      %vm6317 = vcmask 261312
      %v6318 = vsel %vm6317, %v6316, %v6311
      %v6319 = vadd.s32 %v6293, 4294967264
      %v6320 = vlaneseq
      %v6321 = vshrl.u32 %v6320, 7
      %v6322 = vsub.s32 %v6319, %v6321
      %v6323 = vrot.slane %v5784, %v6322
      %vm6324 = vcmask 326912
      %v6325 = vsel %vm6324, %v6323, %v6318
      %v6326 = vadd.s32 %v6293, 4294967256
      %v6327 = vlaneseq
      %v6328 = vshrl.u32 %v6327, 7
      %v6329 = vsub.s32 %v6326, %v6328
      %v6330 = vrot.slane %v5785, %v6329
      %vm6331 = vcmask 392512
      %v6332 = vsel %vm6331, %v6330, %v6325
      %v6333 = vadd.s32 %v6293, 4294967248
      %v6334 = vlaneseq
      %v6335 = vshrl.u32 %v6334, 7
      %v6336 = vsub.s32 %v6333, %v6335
      %v6337 = vrot.slane %v5786, %v6336
      %vm6338 = vcmask 458112
      %v6339 = vsel %vm6338, %v6337, %v6332
      %v6340 = vadd.s32 %v6293, 4294967240
      %v6341 = vlaneseq
      %v6342 = vshrl.u32 %v6341, 7
      %v6343 = vsub.s32 %v6340, %v6342
      %v6344 = vrot.slane %v5787, %v6343
      %vm6345 = vcmask 523712
      %v6346 = vsel %vm6345, %v6344, %v6339
      %v6347 = vadd.s32 %v6293, 4294967232
      %v6348 = vlaneseq
      %v6349 = vshrl.u32 %v6348, 7
      %v6350 = vsub.s32 %v6347, %v6349
      %v6351 = vrot.slane %v5788, %v6350
      %vm6352 = vcmask 589312
      %v6353 = vsel %vm6352, %v6351, %v6346
      %v6354 = vadd.s32 %v6293, 4294967224
      %v6355 = vlaneseq
      %v6356 = vshrl.u32 %v6355, 7
      %v6357 = vsub.s32 %v6354, %v6356
      %v6358 = vrot.slane %v5789, %v6357
      %vm6359 = vcmask 654912
      %v6360 = vsel %vm6359, %v6358, %v6353
      %v6361 = vadd.s32 %v6293, 4294967216
      %v6362 = vlaneseq
      %v6363 = vshrl.u32 %v6362, 7
      %v6364 = vsub.s32 %v6361, %v6363
      %v6365 = vrot.slane %v5790, %v6364
      %vm6366 = vcmask 720512
      %v6367 = vsel %vm6366, %v6365, %v6360
      %v6368 = vadd.s32 %v6293, 4294967208
      %v6369 = vlaneseq
      %v6370 = vshrl.u32 %v6369, 7
      %v6371 = vsub.s32 %v6368, %v6370
      %v6372 = vrot.slane %v5791, %v6371
      %vm6373 = vcmask 786112
      %v6374 = vsel %vm6373, %v6372, %v6367
      %v6375 = vadd.s32 %v6293, 4294967200
      %v6376 = vlaneseq
      %v6377 = vshrl.u32 %v6376, 7
      %v6378 = vsub.s32 %v6375, %v6377
      %v6379 = vrot.slane %v5792, %v6378
      %vm6380 = vcmask 851712
      %v6381 = vsel %vm6380, %v6379, %v6374
      %v6382 = vadd.s32 %v6293, 4294967192
      %v6383 = vlaneseq
      %v6384 = vshrl.u32 %v6383, 7
      %v6385 = vsub.s32 %v6382, %v6384
      %v6386 = vrot.slane %v5793, %v6385
      %vm6387 = vcmask 917312
      %v6388 = vsel %vm6387, %v6386, %v6381
      %v6389 = vadd.s32 %v6293, 4294967184
      %v6390 = vlaneseq
      %v6391 = vshrl.u32 %v6390, 7
      %v6392 = vsub.s32 %v6389, %v6391
      %v6393 = vrot.slane %v5794, %v6392
      %vm6394 = vcmask 982912
      %v6395 = vsel %vm6394, %v6393, %v6388
      %v6396 = vadd.s32 %v6293, 4294967176
      %v6397 = vlaneseq
      %v6398 = vshrl.u32 %v6397, 7
      %v6399 = vsub.s32 %v6396, %v6398
      %v6400 = vrot.slane %v5795, %v6399
      %vm6401 = vcmask 1048512
      %v6402 = vsel %vm6401, %v6400, %v6395
      %v6403 = vlaneseq
      %v6404 = vshrl.u32 %v6403, 7
      %v6405 = vsub.s32 %v6293, %v6404
      %v6406 = vrot.slane %v5796, %v6405
      %v6407 = vlaneseq
      %v6408 = vshrl.u32 %v6407, 7
      %v6409 = vsub.s32 %v6298, %v6408
      %v6410 = vrot.slane %v5797, %v6409
      %v6411 = vsel %vm6303, %v6410, %v6406
      %v6412 = vlaneseq
      %v6413 = vshrl.u32 %v6412, 7
      %v6414 = vsub.s32 %v6305, %v6413
      %v6415 = vrot.slane %v5798, %v6414
      %v6416 = vsel %vm6310, %v6415, %v6411
      %v6417 = vlaneseq
      %v6418 = vshrl.u32 %v6417, 7
      %v6419 = vsub.s32 %v6312, %v6418
      %v6420 = vrot.slane %v5799, %v6419
      %v6421 = vsel %vm6317, %v6420, %v6416
      %v6422 = vlaneseq
      %v6423 = vshrl.u32 %v6422, 7
      %v6424 = vsub.s32 %v6319, %v6423
      %v6425 = vrot.slane %v5800, %v6424
      %v6426 = vsel %vm6324, %v6425, %v6421
      %v6427 = vlaneseq
      %v6428 = vshrl.u32 %v6427, 7
      %v6429 = vsub.s32 %v6326, %v6428
      %v6430 = vrot.slane %v5801, %v6429
      %v6431 = vsel %vm6331, %v6430, %v6426
      %v6432 = vlaneseq
      %v6433 = vshrl.u32 %v6432, 7
      %v6434 = vsub.s32 %v6333, %v6433
      %v6435 = vrot.slane %v5802, %v6434
      %v6436 = vsel %vm6338, %v6435, %v6431
      %v6437 = vlaneseq
      %v6438 = vshrl.u32 %v6437, 7
      %v6439 = vsub.s32 %v6340, %v6438
      %v6440 = vrot.slane %v5803, %v6439
      %v6441 = vsel %vm6345, %v6440, %v6436
      %v6442 = vlaneseq
      %v6443 = vshrl.u32 %v6442, 7
      %v6444 = vsub.s32 %v6347, %v6443
      %v6445 = vrot.slane %v5804, %v6444
      %v6446 = vsel %vm6352, %v6445, %v6441
      %v6447 = vlaneseq
      %v6448 = vshrl.u32 %v6447, 7
      %v6449 = vsub.s32 %v6354, %v6448
      %v6450 = vrot.slane %v5805, %v6449
      %v6451 = vsel %vm6359, %v6450, %v6446
      %v6452 = vlaneseq
      %v6453 = vshrl.u32 %v6452, 7
      %v6454 = vsub.s32 %v6361, %v6453
      %v6455 = vrot.slane %v5806, %v6454
      %v6456 = vsel %vm6366, %v6455, %v6451
      %v6457 = vlaneseq
      %v6458 = vshrl.u32 %v6457, 7
      %v6459 = vsub.s32 %v6368, %v6458
      %v6460 = vrot.slane %v5807, %v6459
      %v6461 = vsel %vm6373, %v6460, %v6456
      %v6462 = vlaneseq
      %v6463 = vshrl.u32 %v6462, 7
      %v6464 = vsub.s32 %v6375, %v6463
      %v6465 = vrot.slane %v5808, %v6464
      %v6466 = vsel %vm6380, %v6465, %v6461
      %v6467 = vlaneseq
      %v6468 = vshrl.u32 %v6467, 7
      %v6469 = vsub.s32 %v6382, %v6468
      %v6470 = vrot.slane %v5809, %v6469
      %v6471 = vsel %vm6387, %v6470, %v6466
      %v6472 = vlaneseq
      %v6473 = vshrl.u32 %v6472, 7
      %v6474 = vsub.s32 %v6389, %v6473
      %v6475 = vrot.slane %v5810, %v6474
      %v6476 = vsel %vm6394, %v6475, %v6471
      %v6477 = vlaneseq
      %v6478 = vshrl.u32 %v6477, 7
      %v6479 = vsub.s32 %v6396, %v6478
      %v6480 = vrot.slane %v5811, %v6479
      %v6481 = vsel %vm6401, %v6480, %v6476
      %v6482 = vlaneseq
      %v6483 = vshrl.u32 %v6482, 7
      %v6484 = vsub.s32 %v6293, %v6483
      %v6485 = vrot.slane %v5812, %v6484
      %v6486 = vlaneseq
      %v6487 = vshrl.u32 %v6486, 7
      %v6488 = vsub.s32 %v6298, %v6487
      %v6489 = vrot.slane %v5813, %v6488
      %v6490 = vsel %vm6303, %v6489, %v6485
      %v6491 = vlaneseq
      %v6492 = vshrl.u32 %v6491, 7
      %v6493 = vsub.s32 %v6305, %v6492
      %v6494 = vrot.slane %v5814, %v6493
      %v6495 = vsel %vm6310, %v6494, %v6490
      %v6496 = vlaneseq
      %v6497 = vshrl.u32 %v6496, 7
      %v6498 = vsub.s32 %v6312, %v6497
      %v6499 = vrot.slane %v5815, %v6498
      %v6500 = vsel %vm6317, %v6499, %v6495
      %v6501 = vlaneseq
      %v6502 = vshrl.u32 %v6501, 7
      %v6503 = vsub.s32 %v6319, %v6502
      %v6504 = vrot.slane %v5816, %v6503
      %v6505 = vsel %vm6324, %v6504, %v6500
      %v6506 = vlaneseq
      %v6507 = vshrl.u32 %v6506, 7
      %v6508 = vsub.s32 %v6326, %v6507
      %v6509 = vrot.slane %v5817, %v6508
      %v6510 = vsel %vm6331, %v6509, %v6505
      %v6511 = vlaneseq
      %v6512 = vshrl.u32 %v6511, 7
      %v6513 = vsub.s32 %v6333, %v6512
      %v6514 = vrot.slane %v5818, %v6513
      %v6515 = vsel %vm6338, %v6514, %v6510
      %v6516 = vlaneseq
      %v6517 = vshrl.u32 %v6516, 7
      %v6518 = vsub.s32 %v6340, %v6517
      %v6519 = vrot.slane %v5819, %v6518
      %v6520 = vsel %vm6345, %v6519, %v6515
      %v6521 = vlaneseq
      %v6522 = vshrl.u32 %v6521, 7
      %v6523 = vsub.s32 %v6347, %v6522
      %v6524 = vrot.slane %v5820, %v6523
      %v6525 = vsel %vm6352, %v6524, %v6520
      %v6526 = vlaneseq
      %v6527 = vshrl.u32 %v6526, 7
      %v6528 = vsub.s32 %v6354, %v6527
      %v6529 = vrot.slane %v5821, %v6528
      %v6530 = vsel %vm6359, %v6529, %v6525
      %v6531 = vlaneseq
      %v6532 = vshrl.u32 %v6531, 7
      %v6533 = vsub.s32 %v6361, %v6532
      %v6534 = vrot.slane %v5822, %v6533
      %v6535 = vsel %vm6366, %v6534, %v6530
      %v6536 = vlaneseq
      %v6537 = vshrl.u32 %v6536, 7
      %v6538 = vsub.s32 %v6368, %v6537
      %v6539 = vrot.slane %v5823, %v6538
      %v6540 = vsel %vm6373, %v6539, %v6535
      %v6541 = vlaneseq
      %v6542 = vshrl.u32 %v6541, 7
      %v6543 = vsub.s32 %v6375, %v6542
      %v6544 = vrot.slane %v5824, %v6543
      %v6545 = vsel %vm6380, %v6544, %v6540
      %v6546 = vlaneseq
      %v6547 = vshrl.u32 %v6546, 7
      %v6548 = vsub.s32 %v6382, %v6547
      %v6549 = vrot.slane %v5825, %v6548
      %v6550 = vsel %vm6387, %v6549, %v6545
      %v6551 = vlaneseq
      %v6552 = vshrl.u32 %v6551, 7
      %v6553 = vsub.s32 %v6389, %v6552
      %v6554 = vrot.slane %v5826, %v6553
      %v6555 = vsel %vm6394, %v6554, %v6550
      %v6556 = vlaneseq
      %v6557 = vshrl.u32 %v6556, 7
      %v6558 = vsub.s32 %v6396, %v6557
      %v6559 = vrot.slane %v5827, %v6558
      %v6560 = vsel %vm6401, %v6559, %v6555
      %v6561 = vlaneseq
      %v6562 = vshrl.u32 %v6561, 7
      %v6563 = vsub.s32 %v6293, %v6562
      %v6564 = vrot.slane %v5828, %v6563
      %v6565 = vlaneseq
      %v6566 = vshrl.u32 %v6565, 7
      %v6567 = vsub.s32 %v6298, %v6566
      %v6568 = vrot.slane %v5829, %v6567
      %v6569 = vsel %vm6303, %v6568, %v6564
      %v6570 = vlaneseq
      %v6571 = vshrl.u32 %v6570, 7
      %v6572 = vsub.s32 %v6305, %v6571
      %v6573 = vrot.slane %v5830, %v6572
      %v6574 = vsel %vm6310, %v6573, %v6569
      %v6575 = vlaneseq
      %v6576 = vshrl.u32 %v6575, 7
      %v6577 = vsub.s32 %v6312, %v6576
      %v6578 = vrot.slane %v5831, %v6577
      %v6579 = vsel %vm6317, %v6578, %v6574
      %v6580 = vlaneseq
      %v6581 = vshrl.u32 %v6580, 7
      %v6582 = vsub.s32 %v6319, %v6581
      %v6583 = vrot.slane %v5832, %v6582
      %v6584 = vsel %vm6324, %v6583, %v6579
      %v6585 = vlaneseq
      %v6586 = vshrl.u32 %v6585, 7
      %v6587 = vsub.s32 %v6326, %v6586
      %v6588 = vrot.slane %v5833, %v6587
      %v6589 = vsel %vm6331, %v6588, %v6584
      %v6590 = vlaneseq
      %v6591 = vshrl.u32 %v6590, 7
      %v6592 = vsub.s32 %v6333, %v6591
      %v6593 = vrot.slane %v5834, %v6592
      %v6594 = vsel %vm6338, %v6593, %v6589
      %v6595 = vlaneseq
      %v6596 = vshrl.u32 %v6595, 7
      %v6597 = vsub.s32 %v6340, %v6596
      %v6598 = vrot.slane %v5835, %v6597
      %v6599 = vsel %vm6345, %v6598, %v6594
      %v6600 = vlaneseq
      %v6601 = vshrl.u32 %v6600, 7
      %v6602 = vsub.s32 %v6347, %v6601
      %v6603 = vrot.slane %v5836, %v6602
      %v6604 = vsel %vm6352, %v6603, %v6599
      %v6605 = vlaneseq
      %v6606 = vshrl.u32 %v6605, 7
      %v6607 = vsub.s32 %v6354, %v6606
      %v6608 = vrot.slane %v5837, %v6607
      %v6609 = vsel %vm6359, %v6608, %v6604
      %v6610 = vlaneseq
      %v6611 = vshrl.u32 %v6610, 7
      %v6612 = vsub.s32 %v6361, %v6611
      %v6613 = vrot.slane %v5838, %v6612
      %v6614 = vsel %vm6366, %v6613, %v6609
      %v6615 = vlaneseq
      %v6616 = vshrl.u32 %v6615, 7
      %v6617 = vsub.s32 %v6368, %v6616
      %v6618 = vrot.slane %v5839, %v6617
      %v6619 = vsel %vm6373, %v6618, %v6614
      %v6620 = vlaneseq
      %v6621 = vshrl.u32 %v6620, 7
      %v6622 = vsub.s32 %v6375, %v6621
      %v6623 = vrot.slane %v5840, %v6622
      %v6624 = vsel %vm6380, %v6623, %v6619
      %v6625 = vlaneseq
      %v6626 = vshrl.u32 %v6625, 7
      %v6627 = vsub.s32 %v6382, %v6626
      %v6628 = vrot.slane %v5841, %v6627
      %v6629 = vsel %vm6387, %v6628, %v6624
      %v6630 = vlaneseq
      %v6631 = vshrl.u32 %v6630, 7
      %v6632 = vsub.s32 %v6389, %v6631
      %v6633 = vrot.slane %v5842, %v6632
      %v6634 = vsel %vm6394, %v6633, %v6629
      %v6635 = vlaneseq
      %v6636 = vshrl.u32 %v6635, 7
      %v6637 = vsub.s32 %v6396, %v6636
      %v6638 = vrot.slane %v5843, %v6637
      %v6639 = vsel %vm6401, %v6638, %v6634
      %v6640 = vlaneseq
      %v6641 = vshrl.u32 %v6640, 7
      %v6642 = vsub.s32 %v6293, %v6641
      %v6643 = vrot.slane %v5844, %v6642
      %v6644 = vlaneseq
      %v6645 = vshrl.u32 %v6644, 7
      %v6646 = vsub.s32 %v6298, %v6645
      %v6647 = vrot.slane %v5845, %v6646
      %v6648 = vsel %vm6303, %v6647, %v6643
      %v6649 = vlaneseq
      %v6650 = vshrl.u32 %v6649, 7
      %v6651 = vsub.s32 %v6305, %v6650
      %v6652 = vrot.slane %v5846, %v6651
      %v6653 = vsel %vm6310, %v6652, %v6648
      %v6654 = vlaneseq
      %v6655 = vshrl.u32 %v6654, 7
      %v6656 = vsub.s32 %v6312, %v6655
      %v6657 = vrot.slane %v5847, %v6656
      %v6658 = vsel %vm6317, %v6657, %v6653
      %v6659 = vlaneseq
      %v6660 = vshrl.u32 %v6659, 7
      %v6661 = vsub.s32 %v6319, %v6660
      %v6662 = vrot.slane %v5848, %v6661
      %v6663 = vsel %vm6324, %v6662, %v6658
      %v6664 = vlaneseq
      %v6665 = vshrl.u32 %v6664, 7
      %v6666 = vsub.s32 %v6326, %v6665
      %v6667 = vrot.slane %v5849, %v6666
      %v6668 = vsel %vm6331, %v6667, %v6663
      %v6669 = vlaneseq
      %v6670 = vshrl.u32 %v6669, 7
      %v6671 = vsub.s32 %v6333, %v6670
      %v6672 = vrot.slane %v5850, %v6671
      %v6673 = vsel %vm6338, %v6672, %v6668
      %v6674 = vlaneseq
      %v6675 = vshrl.u32 %v6674, 7
      %v6676 = vsub.s32 %v6340, %v6675
      %v6677 = vrot.slane %v5851, %v6676
      %v6678 = vsel %vm6345, %v6677, %v6673
      %v6679 = vlaneseq
      %v6680 = vshrl.u32 %v6679, 7
      %v6681 = vsub.s32 %v6347, %v6680
      %v6682 = vrot.slane %v5852, %v6681
      %v6683 = vsel %vm6352, %v6682, %v6678
      %v6684 = vlaneseq
      %v6685 = vshrl.u32 %v6684, 7
      %v6686 = vsub.s32 %v6354, %v6685
      %v6687 = vrot.slane %v5853, %v6686
      %v6688 = vsel %vm6359, %v6687, %v6683
      %v6689 = vlaneseq
      %v6690 = vshrl.u32 %v6689, 7
      %v6691 = vsub.s32 %v6361, %v6690
      %v6692 = vrot.slane %v5854, %v6691
      %v6693 = vsel %vm6366, %v6692, %v6688
      %v6694 = vlaneseq
      %v6695 = vshrl.u32 %v6694, 7
      %v6696 = vsub.s32 %v6368, %v6695
      %v6697 = vrot.slane %v5855, %v6696
      %v6698 = vsel %vm6373, %v6697, %v6693
      %v6699 = vlaneseq
      %v6700 = vshrl.u32 %v6699, 7
      %v6701 = vsub.s32 %v6375, %v6700
      %v6702 = vrot.slane %v5856, %v6701
      %v6703 = vsel %vm6380, %v6702, %v6698
      %v6704 = vlaneseq
      %v6705 = vshrl.u32 %v6704, 7
      %v6706 = vsub.s32 %v6382, %v6705
      %v6707 = vrot.slane %v5857, %v6706
      %v6708 = vsel %vm6387, %v6707, %v6703
      %v6709 = vlaneseq
      %v6710 = vshrl.u32 %v6709, 7
      %v6711 = vsub.s32 %v6389, %v6710
      %v6712 = vrot.slane %v5858, %v6711
      %v6713 = vsel %vm6394, %v6712, %v6708
      %v6714 = vlaneseq
      %v6715 = vshrl.u32 %v6714, 7
      %v6716 = vsub.s32 %v6396, %v6715
      %v6717 = vrot.slane %v5859, %v6716
      %v6718 = vsel %vm6401, %v6717, %v6713
      %v6719 = vlaneseq
      %v6720 = vshrl.u32 %v6719, 7
      %v6721 = vsub.s32 %v6293, %v6720
      %v6722 = vrot.slane %v5860, %v6721
      %v6723 = vlaneseq
      %v6724 = vshrl.u32 %v6723, 7
      %v6725 = vsub.s32 %v6298, %v6724
      %v6726 = vrot.slane %v5861, %v6725
      %v6727 = vsel %vm6303, %v6726, %v6722
      %v6728 = vlaneseq
      %v6729 = vshrl.u32 %v6728, 7
      %v6730 = vsub.s32 %v6305, %v6729
      %v6731 = vrot.slane %v5862, %v6730
      %v6732 = vsel %vm6310, %v6731, %v6727
      %v6733 = vlaneseq
      %v6734 = vshrl.u32 %v6733, 7
      %v6735 = vsub.s32 %v6312, %v6734
      %v6736 = vrot.slane %v5863, %v6735
      %v6737 = vsel %vm6317, %v6736, %v6732
      %v6738 = vlaneseq
      %v6739 = vshrl.u32 %v6738, 7
      %v6740 = vsub.s32 %v6319, %v6739
      %v6741 = vrot.slane %v5864, %v6740
      %v6742 = vsel %vm6324, %v6741, %v6737
      %v6743 = vlaneseq
      %v6744 = vshrl.u32 %v6743, 7
      %v6745 = vsub.s32 %v6326, %v6744
      %v6746 = vrot.slane %v5865, %v6745
      %v6747 = vsel %vm6331, %v6746, %v6742
      %v6748 = vlaneseq
      %v6749 = vshrl.u32 %v6748, 7
      %v6750 = vsub.s32 %v6333, %v6749
      %v6751 = vrot.slane %v5866, %v6750
      %v6752 = vsel %vm6338, %v6751, %v6747
      %v6753 = vlaneseq
      %v6754 = vshrl.u32 %v6753, 7
      %v6755 = vsub.s32 %v6340, %v6754
      %v6756 = vrot.slane %v5867, %v6755
      %v6757 = vsel %vm6345, %v6756, %v6752
      %v6758 = vlaneseq
      %v6759 = vshrl.u32 %v6758, 7
      %v6760 = vsub.s32 %v6347, %v6759
      %v6761 = vrot.slane %v5868, %v6760
      %v6762 = vsel %vm6352, %v6761, %v6757
      %v6763 = vlaneseq
      %v6764 = vshrl.u32 %v6763, 7
      %v6765 = vsub.s32 %v6354, %v6764
      %v6766 = vrot.slane %v5869, %v6765
      %v6767 = vsel %vm6359, %v6766, %v6762
      %v6768 = vlaneseq
      %v6769 = vshrl.u32 %v6768, 7
      %v6770 = vsub.s32 %v6361, %v6769
      %v6771 = vrot.slane %v5870, %v6770
      %v6772 = vsel %vm6366, %v6771, %v6767
      %v6773 = vlaneseq
      %v6774 = vshrl.u32 %v6773, 7
      %v6775 = vsub.s32 %v6368, %v6774
      %v6776 = vrot.slane %v5871, %v6775
      %v6777 = vsel %vm6373, %v6776, %v6772
      %v6778 = vlaneseq
      %v6779 = vshrl.u32 %v6778, 7
      %v6780 = vsub.s32 %v6375, %v6779
      %v6781 = vrot.slane %v5872, %v6780
      %v6782 = vsel %vm6380, %v6781, %v6777
      %v6783 = vlaneseq
      %v6784 = vshrl.u32 %v6783, 7
      %v6785 = vsub.s32 %v6382, %v6784
      %v6786 = vrot.slane %v5873, %v6785
      %v6787 = vsel %vm6387, %v6786, %v6782
      %v6788 = vlaneseq
      %v6789 = vshrl.u32 %v6788, 7
      %v6790 = vsub.s32 %v6389, %v6789
      %v6791 = vrot.slane %v5874, %v6790
      %v6792 = vsel %vm6394, %v6791, %v6787
      %v6793 = vlaneseq
      %v6794 = vshrl.u32 %v6793, 7
      %v6795 = vsub.s32 %v6396, %v6794
      %v6796 = vrot.slane %v5875, %v6795
      %v6797 = vsel %vm6401, %v6796, %v6792
      %v6798 = vlaneseq
      %v6799 = vshrl.u32 %v6798, 7
      %v6800 = vsub.s32 %v6293, %v6799
      %v6801 = vrot.slane %v5876, %v6800
      %v6802 = vlaneseq
      %v6803 = vshrl.u32 %v6802, 7
      %v6804 = vsub.s32 %v6298, %v6803
      %v6805 = vrot.slane %v5877, %v6804
      %v6806 = vsel %vm6303, %v6805, %v6801
      %v6807 = vlaneseq
      %v6808 = vshrl.u32 %v6807, 7
      %v6809 = vsub.s32 %v6305, %v6808
      %v6810 = vrot.slane %v5878, %v6809
      %v6811 = vsel %vm6310, %v6810, %v6806
      %v6812 = vlaneseq
      %v6813 = vshrl.u32 %v6812, 7
      %v6814 = vsub.s32 %v6312, %v6813
      %v6815 = vrot.slane %v5879, %v6814
      %v6816 = vsel %vm6317, %v6815, %v6811
      %v6817 = vlaneseq
      %v6818 = vshrl.u32 %v6817, 7
      %v6819 = vsub.s32 %v6319, %v6818
      %v6820 = vrot.slane %v5880, %v6819
      %v6821 = vsel %vm6324, %v6820, %v6816
      %v6822 = vlaneseq
      %v6823 = vshrl.u32 %v6822, 7
      %v6824 = vsub.s32 %v6326, %v6823
      %v6825 = vrot.slane %v5881, %v6824
      %v6826 = vsel %vm6331, %v6825, %v6821
      %v6827 = vlaneseq
      %v6828 = vshrl.u32 %v6827, 7
      %v6829 = vsub.s32 %v6333, %v6828
      %v6830 = vrot.slane %v5882, %v6829
      %v6831 = vsel %vm6338, %v6830, %v6826
      %v6832 = vlaneseq
      %v6833 = vshrl.u32 %v6832, 7
      %v6834 = vsub.s32 %v6340, %v6833
      %v6835 = vrot.slane %v5883, %v6834
      %v6836 = vsel %vm6345, %v6835, %v6831
      %v6837 = vlaneseq
      %v6838 = vshrl.u32 %v6837, 7
      %v6839 = vsub.s32 %v6347, %v6838
      %v6840 = vrot.slane %v5884, %v6839
      %v6841 = vsel %vm6352, %v6840, %v6836
      %v6842 = vlaneseq
      %v6843 = vshrl.u32 %v6842, 7
      %v6844 = vsub.s32 %v6354, %v6843
      %v6845 = vrot.slane %v5885, %v6844
      %v6846 = vsel %vm6359, %v6845, %v6841
      %v6847 = vlaneseq
      %v6848 = vshrl.u32 %v6847, 7
      %v6849 = vsub.s32 %v6361, %v6848
      %v6850 = vrot.slane %v5886, %v6849
      %v6851 = vsel %vm6366, %v6850, %v6846
      %v6852 = vlaneseq
      %v6853 = vshrl.u32 %v6852, 7
      %v6854 = vsub.s32 %v6368, %v6853
      %v6855 = vrot.slane %v5887, %v6854
      %v6856 = vsel %vm6373, %v6855, %v6851
      %v6857 = vlaneseq
      %v6858 = vshrl.u32 %v6857, 7
      %v6859 = vsub.s32 %v6375, %v6858
      %v6860 = vrot.slane %v5888, %v6859
      %v6861 = vsel %vm6380, %v6860, %v6856
      %v6862 = vlaneseq
      %v6863 = vshrl.u32 %v6862, 7
      %v6864 = vsub.s32 %v6382, %v6863
      %v6865 = vrot.slane %v5889, %v6864
      %v6866 = vsel %vm6387, %v6865, %v6861
      %v6867 = vlaneseq
      %v6868 = vshrl.u32 %v6867, 7
      %v6869 = vsub.s32 %v6389, %v6868
      %v6870 = vrot.slane %v5890, %v6869
      %v6871 = vsel %vm6394, %v6870, %v6866
      %v6872 = vlaneseq
      %v6873 = vshrl.u32 %v6872, 7
      %v6874 = vsub.s32 %v6396, %v6873
      %v6875 = vrot.slane %v5891, %v6874
      %v6876 = vsel %vm6401, %v6875, %v6871
      %v6877 = vlaneseq
      %v6878 = vshrl.u32 %v6877, 7
      %v6879 = vsub.s32 %v6293, %v6878
      %v6880 = vrot.slane %v5892, %v6879
      %v6881 = vlaneseq
      %v6882 = vshrl.u32 %v6881, 7
      %v6883 = vsub.s32 %v6298, %v6882
      %v6884 = vrot.slane %v5893, %v6883
      %v6885 = vsel %vm6303, %v6884, %v6880
      %v6886 = vlaneseq
      %v6887 = vshrl.u32 %v6886, 7
      %v6888 = vsub.s32 %v6305, %v6887
      %v6889 = vrot.slane %v5894, %v6888
      %v6890 = vsel %vm6310, %v6889, %v6885
      %v6891 = vlaneseq
      %v6892 = vshrl.u32 %v6891, 7
      %v6893 = vsub.s32 %v6312, %v6892
      %v6894 = vrot.slane %v5895, %v6893
      %v6895 = vsel %vm6317, %v6894, %v6890
      %v6896 = vlaneseq
      %v6897 = vshrl.u32 %v6896, 7
      %v6898 = vsub.s32 %v6319, %v6897
      %v6899 = vrot.slane %v5896, %v6898
      %v6900 = vsel %vm6324, %v6899, %v6895
      %v6901 = vlaneseq
      %v6902 = vshrl.u32 %v6901, 7
      %v6903 = vsub.s32 %v6326, %v6902
      %v6904 = vrot.slane %v5897, %v6903
      %v6905 = vsel %vm6331, %v6904, %v6900
      %v6906 = vlaneseq
      %v6907 = vshrl.u32 %v6906, 7
      %v6908 = vsub.s32 %v6333, %v6907
      %v6909 = vrot.slane %v5898, %v6908
      %v6910 = vsel %vm6338, %v6909, %v6905
      %v6911 = vlaneseq
      %v6912 = vshrl.u32 %v6911, 7
      %v6913 = vsub.s32 %v6340, %v6912
      %v6914 = vrot.slane %v5899, %v6913
      %v6915 = vsel %vm6345, %v6914, %v6910
      %v6916 = vlaneseq
      %v6917 = vshrl.u32 %v6916, 7
      %v6918 = vsub.s32 %v6347, %v6917
      %v6919 = vrot.slane %v5900, %v6918
      %v6920 = vsel %vm6352, %v6919, %v6915
      %v6921 = vlaneseq
      %v6922 = vshrl.u32 %v6921, 7
      %v6923 = vsub.s32 %v6354, %v6922
      %v6924 = vrot.slane %v5901, %v6923
      %v6925 = vsel %vm6359, %v6924, %v6920
      %v6926 = vlaneseq
      %v6927 = vshrl.u32 %v6926, 7
      %v6928 = vsub.s32 %v6361, %v6927
      %v6929 = vrot.slane %v5902, %v6928
      %v6930 = vsel %vm6366, %v6929, %v6925
      %v6931 = vlaneseq
      %v6932 = vshrl.u32 %v6931, 7
      %v6933 = vsub.s32 %v6368, %v6932
      %v6934 = vrot.slane %v5903, %v6933
      %v6935 = vsel %vm6373, %v6934, %v6930
      %v6936 = vlaneseq
      %v6937 = vshrl.u32 %v6936, 7
      %v6938 = vsub.s32 %v6375, %v6937
      %v6939 = vrot.slane %v5904, %v6938
      %v6940 = vsel %vm6380, %v6939, %v6935
      %v6941 = vlaneseq
      %v6942 = vshrl.u32 %v6941, 7
      %v6943 = vsub.s32 %v6382, %v6942
      %v6944 = vrot.slane %v5905, %v6943
      %v6945 = vsel %vm6387, %v6944, %v6940
      %v6946 = vlaneseq
      %v6947 = vshrl.u32 %v6946, 7
      %v6948 = vsub.s32 %v6389, %v6947
      %v6949 = vrot.slane %v5906, %v6948
      %v6950 = vsel %vm6394, %v6949, %v6945
      %v6951 = vlaneseq
      %v6952 = vshrl.u32 %v6951, 7
      %v6953 = vsub.s32 %v6396, %v6952
      %v6954 = vrot.slane %v5907, %v6953
      %v6955 = vsel %vm6401, %v6954, %v6950
      %v6956 = vlaneseq
      %v6957 = vshrl.u32 %v6956, 7
      %v6958 = vsub.s32 %v6293, %v6957
      %v6959 = vrot.slane %v5908, %v6958
      %v6960 = vlaneseq
      %v6961 = vshrl.u32 %v6960, 7
      %v6962 = vsub.s32 %v6298, %v6961
      %v6963 = vrot.slane %v5909, %v6962
      %v6964 = vsel %vm6303, %v6963, %v6959
      %v6965 = vlaneseq
      %v6966 = vshrl.u32 %v6965, 7
      %v6967 = vsub.s32 %v6305, %v6966
      %v6968 = vrot.slane %v5910, %v6967
      %v6969 = vsel %vm6310, %v6968, %v6964
      %v6970 = vlaneseq
      %v6971 = vshrl.u32 %v6970, 7
      %v6972 = vsub.s32 %v6312, %v6971
      %v6973 = vrot.slane %v5911, %v6972
      %v6974 = vsel %vm6317, %v6973, %v6969
      %v6975 = vlaneseq
      %v6976 = vshrl.u32 %v6975, 7
      %v6977 = vsub.s32 %v6319, %v6976
      %v6978 = vrot.slane %v5912, %v6977
      %v6979 = vsel %vm6324, %v6978, %v6974
      %v6980 = vlaneseq
      %v6981 = vshrl.u32 %v6980, 7
      %v6982 = vsub.s32 %v6326, %v6981
      %v6983 = vrot.slane %v5913, %v6982
      %v6984 = vsel %vm6331, %v6983, %v6979
      %v6985 = vlaneseq
      %v6986 = vshrl.u32 %v6985, 7
      %v6987 = vsub.s32 %v6333, %v6986
      %v6988 = vrot.slane %v5914, %v6987
      %v6989 = vsel %vm6338, %v6988, %v6984
      %v6990 = vlaneseq
      %v6991 = vshrl.u32 %v6990, 7
      %v6992 = vsub.s32 %v6340, %v6991
      %v6993 = vrot.slane %v5915, %v6992
      %v6994 = vsel %vm6345, %v6993, %v6989
      %v6995 = vlaneseq
      %v6996 = vshrl.u32 %v6995, 7
      %v6997 = vsub.s32 %v6347, %v6996
      %v6998 = vrot.slane %v5916, %v6997
      %v6999 = vsel %vm6352, %v6998, %v6994
      %v7000 = vlaneseq
      %v7001 = vshrl.u32 %v7000, 7
      %v7002 = vsub.s32 %v6354, %v7001
      %v7003 = vrot.slane %v5917, %v7002
      %v7004 = vsel %vm6359, %v7003, %v6999
      %v7005 = vlaneseq
      %v7006 = vshrl.u32 %v7005, 7
      %v7007 = vsub.s32 %v6361, %v7006
      %v7008 = vrot.slane %v5918, %v7007
      %v7009 = vsel %vm6366, %v7008, %v7004
      %v7010 = vlaneseq
      %v7011 = vshrl.u32 %v7010, 7
      %v7012 = vsub.s32 %v6368, %v7011
      %v7013 = vrot.slane %v5919, %v7012
      %v7014 = vsel %vm6373, %v7013, %v7009
      %v7015 = vlaneseq
      %v7016 = vshrl.u32 %v7015, 7
      %v7017 = vsub.s32 %v6375, %v7016
      %v7018 = vrot.slane %v5920, %v7017
      %v7019 = vsel %vm6380, %v7018, %v7014
      %v7020 = vlaneseq
      %v7021 = vshrl.u32 %v7020, 7
      %v7022 = vsub.s32 %v6382, %v7021
      %v7023 = vrot.slane %v5921, %v7022
      %v7024 = vsel %vm6387, %v7023, %v7019
      %v7025 = vlaneseq
      %v7026 = vshrl.u32 %v7025, 7
      %v7027 = vsub.s32 %v6389, %v7026
      %v7028 = vrot.slane %v5922, %v7027
      %v7029 = vsel %vm6394, %v7028, %v7024
      %v7030 = vlaneseq
      %v7031 = vshrl.u32 %v7030, 7
      %v7032 = vsub.s32 %v6396, %v7031
      %v7033 = vrot.slane %v5923, %v7032
      %v7034 = vsel %vm6401, %v7033, %v7029
      %v7035 = vlaneseq
      %v7036 = vshrl.u32 %v7035, 7
      %v7037 = vsub.s32 %v6293, %v7036
      %v7038 = vrot.slane %v5924, %v7037
      %v7039 = vlaneseq
      %v7040 = vshrl.u32 %v7039, 7
      %v7041 = vsub.s32 %v6298, %v7040
      %v7042 = vrot.slane %v5925, %v7041
      %v7043 = vsel %vm6303, %v7042, %v7038
      %v7044 = vlaneseq
      %v7045 = vshrl.u32 %v7044, 7
      %v7046 = vsub.s32 %v6305, %v7045
      %v7047 = vrot.slane %v5926, %v7046
      %v7048 = vsel %vm6310, %v7047, %v7043
      %v7049 = vlaneseq
      %v7050 = vshrl.u32 %v7049, 7
      %v7051 = vsub.s32 %v6312, %v7050
      %v7052 = vrot.slane %v5927, %v7051
      %v7053 = vsel %vm6317, %v7052, %v7048
      %v7054 = vlaneseq
      %v7055 = vshrl.u32 %v7054, 7
      %v7056 = vsub.s32 %v6319, %v7055
      %v7057 = vrot.slane %v5928, %v7056
      %v7058 = vsel %vm6324, %v7057, %v7053
      %v7059 = vlaneseq
      %v7060 = vshrl.u32 %v7059, 7
      %v7061 = vsub.s32 %v6326, %v7060
      %v7062 = vrot.slane %v5929, %v7061
      %v7063 = vsel %vm6331, %v7062, %v7058
      %v7064 = vlaneseq
      %v7065 = vshrl.u32 %v7064, 7
      %v7066 = vsub.s32 %v6333, %v7065
      %v7067 = vrot.slane %v5930, %v7066
      %v7068 = vsel %vm6338, %v7067, %v7063
      %v7069 = vlaneseq
      %v7070 = vshrl.u32 %v7069, 7
      %v7071 = vsub.s32 %v6340, %v7070
      %v7072 = vrot.slane %v5931, %v7071
      %v7073 = vsel %vm6345, %v7072, %v7068
      %v7074 = vlaneseq
      %v7075 = vshrl.u32 %v7074, 7
      %v7076 = vsub.s32 %v6347, %v7075
      %v7077 = vrot.slane %v5932, %v7076
      %v7078 = vsel %vm6352, %v7077, %v7073
      %v7079 = vlaneseq
      %v7080 = vshrl.u32 %v7079, 7
      %v7081 = vsub.s32 %v6354, %v7080
      %v7082 = vrot.slane %v5933, %v7081
      %v7083 = vsel %vm6359, %v7082, %v7078
      %v7084 = vlaneseq
      %v7085 = vshrl.u32 %v7084, 7
      %v7086 = vsub.s32 %v6361, %v7085
      %v7087 = vrot.slane %v5934, %v7086
      %v7088 = vsel %vm6366, %v7087, %v7083
      %v7089 = vlaneseq
      %v7090 = vshrl.u32 %v7089, 7
      %v7091 = vsub.s32 %v6368, %v7090
      %v7092 = vrot.slane %v5935, %v7091
      %v7093 = vsel %vm6373, %v7092, %v7088
      %v7094 = vlaneseq
      %v7095 = vshrl.u32 %v7094, 7
      %v7096 = vsub.s32 %v6375, %v7095
      %v7097 = vrot.slane %v5936, %v7096
      %v7098 = vsel %vm6380, %v7097, %v7093
      %v7099 = vlaneseq
      %v7100 = vshrl.u32 %v7099, 7
      %v7101 = vsub.s32 %v6382, %v7100
      %v7102 = vrot.slane %v5937, %v7101
      %v7103 = vsel %vm6387, %v7102, %v7098
      %v7104 = vlaneseq
      %v7105 = vshrl.u32 %v7104, 7
      %v7106 = vsub.s32 %v6389, %v7105
      %v7107 = vrot.slane %v5938, %v7106
      %v7108 = vsel %vm6394, %v7107, %v7103
      %v7109 = vlaneseq
      %v7110 = vshrl.u32 %v7109, 7
      %v7111 = vsub.s32 %v6396, %v7110
      %v7112 = vrot.slane %v5939, %v7111
      %v7113 = vsel %vm6401, %v7112, %v7108
      %v7114 = vlaneseq
      %v7115 = vshrl.u32 %v7114, 7
      %v7116 = vsub.s32 %v6293, %v7115
      %v7117 = vrot.slane %v5940, %v7116
      %v7118 = vlaneseq
      %v7119 = vshrl.u32 %v7118, 7
      %v7120 = vsub.s32 %v6298, %v7119
      %v7121 = vrot.slane %v5941, %v7120
      %v7122 = vsel %vm6303, %v7121, %v7117
      %v7123 = vlaneseq
      %v7124 = vshrl.u32 %v7123, 7
      %v7125 = vsub.s32 %v6305, %v7124
      %v7126 = vrot.slane %v5942, %v7125
      %v7127 = vsel %vm6310, %v7126, %v7122
      %v7128 = vlaneseq
      %v7129 = vshrl.u32 %v7128, 7
      %v7130 = vsub.s32 %v6312, %v7129
      %v7131 = vrot.slane %v5943, %v7130
      %v7132 = vsel %vm6317, %v7131, %v7127
      %v7133 = vlaneseq
      %v7134 = vshrl.u32 %v7133, 7
      %v7135 = vsub.s32 %v6319, %v7134
      %v7136 = vrot.slane %v5944, %v7135
      %v7137 = vsel %vm6324, %v7136, %v7132
      %v7138 = vlaneseq
      %v7139 = vshrl.u32 %v7138, 7
      %v7140 = vsub.s32 %v6326, %v7139
      %v7141 = vrot.slane %v5945, %v7140
      %v7142 = vsel %vm6331, %v7141, %v7137
      %v7143 = vlaneseq
      %v7144 = vshrl.u32 %v7143, 7
      %v7145 = vsub.s32 %v6333, %v7144
      %v7146 = vrot.slane %v5946, %v7145
      %v7147 = vsel %vm6338, %v7146, %v7142
      %v7148 = vlaneseq
      %v7149 = vshrl.u32 %v7148, 7
      %v7150 = vsub.s32 %v6340, %v7149
      %v7151 = vrot.slane %v5947, %v7150
      %v7152 = vsel %vm6345, %v7151, %v7147
      %v7153 = vlaneseq
      %v7154 = vshrl.u32 %v7153, 7
      %v7155 = vsub.s32 %v6347, %v7154
      %v7156 = vrot.slane %v5948, %v7155
      %v7157 = vsel %vm6352, %v7156, %v7152
      %v7158 = vlaneseq
      %v7159 = vshrl.u32 %v7158, 7
      %v7160 = vsub.s32 %v6354, %v7159
      %v7161 = vrot.slane %v5949, %v7160
      %v7162 = vsel %vm6359, %v7161, %v7157
      %v7163 = vlaneseq
      %v7164 = vshrl.u32 %v7163, 7
      %v7165 = vsub.s32 %v6361, %v7164
      %v7166 = vrot.slane %v5950, %v7165
      %v7167 = vsel %vm6366, %v7166, %v7162
      %v7168 = vlaneseq
      %v7169 = vshrl.u32 %v7168, 7
      %v7170 = vsub.s32 %v6368, %v7169
      %v7171 = vrot.slane %v5951, %v7170
      %v7172 = vsel %vm6373, %v7171, %v7167
      %v7173 = vlaneseq
      %v7174 = vshrl.u32 %v7173, 7
      %v7175 = vsub.s32 %v6375, %v7174
      %v7176 = vrot.slane %v5952, %v7175
      %v7177 = vsel %vm6380, %v7176, %v7172
      %v7178 = vlaneseq
      %v7179 = vshrl.u32 %v7178, 7
      %v7180 = vsub.s32 %v6382, %v7179
      %v7181 = vrot.slane %v5953, %v7180
      %v7182 = vsel %vm6387, %v7181, %v7177
      %v7183 = vlaneseq
      %v7184 = vshrl.u32 %v7183, 7
      %v7185 = vsub.s32 %v6389, %v7184
      %v7186 = vrot.slane %v5954, %v7185
      %v7187 = vsel %vm6394, %v7186, %v7182
      %v7188 = vlaneseq
      %v7189 = vshrl.u32 %v7188, 7
      %v7190 = vsub.s32 %v6396, %v7189
      %v7191 = vrot.slane %v5955, %v7190
      %v7192 = vsel %vm6401, %v7191, %v7187
      %v7193 = vlaneseq
      %v7194 = vshrl.u32 %v7193, 7
      %v7195 = vsub.s32 %v6293, %v7194
      %v7196 = vrot.slane %v5956, %v7195
      %v7197 = vlaneseq
      %v7198 = vshrl.u32 %v7197, 7
      %v7199 = vsub.s32 %v6298, %v7198
      %v7200 = vrot.slane %v5957, %v7199
      %v7201 = vsel %vm6303, %v7200, %v7196
      %v7202 = vlaneseq
      %v7203 = vshrl.u32 %v7202, 7
      %v7204 = vsub.s32 %v6305, %v7203
      %v7205 = vrot.slane %v5958, %v7204
      %v7206 = vsel %vm6310, %v7205, %v7201
      %v7207 = vlaneseq
      %v7208 = vshrl.u32 %v7207, 7
      %v7209 = vsub.s32 %v6312, %v7208
      %v7210 = vrot.slane %v5959, %v7209
      %v7211 = vsel %vm6317, %v7210, %v7206
      %v7212 = vlaneseq
      %v7213 = vshrl.u32 %v7212, 7
      %v7214 = vsub.s32 %v6319, %v7213
      %v7215 = vrot.slane %v5960, %v7214
      %v7216 = vsel %vm6324, %v7215, %v7211
      %v7217 = vlaneseq
      %v7218 = vshrl.u32 %v7217, 7
      %v7219 = vsub.s32 %v6326, %v7218
      %v7220 = vrot.slane %v5961, %v7219
      %v7221 = vsel %vm6331, %v7220, %v7216
      %v7222 = vlaneseq
      %v7223 = vshrl.u32 %v7222, 7
      %v7224 = vsub.s32 %v6333, %v7223
      %v7225 = vrot.slane %v5962, %v7224
      %v7226 = vsel %vm6338, %v7225, %v7221
      %v7227 = vlaneseq
      %v7228 = vshrl.u32 %v7227, 7
      %v7229 = vsub.s32 %v6340, %v7228
      %v7230 = vrot.slane %v5963, %v7229
      %v7231 = vsel %vm6345, %v7230, %v7226
      %v7232 = vlaneseq
      %v7233 = vshrl.u32 %v7232, 7
      %v7234 = vsub.s32 %v6347, %v7233
      %v7235 = vrot.slane %v5964, %v7234
      %v7236 = vsel %vm6352, %v7235, %v7231
      %v7237 = vlaneseq
      %v7238 = vshrl.u32 %v7237, 7
      %v7239 = vsub.s32 %v6354, %v7238
      %v7240 = vrot.slane %v5965, %v7239
      %v7241 = vsel %vm6359, %v7240, %v7236
      %v7242 = vlaneseq
      %v7243 = vshrl.u32 %v7242, 7
      %v7244 = vsub.s32 %v6361, %v7243
      %v7245 = vrot.slane %v5966, %v7244
      %v7246 = vsel %vm6366, %v7245, %v7241
      %v7247 = vlaneseq
      %v7248 = vshrl.u32 %v7247, 7
      %v7249 = vsub.s32 %v6368, %v7248
      %v7250 = vrot.slane %v5967, %v7249
      %v7251 = vsel %vm6373, %v7250, %v7246
      %v7252 = vlaneseq
      %v7253 = vshrl.u32 %v7252, 7
      %v7254 = vsub.s32 %v6375, %v7253
      %v7255 = vrot.slane %v5968, %v7254
      %v7256 = vsel %vm6380, %v7255, %v7251
      %v7257 = vlaneseq
      %v7258 = vshrl.u32 %v7257, 7
      %v7259 = vsub.s32 %v6382, %v7258
      %v7260 = vrot.slane %v5969, %v7259
      %v7261 = vsel %vm6387, %v7260, %v7256
      %v7262 = vlaneseq
      %v7263 = vshrl.u32 %v7262, 7
      %v7264 = vsub.s32 %v6389, %v7263
      %v7265 = vrot.slane %v5970, %v7264
      %v7266 = vsel %vm6394, %v7265, %v7261
      %v7267 = vlaneseq
      %v7268 = vshrl.u32 %v7267, 7
      %v7269 = vsub.s32 %v6396, %v7268
      %v7270 = vrot.slane %v5971, %v7269
      %v7271 = vsel %vm6401, %v7270, %v7266
      %v7272 = vlaneseq
      %v7273 = vshrl.u32 %v7272, 7
      %v7274 = vsub.s32 %v6293, %v7273
      %v7275 = vrot.slane %v5972, %v7274
      %v7276 = vlaneseq
      %v7277 = vshrl.u32 %v7276, 7
      %v7278 = vsub.s32 %v6298, %v7277
      %v7279 = vrot.slane %v5973, %v7278
      %v7280 = vsel %vm6303, %v7279, %v7275
      %v7281 = vlaneseq
      %v7282 = vshrl.u32 %v7281, 7
      %v7283 = vsub.s32 %v6305, %v7282
      %v7284 = vrot.slane %v5974, %v7283
      %v7285 = vsel %vm6310, %v7284, %v7280
      %v7286 = vlaneseq
      %v7287 = vshrl.u32 %v7286, 7
      %v7288 = vsub.s32 %v6312, %v7287
      %v7289 = vrot.slane %v5975, %v7288
      %v7290 = vsel %vm6317, %v7289, %v7285
      %v7291 = vlaneseq
      %v7292 = vshrl.u32 %v7291, 7
      %v7293 = vsub.s32 %v6319, %v7292
      %v7294 = vrot.slane %v5976, %v7293
      %v7295 = vsel %vm6324, %v7294, %v7290
      %v7296 = vlaneseq
      %v7297 = vshrl.u32 %v7296, 7
      %v7298 = vsub.s32 %v6326, %v7297
      %v7299 = vrot.slane %v5977, %v7298
      %v7300 = vsel %vm6331, %v7299, %v7295
      %v7301 = vlaneseq
      %v7302 = vshrl.u32 %v7301, 7
      %v7303 = vsub.s32 %v6333, %v7302
      %v7304 = vrot.slane %v5978, %v7303
      %v7305 = vsel %vm6338, %v7304, %v7300
      %v7306 = vlaneseq
      %v7307 = vshrl.u32 %v7306, 7
      %v7308 = vsub.s32 %v6340, %v7307
      %v7309 = vrot.slane %v5979, %v7308
      %v7310 = vsel %vm6345, %v7309, %v7305
      %v7311 = vlaneseq
      %v7312 = vshrl.u32 %v7311, 7
      %v7313 = vsub.s32 %v6347, %v7312
      %v7314 = vrot.slane %v5980, %v7313
      %v7315 = vsel %vm6352, %v7314, %v7310
      %v7316 = vlaneseq
      %v7317 = vshrl.u32 %v7316, 7
      %v7318 = vsub.s32 %v6354, %v7317
      %v7319 = vrot.slane %v5981, %v7318
      %v7320 = vsel %vm6359, %v7319, %v7315
      %v7321 = vlaneseq
      %v7322 = vshrl.u32 %v7321, 7
      %v7323 = vsub.s32 %v6361, %v7322
      %v7324 = vrot.slane %v5982, %v7323
      %v7325 = vsel %vm6366, %v7324, %v7320
      %v7326 = vlaneseq
      %v7327 = vshrl.u32 %v7326, 7
      %v7328 = vsub.s32 %v6368, %v7327
      %v7329 = vrot.slane %v5983, %v7328
      %v7330 = vsel %vm6373, %v7329, %v7325
      %v7331 = vlaneseq
      %v7332 = vshrl.u32 %v7331, 7
      %v7333 = vsub.s32 %v6375, %v7332
      %v7334 = vrot.slane %v5984, %v7333
      %v7335 = vsel %vm6380, %v7334, %v7330
      %v7336 = vlaneseq
      %v7337 = vshrl.u32 %v7336, 7
      %v7338 = vsub.s32 %v6382, %v7337
      %v7339 = vrot.slane %v5985, %v7338
      %v7340 = vsel %vm6387, %v7339, %v7335
      %v7341 = vlaneseq
      %v7342 = vshrl.u32 %v7341, 7
      %v7343 = vsub.s32 %v6389, %v7342
      %v7344 = vrot.slane %v5986, %v7343
      %v7345 = vsel %vm6394, %v7344, %v7340
      %v7346 = vlaneseq
      %v7347 = vshrl.u32 %v7346, 7
      %v7348 = vsub.s32 %v6396, %v7347
      %v7349 = vrot.slane %v5987, %v7348
      %v7350 = vsel %vm6401, %v7349, %v7345
      %v7351 = vlaneseq
      %v7352 = vshrl.u32 %v7351, 7
      %v7353 = vsub.s32 %v6293, %v7352
      %v7354 = vrot.slane %v5988, %v7353
      %v7355 = vlaneseq
      %v7356 = vshrl.u32 %v7355, 7
      %v7357 = vsub.s32 %v6298, %v7356
      %v7358 = vrot.slane %v5989, %v7357
      %v7359 = vsel %vm6303, %v7358, %v7354
      %v7360 = vlaneseq
      %v7361 = vshrl.u32 %v7360, 7
      %v7362 = vsub.s32 %v6305, %v7361
      %v7363 = vrot.slane %v5990, %v7362
      %v7364 = vsel %vm6310, %v7363, %v7359
      %v7365 = vlaneseq
      %v7366 = vshrl.u32 %v7365, 7
      %v7367 = vsub.s32 %v6312, %v7366
      %v7368 = vrot.slane %v5991, %v7367
      %v7369 = vsel %vm6317, %v7368, %v7364
      %v7370 = vlaneseq
      %v7371 = vshrl.u32 %v7370, 7
      %v7372 = vsub.s32 %v6319, %v7371
      %v7373 = vrot.slane %v5992, %v7372
      %v7374 = vsel %vm6324, %v7373, %v7369
      %v7375 = vlaneseq
      %v7376 = vshrl.u32 %v7375, 7
      %v7377 = vsub.s32 %v6326, %v7376
      %v7378 = vrot.slane %v5993, %v7377
      %v7379 = vsel %vm6331, %v7378, %v7374
      %v7380 = vlaneseq
      %v7381 = vshrl.u32 %v7380, 7
      %v7382 = vsub.s32 %v6333, %v7381
      %v7383 = vrot.slane %v5994, %v7382
      %v7384 = vsel %vm6338, %v7383, %v7379
      %v7385 = vlaneseq
      %v7386 = vshrl.u32 %v7385, 7
      %v7387 = vsub.s32 %v6340, %v7386
      %v7388 = vrot.slane %v5995, %v7387
      %v7389 = vsel %vm6345, %v7388, %v7384
      %v7390 = vlaneseq
      %v7391 = vshrl.u32 %v7390, 7
      %v7392 = vsub.s32 %v6347, %v7391
      %v7393 = vrot.slane %v5996, %v7392
      %v7394 = vsel %vm6352, %v7393, %v7389
      %v7395 = vlaneseq
      %v7396 = vshrl.u32 %v7395, 7
      %v7397 = vsub.s32 %v6354, %v7396
      %v7398 = vrot.slane %v5997, %v7397
      %v7399 = vsel %vm6359, %v7398, %v7394
      %v7400 = vlaneseq
      %v7401 = vshrl.u32 %v7400, 7
      %v7402 = vsub.s32 %v6361, %v7401
      %v7403 = vrot.slane %v5998, %v7402
      %v7404 = vsel %vm6366, %v7403, %v7399
      %v7405 = vlaneseq
      %v7406 = vshrl.u32 %v7405, 7
      %v7407 = vsub.s32 %v6368, %v7406
      %v7408 = vrot.slane %v5999, %v7407
      %v7409 = vsel %vm6373, %v7408, %v7404
      %v7410 = vlaneseq
      %v7411 = vshrl.u32 %v7410, 7
      %v7412 = vsub.s32 %v6375, %v7411
      %v7413 = vrot.slane %v6000, %v7412
      %v7414 = vsel %vm6380, %v7413, %v7409
      %v7415 = vlaneseq
      %v7416 = vshrl.u32 %v7415, 7
      %v7417 = vsub.s32 %v6382, %v7416
      %v7418 = vrot.slane %v6001, %v7417
      %v7419 = vsel %vm6387, %v7418, %v7414
      %v7420 = vlaneseq
      %v7421 = vshrl.u32 %v7420, 7
      %v7422 = vsub.s32 %v6389, %v7421
      %v7423 = vrot.slane %v6002, %v7422
      %v7424 = vsel %vm6394, %v7423, %v7419
      %v7425 = vlaneseq
      %v7426 = vshrl.u32 %v7425, 7
      %v7427 = vsub.s32 %v6396, %v7426
      %v7428 = vrot.slane %v6003, %v7427
      %v7429 = vsel %vm6401, %v7428, %v7424
      %v7430 = vlaneseq
      %v7431 = vshrl.u32 %v7430, 7
      %v7432 = vsub.s32 %v6293, %v7431
      %v7433 = vrot.slane %v6004, %v7432
      %v7434 = vlaneseq
      %v7435 = vshrl.u32 %v7434, 7
      %v7436 = vsub.s32 %v6298, %v7435
      %v7437 = vrot.slane %v6005, %v7436
      %v7438 = vsel %vm6303, %v7437, %v7433
      %v7439 = vlaneseq
      %v7440 = vshrl.u32 %v7439, 7
      %v7441 = vsub.s32 %v6305, %v7440
      %v7442 = vrot.slane %v6006, %v7441
      %v7443 = vsel %vm6310, %v7442, %v7438
      %v7444 = vlaneseq
      %v7445 = vshrl.u32 %v7444, 7
      %v7446 = vsub.s32 %v6312, %v7445
      %v7447 = vrot.slane %v6007, %v7446
      %v7448 = vsel %vm6317, %v7447, %v7443
      %v7449 = vlaneseq
      %v7450 = vshrl.u32 %v7449, 7
      %v7451 = vsub.s32 %v6319, %v7450
      %v7452 = vrot.slane %v6008, %v7451
      %v7453 = vsel %vm6324, %v7452, %v7448
      %v7454 = vlaneseq
      %v7455 = vshrl.u32 %v7454, 7
      %v7456 = vsub.s32 %v6326, %v7455
      %v7457 = vrot.slane %v6009, %v7456
      %v7458 = vsel %vm6331, %v7457, %v7453
      %v7459 = vlaneseq
      %v7460 = vshrl.u32 %v7459, 7
      %v7461 = vsub.s32 %v6333, %v7460
      %v7462 = vrot.slane %v6010, %v7461
      %v7463 = vsel %vm6338, %v7462, %v7458
      %v7464 = vlaneseq
      %v7465 = vshrl.u32 %v7464, 7
      %v7466 = vsub.s32 %v6340, %v7465
      %v7467 = vrot.slane %v6011, %v7466
      %v7468 = vsel %vm6345, %v7467, %v7463
      %v7469 = vlaneseq
      %v7470 = vshrl.u32 %v7469, 7
      %v7471 = vsub.s32 %v6347, %v7470
      %v7472 = vrot.slane %v6012, %v7471
      %v7473 = vsel %vm6352, %v7472, %v7468
      %v7474 = vlaneseq
      %v7475 = vshrl.u32 %v7474, 7
      %v7476 = vsub.s32 %v6354, %v7475
      %v7477 = vrot.slane %v6013, %v7476
      %v7478 = vsel %vm6359, %v7477, %v7473
      %v7479 = vlaneseq
      %v7480 = vshrl.u32 %v7479, 7
      %v7481 = vsub.s32 %v6361, %v7480
      %v7482 = vrot.slane %v6014, %v7481
      %v7483 = vsel %vm6366, %v7482, %v7478
      %v7484 = vlaneseq
      %v7485 = vshrl.u32 %v7484, 7
      %v7486 = vsub.s32 %v6368, %v7485
      %v7487 = vrot.slane %v6015, %v7486
      %v7488 = vsel %vm6373, %v7487, %v7483
      %v7489 = vlaneseq
      %v7490 = vshrl.u32 %v7489, 7
      %v7491 = vsub.s32 %v6375, %v7490
      %v7492 = vrot.slane %v6016, %v7491
      %v7493 = vsel %vm6380, %v7492, %v7488
      %v7494 = vlaneseq
      %v7495 = vshrl.u32 %v7494, 7
      %v7496 = vsub.s32 %v6382, %v7495
      %v7497 = vrot.slane %v6017, %v7496
      %v7498 = vsel %vm6387, %v7497, %v7493
      %v7499 = vlaneseq
      %v7500 = vshrl.u32 %v7499, 7
      %v7501 = vsub.s32 %v6389, %v7500
      %v7502 = vrot.slane %v6018, %v7501
      %v7503 = vsel %vm6394, %v7502, %v7498
      %v7504 = vlaneseq
      %v7505 = vshrl.u32 %v7504, 7
      %v7506 = vsub.s32 %v6396, %v7505
      %v7507 = vrot.slane %v6019, %v7506
      %v7508 = vsel %vm6401, %v7507, %v7503
      %v7509 = vlaneseq
      %v7510 = vshrl.u32 %v7509, 7
      %v7511 = vsub.s32 %v6293, %v7510
      %v7512 = vrot.slane %v6020, %v7511
      %v7513 = vlaneseq
      %v7514 = vshrl.u32 %v7513, 7
      %v7515 = vsub.s32 %v6298, %v7514
      %v7516 = vrot.slane %v6021, %v7515
      %v7517 = vsel %vm6303, %v7516, %v7512
      %v7518 = vlaneseq
      %v7519 = vshrl.u32 %v7518, 7
      %v7520 = vsub.s32 %v6305, %v7519
      %v7521 = vrot.slane %v6022, %v7520
      %v7522 = vsel %vm6310, %v7521, %v7517
      %v7523 = vlaneseq
      %v7524 = vshrl.u32 %v7523, 7
      %v7525 = vsub.s32 %v6312, %v7524
      %v7526 = vrot.slane %v6023, %v7525
      %v7527 = vsel %vm6317, %v7526, %v7522
      %v7528 = vlaneseq
      %v7529 = vshrl.u32 %v7528, 7
      %v7530 = vsub.s32 %v6319, %v7529
      %v7531 = vrot.slane %v6024, %v7530
      %v7532 = vsel %vm6324, %v7531, %v7527
      %v7533 = vlaneseq
      %v7534 = vshrl.u32 %v7533, 7
      %v7535 = vsub.s32 %v6326, %v7534
      %v7536 = vrot.slane %v6025, %v7535
      %v7537 = vsel %vm6331, %v7536, %v7532
      %v7538 = vlaneseq
      %v7539 = vshrl.u32 %v7538, 7
      %v7540 = vsub.s32 %v6333, %v7539
      %v7541 = vrot.slane %v6026, %v7540
      %v7542 = vsel %vm6338, %v7541, %v7537
      %v7543 = vlaneseq
      %v7544 = vshrl.u32 %v7543, 7
      %v7545 = vsub.s32 %v6340, %v7544
      %v7546 = vrot.slane %v6027, %v7545
      %v7547 = vsel %vm6345, %v7546, %v7542
      %v7548 = vlaneseq
      %v7549 = vshrl.u32 %v7548, 7
      %v7550 = vsub.s32 %v6347, %v7549
      %v7551 = vrot.slane %v6028, %v7550
      %v7552 = vsel %vm6352, %v7551, %v7547
      %v7553 = vlaneseq
      %v7554 = vshrl.u32 %v7553, 7
      %v7555 = vsub.s32 %v6354, %v7554
      %v7556 = vrot.slane %v6029, %v7555
      %v7557 = vsel %vm6359, %v7556, %v7552
      %v7558 = vlaneseq
      %v7559 = vshrl.u32 %v7558, 7
      %v7560 = vsub.s32 %v6361, %v7559
      %v7561 = vrot.slane %v6030, %v7560
      %v7562 = vsel %vm6366, %v7561, %v7557
      %v7563 = vlaneseq
      %v7564 = vshrl.u32 %v7563, 7
      %v7565 = vsub.s32 %v6368, %v7564
      %v7566 = vrot.slane %v6031, %v7565
      %v7567 = vsel %vm6373, %v7566, %v7562
      %v7568 = vlaneseq
      %v7569 = vshrl.u32 %v7568, 7
      %v7570 = vsub.s32 %v6375, %v7569
      %v7571 = vrot.slane %v6032, %v7570
      %v7572 = vsel %vm6380, %v7571, %v7567
      %v7573 = vlaneseq
      %v7574 = vshrl.u32 %v7573, 7
      %v7575 = vsub.s32 %v6382, %v7574
      %v7576 = vrot.slane %v6033, %v7575
      %v7577 = vsel %vm6387, %v7576, %v7572
      %v7578 = vlaneseq
      %v7579 = vshrl.u32 %v7578, 7
      %v7580 = vsub.s32 %v6389, %v7579
      %v7581 = vrot.slane %v6034, %v7580
      %v7582 = vsel %vm6394, %v7581, %v7577
      %v7583 = vlaneseq
      %v7584 = vshrl.u32 %v7583, 7
      %v7585 = vsub.s32 %v6396, %v7584
      %v7586 = vrot.slane %v6035, %v7585
      %v7587 = vsel %vm6401, %v7586, %v7582
      %v7588 = vsel %vm4976, %v6560, %v6402
      %v7589 = vsel %vm4978, %v6718, %v7588
      %v7590 = vsel %vm4980, %v6876, %v7589
      %v7591 = vsel %vm4982, %v7034, %v7590
      %v7592 = vsel %vm4984, %v7192, %v7591
      %v7593 = vsel %vm4986, %v7350, %v7592
      %v7594 = vsel %vm4988, %v7508, %v7593
      %v7595 = vsel %vm4976, %v6639, %v6481
      %v7596 = vsel %vm4978, %v6797, %v7595
      %v7597 = vsel %vm4980, %v6955, %v7596
      %v7598 = vsel %vm4982, %v7113, %v7597
      %v7599 = vsel %vm4984, %v7271, %v7598
      %v7600 = vsel %vm4986, %v7429, %v7599
      %v7601 = vsel %vm4988, %v7587, %v7600
      %v7604 = vadd.f32 %v5010, %v7594
      %v7605 = vadd.f32 %v5011, %v7601
      %7606 = vst [vmem:[%s5009] sm:$0xff] %v7604
      %7607 = vst [vmem:[%s5009 + $0x8] sm:$0xff] %v7605
    $region33: #{tpu_custom_call.1} parent=1 // pred_fallthru
      _
    // Predicated region
    $region34: #{tpu_custom_call.1} parent=1 // pred_check
      %p7608 = pneg %p65
    $region35: #{tpu_custom_call.1} parent=1 // pred_check_branch
      %7610 = sbr.rel (%p7608) target = $region37
    $region36: #{tpu_custom_call.1} parent=1 // pred_region
      %v7611 = vld [vmem:[%s5] sm:$0x3]
      %v7612 = vld [vmem:[%s6] sm:$0x3]
      %v7613 = vld [vmem:[#allocation2] sm:$0xff]
      %v7614 = vld [vmem:[#allocation2 + $0x8] sm:$0xff]
      %v7615 = vmul.f32 %v7613, 0.00390625
      %v7616 = vmul.f32 %v7614, 0.00390625
      %v7617 = vsub.f32 1.0, %v7615
      %v7618 = vsub.f32 1.0, %v7616
      %v7619 = vadd.f32 %v7615, 1.0
      %v7620 = vadd.f32 %v7616, 1.0
      %v7621 = vmul.f32 %v7617, %v7619
      %v7622 = vmul.f32 %v7618, %v7620
      %v7623 = vmax.f32 %v7621, 1e-30
      %v7624 = vmax.f32 %v7622, 1e-30
      %v7625 = vlog2.pop %v7623
      %v7626 = vmul.f32 %v7625, 0.6931472
      %v7627 = vlog2.pop %v7624
      %v7628 = vmul.f32 %v7627, 0.6931472
      %v7629 = vsub.f32 0.0, %v7626
      %v7630 = vsub.f32 0.0, %v7628
      %v7631 = vsub.f32 %v7629, 2.5
      %v7632 = vsub.f32 %v7630, 2.5
      %v7633 = vmul.f32 %v7631, 2.8102264e-08
      %v7634 = vmul.f32 %v7632, 2.8102264e-08
      %v7635 = vadd.f32 %v7633, 3.4327394e-07
      %v7636 = vadd.f32 %v7634, 3.4327394e-07
      %v7637 = vmul.f32 %v7635, %v7631
      %v7638 = vmul.f32 %v7636, %v7632
      %v7639 = vadd.f32 %v7637, -3.5233877e-06
      %v7640 = vadd.f32 %v7638, -3.5233877e-06
      %v7641 = vmul.f32 %v7639, %v7631
      %v7642 = vmul.f32 %v7640, %v7632
      %v7643 = vadd.f32 %v7641, -4.3915065e-06
      %v7644 = vadd.f32 %v7642, -4.3915065e-06
      %v7645 = vmul.f32 %v7643, %v7631
      %v7646 = vmul.f32 %v7644, %v7632
      %v7647 = vadd.f32 %v7645, 0.00021858087
      %v7648 = vadd.f32 %v7646, 0.00021858087
      %v7649 = vmul.f32 %v7647, %v7631
      %v7650 = vmul.f32 %v7648, %v7632
      %v7651 = vadd.f32 %v7649, -0.001253725
      %v7652 = vadd.f32 %v7650, -0.001253725
      %v7653 = vmul.f32 %v7651, %v7631
      %v7654 = vmul.f32 %v7652, %v7632
      %v7655 = vadd.f32 %v7653, -0.0041776816
      %v7656 = vadd.f32 %v7654, -0.0041776816
      %v7657 = vmul.f32 %v7655, %v7631
      %v7658 = vmul.f32 %v7656, %v7632
      %v7659 = vadd.f32 %v7657, 0.24664073
      %v7660 = vadd.f32 %v7658, 0.24664073
      %v7661 = vmul.f32 %v7659, %v7631
      %v7662 = vmul.f32 %v7660, %v7632
      %v7663 = vadd.f32 %v7661, 1.5014094
      %v7664 = vadd.f32 %v7662, 1.5014094
      %v7665 = vrsqrt.pop %v7629
      %v7666 = vmul.f32 %v7629, %v7665
      %vm7667 = vcmp.eq.f32.partialorder %v7629, inf
      %v7668 = vsel %vm7667, %v7629, %v7666
      %vm7669 = vcmp.eq.f32.partialorder %v7629, 0.0
      %v7670 = vand.u32 %v7629, 2147483648
      %v7671 = vsel %vm7669, %v7670, %v7668
      %v7672 = vrsqrt.pop %v7630
      %v7673 = vmul.f32 %v7630, %v7672
      %vm7674 = vcmp.eq.f32.partialorder %v7630, inf
      %v7675 = vsel %vm7674, %v7630, %v7673
      %vm7676 = vcmp.eq.f32.partialorder %v7630, 0.0
      %v7677 = vand.u32 %v7630, 2147483648
      %v7678 = vsel %vm7676, %v7677, %v7675
      %v7679 = vsub.f32 %v7671, 3.0
      %v7680 = vsub.f32 %v7678, 3.0
      %v7681 = vmul.f32 %v7679, -0.00020021426
      %v7682 = vmul.f32 %v7680, -0.00020021426
      %v7683 = vadd.f32 %v7681, 0.00010095056
      %v7684 = vadd.f32 %v7682, 0.00010095056
      %v7685 = vmul.f32 %v7683, %v7679
      %v7686 = vmul.f32 %v7684, %v7680
      %v7687 = vadd.f32 %v7685, 0.0013493432
      %v7688 = vadd.f32 %v7686, 0.0013493432
      %v7689 = vmul.f32 %v7687, %v7679
      %v7690 = vmul.f32 %v7688, %v7680
      %v7691 = vadd.f32 %v7689, -0.0036734284
      %v7692 = vadd.f32 %v7690, -0.0036734284
      %v7693 = vmul.f32 %v7691, %v7679
      %v7694 = vmul.f32 %v7692, %v7680
      %v7695 = vadd.f32 %v7693, 0.0057395077
      %v7696 = vadd.f32 %v7694, 0.0057395077
      %v7697 = vmul.f32 %v7695, %v7679
      %v7698 = vmul.f32 %v7696, %v7680
      %v7699 = vadd.f32 %v7697, -0.0076224613
      %v7700 = vadd.f32 %v7698, -0.0076224613
      %v7701 = vmul.f32 %v7699, %v7679
      %v7702 = vmul.f32 %v7700, %v7680
      %v7703 = vadd.f32 %v7701, 0.0094388705
      %v7704 = vadd.f32 %v7702, 0.0094388705
      %v7705 = vmul.f32 %v7703, %v7679
      %v7706 = vmul.f32 %v7704, %v7680
      %v7707 = vadd.f32 %v7705, 1.001674
      %v7708 = vadd.f32 %v7706, 1.001674
      %v7709 = vmul.f32 %v7707, %v7679
      %v7710 = vmul.f32 %v7708, %v7680
      %v7711 = vadd.f32 %v7709, 2.8329768
      %v7712 = vadd.f32 %v7710, 2.8329768
      %vm7713 = vcmp.lt.f32.partialorder %v7629, 5.0
      %vm7714 = vcmp.lt.f32.partialorder %v7630, 5.0
      %v7715 = vsel %vm7713, %v7663, %v7711
      %v7716 = vsel %vm7714, %v7664, %v7712
      %v7717 = vmul.f32 %v7715, %v7615
      %v7718 = vmul.f32 %v7716, %v7616
      %v7719 = vmul.f32 %v7717, 1.4142135
      %v7720 = vmul.f32 %v7718, 1.4142135
      %v7722 = vlaneseq
      %v7723 = vshrl.u32 %v7722, 7
      %v7724 = vsub.s32 0, %v7723
      %v7725 = vrot.slane %v7611, %v7724
      %v7726 = vlaneseq
      %v7727 = vshrl.u32 %v7726, 7
      %v7728 = vsub.s32 1, %v7727
      %v7729 = vrot.slane %v7611, %v7728
      %v7732 = vmul.f32 %v7719, %v7725
      %v7733 = vmul.f32 %v7720, %v7729
      %v7735 = vlaneseq
      %v7736 = vshrl.u32 %v7735, 7
      %v7737 = vsub.s32 0, %v7736
      %v7738 = vrot.slane %v7612, %v7737
      %v7739 = vlaneseq
      %v7740 = vshrl.u32 %v7739, 7
      %v7741 = vsub.s32 1, %v7740
      %v7742 = vrot.slane %v7612, %v7741
      %v7745 = vadd.f32 %v7732, %v7738
      %v7746 = vadd.f32 %v7733, %v7742
      %7747 = vst [vmem:[#allocation9] sm:$0xff] %v7745
      %7748 = vst [vmem:[#allocation9 + $0x8] sm:$0xff] %v7746
    $region37: #{tpu_custom_call.1} parent=1 // pred_fallthru
      _
    // Predicated region
    $region38: #{tpu_custom_call.1} parent=1 // pred_check
      _
    $region39: #{tpu_custom_call.1} parent=1 // pred_check_branch
      %7750 = sbr.rel (0) target = $region41
    $region40: #{tpu_custom_call.1} parent=1 // pred_region
      %s7752 = ssub.s32 256, 256
      %7753 = vsyncadd [#allocation8], %s7752
      %s7755 = sshll.u32 [#allocation9], 4
      %s7756 = int_to_ptr.vmem [resolvable:$true] %s7755
      %7758 = dma.vmem_to_hbm [thread:$0]  %s7756, 256, %s7, [#allocation8]
    $region41: #{tpu_custom_call.1} parent=1 // pred_fallthru
      _
    // Predicated region
    $region42: #{tpu_custom_call.1} parent=1 // pred_check
      _
    $region43: #{tpu_custom_call.1} parent=1 // pred_check_branch
      %7760 = sbr.rel (0) target = $region45
    $region44: #{tpu_custom_call.1} parent=1 // pred_region
      %7761 = dma.done [#allocation8], 256
    $region45: #{tpu_custom_call.1} parent=1 // pred_fallthru
      _
    %7762 = vsyncpa [#allocation7], 1
    %7763 = vsyncpa [#allocation8], 1

</llo_original>
